<compile_context>
chip_gen: v6e
topology: v6e:2x2x1
jax: 0.10.0
libtpu: 0.0.40
codegen_flags: <defaults>
</compile_context>

<pallas_src>
import functools

import jax
import jax.numpy as jnp
from jax.experimental import pallas as pl
from jax.experimental.pallas import tpu as pltpu

LANE = 128                      # lane width / channel padding quantum
_VMEM_LIMIT = 48 * 1024 * 1024  # explicit scoped-VMEM budget (safe on v5e/v6e/v7x)


def _round_up(x, m):
    return (x + m - 1) // m * m


# ----------------------------- Pallas kernels ------------------------------------------------

def _conv_bn_kernel(x_ref, w_ref, s_ref, b_ref, *rest, kh, kw, wo, relu, has_residual):
    """Conv + folded-BN (+residual) (+ReLU), one (image, out-row, kernel-row) per grid step.

    x_ref : (1, 1, Wp, Cp)        bf16  one padded input row
    w_ref : (KH*KW, Cp, Npad)     bf16  full weight, resident across the whole grid
    s_ref : (1, Npad)             f32   folded BN scale
    b_ref : (1, Npad)             f32   folded BN bias
    r_ref : (1, 1, Wo, Npad)      bf16  optional residual row
    o_ref : (1, 1, Wo, Npad)      bf16
    acc   : (Wo, Npad)            f32   VMEM accumulator scratch
    """
    if has_residual:
        r_ref, o_ref, acc_ref = rest
    else:
        r_ref = None
        o_ref, acc_ref = rest

    di = pl.program_id(2)               # kernel-row index (reduction axis, last in grid)

    @pl.when(di == 0)
    def _init():
        acc_ref[...] = jnp.zeros_like(acc_ref)

    row = x_ref[0, 0]                   # (Wp, Cp) bf16
    acc = acc_ref[...]
    for dj in range(kw):                # unrolled KW taps: (Wo, Cp) x (Cp, Npad) MXU dots
        acc = acc + jnp.dot(row[dj:dj + wo, :], w_ref[di * kw + dj],
                            preferred_element_type=jnp.float32)
    acc_ref[...] = acc

    @pl.when(di == kh - 1)
    def _finalize():                    # BN / residual / ReLU applied once, on the last k step
        y = acc_ref[...] * s_ref[...] + b_ref[...]
        if has_residual:
            y = y + r_ref[0, 0].astype(jnp.float32)
        if relu:
            y = jnp.maximum(y, 0.0)
        o_ref[0, 0] = y.astype(o_ref.dtype)


def _maxpool_kernel(x_ref, o_ref, *, sw, wo, cp):
    """2x2 max pool, one (image, output-row) per grid step (2 input rows in the block)."""
    r0 = x_ref[0, 0]
    r1 = x_ref[0, 1]
    m = jnp.maximum(r0, r1)             # reduce over the 2 window rows
    if sw == 2:
        # W was pre-packed pairwise into the lane dim: (.., Wo, 2*Cp) -> max of the two halves
        o = jnp.maximum(m[:, :cp], m[:, cp:])
    else:
        # stride-1 along W (maxpool3): max of two shifted views
        o = jnp.maximum(m[0:wo, :], m[1:wo + 1, :])
    o_ref[0, 0] = o


# ----------------------------- Pallas wrappers ------------------------------------------------

def _fold_bn(bn, eps=1e-5):
    scale = bn["gamma"] / jnp.sqrt(bn["var"] + eps)
    bias = bn["beta"] - bn["mean"] * scale
    return scale, bias


def conv_bn(x, w_oihw, bn, *, stride=(1, 1), padding=(1, 1), relu=True, residual=None):
    """x: (N, H, W, Cp) bf16, channel-padded to a lane multiple.  Returns (N, Ho, Wo, Npad) bf16."""
    n, h, w_in, cp = x.shape
    cout, cin, kh, kw = w_oihw.shape
    sh, sw = stride
    ph, pw = padding
    assert sw == 1, "all convs in this network have width-stride 1"
    ho = (h + 2 * ph - kh) // sh + 1
    wo = (w_in + 2 * pw - kw) // sw + 1
    n_pad = _round_up(cout, LANE)

    # spatial zero-padding only (channels already lane-padded)
    xp = jnp.pad(x, ((0, 0), (ph, ph), (pw, pw), (0, 0)))
    hp, wp = h + 2 * ph, w_in + 2 * pw

    # folded weight (KH*KW, Cp, Npad), zero-padded on both channel dims, bf16 for the MXU
    wmat = jnp.transpose(w_oihw, (2, 3, 1, 0))                       # (KH, KW, Cin, Cout)
    wmat = jnp.pad(wmat, ((0, 0), (0, 0), (0, cp - cin), (0, n_pad - cout)))
    wmat = wmat.reshape(kh * kw, cp, n_pad).astype(jnp.bfloat16)

    scale, bias = _fold_bn(bn)
    s2 = jnp.pad(scale, (0, n_pad - cout)).reshape(1, n_pad).astype(jnp.float32)
    b2 = jnp.pad(bias, (0, n_pad - cout)).reshape(1, n_pad).astype(jnp.float32)

    has_residual = residual is not None
    kernel = functools.partial(_conv_bn_kernel, kh=kh, kw=kw, wo=wo,
                               relu=relu, has_residual=has_residual)

    in_specs = [
        # one padded input row; H block size 1 => element-row index hi*sh + di
        pl.BlockSpec((1, 1, wp, cp), lambda ni, hi, di: (ni, hi * sh + di, 0, 0)),
        # full weight, constant block index => DMA'd once, resident in VMEM
        pl.BlockSpec((kh * kw, cp, n_pad), lambda ni, hi, di: (0, 0, 0)),
        pl.BlockSpec((1, n_pad), lambda ni, hi, di: (0, 0)),
        pl.BlockSpec((1, n_pad), lambda ni, hi, di: (0, 0)),
    ]
    args = [xp, wmat, s2, b2]
    if has_residual:
        in_specs.append(pl.BlockSpec((1, 1, wo, n_pad), lambda ni, hi, di: (ni, hi, 0, 0)))
        args.append(residual)

    flops = 2 * n * ho * wo * kh * kw * cp * n_pad
    bytes_accessed = (n * hp * wp * cp * 2 * kh
                      + kh * kw * cp * n_pad * 2
                      + n * ho * wo * n_pad * 2 * (2 if has_residual else 1))

    return pl.pallas_call(
        kernel,
        out_shape=jax.ShapeDtypeStruct((n, ho, wo, n_pad), jnp.bfloat16),
        grid=(n, ho, kh),                                  # reduction (kernel-row) axis last
        in_specs=in_specs,
        out_specs=pl.BlockSpec((1, 1, wo, n_pad), lambda ni, hi, di: (ni, hi, 0, 0)),
        scratch_shapes=[pltpu.VMEM((wo, n_pad), jnp.float32)],
        compiler_params=pltpu.CompilerParams(
            dimension_semantics=("parallel", "parallel", "arbitrary"),
            vmem_limit_bytes=_VMEM_LIMIT),
        cost_estimate=pl.CostEstimate(flops=flops, transcendentals=0,
                                      bytes_accessed=bytes_accessed),
    )(*args)


def maxpool2d(x, *, stride, padding):
    """MaxPool2d(kernel_size=2); x: (N, H, W, Cp) bf16 channel-padded."""
    n, h, w_in, cp = x.shape
    sh, sw = stride
    ph, pw = padding
    assert sh == 2 and ph == 0, "this network only uses H-stride 2, no H padding"
    ho = (h - 2) // 2 + 1

    if sw == 2:
        assert pw == 0 and w_in % 2 == 0
        wo = w_in // 2
        # free row-major regroup: adjacent W pixels land in the two lane halves
        inp = x.reshape(n, h, wo, 2 * cp)
        in_spec = pl.BlockSpec((1, 2, wo, 2 * cp), lambda ni, hi: (ni, hi, 0, 0))
    else:
        wo = (w_in + 2 * pw - 2) // 1 + 1
        wp = w_in + 2 * pw
        inp = jnp.pad(x, ((0, 0), (0, 0), (pw, pw), (0, 0)),
                      constant_values=-jnp.inf)          # -inf pad matches PyTorch semantics
        in_spec = pl.BlockSpec((1, 2, wp, cp), lambda ni, hi: (ni, hi, 0, 0))

    kernel = functools.partial(_maxpool_kernel, sw=sw, wo=wo, cp=cp)
    return pl.pallas_call(
        kernel,
        out_shape=jax.ShapeDtypeStruct((n, ho, wo, cp), x.dtype),
        grid=(n, ho),
        in_specs=[in_spec],
        out_specs=pl.BlockSpec((1, 1, wo, cp), lambda ni, hi: (ni, hi, 0, 0)),
        compiler_params=pltpu.CompilerParams(
            dimension_semantics=("parallel", "parallel"),
            vmem_limit_bytes=_VMEM_LIMIT),
    )(inp)


# ----------------------------- parameter construction ----------------------------------------

def _bn_params(key, c):
    k1, k2, k3, k4 = jax.random.split(key, 4)
    return dict(
        gamma=1.0 + 0.1 * jax.random.normal(k1, (c,), jnp.float32),
        beta=0.1 * jax.random.normal(k2, (c,), jnp.float32),
        mean=0.1 * jax.random.normal(k3, (c,), jnp.float32),
        var=1.0 + 0.1 * jax.random.uniform(k4, (c,), jnp.float32),
    )


def _conv_w(key, cout, cin, kh, kw):
    return 0.1 * jax.random.normal(key, (cout, cin, kh, kw), jnp.float32)


def make_params(key, input_channel=3, output_channel=32, layers=(1, 1, 1, 1)):
    ocb = [output_channel // 4, output_channel // 2, output_channel, output_channel]
    inplanes = output_channel // 8
    keys = iter(jax.random.split(key, 256))
    nk = lambda: next(keys)

    p = {}
    p["conv0_1_w"] = _conv_w(nk(), output_channel // 16, input_channel, 3, 3)
    p["bn0_1"] = _bn_params(nk(), output_channel // 16)
    p["conv0_2_w"] = _conv_w(nk(), inplanes, output_channel // 16, 3, 3)
    p["bn0_2"] = _bn_params(nk(), inplanes)

    def make_layer(planes, blocks):
        nonlocal inplanes
        blocks_p = []
        for b in range(blocks):
            bp = {}
            downsample = None
            if b == 0 and inplanes != planes:   # stride is always 1 in this config
                downsample = dict(conv_w=_conv_w(nk(), planes, inplanes, 1, 1),
                                  bn=_bn_params(nk(), planes))
            bp["conv1_w"] = _conv_w(nk(), planes, inplanes, 3, 3)
            bp["bn1"] = _bn_params(nk(), planes)
            bp["conv2_w"] = _conv_w(nk(), planes, planes, 3, 3)
            bp["bn2"] = _bn_params(nk(), planes)
            bp["downsample"] = downsample
            blocks_p.append(bp)
            inplanes = planes
        return blocks_p

    p["layer1"] = make_layer(ocb[0], layers[0])
    p["conv1_w"] = _conv_w(nk(), ocb[0], ocb[0], 3, 3)
    p["bn1"] = _bn_params(nk(), ocb[0])

    p["layer2"] = make_layer(ocb[1], layers[1])
    p["conv2_w"] = _conv_w(nk(), ocb[1], ocb[1], 3, 3)
    p["bn2"] = _bn_params(nk(), ocb[1])

    p["layer3"] = make_layer(ocb[2], layers[2])
    p["conv3_w"] = _conv_w(nk(), ocb[2], ocb[2], 3, 3)
    p["bn3"] = _bn_params(nk(), ocb[2])

    p["layer4"] = make_layer(ocb[3], layers[3])
    p["conv4_1_w"] = _conv_w(nk(), ocb[3], ocb[3], 2, 2)
    p["bn4_1"] = _bn_params(nk(), ocb[3])
    p["conv4_2_w"] = _conv_w(nk(), ocb[3], ocb[3], 2, 2)
    p["bn4_2"] = _bn_params(nk(), ocb[3])
    return p


# ----------------------------- forward pass ---------------------------------------------------

def basic_block_forward(x, bp):
    residual = x
    out = conv_bn(x, bp["conv1_w"], bp["bn1"], stride=(1, 1), padding=(1, 1), relu=True)
    if bp["downsample"] is not None:
        residual = conv_bn(x, bp["downsample"]["conv_w"], bp["downsample"]["bn"],
                           stride=(1, 1), padding=(0, 0), relu=False)
    # conv2 -> bn2 -> (+residual) -> relu fused in one Pallas kernel epilogue
    # TODO(synk): fuse conv1->conv2 of the BasicBlock into a single pallas_call
    # (emit_pipeline over both matmuls) to cut launch overhead at tiny shapes.
    out = conv_bn(out, bp["conv2_w"], bp["bn2"], stride=(1, 1), padding=(1, 1),
                  relu=True, residual=residual)
    return out


def resnet_forward(x_nchw, p):
    x = jnp.transpose(x_nchw, (0, 2, 3, 1))                       # NCHW -> NHWC
    cin = x.shape[-1]
    x = jnp.pad(x, ((0, 0), (0, 0), (0, 0), (0, _round_up(cin, LANE) - cin)))
    x = x.astype(jnp.bfloat16)                                    # lane-padded bf16 activations

    x = conv_bn(x, p["conv0_1_w"], p["bn0_1"], relu=True)
    x = conv_bn(x, p["conv0_2_w"], p["bn0_2"], relu=True)
    x = maxpool2d(x, stride=(2, 2), padding=(0, 0))               # maxpool1

    for bp in p["layer1"]:
        x = basic_block_forward(x, bp)
    x = conv_bn(x, p["conv1_w"], p["bn1"], relu=True)
    x = maxpool2d(x, stride=(2, 2), padding=(0, 0))               # maxpool2

    for bp in p["layer2"]:
        x = basic_block_forward(x, bp)
    x = conv_bn(x, p["conv2_w"], p["bn2"], relu=True)
    x = maxpool2d(x, stride=(2, 1), padding=(0, 1))               # maxpool3

    for bp in p["layer3"]:
        x = basic_block_forward(x, bp)
    x = conv_bn(x, p["conv3_w"], p["bn3"], relu=True)

    for bp in p["layer4"]:
        x = basic_block_forward(x, bp)
    x = conv_bn(x, p["conv4_1_w"], p["bn4_1"], stride=(2, 1), padding=(0, 1), relu=True)
    x = conv_bn(x, p["conv4_2_w"], p["bn4_2"], stride=(1, 1), padding=(0, 0), relu=True)

    cout = p["conv4_2_w"].shape[0]
    x = x[:, :, :, :cout].astype(jnp.float32)                     # strip channel padding
    return jnp.transpose(x, (0, 3, 1, 2))                         # NHWC -> NCHW


# ----------------------------- main ------------------------------------------------------------

if __name__ == "__main__":
    key = jax.random.PRNGKey(0)
    kx, kp = jax.random.split(key)

    # Text-recognition style input: batch=2, channels=3, H=32, W=32.
    x = jax.random.normal(kx, (2, 3, 32, 32), jnp.float32)
    params = make_params(kp, input_channel=3, output_channel=32, layers=(1, 1, 1, 1))

    fwd = jax.jit(resnet_forward)
    out = jax.block_until_ready(fwd(x, params))

    # expected output shape: (2, 32, 1, 9) == (N, output_channel, 1, W//4 + 1)
    assert out.shape == (2, 32, 1, 9), out.shape
    assert bool(jnp.all(jnp.isfinite(out)))
    print("KERNEL_OK")
</pallas_src>

<mosaic_0001>
module attributes {stable_mosaic.version = 11 : i64} {
  func.func @_conv_bn_kernel(%arg0: i32, %arg1: i32, %arg2: i32, %arg3: memref<1x1x34x128xbf16, #tpu.memory_space<vmem>>, %arg4: memref<9x128x128xbf16, #tpu.memory_space<vmem>>, %arg5: memref<1x128xf32, #tpu.memory_space<vmem>>, %arg6: memref<1x128xf32, #tpu.memory_space<vmem>>, %arg7: memref<1x1x32x128xbf16, #tpu.memory_space<vmem>>, %arg8: memref<32x128xf32, #tpu.memory_space<vmem>>) attributes {dimension_semantics = [#tpu.dimension_semantics<parallel>, #tpu.dimension_semantics<parallel>, #tpu.dimension_semantics<arbitrary>], iteration_bounds = array<i64: 2, 32, 3>, scalar_prefetch = 0 : i64, scratch_operands = 1 : i64, tpu.core_type = #tpu.core_type<tc>, window_params = [{transform_indices = @transform_0, window_bounds = array<i64: 1, 1, 34, 128>}, {pipeline_mode = #tpu.pipeline_mode<synchronous>, transform_indices = @transform_1, window_bounds = array<i64: 9, 128, 128>}, {pipeline_mode = #tpu.pipeline_mode<synchronous>, transform_indices = @transform_2, window_bounds = array<i64: 1, 128>}, {pipeline_mode = #tpu.pipeline_mode<synchronous>, transform_indices = @transform_3, window_bounds = array<i64: 1, 128>}, {transform_indices = @transform_4, window_bounds = array<i64: 1, 1, 32, 128>}]} {
    %c0_i32 = arith.constant 0 : i32
    %0 = arith.cmpi eq, %arg2, %c0_i32 : i32
    %1 = arith.extui %0 : i1 to i32
    %c0_i32_0 = arith.constant 0 : i32
    %2 = arith.cmpi ne, %1, %c0_i32_0 : i32
    scf.if %2 {
      %cst_21 = arith.constant 0.000000e+00 : f32
      %34 = vector.broadcast %cst_21 : f32 to vector<32x128xf32>
      %c0_22 = arith.constant 0 : index
      %c0_23 = arith.constant 0 : index
      %35 = vector.load %arg8[%c0_22, %c0_23] : memref<32x128xf32, #tpu.memory_space<vmem>>, vector<32x128xf32>
      tpu.vector_store %arg8[%c0_22, %c0_23], %34 {strides = array<i32>} : memref<32x128xf32, #tpu.memory_space<vmem>>, vector<32x128xf32>,
    } else {
    }
    %c0 = arith.constant 0 : index
    %c0_1 = arith.constant 0 : index
    %c0_2 = arith.constant 0 : index
    %c0_3 = arith.constant 0 : index
    %3 = vector.load %arg3[%c0, %c0_1, %c0_2, %c0_3] : memref<1x1x34x128xbf16, #tpu.memory_space<vmem>>, vector<1x1x34x128xbf16>
    %4 = vector.shape_cast %3 : vector<1x1x34x128xbf16> to vector<34x128xbf16>
    %c0_4 = arith.constant 0 : index
    %c0_5 = arith.constant 0 : index
    %5 = vector.load %arg8[%c0_4, %c0_5] : memref<32x128xf32, #tpu.memory_space<vmem>>, vector<32x128xf32>
    %6 = vector.extract_strided_slice %4 {offsets = [0, 0], sizes = [32, 128], strides = [1, 1]} : vector<34x128xbf16> to vector<32x128xbf16>
    %c3_i32 = arith.constant 3 : i32
    %7 = arith.muli %arg2, %c3_i32 : i32
    %c0_i32_6 = arith.constant 0 : i32
    %8 = arith.addi %7, %c0_i32_6 : i32
    %9 = arith.index_cast %8 : i32 to index
    %c0_7 = arith.constant 0 : index
    %c0_8 = arith.constant 0 : index
    %10 = vector.load %arg4[%9, %c0_7, %c0_8] : memref<9x128x128xbf16, #tpu.memory_space<vmem>>, vector<1x128x128xbf16>
    %11 = vector.shape_cast %10 : vector<1x128x128xbf16> to vector<128x128xbf16>
    %cst = arith.constant dense<0.000000e+00> : vector<32x128xf32>
    %12 = tpu.matmul %6, %11, %cst {dimension_numbers = #tpu.dot_dimension_numbers<[1], [0], [0], [1], [0, 0, 1, 1], [], []>} : vector<32x128xbf16>, vector<128x128xbf16>, vector<32x128xf32> -> vector<32x128xf32>
    %13 = arith.addf %5, %12 : vector<32x128xf32>
    %14 = vector.extract_strided_slice %4 {offsets = [1, 0], sizes = [32, 128], strides = [1, 1]} : vector<34x128xbf16> to vector<32x128xbf16>
    %c3_i32_9 = arith.constant 3 : i32
    %15 = arith.muli %arg2, %c3_i32_9 : i32
    %c1_i32 = arith.constant 1 : i32
    %16 = arith.addi %15, %c1_i32 : i32
    %17 = arith.index_cast %16 : i32 to index
    %c0_10 = arith.constant 0 : index
    %c0_11 = arith.constant 0 : index
    %18 = vector.load %arg4[%17, %c0_10, %c0_11] : memref<9x128x128xbf16, #tpu.memory_space<vmem>>, vector<1x128x128xbf16>
    %19 = vector.shape_cast %18 : vector<1x128x128xbf16> to vector<128x128xbf16>
    %cst_12 = arith.constant dense<0.000000e+00> : vector<32x128xf32>
    %20 = tpu.matmul %14, %19, %cst_12 {dimension_numbers = #tpu.dot_dimension_numbers<[1], [0], [0], [1], [0, 0, 1, 1], [], []>} : vector<32x128xbf16>, vector<128x128xbf16>, vector<32x128xf32> -> vector<32x128xf32>
    %21 = arith.addf %13, %20 : vector<32x128xf32>
    %22 = vector.extract_strided_slice %4 {offsets = [2, 0], sizes = [32, 128], strides = [1, 1]} : vector<34x128xbf16> to vector<32x128xbf16>
    %c3_i32_13 = arith.constant 3 : i32
    %23 = arith.muli %arg2, %c3_i32_13 : i32
    %c2_i32 = arith.constant 2 : i32
    %24 = arith.addi %23, %c2_i32 : i32
    %25 = arith.index_cast %24 : i32 to index
    %c0_14 = arith.constant 0 : index
    %c0_15 = arith.constant 0 : index
    %26 = vector.load %arg4[%25, %c0_14, %c0_15] : memref<9x128x128xbf16, #tpu.memory_space<vmem>>, vector<1x128x128xbf16>
    %27 = vector.shape_cast %26 : vector<1x128x128xbf16> to vector<128x128xbf16>
    %cst_16 = arith.constant dense<0.000000e+00> : vector<32x128xf32>
    %28 = tpu.matmul %22, %27, %cst_16 {dimension_numbers = #tpu.dot_dimension_numbers<[1], [0], [0], [1], [0, 0, 1, 1], [], []>} : vector<32x128xbf16>, vector<128x128xbf16>, vector<32x128xf32> -> vector<32x128xf32>
    %29 = arith.addf %21, %28 : vector<32x128xf32>
    %c0_17 = arith.constant 0 : index
    %c0_18 = arith.constant 0 : index
    %30 = vector.load %arg8[%c0_17, %c0_18] : memref<32x128xf32, #tpu.memory_space<vmem>>, vector<32x128xf32>
    tpu.vector_store %arg8[%c0_17, %c0_18], %29 {strides = array<i32>} : memref<32x128xf32, #tpu.memory_space<vmem>>, vector<32x128xf32>,
    %c2_i32_19 = arith.constant 2 : i32
    %31 = arith.cmpi eq, %arg2, %c2_i32_19 : i32
    %32 = arith.extui %31 : i1 to i32
    %c0_i32_20 = arith.constant 0 : i32
    %33 = arith.cmpi ne, %32, %c0_i32_20 : i32
    scf.if %33 {
      %c0_21 = arith.constant 0 : index
      %c0_22 = arith.constant 0 : index
      %34 = vector.load %arg8[%c0_21, %c0_22] : memref<32x128xf32, #tpu.memory_space<vmem>>, vector<32x128xf32>
      %c0_23 = arith.constant 0 : index
      %c0_24 = arith.constant 0 : index
      %35 = vector.load %arg5[%c0_23, %c0_24] : memref<1x128xf32, #tpu.memory_space<vmem>>, vector<1x128xf32>
      %36 = vector.broadcast %35 : vector<1x128xf32> to vector<32x128xf32>
      %37 = arith.mulf %34, %36 : vector<32x128xf32>
      %c0_25 = arith.constant 0 : index
      %c0_26 = arith.constant 0 : index
      %38 = vector.load %arg6[%c0_25, %c0_26] : memref<1x128xf32, #tpu.memory_space<vmem>>, vector<1x128xf32>
      %39 = vector.broadcast %38 : vector<1x128xf32> to vector<32x128xf32>
      %40 = arith.addf %37, %39 : vector<32x128xf32>
      %cst_27 = arith.constant 0.000000e+00 : f32
      %41 = vector.broadcast %cst_27 : f32 to vector<32x128xf32>
      %42 = arith.maximumf %40, %41 : vector<32x128xf32>
      %43 = arith.truncf %42 : vector<32x128xf32> to vector<32x128xbf16>
      %c0_28 = arith.constant 0 : index
      %c0_29 = arith.constant 0 : index
      %c0_30 = arith.constant 0 : index
      %c0_31 = arith.constant 0 : index
      %44 = vector.load %arg7[%c0_28, %c0_29, %c0_30, %c0_31] : memref<1x1x32x128xbf16, #tpu.memory_space<vmem>>, vector<1x1x32x128xbf16>
      %45 = vector.shape_cast %44 : vector<1x1x32x128xbf16> to vector<32x128xbf16>
      %46 = vector.shape_cast %43 : vector<32x128xbf16> to vector<1x1x32x128xbf16>
      tpu.vector_store %arg7[%c0_28, %c0_29, %c0_30, %c0_31], %46 {strides = array<i32>} : memref<1x1x32x128xbf16, #tpu.memory_space<vmem>>, vector<1x1x32x128xbf16>,
    } else {
    }
    return
  }
  func.func @transform_0(%arg0: i32, %arg1: i32, %arg2: i32) -> (i32, i32, i32, i32) {
    %c1_i32 = arith.constant 1 : i32
    %0 = arith.muli %arg1, %c1_i32 : i32
    %1 = arith.addi %0, %arg2 : i32
    %c0_i32 = arith.constant 0 : i32
    %c0_i32_0 = arith.constant 0 : i32
    %c0_i32_1 = arith.constant 0 : i32
    return %arg0, %1, %c0_i32, %c0_i32_0 : i32, i32, i32, i32
  }
  func.func @transform_1(%arg0: i32, %arg1: i32, %arg2: i32) -> (i32, i32, i32) {
    %c0_i32 = arith.constant 0 : i32
    %c0_i32_0 = arith.constant 0 : i32
    %c0_i32_1 = arith.constant 0 : i32
    %c0_i32_2 = arith.constant 0 : i32
    return %c0_i32, %c0_i32_0, %c0_i32_1 : i32, i32, i32
  }
  func.func @transform_2(%arg0: i32, %arg1: i32, %arg2: i32) -> (i32, i32) {
    %c0_i32 = arith.constant 0 : i32
    %c0_i32_0 = arith.constant 0 : i32
    %c0_i32_1 = arith.constant 0 : i32
    return %c0_i32, %c0_i32_0 : i32, i32
  }
  func.func @transform_3(%arg0: i32, %arg1: i32, %arg2: i32) -> (i32, i32) {
    %c0_i32 = arith.constant 0 : i32
    %c0_i32_0 = arith.constant 0 : i32
    %c0_i32_1 = arith.constant 0 : i32
    return %c0_i32, %c0_i32_0 : i32, i32
  }
  func.func @transform_4(%arg0: i32, %arg1: i32, %arg2: i32) -> (i32, i32, i32, i32) {
    %c0_i32 = arith.constant 0 : i32
    %c0_i32_0 = arith.constant 0 : i32
    %c0_i32_1 = arith.constant 0 : i32
    return %arg0, %arg1, %c0_i32, %c0_i32_0 : i32, i32, i32, i32
  }
}

module attributes {stable_mosaic.version = 11 : i64} {
  func.func @_maxpool_kernel(%arg0: i32, %arg1: i32, %arg2: memref<1x2x16x256xbf16, #tpu.memory_space<vmem>>, %arg3: memref<1x1x16x128xbf16, #tpu.memory_space<vmem>>) attributes {dimension_semantics = [#tpu.dimension_semantics<parallel>, #tpu.dimension_semantics<parallel>], iteration_bounds = array<i64: 2, 16>, scalar_prefetch = 0 : i64, scratch_operands = 0 : i64, tpu.core_type = #tpu.core_type<tc>, window_params = [{transform_indices = @transform_0, window_bounds = array<i64: 1, 2, 16, 256>}, {transform_indices = @transform_1, window_bounds = array<i64: 1, 1, 16, 128>}]} {
    %c0 = arith.constant 0 : index
    %c0_0 = arith.constant 0 : index
    %c0_1 = arith.constant 0 : index
    %c0_2 = arith.constant 0 : index
    %0 = vector.load %arg2[%c0, %c0_0, %c0_1, %c0_2] : memref<1x2x16x256xbf16, #tpu.memory_space<vmem>>, vector<1x1x16x256xbf16>
    %1 = vector.shape_cast %0 : vector<1x1x16x256xbf16> to vector<16x256xbf16>
    %c0_3 = arith.constant 0 : index
    %c1 = arith.constant 1 : index
    %c0_4 = arith.constant 0 : index
    %c0_5 = arith.constant 0 : index
    %2 = vector.load %arg2[%c0_3, %c1, %c0_4, %c0_5] : memref<1x2x16x256xbf16, #tpu.memory_space<vmem>>, vector<1x1x16x256xbf16>
    %3 = vector.shape_cast %2 : vector<1x1x16x256xbf16> to vector<16x256xbf16>
    %4 = arith.maximumf %1, %3 : vector<16x256xbf16>
    %5 = vector.extract_strided_slice %4 {offsets = [0, 0], sizes = [16, 128], strides = [1, 1]} : vector<16x256xbf16> to vector<16x128xbf16>
    %6 = vector.extract_strided_slice %4 {offsets = [0, 128], sizes = [16, 128], strides = [1, 1]} : vector<16x256xbf16> to vector<16x128xbf16>
    %7 = arith.maximumf %5, %6 : vector<16x128xbf16>
    %c0_6 = arith.constant 0 : index
    %c0_7 = arith.constant 0 : index
    %c0_8 = arith.constant 0 : index
    %c0_9 = arith.constant 0 : index
    %8 = vector.load %arg3[%c0_6, %c0_7, %c0_8, %c0_9] : memref<1x1x16x128xbf16, #tpu.memory_space<vmem>>, vector<1x1x16x128xbf16>
    %9 = vector.shape_cast %8 : vector<1x1x16x128xbf16> to vector<16x128xbf16>
    %10 = vector.shape_cast %7 : vector<16x128xbf16> to vector<1x1x16x128xbf16>
    tpu.vector_store %arg3[%c0_6, %c0_7, %c0_8, %c0_9], %10 {strides = array<i32>} : memref<1x1x16x128xbf16, #tpu.memory_space<vmem>>, vector<1x1x16x128xbf16>,
    return
  }
  func.func @transform_0(%arg0: i32, %arg1: i32) -> (i32, i32, i32, i32) {
    %c0_i32 = arith.constant 0 : i32
    %c0_i32_0 = arith.constant 0 : i32
    %c0_i32_1 = arith.constant 0 : i32
    return %arg0, %arg1, %c0_i32, %c0_i32_0 : i32, i32, i32, i32
  }
  func.func @transform_1(%arg0: i32, %arg1: i32) -> (i32, i32, i32, i32) {
    %c0_i32 = arith.constant 0 : i32
    %c0_i32_0 = arith.constant 0 : i32
    %c0_i32_1 = arith.constant 0 : i32
    return %arg0, %arg1, %c0_i32, %c0_i32_0 : i32, i32, i32, i32
  }
}

module attributes {stable_mosaic.version = 11 : i64} {
  func.func @_conv_bn_kernel(%arg0: i32, %arg1: i32, %arg2: i32, %arg3: memref<1x1x16x128xbf16, #tpu.memory_space<vmem>>, %arg4: memref<1x128x128xbf16, #tpu.memory_space<vmem>>, %arg5: memref<1x128xf32, #tpu.memory_space<vmem>>, %arg6: memref<1x128xf32, #tpu.memory_space<vmem>>, %arg7: memref<1x1x16x128xbf16, #tpu.memory_space<vmem>>, %arg8: memref<16x128xf32, #tpu.memory_space<vmem>>) attributes {dimension_semantics = [#tpu.dimension_semantics<parallel>, #tpu.dimension_semantics<parallel>, #tpu.dimension_semantics<arbitrary>], iteration_bounds = array<i64: 2, 16, 1>, scalar_prefetch = 0 : i64, scratch_operands = 1 : i64, tpu.core_type = #tpu.core_type<tc>, window_params = [{transform_indices = @transform_0, window_bounds = array<i64: 1, 1, 16, 128>}, {pipeline_mode = #tpu.pipeline_mode<synchronous>, transform_indices = @transform_1, window_bounds = array<i64: 1, 128, 128>}, {pipeline_mode = #tpu.pipeline_mode<synchronous>, transform_indices = @transform_2, window_bounds = array<i64: 1, 128>}, {pipeline_mode = #tpu.pipeline_mode<synchronous>, transform_indices = @transform_3, window_bounds = array<i64: 1, 128>}, {transform_indices = @transform_4, window_bounds = array<i64: 1, 1, 16, 128>}]} {
    %c0_i32 = arith.constant 0 : i32
    %0 = arith.cmpi eq, %arg2, %c0_i32 : i32
    %1 = arith.extui %0 : i1 to i32
    %c0_i32_0 = arith.constant 0 : i32
    %2 = arith.cmpi ne, %1, %c0_i32_0 : i32
    scf.if %2 {
      %cst_13 = arith.constant 0.000000e+00 : f32
      %17 = vector.broadcast %cst_13 : f32 to vector<16x128xf32>
      %c0_14 = arith.constant 0 : index
      %c0_15 = arith.constant 0 : index
      %18 = vector.load %arg8[%c0_14, %c0_15] : memref<16x128xf32, #tpu.memory_space<vmem>>, vector<16x128xf32>
      tpu.vector_store %arg8[%c0_14, %c0_15], %17 {strides = array<i32>} : memref<16x128xf32, #tpu.memory_space<vmem>>, vector<16x128xf32>,
    } else {
    }
    %c0 = arith.constant 0 : index
    %c0_1 = arith.constant 0 : index
    %c0_2 = arith.constant 0 : index
    %c0_3 = arith.constant 0 : index
    %3 = vector.load %arg3[%c0, %c0_1, %c0_2, %c0_3] : memref<1x1x16x128xbf16, #tpu.memory_space<vmem>>, vector<1x1x16x128xbf16>
    %4 = vector.shape_cast %3 : vector<1x1x16x128xbf16> to vector<16x128xbf16>
    %c0_4 = arith.constant 0 : index
    %c0_5 = arith.constant 0 : index
    %5 = vector.load %arg8[%c0_4, %c0_5] : memref<16x128xf32, #tpu.memory_space<vmem>>, vector<16x128xf32>
    %c1_i32 = arith.constant 1 : i32
    %6 = arith.muli %arg2, %c1_i32 : i32
    %c0_i32_6 = arith.constant 0 : i32
    %7 = arith.addi %6, %c0_i32_6 : i32
    %8 = arith.index_cast %7 : i32 to index
    %c0_7 = arith.constant 0 : index
    %c0_8 = arith.constant 0 : index
    %9 = vector.load %arg4[%8, %c0_7, %c0_8] : memref<1x128x128xbf16, #tpu.memory_space<vmem>>, vector<1x128x128xbf16>
    %10 = vector.shape_cast %9 : vector<1x128x128xbf16> to vector<128x128xbf16>
    %cst = arith.constant dense<0.000000e+00> : vector<16x128xf32>
    %11 = tpu.matmul %4, %10, %cst {dimension_numbers = #tpu.dot_dimension_numbers<[1], [0], [0], [1], [0, 0, 1, 1], [], []>} : vector<16x128xbf16>, vector<128x128xbf16>, vector<16x128xf32> -> vector<16x128xf32>
    %12 = arith.addf %5, %11 : vector<16x128xf32>
    %c0_9 = arith.constant 0 : index
    %c0_10 = arith.constant 0 : index
    %13 = vector.load %arg8[%c0_9, %c0_10] : memref<16x128xf32, #tpu.memory_space<vmem>>, vector<16x128xf32>
    tpu.vector_store %arg8[%c0_9, %c0_10], %12 {strides = array<i32>} : memref<16x128xf32, #tpu.memory_space<vmem>>, vector<16x128xf32>,
    %c0_i32_11 = arith.constant 0 : i32
    %14 = arith.cmpi eq, %arg2, %c0_i32_11 : i32
    %15 = arith.extui %14 : i1 to i32
    %c0_i32_12 = arith.constant 0 : i32
    %16 = arith.cmpi ne, %15, %c0_i32_12 : i32
    scf.if %16 {
      %c0_13 = arith.constant 0 : index
      %c0_14 = arith.constant 0 : index
      %17 = vector.load %arg8[%c0_13, %c0_14] : memref<16x128xf32, #tpu.memory_space<vmem>>, vector<16x128xf32>
      %c0_15 = arith.constant 0 : index
      %c0_16 = arith.constant 0 : index
      %18 = vector.load %arg5[%c0_15, %c0_16] : memref<1x128xf32, #tpu.memory_space<vmem>>, vector<1x128xf32>
      %19 = vector.broadcast %18 : vector<1x128xf32> to vector<16x128xf32>
      %20 = arith.mulf %17, %19 : vector<16x128xf32>
      %c0_17 = arith.constant 0 : index
      %c0_18 = arith.constant 0 : index
      %21 = vector.load %arg6[%c0_17, %c0_18] : memref<1x128xf32, #tpu.memory_space<vmem>>, vector<1x128xf32>
      %22 = vector.broadcast %21 : vector<1x128xf32> to vector<16x128xf32>
      %23 = arith.addf %20, %22 : vector<16x128xf32>
      %24 = arith.truncf %23 : vector<16x128xf32> to vector<16x128xbf16>
      %c0_19 = arith.constant 0 : index
      %c0_20 = arith.constant 0 : index
      %c0_21 = arith.constant 0 : index
      %c0_22 = arith.constant 0 : index
      %25 = vector.load %arg7[%c0_19, %c0_20, %c0_21, %c0_22] : memref<1x1x16x128xbf16, #tpu.memory_space<vmem>>, vector<1x1x16x128xbf16>
      %26 = vector.shape_cast %25 : vector<1x1x16x128xbf16> to vector<16x128xbf16>
      %27 = vector.shape_cast %24 : vector<16x128xbf16> to vector<1x1x16x128xbf16>
      tpu.vector_store %arg7[%c0_19, %c0_20, %c0_21, %c0_22], %27 {strides = array<i32>} : memref<1x1x16x128xbf16, #tpu.memory_space<vmem>>, vector<1x1x16x128xbf16>,
    } else {
    }
    return
  }
  func.func @transform_0(%arg0: i32, %arg1: i32, %arg2: i32) -> (i32, i32, i32, i32) {
    %c1_i32 = arith.constant 1 : i32
    %0 = arith.muli %arg1, %c1_i32 : i32
    %1 = arith.addi %0, %arg2 : i32
    %c0_i32 = arith.constant 0 : i32
    %c0_i32_0 = arith.constant 0 : i32
    %c0_i32_1 = arith.constant 0 : i32
    return %arg0, %1, %c0_i32, %c0_i32_0 : i32, i32, i32, i32
  }
  func.func @transform_1(%arg0: i32, %arg1: i32, %arg2: i32) -> (i32, i32, i32) {
    %c0_i32 = arith.constant 0 : i32
    %c0_i32_0 = arith.constant 0 : i32
    %c0_i32_1 = arith.constant 0 : i32
    %c0_i32_2 = arith.constant 0 : i32
    return %c0_i32, %c0_i32_0, %c0_i32_1 : i32, i32, i32
  }
  func.func @transform_2(%arg0: i32, %arg1: i32, %arg2: i32) -> (i32, i32) {
    %c0_i32 = arith.constant 0 : i32
    %c0_i32_0 = arith.constant 0 : i32
    %c0_i32_1 = arith.constant 0 : i32
    return %c0_i32, %c0_i32_0 : i32, i32
  }
  func.func @transform_3(%arg0: i32, %arg1: i32, %arg2: i32) -> (i32, i32) {
    %c0_i32 = arith.constant 0 : i32
    %c0_i32_0 = arith.constant 0 : i32
    %c0_i32_1 = arith.constant 0 : i32
    return %c0_i32, %c0_i32_0 : i32, i32
  }
  func.func @transform_4(%arg0: i32, %arg1: i32, %arg2: i32) -> (i32, i32, i32, i32) {
    %c0_i32 = arith.constant 0 : i32
    %c0_i32_0 = arith.constant 0 : i32
    %c0_i32_1 = arith.constant 0 : i32
    return %arg0, %arg1, %c0_i32, %c0_i32_0 : i32, i32, i32, i32
  }
}

module attributes {stable_mosaic.version = 11 : i64} {
  func.func @_conv_bn_kernel(%arg0: i32, %arg1: i32, %arg2: i32, %arg3: memref<1x1x18x128xbf16, #tpu.memory_space<vmem>>, %arg4: memref<9x128x128xbf16, #tpu.memory_space<vmem>>, %arg5: memref<1x128xf32, #tpu.memory_space<vmem>>, %arg6: memref<1x128xf32, #tpu.memory_space<vmem>>, %arg7: memref<1x1x16x128xbf16, #tpu.memory_space<vmem>>, %arg8: memref<16x128xf32, #tpu.memory_space<vmem>>) attributes {dimension_semantics = [#tpu.dimension_semantics<parallel>, #tpu.dimension_semantics<parallel>, #tpu.dimension_semantics<arbitrary>], iteration_bounds = array<i64: 2, 16, 3>, scalar_prefetch = 0 : i64, scratch_operands = 1 : i64, tpu.core_type = #tpu.core_type<tc>, window_params = [{transform_indices = @transform_0, window_bounds = array<i64: 1, 1, 18, 128>}, {pipeline_mode = #tpu.pipeline_mode<synchronous>, transform_indices = @transform_1, window_bounds = array<i64: 9, 128, 128>}, {pipeline_mode = #tpu.pipeline_mode<synchronous>, transform_indices = @transform_2, window_bounds = array<i64: 1, 128>}, {pipeline_mode = #tpu.pipeline_mode<synchronous>, transform_indices = @transform_3, window_bounds = array<i64: 1, 128>}, {transform_indices = @transform_4, window_bounds = array<i64: 1, 1, 16, 128>}]} {
    %c0_i32 = arith.constant 0 : i32
    %0 = arith.cmpi eq, %arg2, %c0_i32 : i32
    %1 = arith.extui %0 : i1 to i32
    %c0_i32_0 = arith.constant 0 : i32
    %2 = arith.cmpi ne, %1, %c0_i32_0 : i32
    scf.if %2 {
      %cst_21 = arith.constant 0.000000e+00 : f32
      %34 = vector.broadcast %cst_21 : f32 to vector<16x128xf32>
      %c0_22 = arith.constant 0 : index
      %c0_23 = arith.constant 0 : index
      %35 = vector.load %arg8[%c0_22, %c0_23] : memref<16x128xf32, #tpu.memory_space<vmem>>, vector<16x128xf32>
      tpu.vector_store %arg8[%c0_22, %c0_23], %34 {strides = array<i32>} : memref<16x128xf32, #tpu.memory_space<vmem>>, vector<16x128xf32>,
    } else {
    }
    %c0 = arith.constant 0 : index
    %c0_1 = arith.constant 0 : index
    %c0_2 = arith.constant 0 : index
    %c0_3 = arith.constant 0 : index
    %3 = vector.load %arg3[%c0, %c0_1, %c0_2, %c0_3] : memref<1x1x18x128xbf16, #tpu.memory_space<vmem>>, vector<1x1x18x128xbf16>
    %4 = vector.shape_cast %3 : vector<1x1x18x128xbf16> to vector<18x128xbf16>
    %c0_4 = arith.constant 0 : index
    %c0_5 = arith.constant 0 : index
    %5 = vector.load %arg8[%c0_4, %c0_5] : memref<16x128xf32, #tpu.memory_space<vmem>>, vector<16x128xf32>
    %6 = vector.extract_strided_slice %4 {offsets = [0, 0], sizes = [16, 128], strides = [1, 1]} : vector<18x128xbf16> to vector<16x128xbf16>
    %c3_i32 = arith.constant 3 : i32
    %7 = arith.muli %arg2, %c3_i32 : i32
    %c0_i32_6 = arith.constant 0 : i32
    %8 = arith.addi %7, %c0_i32_6 : i32
    %9 = arith.index_cast %8 : i32 to index
    %c0_7 = arith.constant 0 : index
    %c0_8 = arith.constant 0 : index
    %10 = vector.load %arg4[%9, %c0_7, %c0_8] : memref<9x128x128xbf16, #tpu.memory_space<vmem>>, vector<1x128x128xbf16>
    %11 = vector.shape_cast %10 : vector<1x128x128xbf16> to vector<128x128xbf16>
    %cst = arith.constant dense<0.000000e+00> : vector<16x128xf32>
    %12 = tpu.matmul %6, %11, %cst {dimension_numbers = #tpu.dot_dimension_numbers<[1], [0], [0], [1], [0, 0, 1, 1], [], []>} : vector<16x128xbf16>, vector<128x128xbf16>, vector<16x128xf32> -> vector<16x128xf32>
    %13 = arith.addf %5, %12 : vector<16x128xf32>
    %14 = vector.extract_strided_slice %4 {offsets = [1, 0], sizes = [16, 128], strides = [1, 1]} : vector<18x128xbf16> to vector<16x128xbf16>
    %c3_i32_9 = arith.constant 3 : i32
    %15 = arith.muli %arg2, %c3_i32_9 : i32
    %c1_i32 = arith.constant 1 : i32
    %16 = arith.addi %15, %c1_i32 : i32
    %17 = arith.index_cast %16 : i32 to index
    %c0_10 = arith.constant 0 : index
    %c0_11 = arith.constant 0 : index
    %18 = vector.load %arg4[%17, %c0_10, %c0_11] : memref<9x128x128xbf16, #tpu.memory_space<vmem>>, vector<1x128x128xbf16>
    %19 = vector.shape_cast %18 : vector<1x128x128xbf16> to vector<128x128xbf16>
    %cst_12 = arith.constant dense<0.000000e+00> : vector<16x128xf32>
    %20 = tpu.matmul %14, %19, %cst_12 {dimension_numbers = #tpu.dot_dimension_numbers<[1], [0], [0], [1], [0, 0, 1, 1], [], []>} : vector<16x128xbf16>, vector<128x128xbf16>, vector<16x128xf32> -> vector<16x128xf32>
    %21 = arith.addf %13, %20 : vector<16x128xf32>
    %22 = vector.extract_strided_slice %4 {offsets = [2, 0], sizes = [16, 128], strides = [1, 1]} : vector<18x128xbf16> to vector<16x128xbf16>
    %c3_i32_13 = arith.constant 3 : i32
    %23 = arith.muli %arg2, %c3_i32_13 : i32
    %c2_i32 = arith.constant 2 : i32
    %24 = arith.addi %23, %c2_i32 : i32
    %25 = arith.index_cast %24 : i32 to index
    %c0_14 = arith.constant 0 : index
    %c0_15 = arith.constant 0 : index
    %26 = vector.load %arg4[%25, %c0_14, %c0_15] : memref<9x128x128xbf16, #tpu.memory_space<vmem>>, vector<1x128x128xbf16>
    %27 = vector.shape_cast %26 : vector<1x128x128xbf16> to vector<128x128xbf16>
    %cst_16 = arith.constant dense<0.000000e+00> : vector<16x128xf32>
    %28 = tpu.matmul %22, %27, %cst_16 {dimension_numbers = #tpu.dot_dimension_numbers<[1], [0], [0], [1], [0, 0, 1, 1], [], []>} : vector<16x128xbf16>, vector<128x128xbf16>, vector<16x128xf32> -> vector<16x128xf32>
    %29 = arith.addf %21, %28 : vector<16x128xf32>
    %c0_17 = arith.constant 0 : index
    %c0_18 = arith.constant 0 : index
    %30 = vector.load %arg8[%c0_17, %c0_18] : memref<16x128xf32, #tpu.memory_space<vmem>>, vector<16x128xf32>
    tpu.vector_store %arg8[%c0_17, %c0_18], %29 {strides = array<i32>} : memref<16x128xf32, #tpu.memory_space<vmem>>, vector<16x128xf32>,
    %c2_i32_19 = arith.constant 2 : i32
    %31 = arith.cmpi eq, %arg2, %c2_i32_19 : i32
    %32 = arith.extui %31 : i1 to i32
    %c0_i32_20 = arith.constant 0 : i32
    %33 = arith.cmpi ne, %32, %c0_i32_20 : i32
    scf.if %33 {
      %c0_21 = arith.constant 0 : index
      %c0_22 = arith.constant 0 : index
      %34 = vector.load %arg8[%c0_21, %c0_22] : memref<16x128xf32, #tpu.memory_space<vmem>>, vector<16x128xf32>
      %c0_23 = arith.constant 0 : index
      %c0_24 = arith.constant 0 : index
      %35 = vector.load %arg5[%c0_23, %c0_24] : memref<1x128xf32, #tpu.memory_space<vmem>>, vector<1x128xf32>
      %36 = vector.broadcast %35 : vector<1x128xf32> to vector<16x128xf32>
      %37 = arith.mulf %34, %36 : vector<16x128xf32>
      %c0_25 = arith.constant 0 : index
      %c0_26 = arith.constant 0 : index
      %38 = vector.load %arg6[%c0_25, %c0_26] : memref<1x128xf32, #tpu.memory_space<vmem>>, vector<1x128xf32>
      %39 = vector.broadcast %38 : vector<1x128xf32> to vector<16x128xf32>
      %40 = arith.addf %37, %39 : vector<16x128xf32>
      %cst_27 = arith.constant 0.000000e+00 : f32
      %41 = vector.broadcast %cst_27 : f32 to vector<16x128xf32>
      %42 = arith.maximumf %40, %41 : vector<16x128xf32>
      %43 = arith.truncf %42 : vector<16x128xf32> to vector<16x128xbf16>
      %c0_28 = arith.constant 0 : index
      %c0_29 = arith.constant 0 : index
      %c0_30 = arith.constant 0 : index
      %c0_31 = arith.constant 0 : index
      %44 = vector.load %arg7[%c0_28, %c0_29, %c0_30, %c0_31] : memref<1x1x16x128xbf16, #tpu.memory_space<vmem>>, vector<1x1x16x128xbf16>
      %45 = vector.shape_cast %44 : vector<1x1x16x128xbf16> to vector<16x128xbf16>
      %46 = vector.shape_cast %43 : vector<16x128xbf16> to vector<1x1x16x128xbf16>
      tpu.vector_store %arg7[%c0_28, %c0_29, %c0_30, %c0_31], %46 {strides = array<i32>} : memref<1x1x16x128xbf16, #tpu.memory_space<vmem>>, vector<1x1x16x128xbf16>,
    } else {
    }
    return
  }
  func.func @transform_0(%arg0: i32, %arg1: i32, %arg2: i32) -> (i32, i32, i32, i32) {
    %c1_i32 = arith.constant 1 : i32
    %0 = arith.muli %arg1, %c1_i32 : i32
    %1 = arith.addi %0, %arg2 : i32
    %c0_i32 = arith.constant 0 : i32
    %c0_i32_0 = arith.constant 0 : i32
    %c0_i32_1 = arith.constant 0 : i32
    return %arg0, %1, %c0_i32, %c0_i32_0 : i32, i32, i32, i32
  }
  func.func @transform_1(%arg0: i32, %arg1: i32, %arg2: i32) -> (i32, i32, i32) {
    %c0_i32 = arith.constant 0 : i32
    %c0_i32_0 = arith.constant 0 : i32
    %c0_i32_1 = arith.constant 0 : i32
    %c0_i32_2 = arith.constant 0 : i32
    return %c0_i32, %c0_i32_0, %c0_i32_1 : i32, i32, i32
  }
  func.func @transform_2(%arg0: i32, %arg1: i32, %arg2: i32) -> (i32, i32) {
    %c0_i32 = arith.constant 0 : i32
    %c0_i32_0 = arith.constant 0 : i32
    %c0_i32_1 = arith.constant 0 : i32
    return %c0_i32, %c0_i32_0 : i32, i32
  }
  func.func @transform_3(%arg0: i32, %arg1: i32, %arg2: i32) -> (i32, i32) {
    %c0_i32 = arith.constant 0 : i32
    %c0_i32_0 = arith.constant 0 : i32
    %c0_i32_1 = arith.constant 0 : i32
    return %c0_i32, %c0_i32_0 : i32, i32
  }
  func.func @transform_4(%arg0: i32, %arg1: i32, %arg2: i32) -> (i32, i32, i32, i32) {
    %c0_i32 = arith.constant 0 : i32
    %c0_i32_0 = arith.constant 0 : i32
    %c0_i32_1 = arith.constant 0 : i32
    return %arg0, %arg1, %c0_i32, %c0_i32_0 : i32, i32, i32, i32
  }
}

module attributes {stable_mosaic.version = 11 : i64} {
  func.func @_conv_bn_kernel(%arg0: i32, %arg1: i32, %arg2: i32, %arg3: memref<1x1x18x128xbf16, #tpu.memory_space<vmem>>, %arg4: memref<9x128x128xbf16, #tpu.memory_space<vmem>>, %arg5: memref<1x128xf32, #tpu.memory_space<vmem>>, %arg6: memref<1x128xf32, #tpu.memory_space<vmem>>, %arg7: memref<1x1x16x128xbf16, #tpu.memory_space<vmem>>, %arg8: memref<1x1x16x128xbf16, #tpu.memory_space<vmem>>, %arg9: memref<16x128xf32, #tpu.memory_space<vmem>>) attributes {dimension_semantics = [#tpu.dimension_semantics<parallel>, #tpu.dimension_semantics<parallel>, #tpu.dimension_semantics<arbitrary>], iteration_bounds = array<i64: 2, 16, 3>, scalar_prefetch = 0 : i64, scratch_operands = 1 : i64, tpu.core_type = #tpu.core_type<tc>, window_params = [{transform_indices = @transform_0, window_bounds = array<i64: 1, 1, 18, 128>}, {pipeline_mode = #tpu.pipeline_mode<synchronous>, transform_indices = @transform_1, window_bounds = array<i64: 9, 128, 128>}, {pipeline_mode = #tpu.pipeline_mode<synchronous>, transform_indices = @transform_2, window_bounds = array<i64: 1, 128>}, {pipeline_mode = #tpu.pipeline_mode<synchronous>, transform_indices = @transform_3, window_bounds = array<i64: 1, 128>}, {transform_indices = @transform_4, window_bounds = array<i64: 1, 1, 16, 128>}, {transform_indices = @transform_5, window_bounds = array<i64: 1, 1, 16, 128>}]} {
    %c0_i32 = arith.constant 0 : i32
    %0 = arith.cmpi eq, %arg2, %c0_i32 : i32
    %1 = arith.extui %0 : i1 to i32
    %c0_i32_0 = arith.constant 0 : i32
    %2 = arith.cmpi ne, %1, %c0_i32_0 : i32
    scf.if %2 {
      %cst_21 = arith.constant 0.000000e+00 : f32
      %34 = vector.broadcast %cst_21 : f32 to vector<16x128xf32>
      %c0_22 = arith.constant 0 : index
      %c0_23 = arith.constant 0 : index
      %35 = vector.load %arg9[%c0_22, %c0_23] : memref<16x128xf32, #tpu.memory_space<vmem>>, vector<16x128xf32>
      tpu.vector_store %arg9[%c0_22, %c0_23], %34 {strides = array<i32>} : memref<16x128xf32, #tpu.memory_space<vmem>>, vector<16x128xf32>,
    } else {
    }
    %c0 = arith.constant 0 : index
    %c0_1 = arith.constant 0 : index
    %c0_2 = arith.constant 0 : index
    %c0_3 = arith.constant 0 : index
    %3 = vector.load %arg3[%c0, %c0_1, %c0_2, %c0_3] : memref<1x1x18x128xbf16, #tpu.memory_space<vmem>>, vector<1x1x18x128xbf16>
    %4 = vector.shape_cast %3 : vector<1x1x18x128xbf16> to vector<18x128xbf16>
    %c0_4 = arith.constant 0 : index
    %c0_5 = arith.constant 0 : index
    %5 = vector.load %arg9[%c0_4, %c0_5] : memref<16x128xf32, #tpu.memory_space<vmem>>, vector<16x128xf32>
    %6 = vector.extract_strided_slice %4 {offsets = [0, 0], sizes = [16, 128], strides = [1, 1]} : vector<18x128xbf16> to vector<16x128xbf16>
    %c3_i32 = arith.constant 3 : i32
    %7 = arith.muli %arg2, %c3_i32 : i32
    %c0_i32_6 = arith.constant 0 : i32
    %8 = arith.addi %7, %c0_i32_6 : i32
    %9 = arith.index_cast %8 : i32 to index
    %c0_7 = arith.constant 0 : index
    %c0_8 = arith.constant 0 : index
    %10 = vector.load %arg4[%9, %c0_7, %c0_8] : memref<9x128x128xbf16, #tpu.memory_space<vmem>>, vector<1x128x128xbf16>
    %11 = vector.shape_cast %10 : vector<1x128x128xbf16> to vector<128x128xbf16>
    %cst = arith.constant dense<0.000000e+00> : vector<16x128xf32>
    %12 = tpu.matmul %6, %11, %cst {dimension_numbers = #tpu.dot_dimension_numbers<[1], [0], [0], [1], [0, 0, 1, 1], [], []>} : vector<16x128xbf16>, vector<128x128xbf16>, vector<16x128xf32> -> vector<16x128xf32>
    %13 = arith.addf %5, %12 : vector<16x128xf32>
    %14 = vector.extract_strided_slice %4 {offsets = [1, 0], sizes = [16, 128], strides = [1, 1]} : vector<18x128xbf16> to vector<16x128xbf16>
    %c3_i32_9 = arith.constant 3 : i32
    %15 = arith.muli %arg2, %c3_i32_9 : i32
    %c1_i32 = arith.constant 1 : i32
    %16 = arith.addi %15, %c1_i32 : i32
    %17 = arith.index_cast %16 : i32 to index
    %c0_10 = arith.constant 0 : index
    %c0_11 = arith.constant 0 : index
    %18 = vector.load %arg4[%17, %c0_10, %c0_11] : memref<9x128x128xbf16, #tpu.memory_space<vmem>>, vector<1x128x128xbf16>
    %19 = vector.shape_cast %18 : vector<1x128x128xbf16> to vector<128x128xbf16>
    %cst_12 = arith.constant dense<0.000000e+00> : vector<16x128xf32>
    %20 = tpu.matmul %14, %19, %cst_12 {dimension_numbers = #tpu.dot_dimension_numbers<[1], [0], [0], [1], [0, 0, 1, 1], [], []>} : vector<16x128xbf16>, vector<128x128xbf16>, vector<16x128xf32> -> vector<16x128xf32>
    %21 = arith.addf %13, %20 : vector<16x128xf32>
    %22 = vector.extract_strided_slice %4 {offsets = [2, 0], sizes = [16, 128], strides = [1, 1]} : vector<18x128xbf16> to vector<16x128xbf16>
    %c3_i32_13 = arith.constant 3 : i32
    %23 = arith.muli %arg2, %c3_i32_13 : i32
    %c2_i32 = arith.constant 2 : i32
    %24 = arith.addi %23, %c2_i32 : i32
    %25 = arith.index_cast %24 : i32 to index
    %c0_14 = arith.constant 0 : index
    %c0_15 = arith.constant 0 : index
    %26 = vector.load %arg4[%25, %c0_14, %c0_15] : memref<9x128x128xbf16, #tpu.memory_space<vmem>>, vector<1x128x128xbf16>
    %27 = vector.shape_cast %26 : vector<1x128x128xbf16> to vector<128x128xbf16>
    %cst_16 = arith.constant dense<0.000000e+00> : vector<16x128xf32>
    %28 = tpu.matmul %22, %27, %cst_16 {dimension_numbers = #tpu.dot_dimension_numbers<[1], [0], [0], [1], [0, 0, 1, 1], [], []>} : vector<16x128xbf16>, vector<128x128xbf16>, vector<16x128xf32> -> vector<16x128xf32>
    %29 = arith.addf %21, %28 : vector<16x128xf32>
    %c0_17 = arith.constant 0 : index
    %c0_18 = arith.constant 0 : index
    %30 = vector.load %arg9[%c0_17, %c0_18] : memref<16x128xf32, #tpu.memory_space<vmem>>, vector<16x128xf32>
    tpu.vector_store %arg9[%c0_17, %c0_18], %29 {strides = array<i32>} : memref<16x128xf32, #tpu.memory_space<vmem>>, vector<16x128xf32>,
    %c2_i32_19 = arith.constant 2 : i32
    %31 = arith.cmpi eq, %arg2, %c2_i32_19 : i32
    %32 = arith.extui %31 : i1 to i32
    %c0_i32_20 = arith.constant 0 : i32
    %33 = arith.cmpi ne, %32, %c0_i32_20 : i32
    scf.if %33 {
      %c0_21 = arith.constant 0 : index
      %c0_22 = arith.constant 0 : index
      %34 = vector.load %arg9[%c0_21, %c0_22] : memref<16x128xf32, #tpu.memory_space<vmem>>, vector<16x128xf32>
      %c0_23 = arith.constant 0 : index
      %c0_24 = arith.constant 0 : index
      %35 = vector.load %arg5[%c0_23, %c0_24] : memref<1x128xf32, #tpu.memory_space<vmem>>, vector<1x128xf32>
      %36 = vector.broadcast %35 : vector<1x128xf32> to vector<16x128xf32>
      %37 = arith.mulf %34, %36 : vector<16x128xf32>
      %c0_25 = arith.constant 0 : index
      %c0_26 = arith.constant 0 : index
      %38 = vector.load %arg6[%c0_25, %c0_26] : memref<1x128xf32, #tpu.memory_space<vmem>>, vector<1x128xf32>
      %39 = vector.broadcast %38 : vector<1x128xf32> to vector<16x128xf32>
      %40 = arith.addf %37, %39 : vector<16x128xf32>
      %c0_27 = arith.constant 0 : index
      %c0_28 = arith.constant 0 : index
      %c0_29 = arith.constant 0 : index
      %c0_30 = arith.constant 0 : index
      %41 = vector.load %arg7[%c0_27, %c0_28, %c0_29, %c0_30] : memref<1x1x16x128xbf16, #tpu.memory_space<vmem>>, vector<1x1x16x128xbf16>
      %42 = vector.shape_cast %41 : vector<1x1x16x128xbf16> to vector<16x128xbf16>
      %43 = arith.extf %42 : vector<16x128xbf16> to vector<16x128xf32>
      %44 = arith.addf %40, %43 : vector<16x128xf32>
      %cst_31 = arith.constant 0.000000e+00 : f32
      %45 = vector.broadcast %cst_31 : f32 to vector<16x128xf32>
      %46 = arith.maximumf %44, %45 : vector<16x128xf32>
      %47 = arith.truncf %46 : vector<16x128xf32> to vector<16x128xbf16>
      %c0_32 = arith.constant 0 : index
      %c0_33 = arith.constant 0 : index
      %c0_34 = arith.constant 0 : index
      %c0_35 = arith.constant 0 : index
      %48 = vector.load %arg8[%c0_32, %c0_33, %c0_34, %c0_35] : memref<1x1x16x128xbf16, #tpu.memory_space<vmem>>, vector<1x1x16x128xbf16>
      %49 = vector.shape_cast %48 : vector<1x1x16x128xbf16> to vector<16x128xbf16>
      %50 = vector.shape_cast %47 : vector<16x128xbf16> to vector<1x1x16x128xbf16>
      tpu.vector_store %arg8[%c0_32, %c0_33, %c0_34, %c0_35], %50 {strides = array<i32>} : memref<1x1x16x128xbf16, #tpu.memory_space<vmem>>, vector<1x1x16x128xbf16>,
    } else {
    }
    return
  }
  func.func @transform_0(%arg0: i32, %arg1: i32, %arg2: i32) -> (i32, i32, i32, i32) {
    %c1_i32 = arith.constant 1 : i32
    %0 = arith.muli %arg1, %c1_i32 : i32
    %1 = arith.addi %0, %arg2 : i32
    %c0_i32 = arith.constant 0 : i32
    %c0_i32_0 = arith.constant 0 : i32
    %c0_i32_1 = arith.constant 0 : i32
    return %arg0, %1, %c0_i32, %c0_i32_0 : i32, i32, i32, i32
  }
  func.func @transform_1(%arg0: i32, %arg1: i32, %arg2: i32) -> (i32, i32, i32) {
    %c0_i32 = arith.constant 0 : i32
    %c0_i32_0 = arith.constant 0 : i32
    %c0_i32_1 = arith.constant 0 : i32
    %c0_i32_2 = arith.constant 0 : i32
    return %c0_i32, %c0_i32_0, %c0_i32_1 : i32, i32, i32
  }
  func.func @transform_2(%arg0: i32, %arg1: i32, %arg2: i32) -> (i32, i32) {
    %c0_i32 = arith.constant 0 : i32
    %c0_i32_0 = arith.constant 0 : i32
    %c0_i32_1 = arith.constant 0 : i32
    return %c0_i32, %c0_i32_0 : i32, i32
  }
  func.func @transform_3(%arg0: i32, %arg1: i32, %arg2: i32) -> (i32, i32) {
    %c0_i32 = arith.constant 0 : i32
    %c0_i32_0 = arith.constant 0 : i32
    %c0_i32_1 = arith.constant 0 : i32
    return %c0_i32, %c0_i32_0 : i32, i32
  }
  func.func @transform_4(%arg0: i32, %arg1: i32, %arg2: i32) -> (i32, i32, i32, i32) {
    %c0_i32 = arith.constant 0 : i32
    %c0_i32_0 = arith.constant 0 : i32
    %c0_i32_1 = arith.constant 0 : i32
    return %arg0, %arg1, %c0_i32, %c0_i32_0 : i32, i32, i32, i32
  }
  func.func @transform_5(%arg0: i32, %arg1: i32, %arg2: i32) -> (i32, i32, i32, i32) {
    %c0_i32 = arith.constant 0 : i32
    %c0_i32_0 = arith.constant 0 : i32
    %c0_i32_1 = arith.constant 0 : i32
    return %arg0, %arg1, %c0_i32, %c0_i32_0 : i32, i32, i32, i32
  }
}

module attributes {stable_mosaic.version = 11 : i64} {
  func.func @_maxpool_kernel(%arg0: i32, %arg1: i32, %arg2: memref<1x2x8x256xbf16, #tpu.memory_space<vmem>>, %arg3: memref<1x1x8x128xbf16, #tpu.memory_space<vmem>>) attributes {dimension_semantics = [#tpu.dimension_semantics<parallel>, #tpu.dimension_semantics<parallel>], iteration_bounds = array<i64: 2, 8>, scalar_prefetch = 0 : i64, scratch_operands = 0 : i64, tpu.core_type = #tpu.core_type<tc>, window_params = [{transform_indices = @transform_0, window_bounds = array<i64: 1, 2, 8, 256>}, {transform_indices = @transform_1, window_bounds = array<i64: 1, 1, 8, 128>}]} {
    %c0 = arith.constant 0 : index
    %c0_0 = arith.constant 0 : index
    %c0_1 = arith.constant 0 : index
    %c0_2 = arith.constant 0 : index
    %0 = vector.load %arg2[%c0, %c0_0, %c0_1, %c0_2] : memref<1x2x8x256xbf16, #tpu.memory_space<vmem>>, vector<1x1x8x256xbf16>
    %1 = vector.shape_cast %0 : vector<1x1x8x256xbf16> to vector<8x256xbf16>
    %c0_3 = arith.constant 0 : index
    %c1 = arith.constant 1 : index
    %c0_4 = arith.constant 0 : index
    %c0_5 = arith.constant 0 : index
    %2 = vector.load %arg2[%c0_3, %c1, %c0_4, %c0_5] : memref<1x2x8x256xbf16, #tpu.memory_space<vmem>>, vector<1x1x8x256xbf16>
    %3 = vector.shape_cast %2 : vector<1x1x8x256xbf16> to vector<8x256xbf16>
    %4 = arith.maximumf %1, %3 : vector<8x256xbf16>
    %5 = vector.extract_strided_slice %4 {offsets = [0, 0], sizes = [8, 128], strides = [1, 1]} : vector<8x256xbf16> to vector<8x128xbf16>
    %6 = vector.extract_strided_slice %4 {offsets = [0, 128], sizes = [8, 128], strides = [1, 1]} : vector<8x256xbf16> to vector<8x128xbf16>
    %7 = arith.maximumf %5, %6 : vector<8x128xbf16>
    %c0_6 = arith.constant 0 : index
    %c0_7 = arith.constant 0 : index
    %c0_8 = arith.constant 0 : index
    %c0_9 = arith.constant 0 : index
    %8 = vector.load %arg3[%c0_6, %c0_7, %c0_8, %c0_9] : memref<1x1x8x128xbf16, #tpu.memory_space<vmem>>, vector<1x1x8x128xbf16>
    %9 = vector.shape_cast %8 : vector<1x1x8x128xbf16> to vector<8x128xbf16>
    %10 = vector.shape_cast %7 : vector<8x128xbf16> to vector<1x1x8x128xbf16>
    tpu.vector_store %arg3[%c0_6, %c0_7, %c0_8, %c0_9], %10 {strides = array<i32>} : memref<1x1x8x128xbf16, #tpu.memory_space<vmem>>, vector<1x1x8x128xbf16>,
    return
  }
  func.func @transform_0(%arg0: i32, %arg1: i32) -> (i32, i32, i32, i32) {
    %c0_i32 = arith.constant 0 : i32
    %c0_i32_0 = arith.constant 0 : i32
    %c0_i32_1 = arith.constant 0 : i32
    return %arg0, %arg1, %c0_i32, %c0_i32_0 : i32, i32, i32, i32
  }
  func.func @transform_1(%arg0: i32, %arg1: i32) -> (i32, i32, i32, i32) {
    %c0_i32 = arith.constant 0 : i32
    %c0_i32_0 = arith.constant 0 : i32
    %c0_i32_1 = arith.constant 0 : i32
    return %arg0, %arg1, %c0_i32, %c0_i32_0 : i32, i32, i32, i32
  }
}

module attributes {stable_mosaic.version = 11 : i64} {
  func.func @_conv_bn_kernel(%arg0: i32, %arg1: i32, %arg2: i32, %arg3: memref<1x1x10x128xbf16, #tpu.memory_space<vmem>>, %arg4: memref<9x128x128xbf16, #tpu.memory_space<vmem>>, %arg5: memref<1x128xf32, #tpu.memory_space<vmem>>, %arg6: memref<1x128xf32, #tpu.memory_space<vmem>>, %arg7: memref<1x1x8x128xbf16, #tpu.memory_space<vmem>>, %arg8: memref<8x128xf32, #tpu.memory_space<vmem>>) attributes {dimension_semantics = [#tpu.dimension_semantics<parallel>, #tpu.dimension_semantics<parallel>, #tpu.dimension_semantics<arbitrary>], iteration_bounds = array<i64: 2, 8, 3>, scalar_prefetch = 0 : i64, scratch_operands = 1 : i64, tpu.core_type = #tpu.core_type<tc>, window_params = [{transform_indices = @transform_0, window_bounds = array<i64: 1, 1, 10, 128>}, {pipeline_mode = #tpu.pipeline_mode<synchronous>, transform_indices = @transform_1, window_bounds = array<i64: 9, 128, 128>}, {pipeline_mode = #tpu.pipeline_mode<synchronous>, transform_indices = @transform_2, window_bounds = array<i64: 1, 128>}, {pipeline_mode = #tpu.pipeline_mode<synchronous>, transform_indices = @transform_3, window_bounds = array<i64: 1, 128>}, {transform_indices = @transform_4, window_bounds = array<i64: 1, 1, 8, 128>}]} {
    %c0_i32 = arith.constant 0 : i32
    %0 = arith.cmpi eq, %arg2, %c0_i32 : i32
    %1 = arith.extui %0 : i1 to i32
    %c0_i32_0 = arith.constant 0 : i32
    %2 = arith.cmpi ne, %1, %c0_i32_0 : i32
    scf.if %2 {
      %cst_21 = arith.constant 0.000000e+00 : f32
      %34 = vector.broadcast %cst_21 : f32 to vector<8x128xf32>
      %c0_22 = arith.constant 0 : index
      %c0_23 = arith.constant 0 : index
      %35 = vector.load %arg8[%c0_22, %c0_23] : memref<8x128xf32, #tpu.memory_space<vmem>>, vector<8x128xf32>
      tpu.vector_store %arg8[%c0_22, %c0_23], %34 {strides = array<i32>} : memref<8x128xf32, #tpu.memory_space<vmem>>, vector<8x128xf32>,
    } else {
    }
    %c0 = arith.constant 0 : index
    %c0_1 = arith.constant 0 : index
    %c0_2 = arith.constant 0 : index
    %c0_3 = arith.constant 0 : index
    %3 = vector.load %arg3[%c0, %c0_1, %c0_2, %c0_3] : memref<1x1x10x128xbf16, #tpu.memory_space<vmem>>, vector<1x1x10x128xbf16>
    %4 = vector.shape_cast %3 : vector<1x1x10x128xbf16> to vector<10x128xbf16>
    %c0_4 = arith.constant 0 : index
    %c0_5 = arith.constant 0 : index
    %5 = vector.load %arg8[%c0_4, %c0_5] : memref<8x128xf32, #tpu.memory_space<vmem>>, vector<8x128xf32>
    %6 = vector.extract_strided_slice %4 {offsets = [0, 0], sizes = [8, 128], strides = [1, 1]} : vector<10x128xbf16> to vector<8x128xbf16>
    %c3_i32 = arith.constant 3 : i32
    %7 = arith.muli %arg2, %c3_i32 : i32
    %c0_i32_6 = arith.constant 0 : i32
    %8 = arith.addi %7, %c0_i32_6 : i32
    %9 = arith.index_cast %8 : i32 to index
    %c0_7 = arith.constant 0 : index
    %c0_8 = arith.constant 0 : index
    %10 = vector.load %arg4[%9, %c0_7, %c0_8] : memref<9x128x128xbf16, #tpu.memory_space<vmem>>, vector<1x128x128xbf16>
    %11 = vector.shape_cast %10 : vector<1x128x128xbf16> to vector<128x128xbf16>
    %cst = arith.constant dense<0.000000e+00> : vector<8x128xf32>
    %12 = tpu.matmul %6, %11, %cst {dimension_numbers = #tpu.dot_dimension_numbers<[1], [0], [0], [1], [0, 0, 1, 1], [], []>} : vector<8x128xbf16>, vector<128x128xbf16>, vector<8x128xf32> -> vector<8x128xf32>
    %13 = arith.addf %5, %12 : vector<8x128xf32>
    %14 = vector.extract_strided_slice %4 {offsets = [1, 0], sizes = [8, 128], strides = [1, 1]} : vector<10x128xbf16> to vector<8x128xbf16>
    %c3_i32_9 = arith.constant 3 : i32
    %15 = arith.muli %arg2, %c3_i32_9 : i32
    %c1_i32 = arith.constant 1 : i32
    %16 = arith.addi %15, %c1_i32 : i32
    %17 = arith.index_cast %16 : i32 to index
    %c0_10 = arith.constant 0 : index
    %c0_11 = arith.constant 0 : index
    %18 = vector.load %arg4[%17, %c0_10, %c0_11] : memref<9x128x128xbf16, #tpu.memory_space<vmem>>, vector<1x128x128xbf16>
    %19 = vector.shape_cast %18 : vector<1x128x128xbf16> to vector<128x128xbf16>
    %cst_12 = arith.constant dense<0.000000e+00> : vector<8x128xf32>
    %20 = tpu.matmul %14, %19, %cst_12 {dimension_numbers = #tpu.dot_dimension_numbers<[1], [0], [0], [1], [0, 0, 1, 1], [], []>} : vector<8x128xbf16>, vector<128x128xbf16>, vector<8x128xf32> -> vector<8x128xf32>
    %21 = arith.addf %13, %20 : vector<8x128xf32>
    %22 = vector.extract_strided_slice %4 {offsets = [2, 0], sizes = [8, 128], strides = [1, 1]} : vector<10x128xbf16> to vector<8x128xbf16>
    %c3_i32_13 = arith.constant 3 : i32
    %23 = arith.muli %arg2, %c3_i32_13 : i32
    %c2_i32 = arith.constant 2 : i32
    %24 = arith.addi %23, %c2_i32 : i32
    %25 = arith.index_cast %24 : i32 to index
    %c0_14 = arith.constant 0 : index
    %c0_15 = arith.constant 0 : index
    %26 = vector.load %arg4[%25, %c0_14, %c0_15] : memref<9x128x128xbf16, #tpu.memory_space<vmem>>, vector<1x128x128xbf16>
    %27 = vector.shape_cast %26 : vector<1x128x128xbf16> to vector<128x128xbf16>
    %cst_16 = arith.constant dense<0.000000e+00> : vector<8x128xf32>
    %28 = tpu.matmul %22, %27, %cst_16 {dimension_numbers = #tpu.dot_dimension_numbers<[1], [0], [0], [1], [0, 0, 1, 1], [], []>} : vector<8x128xbf16>, vector<128x128xbf16>, vector<8x128xf32> -> vector<8x128xf32>
    %29 = arith.addf %21, %28 : vector<8x128xf32>
    %c0_17 = arith.constant 0 : index
    %c0_18 = arith.constant 0 : index
    %30 = vector.load %arg8[%c0_17, %c0_18] : memref<8x128xf32, #tpu.memory_space<vmem>>, vector<8x128xf32>
    tpu.vector_store %arg8[%c0_17, %c0_18], %29 {strides = array<i32>} : memref<8x128xf32, #tpu.memory_space<vmem>>, vector<8x128xf32>,
    %c2_i32_19 = arith.constant 2 : i32
    %31 = arith.cmpi eq, %arg2, %c2_i32_19 : i32
    %32 = arith.extui %31 : i1 to i32
    %c0_i32_20 = arith.constant 0 : i32
    %33 = arith.cmpi ne, %32, %c0_i32_20 : i32
    scf.if %33 {
      %c0_21 = arith.constant 0 : index
      %c0_22 = arith.constant 0 : index
      %34 = vector.load %arg8[%c0_21, %c0_22] : memref<8x128xf32, #tpu.memory_space<vmem>>, vector<8x128xf32>
      %c0_23 = arith.constant 0 : index
      %c0_24 = arith.constant 0 : index
      %35 = vector.load %arg5[%c0_23, %c0_24] : memref<1x128xf32, #tpu.memory_space<vmem>>, vector<1x128xf32>
      %36 = vector.broadcast %35 : vector<1x128xf32> to vector<8x128xf32>
      %37 = arith.mulf %34, %36 : vector<8x128xf32>
      %c0_25 = arith.constant 0 : index
      %c0_26 = arith.constant 0 : index
      %38 = vector.load %arg6[%c0_25, %c0_26] : memref<1x128xf32, #tpu.memory_space<vmem>>, vector<1x128xf32>
      %39 = vector.broadcast %38 : vector<1x128xf32> to vector<8x128xf32>
      %40 = arith.addf %37, %39 : vector<8x128xf32>
      %cst_27 = arith.constant 0.000000e+00 : f32
      %41 = vector.broadcast %cst_27 : f32 to vector<8x128xf32>
      %42 = arith.maximumf %40, %41 : vector<8x128xf32>
      %43 = arith.truncf %42 : vector<8x128xf32> to vector<8x128xbf16>
      %c0_28 = arith.constant 0 : index
      %c0_29 = arith.constant 0 : index
      %c0_30 = arith.constant 0 : index
      %c0_31 = arith.constant 0 : index
      %44 = vector.load %arg7[%c0_28, %c0_29, %c0_30, %c0_31] : memref<1x1x8x128xbf16, #tpu.memory_space<vmem>>, vector<1x1x8x128xbf16>
      %45 = vector.shape_cast %44 : vector<1x1x8x128xbf16> to vector<8x128xbf16>
      %46 = vector.shape_cast %43 : vector<8x128xbf16> to vector<1x1x8x128xbf16>
      tpu.vector_store %arg7[%c0_28, %c0_29, %c0_30, %c0_31], %46 {strides = array<i32>} : memref<1x1x8x128xbf16, #tpu.memory_space<vmem>>, vector<1x1x8x128xbf16>,
    } else {
    }
    return
  }
  func.func @transform_0(%arg0: i32, %arg1: i32, %arg2: i32) -> (i32, i32, i32, i32) {
    %c1_i32 = arith.constant 1 : i32
    %0 = arith.muli %arg1, %c1_i32 : i32
    %1 = arith.addi %0, %arg2 : i32
    %c0_i32 = arith.constant 0 : i32
    %c0_i32_0 = arith.constant 0 : i32
    %c0_i32_1 = arith.constant 0 : i32
    return %arg0, %1, %c0_i32, %c0_i32_0 : i32, i32, i32, i32
  }
  func.func @transform_1(%arg0: i32, %arg1: i32, %arg2: i32) -> (i32, i32, i32) {
    %c0_i32 = arith.constant 0 : i32
    %c0_i32_0 = arith.constant 0 : i32
    %c0_i32_1 = arith.constant 0 : i32
    %c0_i32_2 = arith.constant 0 : i32
    return %c0_i32, %c0_i32_0, %c0_i32_1 : i32, i32, i32
  }
  func.func @transform_2(%arg0: i32, %arg1: i32, %arg2: i32) -> (i32, i32) {
    %c0_i32 = arith.constant 0 : i32
    %c0_i32_0 = arith.constant 0 : i32
    %c0_i32_1 = arith.constant 0 : i32
    return %c0_i32, %c0_i32_0 : i32, i32
  }
  func.func @transform_3(%arg0: i32, %arg1: i32, %arg2: i32) -> (i32, i32) {
    %c0_i32 = arith.constant 0 : i32
    %c0_i32_0 = arith.constant 0 : i32
    %c0_i32_1 = arith.constant 0 : i32
    return %c0_i32, %c0_i32_0 : i32, i32
  }
  func.func @transform_4(%arg0: i32, %arg1: i32, %arg2: i32) -> (i32, i32, i32, i32) {
    %c0_i32 = arith.constant 0 : i32
    %c0_i32_0 = arith.constant 0 : i32
    %c0_i32_1 = arith.constant 0 : i32
    return %arg0, %arg1, %c0_i32, %c0_i32_0 : i32, i32, i32, i32
  }
}

module attributes {stable_mosaic.version = 11 : i64} {
  func.func @_conv_bn_kernel(%arg0: i32, %arg1: i32, %arg2: i32, %arg3: memref<1x1x8x128xbf16, #tpu.memory_space<vmem>>, %arg4: memref<1x128x128xbf16, #tpu.memory_space<vmem>>, %arg5: memref<1x128xf32, #tpu.memory_space<vmem>>, %arg6: memref<1x128xf32, #tpu.memory_space<vmem>>, %arg7: memref<1x1x8x128xbf16, #tpu.memory_space<vmem>>, %arg8: memref<8x128xf32, #tpu.memory_space<vmem>>) attributes {dimension_semantics = [#tpu.dimension_semantics<parallel>, #tpu.dimension_semantics<parallel>, #tpu.dimension_semantics<arbitrary>], iteration_bounds = array<i64: 2, 8, 1>, scalar_prefetch = 0 : i64, scratch_operands = 1 : i64, tpu.core_type = #tpu.core_type<tc>, window_params = [{transform_indices = @transform_0, window_bounds = array<i64: 1, 1, 8, 128>}, {pipeline_mode = #tpu.pipeline_mode<synchronous>, transform_indices = @transform_1, window_bounds = array<i64: 1, 128, 128>}, {pipeline_mode = #tpu.pipeline_mode<synchronous>, transform_indices = @transform_2, window_bounds = array<i64: 1, 128>}, {pipeline_mode = #tpu.pipeline_mode<synchronous>, transform_indices = @transform_3, window_bounds = array<i64: 1, 128>}, {transform_indices = @transform_4, window_bounds = array<i64: 1, 1, 8, 128>}]} {
    %c0_i32 = arith.constant 0 : i32
    %0 = arith.cmpi eq, %arg2, %c0_i32 : i32
    %1 = arith.extui %0 : i1 to i32
    %c0_i32_0 = arith.constant 0 : i32
    %2 = arith.cmpi ne, %1, %c0_i32_0 : i32
    scf.if %2 {
      %cst_13 = arith.constant 0.000000e+00 : f32
      %17 = vector.broadcast %cst_13 : f32 to vector<8x128xf32>
      %c0_14 = arith.constant 0 : index
      %c0_15 = arith.constant 0 : index
      %18 = vector.load %arg8[%c0_14, %c0_15] : memref<8x128xf32, #tpu.memory_space<vmem>>, vector<8x128xf32>
      tpu.vector_store %arg8[%c0_14, %c0_15], %17 {strides = array<i32>} : memref<8x128xf32, #tpu.memory_space<vmem>>, vector<8x128xf32>,
    } else {
    }
    %c0 = arith.constant 0 : index
    %c0_1 = arith.constant 0 : index
    %c0_2 = arith.constant 0 : index
    %c0_3 = arith.constant 0 : index
    %3 = vector.load %arg3[%c0, %c0_1, %c0_2, %c0_3] : memref<1x1x8x128xbf16, #tpu.memory_space<vmem>>, vector<1x1x8x128xbf16>
    %4 = vector.shape_cast %3 : vector<1x1x8x128xbf16> to vector<8x128xbf16>
    %c0_4 = arith.constant 0 : index
    %c0_5 = arith.constant 0 : index
    %5 = vector.load %arg8[%c0_4, %c0_5] : memref<8x128xf32, #tpu.memory_space<vmem>>, vector<8x128xf32>
    %c1_i32 = arith.constant 1 : i32
    %6 = arith.muli %arg2, %c1_i32 : i32
    %c0_i32_6 = arith.constant 0 : i32
    %7 = arith.addi %6, %c0_i32_6 : i32
    %8 = arith.index_cast %7 : i32 to index
    %c0_7 = arith.constant 0 : index
    %c0_8 = arith.constant 0 : index
    %9 = vector.load %arg4[%8, %c0_7, %c0_8] : memref<1x128x128xbf16, #tpu.memory_space<vmem>>, vector<1x128x128xbf16>
    %10 = vector.shape_cast %9 : vector<1x128x128xbf16> to vector<128x128xbf16>
    %cst = arith.constant dense<0.000000e+00> : vector<8x128xf32>
    %11 = tpu.matmul %4, %10, %cst {dimension_numbers = #tpu.dot_dimension_numbers<[1], [0], [0], [1], [0, 0, 1, 1], [], []>} : vector<8x128xbf16>, vector<128x128xbf16>, vector<8x128xf32> -> vector<8x128xf32>
    %12 = arith.addf %5, %11 : vector<8x128xf32>
    %c0_9 = arith.constant 0 : index
    %c0_10 = arith.constant 0 : index
    %13 = vector.load %arg8[%c0_9, %c0_10] : memref<8x128xf32, #tpu.memory_space<vmem>>, vector<8x128xf32>
    tpu.vector_store %arg8[%c0_9, %c0_10], %12 {strides = array<i32>} : memref<8x128xf32, #tpu.memory_space<vmem>>, vector<8x128xf32>,
    %c0_i32_11 = arith.constant 0 : i32
    %14 = arith.cmpi eq, %arg2, %c0_i32_11 : i32
    %15 = arith.extui %14 : i1 to i32
    %c0_i32_12 = arith.constant 0 : i32
    %16 = arith.cmpi ne, %15, %c0_i32_12 : i32
    scf.if %16 {
      %c0_13 = arith.constant 0 : index
      %c0_14 = arith.constant 0 : index
      %17 = vector.load %arg8[%c0_13, %c0_14] : memref<8x128xf32, #tpu.memory_space<vmem>>, vector<8x128xf32>
      %c0_15 = arith.constant 0 : index
      %c0_16 = arith.constant 0 : index
      %18 = vector.load %arg5[%c0_15, %c0_16] : memref<1x128xf32, #tpu.memory_space<vmem>>, vector<1x128xf32>
      %19 = vector.broadcast %18 : vector<1x128xf32> to vector<8x128xf32>
      %20 = arith.mulf %17, %19 : vector<8x128xf32>
      %c0_17 = arith.constant 0 : index
      %c0_18 = arith.constant 0 : index
      %21 = vector.load %arg6[%c0_17, %c0_18] : memref<1x128xf32, #tpu.memory_space<vmem>>, vector<1x128xf32>
      %22 = vector.broadcast %21 : vector<1x128xf32> to vector<8x128xf32>
      %23 = arith.addf %20, %22 : vector<8x128xf32>
      %24 = arith.truncf %23 : vector<8x128xf32> to vector<8x128xbf16>
      %c0_19 = arith.constant 0 : index
      %c0_20 = arith.constant 0 : index
      %c0_21 = arith.constant 0 : index
      %c0_22 = arith.constant 0 : index
      %25 = vector.load %arg7[%c0_19, %c0_20, %c0_21, %c0_22] : memref<1x1x8x128xbf16, #tpu.memory_space<vmem>>, vector<1x1x8x128xbf16>
      %26 = vector.shape_cast %25 : vector<1x1x8x128xbf16> to vector<8x128xbf16>
      %27 = vector.shape_cast %24 : vector<8x128xbf16> to vector<1x1x8x128xbf16>
      tpu.vector_store %arg7[%c0_19, %c0_20, %c0_21, %c0_22], %27 {strides = array<i32>} : memref<1x1x8x128xbf16, #tpu.memory_space<vmem>>, vector<1x1x8x128xbf16>,
    } else {
    }
    return
  }
  func.func @transform_0(%arg0: i32, %arg1: i32, %arg2: i32) -> (i32, i32, i32, i32) {
    %c1_i32 = arith.constant 1 : i32
    %0 = arith.muli %arg1, %c1_i32 : i32
    %1 = arith.addi %0, %arg2 : i32
    %c0_i32 = arith.constant 0 : i32
    %c0_i32_0 = arith.constant 0 : i32
    %c0_i32_1 = arith.constant 0 : i32
    return %arg0, %1, %c0_i32, %c0_i32_0 : i32, i32, i32, i32
  }
  func.func @transform_1(%arg0: i32, %arg1: i32, %arg2: i32) -> (i32, i32, i32) {
    %c0_i32 = arith.constant 0 : i32
    %c0_i32_0 = arith.constant 0 : i32
    %c0_i32_1 = arith.constant 0 : i32
    %c0_i32_2 = arith.constant 0 : i32
    return %c0_i32, %c0_i32_0, %c0_i32_1 : i32, i32, i32
  }
  func.func @transform_2(%arg0: i32, %arg1: i32, %arg2: i32) -> (i32, i32) {
    %c0_i32 = arith.constant 0 : i32
    %c0_i32_0 = arith.constant 0 : i32
    %c0_i32_1 = arith.constant 0 : i32
    return %c0_i32, %c0_i32_0 : i32, i32
  }
  func.func @transform_3(%arg0: i32, %arg1: i32, %arg2: i32) -> (i32, i32) {
    %c0_i32 = arith.constant 0 : i32
    %c0_i32_0 = arith.constant 0 : i32
    %c0_i32_1 = arith.constant 0 : i32
    return %c0_i32, %c0_i32_0 : i32, i32
  }
  func.func @transform_4(%arg0: i32, %arg1: i32, %arg2: i32) -> (i32, i32, i32, i32) {
    %c0_i32 = arith.constant 0 : i32
    %c0_i32_0 = arith.constant 0 : i32
    %c0_i32_1 = arith.constant 0 : i32
    return %arg0, %arg1, %c0_i32, %c0_i32_0 : i32, i32, i32, i32
  }
}

module attributes {stable_mosaic.version = 11 : i64} {
  func.func @_conv_bn_kernel(%arg0: i32, %arg1: i32, %arg2: i32, %arg3: memref<1x1x10x128xbf16, #tpu.memory_space<vmem>>, %arg4: memref<9x128x128xbf16, #tpu.memory_space<vmem>>, %arg5: memref<1x128xf32, #tpu.memory_space<vmem>>, %arg6: memref<1x128xf32, #tpu.memory_space<vmem>>, %arg7: memref<1x1x8x128xbf16, #tpu.memory_space<vmem>>, %arg8: memref<1x1x8x128xbf16, #tpu.memory_space<vmem>>, %arg9: memref<8x128xf32, #tpu.memory_space<vmem>>) attributes {dimension_semantics = [#tpu.dimension_semantics<parallel>, #tpu.dimension_semantics<parallel>, #tpu.dimension_semantics<arbitrary>], iteration_bounds = array<i64: 2, 8, 3>, scalar_prefetch = 0 : i64, scratch_operands = 1 : i64, tpu.core_type = #tpu.core_type<tc>, window_params = [{transform_indices = @transform_0, window_bounds = array<i64: 1, 1, 10, 128>}, {pipeline_mode = #tpu.pipeline_mode<synchronous>, transform_indices = @transform_1, window_bounds = array<i64: 9, 128, 128>}, {pipeline_mode = #tpu.pipeline_mode<synchronous>, transform_indices = @transform_2, window_bounds = array<i64: 1, 128>}, {pipeline_mode = #tpu.pipeline_mode<synchronous>, transform_indices = @transform_3, window_bounds = array<i64: 1, 128>}, {transform_indices = @transform_4, window_bounds = array<i64: 1, 1, 8, 128>}, {transform_indices = @transform_5, window_bounds = array<i64: 1, 1, 8, 128>}]} {
    %c0_i32 = arith.constant 0 : i32
    %0 = arith.cmpi eq, %arg2, %c0_i32 : i32
    %1 = arith.extui %0 : i1 to i32
    %c0_i32_0 = arith.constant 0 : i32
    %2 = arith.cmpi ne, %1, %c0_i32_0 : i32
    scf.if %2 {
      %cst_21 = arith.constant 0.000000e+00 : f32
      %34 = vector.broadcast %cst_21 : f32 to vector<8x128xf32>
      %c0_22 = arith.constant 0 : index
      %c0_23 = arith.constant 0 : index
      %35 = vector.load %arg9[%c0_22, %c0_23] : memref<8x128xf32, #tpu.memory_space<vmem>>, vector<8x128xf32>
      tpu.vector_store %arg9[%c0_22, %c0_23], %34 {strides = array<i32>} : memref<8x128xf32, #tpu.memory_space<vmem>>, vector<8x128xf32>,
    } else {
    }
    %c0 = arith.constant 0 : index
    %c0_1 = arith.constant 0 : index
    %c0_2 = arith.constant 0 : index
    %c0_3 = arith.constant 0 : index
    %3 = vector.load %arg3[%c0, %c0_1, %c0_2, %c0_3] : memref<1x1x10x128xbf16, #tpu.memory_space<vmem>>, vector<1x1x10x128xbf16>
    %4 = vector.shape_cast %3 : vector<1x1x10x128xbf16> to vector<10x128xbf16>
    %c0_4 = arith.constant 0 : index
    %c0_5 = arith.constant 0 : index
    %5 = vector.load %arg9[%c0_4, %c0_5] : memref<8x128xf32, #tpu.memory_space<vmem>>, vector<8x128xf32>
    %6 = vector.extract_strided_slice %4 {offsets = [0, 0], sizes = [8, 128], strides = [1, 1]} : vector<10x128xbf16> to vector<8x128xbf16>
    %c3_i32 = arith.constant 3 : i32
    %7 = arith.muli %arg2, %c3_i32 : i32
    %c0_i32_6 = arith.constant 0 : i32
    %8 = arith.addi %7, %c0_i32_6 : i32
    %9 = arith.index_cast %8 : i32 to index
    %c0_7 = arith.constant 0 : index
    %c0_8 = arith.constant 0 : index
    %10 = vector.load %arg4[%9, %c0_7, %c0_8] : memref<9x128x128xbf16, #tpu.memory_space<vmem>>, vector<1x128x128xbf16>
    %11 = vector.shape_cast %10 : vector<1x128x128xbf16> to vector<128x128xbf16>
    %cst = arith.constant dense<0.000000e+00> : vector<8x128xf32>
    %12 = tpu.matmul %6, %11, %cst {dimension_numbers = #tpu.dot_dimension_numbers<[1], [0], [0], [1], [0, 0, 1, 1], [], []>} : vector<8x128xbf16>, vector<128x128xbf16>, vector<8x128xf32> -> vector<8x128xf32>
    %13 = arith.addf %5, %12 : vector<8x128xf32>
    %14 = vector.extract_strided_slice %4 {offsets = [1, 0], sizes = [8, 128], strides = [1, 1]} : vector<10x128xbf16> to vector<8x128xbf16>
    %c3_i32_9 = arith.constant 3 : i32
    %15 = arith.muli %arg2, %c3_i32_9 : i32
    %c1_i32 = arith.constant 1 : i32
    %16 = arith.addi %15, %c1_i32 : i32
    %17 = arith.index_cast %16 : i32 to index
    %c0_10 = arith.constant 0 : index
    %c0_11 = arith.constant 0 : index
    %18 = vector.load %arg4[%17, %c0_10, %c0_11] : memref<9x128x128xbf16, #tpu.memory_space<vmem>>, vector<1x128x128xbf16>
    %19 = vector.shape_cast %18 : vector<1x128x128xbf16> to vector<128x128xbf16>
    %cst_12 = arith.constant dense<0.000000e+00> : vector<8x128xf32>
    %20 = tpu.matmul %14, %19, %cst_12 {dimension_numbers = #tpu.dot_dimension_numbers<[1], [0], [0], [1], [0, 0, 1, 1], [], []>} : vector<8x128xbf16>, vector<128x128xbf16>, vector<8x128xf32> -> vector<8x128xf32>
    %21 = arith.addf %13, %20 : vector<8x128xf32>
    %22 = vector.extract_strided_slice %4 {offsets = [2, 0], sizes = [8, 128], strides = [1, 1]} : vector<10x128xbf16> to vector<8x128xbf16>
    %c3_i32_13 = arith.constant 3 : i32
    %23 = arith.muli %arg2, %c3_i32_13 : i32
    %c2_i32 = arith.constant 2 : i32
    %24 = arith.addi %23, %c2_i32 : i32
    %25 = arith.index_cast %24 : i32 to index
    %c0_14 = arith.constant 0 : index
    %c0_15 = arith.constant 0 : index
    %26 = vector.load %arg4[%25, %c0_14, %c0_15] : memref<9x128x128xbf16, #tpu.memory_space<vmem>>, vector<1x128x128xbf16>
    %27 = vector.shape_cast %26 : vector<1x128x128xbf16> to vector<128x128xbf16>
    %cst_16 = arith.constant dense<0.000000e+00> : vector<8x128xf32>
    %28 = tpu.matmul %22, %27, %cst_16 {dimension_numbers = #tpu.dot_dimension_numbers<[1], [0], [0], [1], [0, 0, 1, 1], [], []>} : vector<8x128xbf16>, vector<128x128xbf16>, vector<8x128xf32> -> vector<8x128xf32>
    %29 = arith.addf %21, %28 : vector<8x128xf32>
    %c0_17 = arith.constant 0 : index
    %c0_18 = arith.constant 0 : index
    %30 = vector.load %arg9[%c0_17, %c0_18] : memref<8x128xf32, #tpu.memory_space<vmem>>, vector<8x128xf32>
    tpu.vector_store %arg9[%c0_17, %c0_18], %29 {strides = array<i32>} : memref<8x128xf32, #tpu.memory_space<vmem>>, vector<8x128xf32>,
    %c2_i32_19 = arith.constant 2 : i32
    %31 = arith.cmpi eq, %arg2, %c2_i32_19 : i32
    %32 = arith.extui %31 : i1 to i32
    %c0_i32_20 = arith.constant 0 : i32
    %33 = arith.cmpi ne, %32, %c0_i32_20 : i32
    scf.if %33 {
      %c0_21 = arith.constant 0 : index
      %c0_22 = arith.constant 0 : index
      %34 = vector.load %arg9[%c0_21, %c0_22] : memref<8x128xf32, #tpu.memory_space<vmem>>, vector<8x128xf32>
      %c0_23 = arith.constant 0 : index
      %c0_24 = arith.constant 0 : index
      %35 = vector.load %arg5[%c0_23, %c0_24] : memref<1x128xf32, #tpu.memory_space<vmem>>, vector<1x128xf32>
      %36 = vector.broadcast %35 : vector<1x128xf32> to vector<8x128xf32>
      %37 = arith.mulf %34, %36 : vector<8x128xf32>
      %c0_25 = arith.constant 0 : index
      %c0_26 = arith.constant 0 : index
      %38 = vector.load %arg6[%c0_25, %c0_26] : memref<1x128xf32, #tpu.memory_space<vmem>>, vector<1x128xf32>
      %39 = vector.broadcast %38 : vector<1x128xf32> to vector<8x128xf32>
      %40 = arith.addf %37, %39 : vector<8x128xf32>
      %c0_27 = arith.constant 0 : index
      %c0_28 = arith.constant 0 : index
      %c0_29 = arith.constant 0 : index
      %c0_30 = arith.constant 0 : index
      %41 = vector.load %arg7[%c0_27, %c0_28, %c0_29, %c0_30] : memref<1x1x8x128xbf16, #tpu.memory_space<vmem>>, vector<1x1x8x128xbf16>
      %42 = vector.shape_cast %41 : vector<1x1x8x128xbf16> to vector<8x128xbf16>
      %43 = arith.extf %42 : vector<8x128xbf16> to vector<8x128xf32>
      %44 = arith.addf %40, %43 : vector<8x128xf32>
      %cst_31 = arith.constant 0.000000e+00 : f32
      %45 = vector.broadcast %cst_31 : f32 to vector<8x128xf32>
      %46 = arith.maximumf %44, %45 : vector<8x128xf32>
      %47 = arith.truncf %46 : vector<8x128xf32> to vector<8x128xbf16>
      %c0_32 = arith.constant 0 : index
      %c0_33 = arith.constant 0 : index
      %c0_34 = arith.constant 0 : index
      %c0_35 = arith.constant 0 : index
      %48 = vector.load %arg8[%c0_32, %c0_33, %c0_34, %c0_35] : memref<1x1x8x128xbf16, #tpu.memory_space<vmem>>, vector<1x1x8x128xbf16>
      %49 = vector.shape_cast %48 : vector<1x1x8x128xbf16> to vector<8x128xbf16>
      %50 = vector.shape_cast %47 : vector<8x128xbf16> to vector<1x1x8x128xbf16>
      tpu.vector_store %arg8[%c0_32, %c0_33, %c0_34, %c0_35], %50 {strides = array<i32>} : memref<1x1x8x128xbf16, #tpu.memory_space<vmem>>, vector<1x1x8x128xbf16>,
    } else {
    }
    return
  }
  func.func @transform_0(%arg0: i32, %arg1: i32, %arg2: i32) -> (i32, i32, i32, i32) {
    %c1_i32 = arith.constant 1 : i32
    %0 = arith.muli %arg1, %c1_i32 : i32
    %1 = arith.addi %0, %arg2 : i32
    %c0_i32 = arith.constant 0 : i32
    %c0_i32_0 = arith.constant 0 : i32
    %c0_i32_1 = arith.constant 0 : i32
    return %arg0, %1, %c0_i32, %c0_i32_0 : i32, i32, i32, i32
  }
  func.func @transform_1(%arg0: i32, %arg1: i32, %arg2: i32) -> (i32, i32, i32) {
    %c0_i32 = arith.constant 0 : i32
    %c0_i32_0 = arith.constant 0 : i32
    %c0_i32_1 = arith.constant 0 : i32
    %c0_i32_2 = arith.constant 0 : i32
    return %c0_i32, %c0_i32_0, %c0_i32_1 : i32, i32, i32
  }
  func.func @transform_2(%arg0: i32, %arg1: i32, %arg2: i32) -> (i32, i32) {
    %c0_i32 = arith.constant 0 : i32
    %c0_i32_0 = arith.constant 0 : i32
    %c0_i32_1 = arith.constant 0 : i32
    return %c0_i32, %c0_i32_0 : i32, i32
  }
  func.func @transform_3(%arg0: i32, %arg1: i32, %arg2: i32) -> (i32, i32) {
    %c0_i32 = arith.constant 0 : i32
    %c0_i32_0 = arith.constant 0 : i32
    %c0_i32_1 = arith.constant 0 : i32
    return %c0_i32, %c0_i32_0 : i32, i32
  }
  func.func @transform_4(%arg0: i32, %arg1: i32, %arg2: i32) -> (i32, i32, i32, i32) {
    %c0_i32 = arith.constant 0 : i32
    %c0_i32_0 = arith.constant 0 : i32
    %c0_i32_1 = arith.constant 0 : i32
    return %arg0, %arg1, %c0_i32, %c0_i32_0 : i32, i32, i32, i32
  }
  func.func @transform_5(%arg0: i32, %arg1: i32, %arg2: i32) -> (i32, i32, i32, i32) {
    %c0_i32 = arith.constant 0 : i32
    %c0_i32_0 = arith.constant 0 : i32
    %c0_i32_1 = arith.constant 0 : i32
    return %arg0, %arg1, %c0_i32, %c0_i32_0 : i32, i32, i32, i32
  }
}

module attributes {stable_mosaic.version = 11 : i64} {
  func.func @_maxpool_kernel(%arg0: i32, %arg1: i32, %arg2: memref<1x2x10x128xbf16, #tpu.memory_space<vmem>>, %arg3: memref<1x1x9x128xbf16, #tpu.memory_space<vmem>>) attributes {dimension_semantics = [#tpu.dimension_semantics<parallel>, #tpu.dimension_semantics<parallel>], iteration_bounds = array<i64: 2, 4>, scalar_prefetch = 0 : i64, scratch_operands = 0 : i64, tpu.core_type = #tpu.core_type<tc>, window_params = [{transform_indices = @transform_0, window_bounds = array<i64: 1, 2, 10, 128>}, {transform_indices = @transform_1, window_bounds = array<i64: 1, 1, 9, 128>}]} {
    %c0 = arith.constant 0 : index
    %c0_0 = arith.constant 0 : index
    %c0_1 = arith.constant 0 : index
    %c0_2 = arith.constant 0 : index
    %0 = vector.load %arg2[%c0, %c0_0, %c0_1, %c0_2] : memref<1x2x10x128xbf16, #tpu.memory_space<vmem>>, vector<1x1x10x128xbf16>
    %1 = vector.shape_cast %0 : vector<1x1x10x128xbf16> to vector<10x128xbf16>
    %c0_3 = arith.constant 0 : index
    %c1 = arith.constant 1 : index
    %c0_4 = arith.constant 0 : index
    %c0_5 = arith.constant 0 : index
    %2 = vector.load %arg2[%c0_3, %c1, %c0_4, %c0_5] : memref<1x2x10x128xbf16, #tpu.memory_space<vmem>>, vector<1x1x10x128xbf16>
    %3 = vector.shape_cast %2 : vector<1x1x10x128xbf16> to vector<10x128xbf16>
    %4 = arith.maximumf %1, %3 : vector<10x128xbf16>
    %5 = vector.extract_strided_slice %4 {offsets = [0, 0], sizes = [9, 128], strides = [1, 1]} : vector<10x128xbf16> to vector<9x128xbf16>
    %6 = vector.extract_strided_slice %4 {offsets = [1, 0], sizes = [9, 128], strides = [1, 1]} : vector<10x128xbf16> to vector<9x128xbf16>
    %7 = arith.maximumf %5, %6 : vector<9x128xbf16>
    %c0_6 = arith.constant 0 : index
    %c0_7 = arith.constant 0 : index
    %c0_8 = arith.constant 0 : index
    %c0_9 = arith.constant 0 : index
    %8 = vector.load %arg3[%c0_6, %c0_7, %c0_8, %c0_9] : memref<1x1x9x128xbf16, #tpu.memory_space<vmem>>, vector<1x1x9x128xbf16>
    %9 = vector.shape_cast %8 : vector<1x1x9x128xbf16> to vector<9x128xbf16>
    %10 = vector.shape_cast %7 : vector<9x128xbf16> to vector<1x1x9x128xbf16>
    tpu.vector_store %arg3[%c0_6, %c0_7, %c0_8, %c0_9], %10 {strides = array<i32>} : memref<1x1x9x128xbf16, #tpu.memory_space<vmem>>, vector<1x1x9x128xbf16>,
    return
  }
  func.func @transform_0(%arg0: i32, %arg1: i32) -> (i32, i32, i32, i32) {
    %c0_i32 = arith.constant 0 : i32
    %c0_i32_0 = arith.constant 0 : i32
    %c0_i32_1 = arith.constant 0 : i32
    return %arg0, %arg1, %c0_i32, %c0_i32_0 : i32, i32, i32, i32
  }
  func.func @transform_1(%arg0: i32, %arg1: i32) -> (i32, i32, i32, i32) {
    %c0_i32 = arith.constant 0 : i32
    %c0_i32_0 = arith.constant 0 : i32
    %c0_i32_1 = arith.constant 0 : i32
    return %arg0, %arg1, %c0_i32, %c0_i32_0 : i32, i32, i32, i32
  }
}

module attributes {stable_mosaic.version = 11 : i64} {
  func.func @_conv_bn_kernel(%arg0: i32, %arg1: i32, %arg2: i32, %arg3: memref<1x1x11x128xbf16, #tpu.memory_space<vmem>>, %arg4: memref<9x128x128xbf16, #tpu.memory_space<vmem>>, %arg5: memref<1x128xf32, #tpu.memory_space<vmem>>, %arg6: memref<1x128xf32, #tpu.memory_space<vmem>>, %arg7: memref<1x1x9x128xbf16, #tpu.memory_space<vmem>>, %arg8: memref<9x128xf32, #tpu.memory_space<vmem>>) attributes {dimension_semantics = [#tpu.dimension_semantics<parallel>, #tpu.dimension_semantics<parallel>, #tpu.dimension_semantics<arbitrary>], iteration_bounds = array<i64: 2, 4, 3>, scalar_prefetch = 0 : i64, scratch_operands = 1 : i64, tpu.core_type = #tpu.core_type<tc>, window_params = [{transform_indices = @transform_0, window_bounds = array<i64: 1, 1, 11, 128>}, {pipeline_mode = #tpu.pipeline_mode<synchronous>, transform_indices = @transform_1, window_bounds = array<i64: 9, 128, 128>}, {pipeline_mode = #tpu.pipeline_mode<synchronous>, transform_indices = @transform_2, window_bounds = array<i64: 1, 128>}, {pipeline_mode = #tpu.pipeline_mode<synchronous>, transform_indices = @transform_3, window_bounds = array<i64: 1, 128>}, {transform_indices = @transform_4, window_bounds = array<i64: 1, 1, 9, 128>}]} {
    %c0_i32 = arith.constant 0 : i32
    %0 = arith.cmpi eq, %arg2, %c0_i32 : i32
    %1 = arith.extui %0 : i1 to i32
    %c0_i32_0 = arith.constant 0 : i32
    %2 = arith.cmpi ne, %1, %c0_i32_0 : i32
    scf.if %2 {
      %cst_21 = arith.constant 0.000000e+00 : f32
      %34 = vector.broadcast %cst_21 : f32 to vector<9x128xf32>
      %c0_22 = arith.constant 0 : index
      %c0_23 = arith.constant 0 : index
      %35 = vector.load %arg8[%c0_22, %c0_23] : memref<9x128xf32, #tpu.memory_space<vmem>>, vector<9x128xf32>
      tpu.vector_store %arg8[%c0_22, %c0_23], %34 {strides = array<i32>} : memref<9x128xf32, #tpu.memory_space<vmem>>, vector<9x128xf32>,
    } else {
    }
    %c0 = arith.constant 0 : index
    %c0_1 = arith.constant 0 : index
    %c0_2 = arith.constant 0 : index
    %c0_3 = arith.constant 0 : index
    %3 = vector.load %arg3[%c0, %c0_1, %c0_2, %c0_3] : memref<1x1x11x128xbf16, #tpu.memory_space<vmem>>, vector<1x1x11x128xbf16>
    %4 = vector.shape_cast %3 : vector<1x1x11x128xbf16> to vector<11x128xbf16>
    %c0_4 = arith.constant 0 : index
    %c0_5 = arith.constant 0 : index
    %5 = vector.load %arg8[%c0_4, %c0_5] : memref<9x128xf32, #tpu.memory_space<vmem>>, vector<9x128xf32>
    %6 = vector.extract_strided_slice %4 {offsets = [0, 0], sizes = [9, 128], strides = [1, 1]} : vector<11x128xbf16> to vector<9x128xbf16>
    %c3_i32 = arith.constant 3 : i32
    %7 = arith.muli %arg2, %c3_i32 : i32
    %c0_i32_6 = arith.constant 0 : i32
    %8 = arith.addi %7, %c0_i32_6 : i32
    %9 = arith.index_cast %8 : i32 to index
    %c0_7 = arith.constant 0 : index
    %c0_8 = arith.constant 0 : index
    %10 = vector.load %arg4[%9, %c0_7, %c0_8] : memref<9x128x128xbf16, #tpu.memory_space<vmem>>, vector<1x128x128xbf16>
    %11 = vector.shape_cast %10 : vector<1x128x128xbf16> to vector<128x128xbf16>
    %cst = arith.constant dense<0.000000e+00> : vector<9x128xf32>
    %12 = tpu.matmul %6, %11, %cst {dimension_numbers = #tpu.dot_dimension_numbers<[1], [0], [0], [1], [0, 0, 1, 1], [], []>} : vector<9x128xbf16>, vector<128x128xbf16>, vector<9x128xf32> -> vector<9x128xf32>
    %13 = arith.addf %5, %12 : vector<9x128xf32>
    %14 = vector.extract_strided_slice %4 {offsets = [1, 0], sizes = [9, 128], strides = [1, 1]} : vector<11x128xbf16> to vector<9x128xbf16>
    %c3_i32_9 = arith.constant 3 : i32
    %15 = arith.muli %arg2, %c3_i32_9 : i32
    %c1_i32 = arith.constant 1 : i32
    %16 = arith.addi %15, %c1_i32 : i32
    %17 = arith.index_cast %16 : i32 to index
    %c0_10 = arith.constant 0 : index
    %c0_11 = arith.constant 0 : index
    %18 = vector.load %arg4[%17, %c0_10, %c0_11] : memref<9x128x128xbf16, #tpu.memory_space<vmem>>, vector<1x128x128xbf16>
    %19 = vector.shape_cast %18 : vector<1x128x128xbf16> to vector<128x128xbf16>
    %cst_12 = arith.constant dense<0.000000e+00> : vector<9x128xf32>
    %20 = tpu.matmul %14, %19, %cst_12 {dimension_numbers = #tpu.dot_dimension_numbers<[1], [0], [0], [1], [0, 0, 1, 1], [], []>} : vector<9x128xbf16>, vector<128x128xbf16>, vector<9x128xf32> -> vector<9x128xf32>
    %21 = arith.addf %13, %20 : vector<9x128xf32>
    %22 = vector.extract_strided_slice %4 {offsets = [2, 0], sizes = [9, 128], strides = [1, 1]} : vector<11x128xbf16> to vector<9x128xbf16>
    %c3_i32_13 = arith.constant 3 : i32
    %23 = arith.muli %arg2, %c3_i32_13 : i32
    %c2_i32 = arith.constant 2 : i32
    %24 = arith.addi %23, %c2_i32 : i32
    %25 = arith.index_cast %24 : i32 to index
    %c0_14 = arith.constant 0 : index
    %c0_15 = arith.constant 0 : index
    %26 = vector.load %arg4[%25, %c0_14, %c0_15] : memref<9x128x128xbf16, #tpu.memory_space<vmem>>, vector<1x128x128xbf16>
    %27 = vector.shape_cast %26 : vector<1x128x128xbf16> to vector<128x128xbf16>
    %cst_16 = arith.constant dense<0.000000e+00> : vector<9x128xf32>
    %28 = tpu.matmul %22, %27, %cst_16 {dimension_numbers = #tpu.dot_dimension_numbers<[1], [0], [0], [1], [0, 0, 1, 1], [], []>} : vector<9x128xbf16>, vector<128x128xbf16>, vector<9x128xf32> -> vector<9x128xf32>
    %29 = arith.addf %21, %28 : vector<9x128xf32>
    %c0_17 = arith.constant 0 : index
    %c0_18 = arith.constant 0 : index
    %30 = vector.load %arg8[%c0_17, %c0_18] : memref<9x128xf32, #tpu.memory_space<vmem>>, vector<9x128xf32>
    tpu.vector_store %arg8[%c0_17, %c0_18], %29 {strides = array<i32>} : memref<9x128xf32, #tpu.memory_space<vmem>>, vector<9x128xf32>,
    %c2_i32_19 = arith.constant 2 : i32
    %31 = arith.cmpi eq, %arg2, %c2_i32_19 : i32
    %32 = arith.extui %31 : i1 to i32
    %c0_i32_20 = arith.constant 0 : i32
    %33 = arith.cmpi ne, %32, %c0_i32_20 : i32
    scf.if %33 {
      %c0_21 = arith.constant 0 : index
      %c0_22 = arith.constant 0 : index
      %34 = vector.load %arg8[%c0_21, %c0_22] : memref<9x128xf32, #tpu.memory_space<vmem>>, vector<9x128xf32>
      %c0_23 = arith.constant 0 : index
      %c0_24 = arith.constant 0 : index
      %35 = vector.load %arg5[%c0_23, %c0_24] : memref<1x128xf32, #tpu.memory_space<vmem>>, vector<1x128xf32>
      %36 = vector.broadcast %35 : vector<1x128xf32> to vector<9x128xf32>
      %37 = arith.mulf %34, %36 : vector<9x128xf32>
      %c0_25 = arith.constant 0 : index
      %c0_26 = arith.constant 0 : index
      %38 = vector.load %arg6[%c0_25, %c0_26] : memref<1x128xf32, #tpu.memory_space<vmem>>, vector<1x128xf32>
      %39 = vector.broadcast %38 : vector<1x128xf32> to vector<9x128xf32>
      %40 = arith.addf %37, %39 : vector<9x128xf32>
      %cst_27 = arith.constant 0.000000e+00 : f32
      %41 = vector.broadcast %cst_27 : f32 to vector<9x128xf32>
      %42 = arith.maximumf %40, %41 : vector<9x128xf32>
      %43 = arith.truncf %42 : vector<9x128xf32> to vector<9x128xbf16>
      %c0_28 = arith.constant 0 : index
      %c0_29 = arith.constant 0 : index
      %c0_30 = arith.constant 0 : index
      %c0_31 = arith.constant 0 : index
      %44 = vector.load %arg7[%c0_28, %c0_29, %c0_30, %c0_31] : memref<1x1x9x128xbf16, #tpu.memory_space<vmem>>, vector<1x1x9x128xbf16>
      %45 = vector.shape_cast %44 : vector<1x1x9x128xbf16> to vector<9x128xbf16>
      %46 = vector.shape_cast %43 : vector<9x128xbf16> to vector<1x1x9x128xbf16>
      tpu.vector_store %arg7[%c0_28, %c0_29, %c0_30, %c0_31], %46 {strides = array<i32>} : memref<1x1x9x128xbf16, #tpu.memory_space<vmem>>, vector<1x1x9x128xbf16>,
    } else {
    }
    return
  }
  func.func @transform_0(%arg0: i32, %arg1: i32, %arg2: i32) -> (i32, i32, i32, i32) {
    %c1_i32 = arith.constant 1 : i32
    %0 = arith.muli %arg1, %c1_i32 : i32
    %1 = arith.addi %0, %arg2 : i32
    %c0_i32 = arith.constant 0 : i32
    %c0_i32_0 = arith.constant 0 : i32
    %c0_i32_1 = arith.constant 0 : i32
    return %arg0, %1, %c0_i32, %c0_i32_0 : i32, i32, i32, i32
  }
  func.func @transform_1(%arg0: i32, %arg1: i32, %arg2: i32) -> (i32, i32, i32) {
    %c0_i32 = arith.constant 0 : i32
    %c0_i32_0 = arith.constant 0 : i32
    %c0_i32_1 = arith.constant 0 : i32
    %c0_i32_2 = arith.constant 0 : i32
    return %c0_i32, %c0_i32_0, %c0_i32_1 : i32, i32, i32
  }
  func.func @transform_2(%arg0: i32, %arg1: i32, %arg2: i32) -> (i32, i32) {
    %c0_i32 = arith.constant 0 : i32
    %c0_i32_0 = arith.constant 0 : i32
    %c0_i32_1 = arith.constant 0 : i32
    return %c0_i32, %c0_i32_0 : i32, i32
  }
  func.func @transform_3(%arg0: i32, %arg1: i32, %arg2: i32) -> (i32, i32) {
    %c0_i32 = arith.constant 0 : i32
    %c0_i32_0 = arith.constant 0 : i32
    %c0_i32_1 = arith.constant 0 : i32
    return %c0_i32, %c0_i32_0 : i32, i32
  }
  func.func @transform_4(%arg0: i32, %arg1: i32, %arg2: i32) -> (i32, i32, i32, i32) {
    %c0_i32 = arith.constant 0 : i32
    %c0_i32_0 = arith.constant 0 : i32
    %c0_i32_1 = arith.constant 0 : i32
    return %arg0, %arg1, %c0_i32, %c0_i32_0 : i32, i32, i32, i32
  }
}

module attributes {stable_mosaic.version = 11 : i64} {
  func.func @_conv_bn_kernel(%arg0: i32, %arg1: i32, %arg2: i32, %arg3: memref<1x1x9x128xbf16, #tpu.memory_space<vmem>>, %arg4: memref<1x128x128xbf16, #tpu.memory_space<vmem>>, %arg5: memref<1x128xf32, #tpu.memory_space<vmem>>, %arg6: memref<1x128xf32, #tpu.memory_space<vmem>>, %arg7: memref<1x1x9x128xbf16, #tpu.memory_space<vmem>>, %arg8: memref<9x128xf32, #tpu.memory_space<vmem>>) attributes {dimension_semantics = [#tpu.dimension_semantics<parallel>, #tpu.dimension_semantics<parallel>, #tpu.dimension_semantics<arbitrary>], iteration_bounds = array<i64: 2, 4, 1>, scalar_prefetch = 0 : i64, scratch_operands = 1 : i64, tpu.core_type = #tpu.core_type<tc>, window_params = [{transform_indices = @transform_0, window_bounds = array<i64: 1, 1, 9, 128>}, {pipeline_mode = #tpu.pipeline_mode<synchronous>, transform_indices = @transform_1, window_bounds = array<i64: 1, 128, 128>}, {pipeline_mode = #tpu.pipeline_mode<synchronous>, transform_indices = @transform_2, window_bounds = array<i64: 1, 128>}, {pipeline_mode = #tpu.pipeline_mode<synchronous>, transform_indices = @transform_3, window_bounds = array<i64: 1, 128>}, {transform_indices = @transform_4, window_bounds = array<i64: 1, 1, 9, 128>}]} {
    %c0_i32 = arith.constant 0 : i32
    %0 = arith.cmpi eq, %arg2, %c0_i32 : i32
    %1 = arith.extui %0 : i1 to i32
    %c0_i32_0 = arith.constant 0 : i32
    %2 = arith.cmpi ne, %1, %c0_i32_0 : i32
    scf.if %2 {
      %cst_13 = arith.constant 0.000000e+00 : f32
      %17 = vector.broadcast %cst_13 : f32 to vector<9x128xf32>
      %c0_14 = arith.constant 0 : index
      %c0_15 = arith.constant 0 : index
      %18 = vector.load %arg8[%c0_14, %c0_15] : memref<9x128xf32, #tpu.memory_space<vmem>>, vector<9x128xf32>
      tpu.vector_store %arg8[%c0_14, %c0_15], %17 {strides = array<i32>} : memref<9x128xf32, #tpu.memory_space<vmem>>, vector<9x128xf32>,
    } else {
    }
    %c0 = arith.constant 0 : index
    %c0_1 = arith.constant 0 : index
    %c0_2 = arith.constant 0 : index
    %c0_3 = arith.constant 0 : index
    %3 = vector.load %arg3[%c0, %c0_1, %c0_2, %c0_3] : memref<1x1x9x128xbf16, #tpu.memory_space<vmem>>, vector<1x1x9x128xbf16>
    %4 = vector.shape_cast %3 : vector<1x1x9x128xbf16> to vector<9x128xbf16>
    %c0_4 = arith.constant 0 : index
    %c0_5 = arith.constant 0 : index
    %5 = vector.load %arg8[%c0_4, %c0_5] : memref<9x128xf32, #tpu.memory_space<vmem>>, vector<9x128xf32>
    %c1_i32 = arith.constant 1 : i32
    %6 = arith.muli %arg2, %c1_i32 : i32
    %c0_i32_6 = arith.constant 0 : i32
    %7 = arith.addi %6, %c0_i32_6 : i32
    %8 = arith.index_cast %7 : i32 to index
    %c0_7 = arith.constant 0 : index
    %c0_8 = arith.constant 0 : index
    %9 = vector.load %arg4[%8, %c0_7, %c0_8] : memref<1x128x128xbf16, #tpu.memory_space<vmem>>, vector<1x128x128xbf16>
    %10 = vector.shape_cast %9 : vector<1x128x128xbf16> to vector<128x128xbf16>
    %cst = arith.constant dense<0.000000e+00> : vector<9x128xf32>
    %11 = tpu.matmul %4, %10, %cst {dimension_numbers = #tpu.dot_dimension_numbers<[1], [0], [0], [1], [0, 0, 1, 1], [], []>} : vector<9x128xbf16>, vector<128x128xbf16>, vector<9x128xf32> -> vector<9x128xf32>
    %12 = arith.addf %5, %11 : vector<9x128xf32>
    %c0_9 = arith.constant 0 : index
    %c0_10 = arith.constant 0 : index
    %13 = vector.load %arg8[%c0_9, %c0_10] : memref<9x128xf32, #tpu.memory_space<vmem>>, vector<9x128xf32>
    tpu.vector_store %arg8[%c0_9, %c0_10], %12 {strides = array<i32>} : memref<9x128xf32, #tpu.memory_space<vmem>>, vector<9x128xf32>,
    %c0_i32_11 = arith.constant 0 : i32
    %14 = arith.cmpi eq, %arg2, %c0_i32_11 : i32
    %15 = arith.extui %14 : i1 to i32
    %c0_i32_12 = arith.constant 0 : i32
    %16 = arith.cmpi ne, %15, %c0_i32_12 : i32
    scf.if %16 {
      %c0_13 = arith.constant 0 : index
      %c0_14 = arith.constant 0 : index
      %17 = vector.load %arg8[%c0_13, %c0_14] : memref<9x128xf32, #tpu.memory_space<vmem>>, vector<9x128xf32>
      %c0_15 = arith.constant 0 : index
      %c0_16 = arith.constant 0 : index
      %18 = vector.load %arg5[%c0_15, %c0_16] : memref<1x128xf32, #tpu.memory_space<vmem>>, vector<1x128xf32>
      %19 = vector.broadcast %18 : vector<1x128xf32> to vector<9x128xf32>
      %20 = arith.mulf %17, %19 : vector<9x128xf32>
      %c0_17 = arith.constant 0 : index
      %c0_18 = arith.constant 0 : index
      %21 = vector.load %arg6[%c0_17, %c0_18] : memref<1x128xf32, #tpu.memory_space<vmem>>, vector<1x128xf32>
      %22 = vector.broadcast %21 : vector<1x128xf32> to vector<9x128xf32>
      %23 = arith.addf %20, %22 : vector<9x128xf32>
      %24 = arith.truncf %23 : vector<9x128xf32> to vector<9x128xbf16>
      %c0_19 = arith.constant 0 : index
      %c0_20 = arith.constant 0 : index
      %c0_21 = arith.constant 0 : index
      %c0_22 = arith.constant 0 : index
      %25 = vector.load %arg7[%c0_19, %c0_20, %c0_21, %c0_22] : memref<1x1x9x128xbf16, #tpu.memory_space<vmem>>, vector<1x1x9x128xbf16>
      %26 = vector.shape_cast %25 : vector<1x1x9x128xbf16> to vector<9x128xbf16>
      %27 = vector.shape_cast %24 : vector<9x128xbf16> to vector<1x1x9x128xbf16>
      tpu.vector_store %arg7[%c0_19, %c0_20, %c0_21, %c0_22], %27 {strides = array<i32>} : memref<1x1x9x128xbf16, #tpu.memory_space<vmem>>, vector<1x1x9x128xbf16>,
    } else {
    }
    return
  }
  func.func @transform_0(%arg0: i32, %arg1: i32, %arg2: i32) -> (i32, i32, i32, i32) {
    %c1_i32 = arith.constant 1 : i32
    %0 = arith.muli %arg1, %c1_i32 : i32
    %1 = arith.addi %0, %arg2 : i32
    %c0_i32 = arith.constant 0 : i32
    %c0_i32_0 = arith.constant 0 : i32
    %c0_i32_1 = arith.constant 0 : i32
    return %arg0, %1, %c0_i32, %c0_i32_0 : i32, i32, i32, i32
  }
  func.func @transform_1(%arg0: i32, %arg1: i32, %arg2: i32) -> (i32, i32, i32) {
    %c0_i32 = arith.constant 0 : i32
    %c0_i32_0 = arith.constant 0 : i32
    %c0_i32_1 = arith.constant 0 : i32
    %c0_i32_2 = arith.constant 0 : i32
    return %c0_i32, %c0_i32_0, %c0_i32_1 : i32, i32, i32
  }
  func.func @transform_2(%arg0: i32, %arg1: i32, %arg2: i32) -> (i32, i32) {
    %c0_i32 = arith.constant 0 : i32
    %c0_i32_0 = arith.constant 0 : i32
    %c0_i32_1 = arith.constant 0 : i32
    return %c0_i32, %c0_i32_0 : i32, i32
  }
  func.func @transform_3(%arg0: i32, %arg1: i32, %arg2: i32) -> (i32, i32) {
    %c0_i32 = arith.constant 0 : i32
    %c0_i32_0 = arith.constant 0 : i32
    %c0_i32_1 = arith.constant 0 : i32
    return %c0_i32, %c0_i32_0 : i32, i32
  }
  func.func @transform_4(%arg0: i32, %arg1: i32, %arg2: i32) -> (i32, i32, i32, i32) {
    %c0_i32 = arith.constant 0 : i32
    %c0_i32_0 = arith.constant 0 : i32
    %c0_i32_1 = arith.constant 0 : i32
    return %arg0, %arg1, %c0_i32, %c0_i32_0 : i32, i32, i32, i32
  }
}

module attributes {stable_mosaic.version = 11 : i64} {
  func.func @_conv_bn_kernel(%arg0: i32, %arg1: i32, %arg2: i32, %arg3: memref<1x1x11x128xbf16, #tpu.memory_space<vmem>>, %arg4: memref<9x128x128xbf16, #tpu.memory_space<vmem>>, %arg5: memref<1x128xf32, #tpu.memory_space<vmem>>, %arg6: memref<1x128xf32, #tpu.memory_space<vmem>>, %arg7: memref<1x1x9x128xbf16, #tpu.memory_space<vmem>>, %arg8: memref<1x1x9x128xbf16, #tpu.memory_space<vmem>>, %arg9: memref<9x128xf32, #tpu.memory_space<vmem>>) attributes {dimension_semantics = [#tpu.dimension_semantics<parallel>, #tpu.dimension_semantics<parallel>, #tpu.dimension_semantics<arbitrary>], iteration_bounds = array<i64: 2, 4, 3>, scalar_prefetch = 0 : i64, scratch_operands = 1 : i64, tpu.core_type = #tpu.core_type<tc>, window_params = [{transform_indices = @transform_0, window_bounds = array<i64: 1, 1, 11, 128>}, {pipeline_mode = #tpu.pipeline_mode<synchronous>, transform_indices = @transform_1, window_bounds = array<i64: 9, 128, 128>}, {pipeline_mode = #tpu.pipeline_mode<synchronous>, transform_indices = @transform_2, window_bounds = array<i64: 1, 128>}, {pipeline_mode = #tpu.pipeline_mode<synchronous>, transform_indices = @transform_3, window_bounds = array<i64: 1, 128>}, {transform_indices = @transform_4, window_bounds = array<i64: 1, 1, 9, 128>}, {transform_indices = @transform_5, window_bounds = array<i64: 1, 1, 9, 128>}]} {
    %c0_i32 = arith.constant 0 : i32
    %0 = arith.cmpi eq, %arg2, %c0_i32 : i32
    %1 = arith.extui %0 : i1 to i32
    %c0_i32_0 = arith.constant 0 : i32
    %2 = arith.cmpi ne, %1, %c0_i32_0 : i32
    scf.if %2 {
      %cst_21 = arith.constant 0.000000e+00 : f32
      %34 = vector.broadcast %cst_21 : f32 to vector<9x128xf32>
      %c0_22 = arith.constant 0 : index
      %c0_23 = arith.constant 0 : index
      %35 = vector.load %arg9[%c0_22, %c0_23] : memref<9x128xf32, #tpu.memory_space<vmem>>, vector<9x128xf32>
      tpu.vector_store %arg9[%c0_22, %c0_23], %34 {strides = array<i32>} : memref<9x128xf32, #tpu.memory_space<vmem>>, vector<9x128xf32>,
    } else {
    }
    %c0 = arith.constant 0 : index
    %c0_1 = arith.constant 0 : index
    %c0_2 = arith.constant 0 : index
    %c0_3 = arith.constant 0 : index
    %3 = vector.load %arg3[%c0, %c0_1, %c0_2, %c0_3] : memref<1x1x11x128xbf16, #tpu.memory_space<vmem>>, vector<1x1x11x128xbf16>
    %4 = vector.shape_cast %3 : vector<1x1x11x128xbf16> to vector<11x128xbf16>
    %c0_4 = arith.constant 0 : index
    %c0_5 = arith.constant 0 : index
    %5 = vector.load %arg9[%c0_4, %c0_5] : memref<9x128xf32, #tpu.memory_space<vmem>>, vector<9x128xf32>
    %6 = vector.extract_strided_slice %4 {offsets = [0, 0], sizes = [9, 128], strides = [1, 1]} : vector<11x128xbf16> to vector<9x128xbf16>
    %c3_i32 = arith.constant 3 : i32
    %7 = arith.muli %arg2, %c3_i32 : i32
    %c0_i32_6 = arith.constant 0 : i32
    %8 = arith.addi %7, %c0_i32_6 : i32
    %9 = arith.index_cast %8 : i32 to index
    %c0_7 = arith.constant 0 : index
    %c0_8 = arith.constant 0 : index
    %10 = vector.load %arg4[%9, %c0_7, %c0_8] : memref<9x128x128xbf16, #tpu.memory_space<vmem>>, vector<1x128x128xbf16>
    %11 = vector.shape_cast %10 : vector<1x128x128xbf16> to vector<128x128xbf16>
    %cst = arith.constant dense<0.000000e+00> : vector<9x128xf32>
    %12 = tpu.matmul %6, %11, %cst {dimension_numbers = #tpu.dot_dimension_numbers<[1], [0], [0], [1], [0, 0, 1, 1], [], []>} : vector<9x128xbf16>, vector<128x128xbf16>, vector<9x128xf32> -> vector<9x128xf32>
    %13 = arith.addf %5, %12 : vector<9x128xf32>
    %14 = vector.extract_strided_slice %4 {offsets = [1, 0], sizes = [9, 128], strides = [1, 1]} : vector<11x128xbf16> to vector<9x128xbf16>
    %c3_i32_9 = arith.constant 3 : i32
    %15 = arith.muli %arg2, %c3_i32_9 : i32
    %c1_i32 = arith.constant 1 : i32
    %16 = arith.addi %15, %c1_i32 : i32
    %17 = arith.index_cast %16 : i32 to index
    %c0_10 = arith.constant 0 : index
    %c0_11 = arith.constant 0 : index
    %18 = vector.load %arg4[%17, %c0_10, %c0_11] : memref<9x128x128xbf16, #tpu.memory_space<vmem>>, vector<1x128x128xbf16>
    %19 = vector.shape_cast %18 : vector<1x128x128xbf16> to vector<128x128xbf16>
    %cst_12 = arith.constant dense<0.000000e+00> : vector<9x128xf32>
    %20 = tpu.matmul %14, %19, %cst_12 {dimension_numbers = #tpu.dot_dimension_numbers<[1], [0], [0], [1], [0, 0, 1, 1], [], []>} : vector<9x128xbf16>, vector<128x128xbf16>, vector<9x128xf32> -> vector<9x128xf32>
    %21 = arith.addf %13, %20 : vector<9x128xf32>
    %22 = vector.extract_strided_slice %4 {offsets = [2, 0], sizes = [9, 128], strides = [1, 1]} : vector<11x128xbf16> to vector<9x128xbf16>
    %c3_i32_13 = arith.constant 3 : i32
    %23 = arith.muli %arg2, %c3_i32_13 : i32
    %c2_i32 = arith.constant 2 : i32
    %24 = arith.addi %23, %c2_i32 : i32
    %25 = arith.index_cast %24 : i32 to index
    %c0_14 = arith.constant 0 : index
    %c0_15 = arith.constant 0 : index
    %26 = vector.load %arg4[%25, %c0_14, %c0_15] : memref<9x128x128xbf16, #tpu.memory_space<vmem>>, vector<1x128x128xbf16>
    %27 = vector.shape_cast %26 : vector<1x128x128xbf16> to vector<128x128xbf16>
    %cst_16 = arith.constant dense<0.000000e+00> : vector<9x128xf32>
    %28 = tpu.matmul %22, %27, %cst_16 {dimension_numbers = #tpu.dot_dimension_numbers<[1], [0], [0], [1], [0, 0, 1, 1], [], []>} : vector<9x128xbf16>, vector<128x128xbf16>, vector<9x128xf32> -> vector<9x128xf32>
    %29 = arith.addf %21, %28 : vector<9x128xf32>
    %c0_17 = arith.constant 0 : index
    %c0_18 = arith.constant 0 : index
    %30 = vector.load %arg9[%c0_17, %c0_18] : memref<9x128xf32, #tpu.memory_space<vmem>>, vector<9x128xf32>
    tpu.vector_store %arg9[%c0_17, %c0_18], %29 {strides = array<i32>} : memref<9x128xf32, #tpu.memory_space<vmem>>, vector<9x128xf32>,
    %c2_i32_19 = arith.constant 2 : i32
    %31 = arith.cmpi eq, %arg2, %c2_i32_19 : i32
    %32 = arith.extui %31 : i1 to i32
    %c0_i32_20 = arith.constant 0 : i32
    %33 = arith.cmpi ne, %32, %c0_i32_20 : i32
    scf.if %33 {
      %c0_21 = arith.constant 0 : index
      %c0_22 = arith.constant 0 : index
      %34 = vector.load %arg9[%c0_21, %c0_22] : memref<9x128xf32, #tpu.memory_space<vmem>>, vector<9x128xf32>
      %c0_23 = arith.constant 0 : index
      %c0_24 = arith.constant 0 : index
      %35 = vector.load %arg5[%c0_23, %c0_24] : memref<1x128xf32, #tpu.memory_space<vmem>>, vector<1x128xf32>
      %36 = vector.broadcast %35 : vector<1x128xf32> to vector<9x128xf32>
      %37 = arith.mulf %34, %36 : vector<9x128xf32>
      %c0_25 = arith.constant 0 : index
      %c0_26 = arith.constant 0 : index
      %38 = vector.load %arg6[%c0_25, %c0_26] : memref<1x128xf32, #tpu.memory_space<vmem>>, vector<1x128xf32>
      %39 = vector.broadcast %38 : vector<1x128xf32> to vector<9x128xf32>
      %40 = arith.addf %37, %39 : vector<9x128xf32>
      %c0_27 = arith.constant 0 : index
      %c0_28 = arith.constant 0 : index
      %c0_29 = arith.constant 0 : index
      %c0_30 = arith.constant 0 : index
      %41 = vector.load %arg7[%c0_27, %c0_28, %c0_29, %c0_30] : memref<1x1x9x128xbf16, #tpu.memory_space<vmem>>, vector<1x1x9x128xbf16>
      %42 = vector.shape_cast %41 : vector<1x1x9x128xbf16> to vector<9x128xbf16>
      %43 = arith.extf %42 : vector<9x128xbf16> to vector<9x128xf32>
      %44 = arith.addf %40, %43 : vector<9x128xf32>
      %cst_31 = arith.constant 0.000000e+00 : f32
      %45 = vector.broadcast %cst_31 : f32 to vector<9x128xf32>
      %46 = arith.maximumf %44, %45 : vector<9x128xf32>
      %47 = arith.truncf %46 : vector<9x128xf32> to vector<9x128xbf16>
      %c0_32 = arith.constant 0 : index
      %c0_33 = arith.constant 0 : index
      %c0_34 = arith.constant 0 : index
      %c0_35 = arith.constant 0 : index
      %48 = vector.load %arg8[%c0_32, %c0_33, %c0_34, %c0_35] : memref<1x1x9x128xbf16, #tpu.memory_space<vmem>>, vector<1x1x9x128xbf16>
      %49 = vector.shape_cast %48 : vector<1x1x9x128xbf16> to vector<9x128xbf16>
      %50 = vector.shape_cast %47 : vector<9x128xbf16> to vector<1x1x9x128xbf16>
      tpu.vector_store %arg8[%c0_32, %c0_33, %c0_34, %c0_35], %50 {strides = array<i32>} : memref<1x1x9x128xbf16, #tpu.memory_space<vmem>>, vector<1x1x9x128xbf16>,
    } else {
    }
    return
  }
  func.func @transform_0(%arg0: i32, %arg1: i32, %arg2: i32) -> (i32, i32, i32, i32) {
    %c1_i32 = arith.constant 1 : i32
    %0 = arith.muli %arg1, %c1_i32 : i32
    %1 = arith.addi %0, %arg2 : i32
    %c0_i32 = arith.constant 0 : i32
    %c0_i32_0 = arith.constant 0 : i32
    %c0_i32_1 = arith.constant 0 : i32
    return %arg0, %1, %c0_i32, %c0_i32_0 : i32, i32, i32, i32
  }
  func.func @transform_1(%arg0: i32, %arg1: i32, %arg2: i32) -> (i32, i32, i32) {
    %c0_i32 = arith.constant 0 : i32
    %c0_i32_0 = arith.constant 0 : i32
    %c0_i32_1 = arith.constant 0 : i32
    %c0_i32_2 = arith.constant 0 : i32
    return %c0_i32, %c0_i32_0, %c0_i32_1 : i32, i32, i32
  }
  func.func @transform_2(%arg0: i32, %arg1: i32, %arg2: i32) -> (i32, i32) {
    %c0_i32 = arith.constant 0 : i32
    %c0_i32_0 = arith.constant 0 : i32
    %c0_i32_1 = arith.constant 0 : i32
    return %c0_i32, %c0_i32_0 : i32, i32
  }
  func.func @transform_3(%arg0: i32, %arg1: i32, %arg2: i32) -> (i32, i32) {
    %c0_i32 = arith.constant 0 : i32
    %c0_i32_0 = arith.constant 0 : i32
    %c0_i32_1 = arith.constant 0 : i32
    return %c0_i32, %c0_i32_0 : i32, i32
  }
  func.func @transform_4(%arg0: i32, %arg1: i32, %arg2: i32) -> (i32, i32, i32, i32) {
    %c0_i32 = arith.constant 0 : i32
    %c0_i32_0 = arith.constant 0 : i32
    %c0_i32_1 = arith.constant 0 : i32
    return %arg0, %arg1, %c0_i32, %c0_i32_0 : i32, i32, i32, i32
  }
  func.func @transform_5(%arg0: i32, %arg1: i32, %arg2: i32) -> (i32, i32, i32, i32) {
    %c0_i32 = arith.constant 0 : i32
    %c0_i32_0 = arith.constant 0 : i32
    %c0_i32_1 = arith.constant 0 : i32
    return %arg0, %arg1, %c0_i32, %c0_i32_0 : i32, i32, i32, i32
  }
}

module attributes {stable_mosaic.version = 11 : i64} {
  func.func @_conv_bn_kernel(%arg0: i32, %arg1: i32, %arg2: i32, %arg3: memref<1x1x11x128xbf16, #tpu.memory_space<vmem>>, %arg4: memref<4x128x128xbf16, #tpu.memory_space<vmem>>, %arg5: memref<1x128xf32, #tpu.memory_space<vmem>>, %arg6: memref<1x128xf32, #tpu.memory_space<vmem>>, %arg7: memref<1x1x10x128xbf16, #tpu.memory_space<vmem>>, %arg8: memref<10x128xf32, #tpu.memory_space<vmem>>) attributes {dimension_semantics = [#tpu.dimension_semantics<parallel>, #tpu.dimension_semantics<parallel>, #tpu.dimension_semantics<arbitrary>], iteration_bounds = array<i64: 2, 2, 2>, scalar_prefetch = 0 : i64, scratch_operands = 1 : i64, tpu.core_type = #tpu.core_type<tc>, window_params = [{transform_indices = @transform_0, window_bounds = array<i64: 1, 1, 11, 128>}, {pipeline_mode = #tpu.pipeline_mode<synchronous>, transform_indices = @transform_1, window_bounds = array<i64: 4, 128, 128>}, {pipeline_mode = #tpu.pipeline_mode<synchronous>, transform_indices = @transform_2, window_bounds = array<i64: 1, 128>}, {pipeline_mode = #tpu.pipeline_mode<synchronous>, transform_indices = @transform_3, window_bounds = array<i64: 1, 128>}, {transform_indices = @transform_4, window_bounds = array<i64: 1, 1, 10, 128>}]} {
    %c0_i32 = arith.constant 0 : i32
    %0 = arith.cmpi eq, %arg2, %c0_i32 : i32
    %1 = arith.extui %0 : i1 to i32
    %c0_i32_0 = arith.constant 0 : i32
    %2 = arith.cmpi ne, %1, %c0_i32_0 : i32
    scf.if %2 {
      %cst_17 = arith.constant 0.000000e+00 : f32
      %26 = vector.broadcast %cst_17 : f32 to vector<10x128xf32>
      %c0_18 = arith.constant 0 : index
      %c0_19 = arith.constant 0 : index
      %27 = vector.load %arg8[%c0_18, %c0_19] : memref<10x128xf32, #tpu.memory_space<vmem>>, vector<10x128xf32>
      tpu.vector_store %arg8[%c0_18, %c0_19], %26 {strides = array<i32>} : memref<10x128xf32, #tpu.memory_space<vmem>>, vector<10x128xf32>,
    } else {
    }
    %c0 = arith.constant 0 : index
    %c0_1 = arith.constant 0 : index
    %c0_2 = arith.constant 0 : index
    %c0_3 = arith.constant 0 : index
    %3 = vector.load %arg3[%c0, %c0_1, %c0_2, %c0_3] : memref<1x1x11x128xbf16, #tpu.memory_space<vmem>>, vector<1x1x11x128xbf16>
    %4 = vector.shape_cast %3 : vector<1x1x11x128xbf16> to vector<11x128xbf16>
    %c0_4 = arith.constant 0 : index
    %c0_5 = arith.constant 0 : index
    %5 = vector.load %arg8[%c0_4, %c0_5] : memref<10x128xf32, #tpu.memory_space<vmem>>, vector<10x128xf32>
    %6 = vector.extract_strided_slice %4 {offsets = [0, 0], sizes = [10, 128], strides = [1, 1]} : vector<11x128xbf16> to vector<10x128xbf16>
    %c2_i32 = arith.constant 2 : i32
    %7 = arith.muli %arg2, %c2_i32 : i32
    %c0_i32_6 = arith.constant 0 : i32
    %8 = arith.addi %7, %c0_i32_6 : i32
    %9 = arith.index_cast %8 : i32 to index
    %c0_7 = arith.constant 0 : index
    %c0_8 = arith.constant 0 : index
    %10 = vector.load %arg4[%9, %c0_7, %c0_8] : memref<4x128x128xbf16, #tpu.memory_space<vmem>>, vector<1x128x128xbf16>
    %11 = vector.shape_cast %10 : vector<1x128x128xbf16> to vector<128x128xbf16>
    %cst = arith.constant dense<0.000000e+00> : vector<10x128xf32>
    %12 = tpu.matmul %6, %11, %cst {dimension_numbers = #tpu.dot_dimension_numbers<[1], [0], [0], [1], [0, 0, 1, 1], [], []>} : vector<10x128xbf16>, vector<128x128xbf16>, vector<10x128xf32> -> vector<10x128xf32>
    %13 = arith.addf %5, %12 : vector<10x128xf32>
    %14 = vector.extract_strided_slice %4 {offsets = [1, 0], sizes = [10, 128], strides = [1, 1]} : vector<11x128xbf16> to vector<10x128xbf16>
    %c2_i32_9 = arith.constant 2 : i32
    %15 = arith.muli %arg2, %c2_i32_9 : i32
    %c1_i32 = arith.constant 1 : i32
    %16 = arith.addi %15, %c1_i32 : i32
    %17 = arith.index_cast %16 : i32 to index
    %c0_10 = arith.constant 0 : index
    %c0_11 = arith.constant 0 : index
    %18 = vector.load %arg4[%17, %c0_10, %c0_11] : memref<4x128x128xbf16, #tpu.memory_space<vmem>>, vector<1x128x128xbf16>
    %19 = vector.shape_cast %18 : vector<1x128x128xbf16> to vector<128x128xbf16>
    %cst_12 = arith.constant dense<0.000000e+00> : vector<10x128xf32>
    %20 = tpu.matmul %14, %19, %cst_12 {dimension_numbers = #tpu.dot_dimension_numbers<[1], [0], [0], [1], [0, 0, 1, 1], [], []>} : vector<10x128xbf16>, vector<128x128xbf16>, vector<10x128xf32> -> vector<10x128xf32>
    %21 = arith.addf %13, %20 : vector<10x128xf32>
    %c0_13 = arith.constant 0 : index
    %c0_14 = arith.constant 0 : index
    %22 = vector.load %arg8[%c0_13, %c0_14] : memref<10x128xf32, #tpu.memory_space<vmem>>, vector<10x128xf32>
    tpu.vector_store %arg8[%c0_13, %c0_14], %21 {strides = array<i32>} : memref<10x128xf32, #tpu.memory_space<vmem>>, vector<10x128xf32>,
    %c1_i32_15 = arith.constant 1 : i32
    %23 = arith.cmpi eq, %arg2, %c1_i32_15 : i32
    %24 = arith.extui %23 : i1 to i32
    %c0_i32_16 = arith.constant 0 : i32
    %25 = arith.cmpi ne, %24, %c0_i32_16 : i32
    scf.if %25 {
      %c0_17 = arith.constant 0 : index
      %c0_18 = arith.constant 0 : index
      %26 = vector.load %arg8[%c0_17, %c0_18] : memref<10x128xf32, #tpu.memory_space<vmem>>, vector<10x128xf32>
      %c0_19 = arith.constant 0 : index
      %c0_20 = arith.constant 0 : index
      %27 = vector.load %arg5[%c0_19, %c0_20] : memref<1x128xf32, #tpu.memory_space<vmem>>, vector<1x128xf32>
      %28 = vector.broadcast %27 : vector<1x128xf32> to vector<10x128xf32>
      %29 = arith.mulf %26, %28 : vector<10x128xf32>
      %c0_21 = arith.constant 0 : index
      %c0_22 = arith.constant 0 : index
      %30 = vector.load %arg6[%c0_21, %c0_22] : memref<1x128xf32, #tpu.memory_space<vmem>>, vector<1x128xf32>
      %31 = vector.broadcast %30 : vector<1x128xf32> to vector<10x128xf32>
      %32 = arith.addf %29, %31 : vector<10x128xf32>
      %cst_23 = arith.constant 0.000000e+00 : f32
      %33 = vector.broadcast %cst_23 : f32 to vector<10x128xf32>
      %34 = arith.maximumf %32, %33 : vector<10x128xf32>
      %35 = arith.truncf %34 : vector<10x128xf32> to vector<10x128xbf16>
      %c0_24 = arith.constant 0 : index
      %c0_25 = arith.constant 0 : index
      %c0_26 = arith.constant 0 : index
      %c0_27 = arith.constant 0 : index
      %36 = vector.load %arg7[%c0_24, %c0_25, %c0_26, %c0_27] : memref<1x1x10x128xbf16, #tpu.memory_space<vmem>>, vector<1x1x10x128xbf16>
      %37 = vector.shape_cast %36 : vector<1x1x10x128xbf16> to vector<10x128xbf16>
      %38 = vector.shape_cast %35 : vector<10x128xbf16> to vector<1x1x10x128xbf16>
      tpu.vector_store %arg7[%c0_24, %c0_25, %c0_26, %c0_27], %38 {strides = array<i32>} : memref<1x1x10x128xbf16, #tpu.memory_space<vmem>>, vector<1x1x10x128xbf16>,
    } else {
    }
    return
  }
  func.func @transform_0(%arg0: i32, %arg1: i32, %arg2: i32) -> (i32, i32, i32, i32) {
    %c2_i32 = arith.constant 2 : i32
    %0 = arith.muli %arg1, %c2_i32 : i32
    %1 = arith.addi %0, %arg2 : i32
    %c0_i32 = arith.constant 0 : i32
    %c0_i32_0 = arith.constant 0 : i32
    %c0_i32_1 = arith.constant 0 : i32
    return %arg0, %1, %c0_i32, %c0_i32_0 : i32, i32, i32, i32
  }
  func.func @transform_1(%arg0: i32, %arg1: i32, %arg2: i32) -> (i32, i32, i32) {
    %c0_i32 = arith.constant 0 : i32
    %c0_i32_0 = arith.constant 0 : i32
    %c0_i32_1 = arith.constant 0 : i32
    %c0_i32_2 = arith.constant 0 : i32
    return %c0_i32, %c0_i32_0, %c0_i32_1 : i32, i32, i32
  }
  func.func @transform_2(%arg0: i32, %arg1: i32, %arg2: i32) -> (i32, i32) {
    %c0_i32 = arith.constant 0 : i32
    %c0_i32_0 = arith.constant 0 : i32
    %c0_i32_1 = arith.constant 0 : i32
    return %c0_i32, %c0_i32_0 : i32, i32
  }
  func.func @transform_3(%arg0: i32, %arg1: i32, %arg2: i32) -> (i32, i32) {
    %c0_i32 = arith.constant 0 : i32
    %c0_i32_0 = arith.constant 0 : i32
    %c0_i32_1 = arith.constant 0 : i32
    return %c0_i32, %c0_i32_0 : i32, i32
  }
  func.func @transform_4(%arg0: i32, %arg1: i32, %arg2: i32) -> (i32, i32, i32, i32) {
    %c0_i32 = arith.constant 0 : i32
    %c0_i32_0 = arith.constant 0 : i32
    %c0_i32_1 = arith.constant 0 : i32
    return %arg0, %arg1, %c0_i32, %c0_i32_0 : i32, i32, i32, i32
  }
}

module attributes {stable_mosaic.version = 11 : i64} {
  func.func @_conv_bn_kernel(%arg0: i32, %arg1: i32, %arg2: i32, %arg3: memref<1x1x10x128xbf16, #tpu.memory_space<vmem>>, %arg4: memref<4x128x128xbf16, #tpu.memory_space<vmem>>, %arg5: memref<1x128xf32, #tpu.memory_space<vmem>>, %arg6: memref<1x128xf32, #tpu.memory_space<vmem>>, %arg7: memref<1x1x9x128xbf16, #tpu.memory_space<vmem>>, %arg8: memref<9x128xf32, #tpu.memory_space<vmem>>) attributes {dimension_semantics = [#tpu.dimension_semantics<parallel>, #tpu.dimension_semantics<parallel>, #tpu.dimension_semantics<arbitrary>], iteration_bounds = array<i64: 2, 1, 2>, scalar_prefetch = 0 : i64, scratch_operands = 1 : i64, tpu.core_type = #tpu.core_type<tc>, window_params = [{transform_indices = @transform_0, window_bounds = array<i64: 1, 1, 10, 128>}, {pipeline_mode = #tpu.pipeline_mode<synchronous>, transform_indices = @transform_1, window_bounds = array<i64: 4, 128, 128>}, {pipeline_mode = #tpu.pipeline_mode<synchronous>, transform_indices = @transform_2, window_bounds = array<i64: 1, 128>}, {pipeline_mode = #tpu.pipeline_mode<synchronous>, transform_indices = @transform_3, window_bounds = array<i64: 1, 128>}, {transform_indices = @transform_4, window_bounds = array<i64: 1, 1, 9, 128>}]} {
    %c0_i32 = arith.constant 0 : i32
    %0 = arith.cmpi eq, %arg2, %c0_i32 : i32
    %1 = arith.extui %0 : i1 to i32
    %c0_i32_0 = arith.constant 0 : i32
    %2 = arith.cmpi ne, %1, %c0_i32_0 : i32
    scf.if %2 {
      %cst_17 = arith.constant 0.000000e+00 : f32
      %26 = vector.broadcast %cst_17 : f32 to vector<9x128xf32>
      %c0_18 = arith.constant 0 : index
      %c0_19 = arith.constant 0 : index
      %27 = vector.load %arg8[%c0_18, %c0_19] : memref<9x128xf32, #tpu.memory_space<vmem>>, vector<9x128xf32>
      tpu.vector_store %arg8[%c0_18, %c0_19], %26 {strides = array<i32>} : memref<9x128xf32, #tpu.memory_space<vmem>>, vector<9x128xf32>,
    } else {
    }
    %c0 = arith.constant 0 : index
    %c0_1 = arith.constant 0 : index
    %c0_2 = arith.constant 0 : index
    %c0_3 = arith.constant 0 : index
    %3 = vector.load %arg3[%c0, %c0_1, %c0_2, %c0_3] : memref<1x1x10x128xbf16, #tpu.memory_space<vmem>>, vector<1x1x10x128xbf16>
    %4 = vector.shape_cast %3 : vector<1x1x10x128xbf16> to vector<10x128xbf16>
    %c0_4 = arith.constant 0 : index
    %c0_5 = arith.constant 0 : index
    %5 = vector.load %arg8[%c0_4, %c0_5] : memref<9x128xf32, #tpu.memory_space<vmem>>, vector<9x128xf32>
    %6 = vector.extract_strided_slice %4 {offsets = [0, 0], sizes = [9, 128], strides = [1, 1]} : vector<10x128xbf16> to vector<9x128xbf16>
    %c2_i32 = arith.constant 2 : i32
    %7 = arith.muli %arg2, %c2_i32 : i32
    %c0_i32_6 = arith.constant 0 : i32
    %8 = arith.addi %7, %c0_i32_6 : i32
    %9 = arith.index_cast %8 : i32 to index
    %c0_7 = arith.constant 0 : index
    %c0_8 = arith.constant 0 : index
    %10 = vector.load %arg4[%9, %c0_7, %c0_8] : memref<4x128x128xbf16, #tpu.memory_space<vmem>>, vector<1x128x128xbf16>
    %11 = vector.shape_cast %10 : vector<1x128x128xbf16> to vector<128x128xbf16>
    %cst = arith.constant dense<0.000000e+00> : vector<9x128xf32>
    %12 = tpu.matmul %6, %11, %cst {dimension_numbers = #tpu.dot_dimension_numbers<[1], [0], [0], [1], [0, 0, 1, 1], [], []>} : vector<9x128xbf16>, vector<128x128xbf16>, vector<9x128xf32> -> vector<9x128xf32>
    %13 = arith.addf %5, %12 : vector<9x128xf32>
    %14 = vector.extract_strided_slice %4 {offsets = [1, 0], sizes = [9, 128], strides = [1, 1]} : vector<10x128xbf16> to vector<9x128xbf16>
    %c2_i32_9 = arith.constant 2 : i32
    %15 = arith.muli %arg2, %c2_i32_9 : i32
    %c1_i32 = arith.constant 1 : i32
    %16 = arith.addi %15, %c1_i32 : i32
    %17 = arith.index_cast %16 : i32 to index
    %c0_10 = arith.constant 0 : index
    %c0_11 = arith.constant 0 : index
    %18 = vector.load %arg4[%17, %c0_10, %c0_11] : memref<4x128x128xbf16, #tpu.memory_space<vmem>>, vector<1x128x128xbf16>
    %19 = vector.shape_cast %18 : vector<1x128x128xbf16> to vector<128x128xbf16>
    %cst_12 = arith.constant dense<0.000000e+00> : vector<9x128xf32>
    %20 = tpu.matmul %14, %19, %cst_12 {dimension_numbers = #tpu.dot_dimension_numbers<[1], [0], [0], [1], [0, 0, 1, 1], [], []>} : vector<9x128xbf16>, vector<128x128xbf16>, vector<9x128xf32> -> vector<9x128xf32>
    %21 = arith.addf %13, %20 : vector<9x128xf32>
    %c0_13 = arith.constant 0 : index
    %c0_14 = arith.constant 0 : index
    %22 = vector.load %arg8[%c0_13, %c0_14] : memref<9x128xf32, #tpu.memory_space<vmem>>, vector<9x128xf32>
    tpu.vector_store %arg8[%c0_13, %c0_14], %21 {strides = array<i32>} : memref<9x128xf32, #tpu.memory_space<vmem>>, vector<9x128xf32>,
    %c1_i32_15 = arith.constant 1 : i32
    %23 = arith.cmpi eq, %arg2, %c1_i32_15 : i32
    %24 = arith.extui %23 : i1 to i32
    %c0_i32_16 = arith.constant 0 : i32
    %25 = arith.cmpi ne, %24, %c0_i32_16 : i32
    scf.if %25 {
      %c0_17 = arith.constant 0 : index
      %c0_18 = arith.constant 0 : index
      %26 = vector.load %arg8[%c0_17, %c0_18] : memref<9x128xf32, #tpu.memory_space<vmem>>, vector<9x128xf32>
      %c0_19 = arith.constant 0 : index
      %c0_20 = arith.constant 0 : index
      %27 = vector.load %arg5[%c0_19, %c0_20] : memref<1x128xf32, #tpu.memory_space<vmem>>, vector<1x128xf32>
      %28 = vector.broadcast %27 : vector<1x128xf32> to vector<9x128xf32>
      %29 = arith.mulf %26, %28 : vector<9x128xf32>
      %c0_21 = arith.constant 0 : index
      %c0_22 = arith.constant 0 : index
      %30 = vector.load %arg6[%c0_21, %c0_22] : memref<1x128xf32, #tpu.memory_space<vmem>>, vector<1x128xf32>
      %31 = vector.broadcast %30 : vector<1x128xf32> to vector<9x128xf32>
      %32 = arith.addf %29, %31 : vector<9x128xf32>
      %cst_23 = arith.constant 0.000000e+00 : f32
      %33 = vector.broadcast %cst_23 : f32 to vector<9x128xf32>
      %34 = arith.maximumf %32, %33 : vector<9x128xf32>
      %35 = arith.truncf %34 : vector<9x128xf32> to vector<9x128xbf16>
      %c0_24 = arith.constant 0 : index
      %c0_25 = arith.constant 0 : index
      %c0_26 = arith.constant 0 : index
      %c0_27 = arith.constant 0 : index
      %36 = vector.load %arg7[%c0_24, %c0_25, %c0_26, %c0_27] : memref<1x1x9x128xbf16, #tpu.memory_space<vmem>>, vector<1x1x9x128xbf16>
      %37 = vector.shape_cast %36 : vector<1x1x9x128xbf16> to vector<9x128xbf16>
      %38 = vector.shape_cast %35 : vector<9x128xbf16> to vector<1x1x9x128xbf16>
      tpu.vector_store %arg7[%c0_24, %c0_25, %c0_26, %c0_27], %38 {strides = array<i32>} : memref<1x1x9x128xbf16, #tpu.memory_space<vmem>>, vector<1x1x9x128xbf16>,
    } else {
    }
    return
  }
  func.func @transform_0(%arg0: i32, %arg1: i32, %arg2: i32) -> (i32, i32, i32, i32) {
    %c1_i32 = arith.constant 1 : i32
    %0 = arith.muli %arg1, %c1_i32 : i32
    %1 = arith.addi %0, %arg2 : i32
    %c0_i32 = arith.constant 0 : i32
    %c0_i32_0 = arith.constant 0 : i32
    %c0_i32_1 = arith.constant 0 : i32
    return %arg0, %1, %c0_i32, %c0_i32_0 : i32, i32, i32, i32
  }
  func.func @transform_1(%arg0: i32, %arg1: i32, %arg2: i32) -> (i32, i32, i32) {
    %c0_i32 = arith.constant 0 : i32
    %c0_i32_0 = arith.constant 0 : i32
    %c0_i32_1 = arith.constant 0 : i32
    %c0_i32_2 = arith.constant 0 : i32
    return %c0_i32, %c0_i32_0, %c0_i32_1 : i32, i32, i32
  }
  func.func @transform_2(%arg0: i32, %arg1: i32, %arg2: i32) -> (i32, i32) {
    %c0_i32 = arith.constant 0 : i32
    %c0_i32_0 = arith.constant 0 : i32
    %c0_i32_1 = arith.constant 0 : i32
    return %c0_i32, %c0_i32_0 : i32, i32
  }
  func.func @transform_3(%arg0: i32, %arg1: i32, %arg2: i32) -> (i32, i32) {
    %c0_i32 = arith.constant 0 : i32
    %c0_i32_0 = arith.constant 0 : i32
    %c0_i32_1 = arith.constant 0 : i32
    return %c0_i32, %c0_i32_0 : i32, i32
  }
  func.func @transform_4(%arg0: i32, %arg1: i32, %arg2: i32) -> (i32, i32, i32, i32) {
    %c0_i32 = arith.constant 0 : i32
    %c0_i32_0 = arith.constant 0 : i32
    %c0_i32_1 = arith.constant 0 : i32
    return %arg0, %arg1, %c0_i32, %c0_i32_0 : i32, i32, i32, i32
  }
}

</mosaic_0001>

<llo_original>
// kernel: resnet_forward.21
$region0: #{resnet_forward.21}
  #allocation0 [shape = 'u32[]', space=smem, size = 0x4, offset = 0x4, fixed_abs, tag = 'smem constant byte address 0x4 - core index']
  #allocation1 [shape = 'u32[144,128]{1,0:T(1,128)}', space=vmem, size = 0x12000, scoped, tag = 'internal scratch']
  #allocation2 [shape = 'f32[32,128]{1,0:T(8,128)}', space=vmem, size = 0x4000, scoped, tag = 'scratch operand']
  %s0 = inlined_call_operand.vmem [shape: bf16[2,34,34,128], index: 0, kind: input, shape index: {}]
  %s1 = inlined_call_operand.vmem [shape: bf16[9,128,128], index: 1, kind: input, shape index: {}]
  %s2 = inlined_call_operand.vmem [shape: f32[1,128], index: 2, kind: input, shape index: {}]
  %s3 = inlined_call_operand.vmem [shape: f32[1,128], index: 3, kind: input, shape index: {}]
  %s4 = inlined_call_operand.vmem [shape: bf16[2,32,32,128], index: 4, kind: output, shape index: {}]
  %s5 = sld [smem:[#allocation0]]
  $region57: #{resnet_forward.21} parent=0
    _
  %s7 = ssub.s32 1, %s5
  %s8 = scalar_select 0, %s7, %s5
  loop: start=0, step=1, limit=194
  $region2: #{resnet_forward.21} parent=0 // loop_pre_header
    _
  $region3: #{resnet_forward.21} parent=0 // loop_header
    %s10 = sphi 0, %s14
    %p11 = scmp.ge.s32.totalorder %s10, 194
    %s17 = sphi 0, %s36
    %s18 = sphi 0, %s32
    %s19 = sphi 0, %s28
    %s20 = sphi 0, %s17
    %s21 = sphi 0, %s18
    %s22 = sphi 0, %s19
    %s23 = sphi 0, %s20
    %s24 = sphi 0, %s21
    %s25 = sphi 0, %s22
    %s43 = sphi 0, %s45
    %s46 = sphi 0, %s43
    %s47 = sphi 0, %s46
    %s63 = sphi 0, %s47
    %s67 = sphi 0, %s67
    %s69 = sphi 0, %s67
    %s70 = sphi 0, %s69
    %s84 = sphi 0, %s70
    %s88 = sphi 0, %s88
    %s90 = sphi 0, %s88
    %s91 = sphi 0, %s90
    %s105 = sphi 0, %s91
    %s109 = sphi 0, %s109
    %s111 = sphi 0, %s109
    %s112 = sphi 0, %s111
    %s126 = sphi 0, %s112
    %s134 = sphi 0, %s136
    %s137 = sphi 0, %s134
    %s138 = sphi 0, %s137
    %s154 = sphi 0, %s138
  $region4: #{resnet_forward.21} parent=0 // loop_header_branch
    %13 = sbr.rel (%p11) target = $region8
  $region5: #{resnet_forward.21} parent=0 // loop_body
    %s15 = ssub.s32 %s10, 1
    %s16 = ssub.s32 %s10, 2
    %s26 = sadd.s32 1, %s19
    %p27 = scmp.ge.s32.totalorder %s26, 3
    %s28 = scalar_select %p27, 0, %s26
    %s29 = sadd.s32 1, %s18
    %s30 = scalar_select %p27, %s29, %s18
    %p31 = scmp.ge.s32.totalorder %s30, 32
    %s32 = scalar_select %p31, 0, %s30
    %s33 = sadd.s32 1, %s17
    %s34 = scalar_select %p31, %s33, %s17
    %p35 = scmp.ge.s32.totalorder %s34, 2
    %s36 = scalar_select %p35, 0, %s34
    %s37 = sadd.s32 %s18, %s19
    %s38 = sadd.s32 %s32, %s28
    %s39 = ssub.s32 %s17, %s36
    %s40 = ssub.s32 %s37, %s38
    %s41 = sor.u32 %s39, %s40
    %p42 = scmp.eq.s32.totalorder %s41, 0
    %s44 = sadd.s32 %s43, 1
    %s45 = scalar_select %p42, %s43, %s44
    %p48 = pneg %p42
    %p49 = scmp.eq.s32.totalorder %s10, 191
    %p50 = por %p48, %p49
    %p51 = scmp.ne.s32.totalorder %s43, %s46
    %p52 = scmp.eq.s32.totalorder %s10, 0
    %p53 = por %p51, %p52
    %p54 = scmp.ne.s32.totalorder %s43, %s46
    %p55 = scmp.eq.s32.totalorder %s15, 191
    %p56 = por %p54, %p55
    %p57 = scmp.ne.s32.totalorder %s46, %s47
    %p58 = scmp.eq.s32.totalorder %s15, 0
    %p59 = por %p57, %p58
    %p60 = scmp.ne.s32.totalorder %s46, %s47
    %p61 = scmp.eq.s32.totalorder %s16, 191
    %p62 = por %p60, %p61
    %p64 = scmp.ne.s32.totalorder %s47, %s63
    %p65 = scmp.eq.s32.totalorder %s16, 0
    %p66 = por %p64, %p65
    %s68 = sadd.s32 %s67, 1
    %p71 = scmp.eq.s32.totalorder %s10, 191
    %p72 = scmp.ne.s32.totalorder %s67, %s69
    %p73 = scmp.eq.s32.totalorder %s10, 0
    %p74 = por %p72, %p73
    %p75 = scmp.ne.s32.totalorder %s67, %s69
    %p76 = scmp.eq.s32.totalorder %s15, 191
    %p77 = por %p75, %p76
    %p78 = scmp.ne.s32.totalorder %s69, %s70
    %p79 = scmp.eq.s32.totalorder %s15, 0
    %p80 = por %p78, %p79
    %p81 = scmp.ne.s32.totalorder %s69, %s70
    %p82 = scmp.eq.s32.totalorder %s16, 191
    %p83 = por %p81, %p82
    %p85 = scmp.ne.s32.totalorder %s70, %s84
    %p86 = scmp.eq.s32.totalorder %s16, 0
    %p87 = por %p85, %p86
    %s89 = sadd.s32 %s88, 1
    %p92 = scmp.eq.s32.totalorder %s10, 191
    %p93 = scmp.ne.s32.totalorder %s88, %s90
    %p94 = scmp.eq.s32.totalorder %s10, 0
    %p95 = por %p93, %p94
    %p96 = scmp.ne.s32.totalorder %s88, %s90
    %p97 = scmp.eq.s32.totalorder %s15, 191
    %p98 = por %p96, %p97
    %p99 = scmp.ne.s32.totalorder %s90, %s91
    %p100 = scmp.eq.s32.totalorder %s15, 0
    %p101 = por %p99, %p100
    %p102 = scmp.ne.s32.totalorder %s90, %s91
    %p103 = scmp.eq.s32.totalorder %s16, 191
    %p104 = por %p102, %p103
    %p106 = scmp.ne.s32.totalorder %s91, %s105
    %p107 = scmp.eq.s32.totalorder %s16, 0
    %p108 = por %p106, %p107
    %s110 = sadd.s32 %s109, 1
    %p113 = scmp.eq.s32.totalorder %s10, 191
    %p114 = scmp.ne.s32.totalorder %s109, %s111
    %p115 = scmp.eq.s32.totalorder %s10, 0
    %p116 = por %p114, %p115
    %p117 = scmp.ne.s32.totalorder %s109, %s111
    %p118 = scmp.eq.s32.totalorder %s15, 191
    %p119 = por %p117, %p118
    %p120 = scmp.ne.s32.totalorder %s111, %s112
    %p121 = scmp.eq.s32.totalorder %s15, 0
    %p122 = por %p120, %p121
    %p123 = scmp.ne.s32.totalorder %s111, %s112
    %p124 = scmp.eq.s32.totalorder %s16, 191
    %p125 = por %p123, %p124
    %p127 = scmp.ne.s32.totalorder %s112, %s126
    %p128 = scmp.eq.s32.totalorder %s16, 0
    %p129 = por %p127, %p128
    %s130 = ssub.s32 %s17, %s36
    %s131 = ssub.s32 %s18, %s32
    %s132 = sor.u32 %s130, %s131
    %p133 = scmp.eq.s32.totalorder %s132, 0
    %s135 = sadd.s32 %s134, 1
    %s136 = scalar_select %p133, %s134, %s135
    %p139 = pneg %p133
    %p140 = scmp.eq.s32.totalorder %s10, 191
    %p141 = por %p139, %p140
    %p142 = scmp.ne.s32.totalorder %s134, %s137
    %p143 = scmp.eq.s32.totalorder %s10, 0
    %p144 = por %p142, %p143
    %p145 = scmp.ne.s32.totalorder %s134, %s137
    %p146 = scmp.eq.s32.totalorder %s15, 191
    %p147 = por %p145, %p146
    %p148 = scmp.ne.s32.totalorder %s137, %s138
    %p149 = scmp.eq.s32.totalorder %s15, 0
    %p150 = por %p148, %p149
    %p151 = scmp.ne.s32.totalorder %s137, %s138
    %p152 = scmp.eq.s32.totalorder %s16, 191
    %p153 = por %p151, %p152
    %p155 = scmp.ne.s32.totalorder %s138, %s154
    %p156 = scmp.eq.s32.totalorder %s16, 0
    %p157 = por %p155, %p156
    %p158 = scmp.le.s32.totalorder 1, %s10
    %p159 = scmp.lt.s32.totalorder %s10, 193
    %p160 = pnand %p158, %p159
    %p161 = pneg %p160
    // Predicated region
    $region9: #{resnet_forward.21} parent=5 // pred_check
      _
    $region10: #{resnet_forward.21} parent=5 // pred_check_branch
      %163 = sbr.rel (%p160) target = $region12
    $region11: #{resnet_forward.21} parent=5 // pred_region
      %s164 = ssub.s32 %s10, 1
      // Predicated region
      $region13: #{resnet_forward.21} parent=11 // pred_check
        %p165 = pneg %p80
      $region14: #{resnet_forward.21} parent=11 // pred_check_branch
        %167 = sbr.rel (%p165) target = $region16
      $region15: #{resnet_forward.21} parent=11 // pred_region
        _
      $region16: #{resnet_forward.21} parent=11 // pred_fallthru
        _
      // Predicated region
      $region17: #{resnet_forward.21} parent=11 // pred_check
        %p168 = pneg %p101
      $region18: #{resnet_forward.21} parent=11 // pred_check_branch
        %170 = sbr.rel (%p168) target = $region20
      $region19: #{resnet_forward.21} parent=11 // pred_region
        _
      $region20: #{resnet_forward.21} parent=11 // pred_fallthru
        _
      // Predicated region
      $region21: #{resnet_forward.21} parent=11 // pred_check
        %p171 = pneg %p122
      $region22: #{resnet_forward.21} parent=11 // pred_check_branch
        %173 = sbr.rel (%p171) target = $region24
      $region23: #{resnet_forward.21} parent=11 // pred_region
        _
      $region24: #{resnet_forward.21} parent=11 // pred_fallthru
        _
    $region12: #{resnet_forward.21} parent=5 // pred_fallthru
      _
    %p174 = scmp.lt.s32.totalorder %s10, 192
    // Predicated region
    $region25: #{resnet_forward.21} parent=5 // pred_check
      %p175 = pneg %p174
    $region26: #{resnet_forward.21} parent=5 // pred_check_branch
      %177 = sbr.rel (%p175) target = $region28
    $region27: #{resnet_forward.21} parent=5 // pred_region
      // Predicated region
      $region29: #{resnet_forward.21} parent=27 // pred_check
        %p178 = pneg %p53
      $region30: #{resnet_forward.21} parent=27 // pred_check_branch
        %180 = sbr.rel (%p178) target = $region32
      $region31: #{resnet_forward.21} parent=27 // pred_region
        %s181 = sadd.s32 %s18, %s19
        %p182 = scmp.lt.s32.totalorder %s17, 1
        %s183 = scalar_select %p182, %s17, 1
        %p184 = scmp.lt.s32.totalorder %s181, 33
        %s185 = scalar_select %p184, %s181, 33
        %s186 = smul.addr %s185, 5
        %s187 = smul.addr %s183, 170
        %s188 = sadd.s32 %s186, %s187
        %s189 = smul.addr %s188, 4
        %s190 = scalar_lea.vmem %s0, %s189
        %s191 = sadd.s32 %s18, %s19
      $region32: #{resnet_forward.21} parent=27 // pred_fallthru
        _
    $region28: #{resnet_forward.21} parent=5 // pred_fallthru
      _
    %p192 = scmp.le.s32.totalorder 1, %s10
    %p193 = scmp.lt.s32.totalorder %s10, 193
    %p194 = pnand %p192, %p193
    %p195 = pneg %p194
    // Predicated region
    $region33: #{resnet_forward.21} parent=5 // pred_check
      _
    $region34: #{resnet_forward.21} parent=5 // pred_check_branch
      %197 = sbr.rel (%p194) target = $region36
    $region35: #{resnet_forward.21} parent=5 // pred_region
      %s198 = ssub.s32 %s10, 1
      %s199 = sadd.s32 %s21, %s22
      %p200 = scmp.lt.s32.totalorder %s20, 1
      %s201 = scalar_select %p200, %s20, 1
      %p202 = scmp.lt.s32.totalorder %s199, 33
      %s203 = scalar_select %p202, %s199, 33
      %s204 = smul.addr %s203, 5
      %s205 = smul.addr %s201, 170
      %s206 = sadd.s32 %s204, %s205
      %s207 = smul.addr %s206, 4
      %s208 = scalar_lea.vmem %s0, %s207
      %p209 = pneg %p59
      %p210 = pneg %p56
      %p211 = pneg %p80
      %p212 = pneg %p77
      %p213 = pneg %p101
      %p214 = pneg %p98
      %p215 = pneg %p122
      %p216 = pneg %p119
      %p217 = pneg %p150
      %p218 = pneg %p147
      %p219 = scmp.lt.s32.totalorder %s20, 1
      %s220 = scalar_select %p219, %s20, 1
      %p221 = scmp.lt.s32.totalorder %s21, 31
      %s222 = scalar_select %p221, %s21, 31
      %s223 = smul.addr %s222, 4
      %s224 = smul.addr %s220, 128
      %s225 = sadd.s32 %s223, %s224
      %s226 = smul.addr %s225, 4
      %s227 = scalar_lea.vmem %s4, %s226
      %s228 = sadd.s32 %s21, %s22
      %p229 = scmp.lt.s32.totalorder %s20, 1
      %s230 = scalar_select %p229, %s20, 1
      %p231 = scmp.lt.s32.totalorder %s228, 33
      %s232 = scalar_select %p231, %s228, 33
      %s233 = smul.addr %s232, 5
      %s234 = smul.addr %s230, 170
      %s235 = sadd.s32 %s233, %s234
      %s236 = smul.addr %s235, 4
      %s237 = scalar_lea.vmem %s0, %s236
      %s238 = sadd.s32 %s21, %s22
      %p239 = scmp.lt.s32.totalorder %s20, 1
      %s240 = scalar_select %p239, %s20, 1
      %p241 = scmp.lt.s32.totalorder %s21, 31
      %s242 = scalar_select %p241, %s21, 31
      %s243 = smul.addr %s242, 4
      %s244 = smul.addr %s240, 128
      %s245 = sadd.s32 %s243, %s244
      %s246 = smul.addr %s245, 4
      %s247 = scalar_lea.vmem %s4, %s246
      %p249 = scmp.eq.s32.totalorder %s22, 0
      // Predicated region
      $region37: #{resnet_forward.21} parent=35 // pred_check
        %p250 = pneg %p249
      $region38: #{resnet_forward.21} parent=35 // pred_check_branch
        %252 = sbr.rel (%p250) target = $region40
      $region39: #{resnet_forward.21} parent=35 // pred_region
        %253 = vst [vmem:[#allocation2] sm:$0xff] 0.0
        %254 = vst [vmem:[#allocation2 + $0x8] sm:$0xff] 0.0
        %255 = vst [vmem:[#allocation2 + $0x10] sm:$0xff] 0.0
        %256 = vst [vmem:[#allocation2 + $0x18] sm:$0xff] 0.0
      $region40: #{resnet_forward.21} parent=35 // pred_fallthru
        _
      %v257 = vld [vmem:[%s237] sm:$0xf]
      %v258 = vld [vmem:[%s237 + $0x4] sm:$0xf]
      %v259 = vld [vmem:[%s237 + $0x8] sm:$0xf]
      %v260 = vld [vmem:[%s237 + $0xc] sm:$0xf]
      %v261 = vld [vmem:[%s237 + $0x10] sm:$0x1]
      %v262 = vld [vmem:[#allocation2] sm:$0xff]
      %v263 = vld [vmem:[#allocation2 + $0x8] sm:$0xff]
      %v264 = vld [vmem:[#allocation2 + $0x10] sm:$0xff]
      %v265 = vld [vmem:[#allocation2 + $0x18] sm:$0xff]
      %s266 = smul.u32 %s22, 3
      %s267 = smul.u32 %s266, 16
      %s268 = smul.addr %s267, 4
      %s269 = scalar_lea.vmem %s1, %s268
      %v270 = vld [vmem:[%s269] sm:$0xf]
      %v271 = vld [vmem:[%s269 + $0x4] sm:$0xf]
      %v272 = vld [vmem:[%s269 + $0x8] sm:$0xf]
      %v273 = vld [vmem:[%s269 + $0xc] sm:$0xf]
      %v274 = vld [vmem:[%s269 + $0x10] sm:$0xf]
      %v275 = vld [vmem:[%s269 + $0x14] sm:$0xf]
      %v276 = vld [vmem:[%s269 + $0x18] sm:$0xf]
      %v277 = vld [vmem:[%s269 + $0x1c] sm:$0xf]
      %v278 = vld [vmem:[%s269 + $0x20] sm:$0xf]
      %v279 = vld [vmem:[%s269 + $0x24] sm:$0xf]
      %v280 = vld [vmem:[%s269 + $0x28] sm:$0xf]
      %v281 = vld [vmem:[%s269 + $0x2c] sm:$0xf]
      %v282 = vld [vmem:[%s269 + $0x30] sm:$0xf]
      %v283 = vld [vmem:[%s269 + $0x34] sm:$0xf]
      %v284 = vld [vmem:[%s269 + $0x38] sm:$0xf]
      %v285 = vld [vmem:[%s269 + $0x3c] sm:$0xf]
      %v290 = vunpack.c.l.b16 %v257
      %v291 = vunpack.c.l.b16 %v258
      %v292 = vunpack.c.l.b16 %v259
      %v293 = vunpack.c.l.b16 %v260
      %v294 = vpack.c.b16 %v291, %v290
      %v295 = vpack.c.b16 %v293, %v292
      %v314 = vunpack.c.l.b16 %v270
      %v315 = vunpack.c.l.b16 %v271
      %v316 = vunpack.c.l.b16 %v272
      %v317 = vunpack.c.l.b16 %v273
      %v318 = vunpack.c.l.b16 %v274
      %v319 = vunpack.c.l.b16 %v275
      %v320 = vunpack.c.l.b16 %v276
      %v321 = vunpack.c.l.b16 %v277
      %v322 = vunpack.c.l.b16 %v278
      %v323 = vunpack.c.l.b16 %v279
      %v324 = vunpack.c.l.b16 %v280
      %v325 = vunpack.c.l.b16 %v281
      %v326 = vunpack.c.l.b16 %v282
      %v327 = vunpack.c.l.b16 %v283
      %v328 = vunpack.c.l.b16 %v284
      %v329 = vunpack.c.l.b16 %v285
      %v330 = vpack.c.b16 %v315, %v314
      %v331 = vpack.c.b16 %v317, %v316
      %v332 = vpack.c.b16 %v319, %v318
      %v333 = vpack.c.b16 %v321, %v320
      %v334 = vpack.c.b16 %v323, %v322
      %v335 = vpack.c.b16 %v325, %v324
      %v336 = vpack.c.b16 %v327, %v326
      %v337 = vpack.c.b16 %v329, %v328
      %346 = vmatprep.subr.bf16.mxu0 0
      %347 = vmatpush1.bf16.msra.mxu0 %v337
      %348 = vmatprep.subr.bf16.mxu0 0
      %349 = vmatpush1.bf16.msra.mxu0 %v336
      %350 = vmatprep.subr.bf16.mxu0 0
      %351 = vmatpush1.bf16.msra.mxu0 %v335
      %352 = vmatprep.subr.bf16.mxu0 0
      %353 = vmatpush1.bf16.msra.mxu0 %v334
      %354 = vmatprep.subr.bf16.mxu0 0
      %355 = vmatpush1.bf16.msra.mxu0 %v333
      %356 = vmatprep.subr.bf16.mxu0 0
      %357 = vmatpush1.bf16.msra.mxu0 %v332
      %358 = vmatprep.subr.bf16.mxu0 0
      %359 = vmatpush1.bf16.msra.mxu0 %v331
      %360 = vmatprep.subr.bf16.mxu0 0
      %361 = vmatpush1.bf16.msra.mxu0 %v330
      %362 = vmatprep.subr.bf16.mxu0 0
      %363 = vmatpush2.bf16.msra.mxu0 0
      %364 = vmatprep.subr.bf16.mxu0 0
      %365 = vmatpush2.bf16.msra.mxu0 0
      %366 = vmatprep.subr.bf16.mxu0 0
      %367 = vmatpush2.bf16.msra.mxu0 0
      %368 = vmatprep.subr.bf16.mxu0 0
      %369 = vmatpush2.bf16.msra.mxu0 0
      %370 = vmatprep.subr.bf16.mxu0 0
      %371 = vmatpush2.bf16.msra.mxu0 0
      %372 = vmatprep.subr.bf16.mxu0 0
      %373 = vmatpush2.bf16.msra.mxu0 0
      %374 = vmatprep.subr.bf16.mxu0 0
      %375 = vmatpush2.bf16.msra.mxu0 0
      %376 = vmatprep.subr.bf16.mxu0 0
      %377 = vmatpush2.bf16.msra.mxu0 0
      %378 = vmatprep.mubr.bf16.mxu0 0
      %379 = vmatmul.mubr.bf16.gmra.mxu0 %v294
      %v380 = vpop.f32.mrf.mxu0
      %v381 = vadd.f32 0.0, %v380
      %v382 = vpop.f32.mrf.mxu0
      %v383 = vpop.f32.mrf.mxu0
      %v384 = vadd.f32 0.0, %v383
      %v385 = vpop.f32.mrf.mxu0
      %386 = vmatprep.mubr.bf16.mxu0 0
      %387 = vmatmul.mubr.bf16.gmra.mxu0 %v295
      %v388 = vpop.f32.mrf.mxu0
      %v389 = vadd.f32 0.0, %v388
      %v390 = vpop.f32.mrf.mxu0
      %v391 = vpop.f32.mrf.mxu0
      %v392 = vadd.f32 0.0, %v391
      %v393 = vpop.f32.mrf.mxu0
      %394 = vdwg.mxu0
      %v395 = vadd.f32 %v262, %v381
      %v396 = vadd.f32 %v263, %v384
      %v397 = vadd.f32 %v264, %v389
      %v398 = vadd.f32 %v265, %v392
      %s399 = sadd.s32 %s266, 1
      %s400 = smul.u32 %s399, 16
      %s401 = smul.addr %s400, 4
      %s402 = scalar_lea.vmem %s1, %s401
      %v403 = vld [vmem:[%s402] sm:$0xf]
      %v404 = vld [vmem:[%s402 + $0x4] sm:$0xf]
      %v405 = vld [vmem:[%s402 + $0x8] sm:$0xf]
      %v406 = vld [vmem:[%s402 + $0xc] sm:$0xf]
      %v407 = vld [vmem:[%s402 + $0x10] sm:$0xf]
      %v408 = vld [vmem:[%s402 + $0x14] sm:$0xf]
      %v409 = vld [vmem:[%s402 + $0x18] sm:$0xf]
      %v410 = vld [vmem:[%s402 + $0x1c] sm:$0xf]
      %v411 = vld [vmem:[%s402 + $0x20] sm:$0xf]
      %v412 = vld [vmem:[%s402 + $0x24] sm:$0xf]
      %v413 = vld [vmem:[%s402 + $0x28] sm:$0xf]
      %v414 = vld [vmem:[%s402 + $0x2c] sm:$0xf]
      %v415 = vld [vmem:[%s402 + $0x30] sm:$0xf]
      %v416 = vld [vmem:[%s402 + $0x34] sm:$0xf]
      %v417 = vld [vmem:[%s402 + $0x38] sm:$0xf]
      %v418 = vld [vmem:[%s402 + $0x3c] sm:$0xf]
      %v420 = vunpack.c.l.b16 %v261
      %v421 = vpack.c.b16 %v420, %v420
      %vm422 = vsmask.f32 7424
      %v424 = vshrl.u32 %v294, 16
      %v426 = vshll.u32 %v294, 16
      %v428 = vrot.slane %v426, 1
      %v429 = vor.u32 %v424, %v428
      %v431 = vshll.u32 %v295, 16
      %v433 = vrot.slane %v431, 1
      %v434 = vsel %vm422, %v429, %v433
      %v435 = vshrl.u32 %v295, 16
      %v437 = vor.u32 %v435, %v433
      %v439 = vshll.u32 %v421, 16
      %v441 = vrot.slane %v439, 1
      %v442 = vsel %vm422, %v437, %v441
      %v461 = vunpack.c.l.b16 %v403
      %v462 = vunpack.c.l.b16 %v404
      %v463 = vunpack.c.l.b16 %v405
      %v464 = vunpack.c.l.b16 %v406
      %v465 = vunpack.c.l.b16 %v407
      %v466 = vunpack.c.l.b16 %v408
      %v467 = vunpack.c.l.b16 %v409
      %v468 = vunpack.c.l.b16 %v410
      %v469 = vunpack.c.l.b16 %v411
      %v470 = vunpack.c.l.b16 %v412
      %v471 = vunpack.c.l.b16 %v413
      %v472 = vunpack.c.l.b16 %v414
      %v473 = vunpack.c.l.b16 %v415
      %v474 = vunpack.c.l.b16 %v416
      %v475 = vunpack.c.l.b16 %v417
      %v476 = vunpack.c.l.b16 %v418
      %v477 = vpack.c.b16 %v462, %v461
      %v478 = vpack.c.b16 %v464, %v463
      %v479 = vpack.c.b16 %v466, %v465
      %v480 = vpack.c.b16 %v468, %v467
      %v481 = vpack.c.b16 %v470, %v469
      %v482 = vpack.c.b16 %v472, %v471
      %v483 = vpack.c.b16 %v474, %v473
      %v484 = vpack.c.b16 %v476, %v475
      %493 = vmatprep.subr.bf16.mxu0 0
      %494 = vmatpush1.bf16.msra.mxu0 %v484
      %495 = vmatprep.subr.bf16.mxu0 0
      %496 = vmatpush1.bf16.msra.mxu0 %v483
      %497 = vmatprep.subr.bf16.mxu0 0
      %498 = vmatpush1.bf16.msra.mxu0 %v482
      %499 = vmatprep.subr.bf16.mxu0 0
      %500 = vmatpush1.bf16.msra.mxu0 %v481
      %501 = vmatprep.subr.bf16.mxu0 0
      %502 = vmatpush1.bf16.msra.mxu0 %v480
      %503 = vmatprep.subr.bf16.mxu0 0
      %504 = vmatpush1.bf16.msra.mxu0 %v479
      %505 = vmatprep.subr.bf16.mxu0 0
      %506 = vmatpush1.bf16.msra.mxu0 %v478
      %507 = vmatprep.subr.bf16.mxu0 0
      %508 = vmatpush1.bf16.msra.mxu0 %v477
      %509 = vmatprep.subr.bf16.mxu0 0
      %510 = vmatpush2.bf16.msra.mxu0 0
      %511 = vmatprep.subr.bf16.mxu0 0
      %512 = vmatpush2.bf16.msra.mxu0 0
      %513 = vmatprep.subr.bf16.mxu0 0
      %514 = vmatpush2.bf16.msra.mxu0 0
      %515 = vmatprep.subr.bf16.mxu0 0
      %516 = vmatpush2.bf16.msra.mxu0 0
      %517 = vmatprep.subr.bf16.mxu0 0
      %518 = vmatpush2.bf16.msra.mxu0 0
      %519 = vmatprep.subr.bf16.mxu0 0
      %520 = vmatpush2.bf16.msra.mxu0 0
      %521 = vmatprep.subr.bf16.mxu0 0
      %522 = vmatpush2.bf16.msra.mxu0 0
      %523 = vmatprep.subr.bf16.mxu0 0
      %524 = vmatpush2.bf16.msra.mxu0 0
      %525 = vmatprep.mubr.bf16.mxu0 0
      %526 = vmatmul.mubr.bf16.gmra.mxu0 %v434
      %v527 = vpop.f32.mrf.mxu0
      %v528 = vadd.f32 0.0, %v527
      %v529 = vpop.f32.mrf.mxu0
      %v530 = vpop.f32.mrf.mxu0
      %v531 = vadd.f32 0.0, %v530
      %v532 = vpop.f32.mrf.mxu0
      %533 = vmatprep.mubr.bf16.mxu0 0
      %534 = vmatmul.mubr.bf16.gmra.mxu0 %v442
      %v535 = vpop.f32.mrf.mxu0
      %v536 = vadd.f32 0.0, %v535
      %v537 = vpop.f32.mrf.mxu0
      %v538 = vpop.f32.mrf.mxu0
      %v539 = vadd.f32 0.0, %v538
      %v540 = vpop.f32.mrf.mxu0
      %541 = vdwg.mxu0
      %v542 = vadd.f32 %v395, %v528
      %v543 = vadd.f32 %v396, %v531
      %v544 = vadd.f32 %v397, %v536
      %v545 = vadd.f32 %v398, %v539
      %s546 = sadd.s32 %s266, 2
      %s547 = smul.u32 %s546, 16
      %s548 = smul.addr %s547, 4
      %s549 = scalar_lea.vmem %s1, %s548
      %v550 = vld [vmem:[%s549] sm:$0xf]
      %v551 = vld [vmem:[%s549 + $0x4] sm:$0xf]
      %v552 = vld [vmem:[%s549 + $0x8] sm:$0xf]
      %v553 = vld [vmem:[%s549 + $0xc] sm:$0xf]
      %v554 = vld [vmem:[%s549 + $0x10] sm:$0xf]
      %v555 = vld [vmem:[%s549 + $0x14] sm:$0xf]
      %v556 = vld [vmem:[%s549 + $0x18] sm:$0xf]
      %v557 = vld [vmem:[%s549 + $0x1c] sm:$0xf]
      %v558 = vld [vmem:[%s549 + $0x20] sm:$0xf]
      %v559 = vld [vmem:[%s549 + $0x24] sm:$0xf]
      %v560 = vld [vmem:[%s549 + $0x28] sm:$0xf]
      %v561 = vld [vmem:[%s549 + $0x2c] sm:$0xf]
      %v562 = vld [vmem:[%s549 + $0x30] sm:$0xf]
      %v563 = vld [vmem:[%s549 + $0x34] sm:$0xf]
      %v564 = vld [vmem:[%s549 + $0x38] sm:$0xf]
      %v565 = vld [vmem:[%s549 + $0x3c] sm:$0xf]
      %vm566 = vcmask 1046528
      %v567 = vrot.slane %v294, 1
      %v568 = vrot.slane %v295, 1
      %v569 = vsel %vm566, %v567, %v568
      %v570 = vrot.slane %v421, 1
      %v571 = vsel %vm566, %v568, %v570
      %v590 = vunpack.c.l.b16 %v550
      %v591 = vunpack.c.l.b16 %v551
      %v592 = vunpack.c.l.b16 %v552
      %v593 = vunpack.c.l.b16 %v553
      %v594 = vunpack.c.l.b16 %v554
      %v595 = vunpack.c.l.b16 %v555
      %v596 = vunpack.c.l.b16 %v556
      %v597 = vunpack.c.l.b16 %v557
      %v598 = vunpack.c.l.b16 %v558
      %v599 = vunpack.c.l.b16 %v559
      %v600 = vunpack.c.l.b16 %v560
      %v601 = vunpack.c.l.b16 %v561
      %v602 = vunpack.c.l.b16 %v562
      %v603 = vunpack.c.l.b16 %v563
      %v604 = vunpack.c.l.b16 %v564
      %v605 = vunpack.c.l.b16 %v565
      %v606 = vpack.c.b16 %v591, %v590
      %v607 = vpack.c.b16 %v593, %v592
      %v608 = vpack.c.b16 %v595, %v594
      %v609 = vpack.c.b16 %v597, %v596
      %v610 = vpack.c.b16 %v599, %v598
      %v611 = vpack.c.b16 %v601, %v600
      %v612 = vpack.c.b16 %v603, %v602
      %v613 = vpack.c.b16 %v605, %v604
      %622 = vmatprep.subr.bf16.mxu0 0
      %623 = vmatpush1.bf16.msra.mxu0 %v613
      %624 = vmatprep.subr.bf16.mxu0 0
      %625 = vmatpush1.bf16.msra.mxu0 %v612
      %626 = vmatprep.subr.bf16.mxu0 0
      %627 = vmatpush1.bf16.msra.mxu0 %v611
      %628 = vmatprep.subr.bf16.mxu0 0
      %629 = vmatpush1.bf16.msra.mxu0 %v610
      %630 = vmatprep.subr.bf16.mxu0 0
      %631 = vmatpush1.bf16.msra.mxu0 %v609
      %632 = vmatprep.subr.bf16.mxu0 0
      %633 = vmatpush1.bf16.msra.mxu0 %v608
      %634 = vmatprep.subr.bf16.mxu0 0
      %635 = vmatpush1.bf16.msra.mxu0 %v607
      %636 = vmatprep.subr.bf16.mxu0 0
      %637 = vmatpush1.bf16.msra.mxu0 %v606
      %638 = vmatprep.subr.bf16.mxu0 0
      %639 = vmatpush2.bf16.msra.mxu0 0
      %640 = vmatprep.subr.bf16.mxu0 0
      %641 = vmatpush2.bf16.msra.mxu0 0
      %642 = vmatprep.subr.bf16.mxu0 0
      %643 = vmatpush2.bf16.msra.mxu0 0
      %644 = vmatprep.subr.bf16.mxu0 0
      %645 = vmatpush2.bf16.msra.mxu0 0
      %646 = vmatprep.subr.bf16.mxu0 0
      %647 = vmatpush2.bf16.msra.mxu0 0
      %648 = vmatprep.subr.bf16.mxu0 0
      %649 = vmatpush2.bf16.msra.mxu0 0
      %650 = vmatprep.subr.bf16.mxu0 0
      %651 = vmatpush2.bf16.msra.mxu0 0
      %652 = vmatprep.subr.bf16.mxu0 0
      %653 = vmatpush2.bf16.msra.mxu0 0
      %654 = vmatprep.mubr.bf16.mxu0 0
      %655 = vmatmul.mubr.bf16.gmra.mxu0 %v569
      %v656 = vpop.f32.mrf.mxu0
      %v657 = vadd.f32 0.0, %v656
      %v658 = vpop.f32.mrf.mxu0
      %v659 = vpop.f32.mrf.mxu0
      %v660 = vadd.f32 0.0, %v659
      %v661 = vpop.f32.mrf.mxu0
      %662 = vmatprep.mubr.bf16.mxu0 0
      %663 = vmatmul.mubr.bf16.gmra.mxu0 %v571
      %v664 = vpop.f32.mrf.mxu0
      %v665 = vadd.f32 0.0, %v664
      %v666 = vpop.f32.mrf.mxu0
      %v667 = vpop.f32.mrf.mxu0
      %v668 = vadd.f32 0.0, %v667
      %v669 = vpop.f32.mrf.mxu0
      %670 = vdwg.mxu0
      %v671 = vadd.f32 %v542, %v657
      %v672 = vadd.f32 %v543, %v660
      %v673 = vadd.f32 %v544, %v665
      %v674 = vadd.f32 %v545, %v668
      %675 = vst [vmem:[#allocation2] sm:$0xff] %v671
      %676 = vst [vmem:[#allocation2 + $0x8] sm:$0xff] %v672
      %677 = vst [vmem:[#allocation2 + $0x10] sm:$0xff] %v673
      %678 = vst [vmem:[#allocation2 + $0x18] sm:$0xff] %v674
      %p679 = scmp.eq.s32.totalorder %s22, 2
      // Predicated region
      $region41: #{resnet_forward.21} parent=35 // pred_check
        %p680 = pneg %p679
      $region42: #{resnet_forward.21} parent=35 // pred_check_branch
        %682 = sbr.rel (%p680) target = $region44
      $region43: #{resnet_forward.21} parent=35 // pred_region
        %v683 = vld [vmem:[#allocation2] sm:$0xff]
        %v684 = vld [vmem:[#allocation2 + $0x8] sm:$0xff]
        %v685 = vld [vmem:[#allocation2 + $0x10] sm:$0xff]
        %v686 = vld [vmem:[#allocation2 + $0x18] sm:$0xff]
        %v687 = vld [vmem:[%s2] sm:$0x1]
        %v689 = vlaneseq
        %v690 = vshrl.u32 %v689, 7
        %v691 = vsub.s32 0, %v690
        %v692 = vrot.slane %v687, %v691
        %v694 = vmul.f32 %v683, %v692
        %v695 = vmul.f32 %v684, %v692
        %v696 = vmul.f32 %v685, %v692
        %v697 = vmul.f32 %v686, %v692
        %v698 = vld [vmem:[%s3] sm:$0x1]
        %v700 = vlaneseq
        %v701 = vshrl.u32 %v700, 7
        %v702 = vsub.s32 0, %v701
        %v703 = vrot.slane %v698, %v702
        %v705 = vadd.f32 %v694, %v703
        %v706 = vadd.f32 %v695, %v703
        %v707 = vadd.f32 %v696, %v703
        %v708 = vadd.f32 %v697, %v703
        %v709 = vmax.f32 %v705, 0.0
        %v710 = vmax.f32 %v706, 0.0
        %v711 = vmax.f32 %v707, 0.0
        %v712 = vmax.f32 %v708, 0.0
        %v713 = vpack.c.bf16 %v710, %v709
        %v714 = vpack.c.bf16 %v712, %v711
        %v717 = vunpack.c.l.b16 %v713
        %v718 = vunpack.c.h.b16 %v713
        %v719 = vunpack.c.l.b16 %v714
        %v720 = vunpack.c.h.b16 %v714
        %v721 = vpack.c.b16 %v717, %v717
        %v722 = vpack.c.b16 %v718, %v718
        %v723 = vpack.c.b16 %v719, %v719
        %v724 = vpack.c.b16 %v720, %v720
        %729 = vst [vmem:[%s247] sm:$0xf] %v721
        %730 = vst [vmem:[%s247 + $0x4] sm:$0xf] %v722
        %731 = vst [vmem:[%s247 + $0x8] sm:$0xf] %v723
        %732 = vst [vmem:[%s247 + $0xc] sm:$0xf] %v724
      $region44: #{resnet_forward.21} parent=35 // pred_fallthru
        _
      %p733 = scmp.lt.s32.totalorder %s20, 1
      %s734 = scalar_select %p733, %s20, 1
      %p735 = scmp.lt.s32.totalorder %s21, 31
      %s736 = scalar_select %p735, %s21, 31
      %s737 = smul.addr %s736, 4
      %s738 = smul.addr %s734, 128
      %s739 = sadd.s32 %s737, %s738
      %s740 = smul.addr %s739, 4
      %s741 = scalar_lea.vmem %s4, %s740
      // Predicated region
      $region45: #{resnet_forward.21} parent=35 // pred_check
        %p742 = pneg %p147
      $region46: #{resnet_forward.21} parent=35 // pred_check_branch
        %744 = sbr.rel (%p742) target = $region48
      $region47: #{resnet_forward.21} parent=35 // pred_region
        _
      $region48: #{resnet_forward.21} parent=35 // pred_fallthru
        _
    $region36: #{resnet_forward.21} parent=5 // pred_fallthru
      _
    %p745 = scmp.le.s32.totalorder 2, %s10
    // Predicated region
    $region49: #{resnet_forward.21} parent=5 // pred_check
      %p746 = pneg %p745
    $region50: #{resnet_forward.21} parent=5 // pred_check_branch
      %748 = sbr.rel (%p746) target = $region52
    $region51: #{resnet_forward.21} parent=5 // pred_region
      %s749 = ssub.s32 %s10, 2
      // Predicated region
      $region53: #{resnet_forward.21} parent=51 // pred_check
        %p750 = pneg %p153
      $region54: #{resnet_forward.21} parent=51 // pred_check_branch
        %752 = sbr.rel (%p750) target = $region56
      $region55: #{resnet_forward.21} parent=51 // pred_region
        %p753 = scmp.lt.s32.totalorder %s23, 1
        %s754 = scalar_select %p753, %s23, 1
        %p755 = scmp.lt.s32.totalorder %s24, 31
        %s756 = scalar_select %p755, %s24, 31
        %s757 = smul.addr %s756, 4
        %s758 = smul.addr %s754, 128
        %s759 = sadd.s32 %s757, %s758
        %s760 = smul.addr %s759, 4
        %s761 = scalar_lea.vmem %s4, %s760
      $region56: #{resnet_forward.21} parent=51 // pred_fallthru
        _
    $region52: #{resnet_forward.21} parent=5 // pred_fallthru
      _
  $region6: #{resnet_forward.21} parent=0 // loop_footer
    %s14 = sadd.s32 1, %s10
  $region7: #{resnet_forward.21} parent=0 // loop_footer_branch
    %9 = sbr.rel target = $region3
  $region8: #{resnet_forward.21} parent=0 // loop_exit
    _

// kernel: resnet_forward.23
$region0: #{resnet_forward.23}
  #allocation0 [shape = 'u32[]', space=smem, size = 0x4, offset = 0x4, fixed_abs, tag = 'smem constant byte address 0x4 - core index']
  #allocation1 [shape = 'u32[144,128]{1,0:T(1,128)}', space=vmem, size = 0x12000, scoped, tag = 'internal scratch']
  %s0 = inlined_call_operand.vmem [shape: bf16[2,32,16,256], index: 0, kind: input, shape index: {}]
  %s1 = inlined_call_operand.vmem [shape: bf16[2,16,16,128], index: 1, kind: output, shape index: {}]
  %s2 = sld [smem:[#allocation0]]
  $region37: #{resnet_forward.23} parent=0
    _
  %s4 = ssub.s32 1, %s2
  %s5 = scalar_select 0, %s4, %s2
  loop: start=0, step=1, limit=34
  $region2: #{resnet_forward.23} parent=0 // loop_pre_header
    _
  $region3: #{resnet_forward.23} parent=0 // loop_header
    %s7 = sphi 0, %s11
    %p8 = scmp.ge.s32.totalorder %s7, 34
    %s14 = sphi 0, %s26
    %s15 = sphi 0, %s22
    %s16 = sphi 0, %s14
    %s17 = sphi 0, %s15
    %s18 = sphi 0, %s16
    %s19 = sphi 0, %s17
    %s31 = sphi 0, %s33
    %s34 = sphi 0, %s31
    %s35 = sphi 0, %s34
    %s51 = sphi 0, %s35
    %s59 = sphi 0, %s61
    %s62 = sphi 0, %s59
    %s63 = sphi 0, %s62
    %s79 = sphi 0, %s63
  $region4: #{resnet_forward.23} parent=0 // loop_header_branch
    %10 = sbr.rel (%p8) target = $region8
  $region5: #{resnet_forward.23} parent=0 // loop_body
    %s12 = ssub.s32 %s7, 1
    %s13 = ssub.s32 %s7, 2
    %s20 = sadd.s32 1, %s15
    %p21 = scmp.ge.s32.totalorder %s20, 16
    %s22 = scalar_select %p21, 0, %s20
    %s23 = sadd.s32 1, %s14
    %s24 = scalar_select %p21, %s23, %s14
    %p25 = scmp.ge.s32.totalorder %s24, 2
    %s26 = scalar_select %p25, 0, %s24
    %s27 = ssub.s32 %s14, %s26
    %s28 = ssub.s32 %s15, %s22
    %s29 = sor.u32 %s27, %s28
    %p30 = scmp.eq.s32.totalorder %s29, 0
    %s32 = sadd.s32 %s31, 1
    %s33 = scalar_select %p30, %s31, %s32
    %p36 = pneg %p30
    %p37 = scmp.eq.s32.totalorder %s7, 31
    %p38 = por %p36, %p37
    %p39 = scmp.ne.s32.totalorder %s31, %s34
    %p40 = scmp.eq.s32.totalorder %s7, 0
    %p41 = por %p39, %p40
    %p42 = scmp.ne.s32.totalorder %s31, %s34
    %p43 = scmp.eq.s32.totalorder %s12, 31
    %p44 = por %p42, %p43
    %p45 = scmp.ne.s32.totalorder %s34, %s35
    %p46 = scmp.eq.s32.totalorder %s12, 0
    %p47 = por %p45, %p46
    %p48 = scmp.ne.s32.totalorder %s34, %s35
    %p49 = scmp.eq.s32.totalorder %s13, 31
    %p50 = por %p48, %p49
    %p52 = scmp.ne.s32.totalorder %s35, %s51
    %p53 = scmp.eq.s32.totalorder %s13, 0
    %p54 = por %p52, %p53
    %s55 = ssub.s32 %s14, %s26
    %s56 = ssub.s32 %s15, %s22
    %s57 = sor.u32 %s55, %s56
    %p58 = scmp.eq.s32.totalorder %s57, 0
    %s60 = sadd.s32 %s59, 1
    %s61 = scalar_select %p58, %s59, %s60
    %p64 = pneg %p58
    %p65 = scmp.eq.s32.totalorder %s7, 31
    %p66 = por %p64, %p65
    %p67 = scmp.ne.s32.totalorder %s59, %s62
    %p68 = scmp.eq.s32.totalorder %s7, 0
    %p69 = por %p67, %p68
    %p70 = scmp.ne.s32.totalorder %s59, %s62
    %p71 = scmp.eq.s32.totalorder %s12, 31
    %p72 = por %p70, %p71
    %p73 = scmp.ne.s32.totalorder %s62, %s63
    %p74 = scmp.eq.s32.totalorder %s12, 0
    %p75 = por %p73, %p74
    %p76 = scmp.ne.s32.totalorder %s62, %s63
    %p77 = scmp.eq.s32.totalorder %s13, 31
    %p78 = por %p76, %p77
    %p80 = scmp.ne.s32.totalorder %s63, %s79
    %p81 = scmp.eq.s32.totalorder %s13, 0
    %p82 = por %p80, %p81
    %p83 = scmp.le.s32.totalorder 1, %s7
    %p84 = scmp.lt.s32.totalorder %s7, 33
    %p85 = pnand %p83, %p84
    %p86 = pneg %p85
    // Predicated region
    $region9: #{resnet_forward.23} parent=5 // pred_check
      _
    $region10: #{resnet_forward.23} parent=5 // pred_check_branch
      %88 = sbr.rel (%p85) target = $region12
    $region11: #{resnet_forward.23} parent=5 // pred_region
      %s89 = ssub.s32 %s7, 1
    $region12: #{resnet_forward.23} parent=5 // pred_fallthru
      _
    %p90 = scmp.lt.s32.totalorder %s7, 32
    // Predicated region
    $region13: #{resnet_forward.23} parent=5 // pred_check
      %p91 = pneg %p90
    $region14: #{resnet_forward.23} parent=5 // pred_check_branch
      %93 = sbr.rel (%p91) target = $region16
    $region15: #{resnet_forward.23} parent=5 // pred_region
      // Predicated region
      $region17: #{resnet_forward.23} parent=15 // pred_check
        %p94 = pneg %p41
      $region18: #{resnet_forward.23} parent=15 // pred_check_branch
        %96 = sbr.rel (%p94) target = $region20
      $region19: #{resnet_forward.23} parent=15 // pred_region
        %s97 = smul.u32 2, %s15
        %p98 = scmp.lt.s32.totalorder %s14, 1
        %s99 = scalar_select %p98, %s14, 1
        %p100 = scmp.lt.s32.totalorder %s97, 31
        %s101 = scalar_select %p100, %s97, 31
        %s102 = smul.addr %s101, 4
        %s103 = smul.addr %s99, 128
        %s104 = sadd.s32 %s102, %s103
        %s105 = smul.addr %s104, 4
        %s106 = scalar_lea.vmem %s0, %s105
        %s107 = smul.u32 2, %s15
      $region20: #{resnet_forward.23} parent=15 // pred_fallthru
        _
    $region16: #{resnet_forward.23} parent=5 // pred_fallthru
      _
    %p108 = scmp.le.s32.totalorder 1, %s7
    %p109 = scmp.lt.s32.totalorder %s7, 33
    %p110 = pnand %p108, %p109
    %p111 = pneg %p110
    // Predicated region
    $region21: #{resnet_forward.23} parent=5 // pred_check
      _
    $region22: #{resnet_forward.23} parent=5 // pred_check_branch
      %113 = sbr.rel (%p110) target = $region24
    $region23: #{resnet_forward.23} parent=5 // pred_region
      %s114 = ssub.s32 %s7, 1
      %s115 = smul.u32 2, %s17
      %p116 = scmp.lt.s32.totalorder %s16, 1
      %s117 = scalar_select %p116, %s16, 1
      %p118 = scmp.lt.s32.totalorder %s115, 31
      %s119 = scalar_select %p118, %s115, 31
      %s120 = smul.addr %s119, 4
      %s121 = smul.addr %s117, 128
      %s122 = sadd.s32 %s120, %s121
      %s123 = smul.addr %s122, 4
      %s124 = scalar_lea.vmem %s0, %s123
      %p125 = pneg %p47
      %p126 = pneg %p44
      %p127 = pneg %p75
      %p128 = pneg %p72
      %p129 = scmp.lt.s32.totalorder %s16, 1
      %s130 = scalar_select %p129, %s16, 1
      %p131 = scmp.lt.s32.totalorder %s17, 15
      %s132 = scalar_select %p131, %s17, 15
      %s133 = smul.addr %s132, 2
      %s134 = smul.addr %s130, 32
      %s135 = sadd.s32 %s133, %s134
      %s136 = smul.addr %s135, 4
      %s137 = scalar_lea.vmem %s1, %s136
      %s138 = smul.u32 2, %s17
      %p139 = scmp.lt.s32.totalorder %s16, 1
      %s140 = scalar_select %p139, %s16, 1
      %p141 = scmp.lt.s32.totalorder %s138, 31
      %s142 = scalar_select %p141, %s138, 31
      %s143 = smul.addr %s142, 4
      %s144 = smul.addr %s140, 128
      %s145 = sadd.s32 %s143, %s144
      %s146 = smul.addr %s145, 4
      %s147 = scalar_lea.vmem %s0, %s146
      %s148 = smul.u32 2, %s17
      %p149 = scmp.lt.s32.totalorder %s16, 1
      %s150 = scalar_select %p149, %s16, 1
      %p151 = scmp.lt.s32.totalorder %s17, 15
      %s152 = scalar_select %p151, %s17, 15
      %s153 = smul.addr %s152, 2
      %s154 = smul.addr %s150, 32
      %s155 = sadd.s32 %s153, %s154
      %s156 = smul.addr %s155, 4
      %s157 = scalar_lea.vmem %s1, %s156
      %v158 = vld [vmem:[%s147] sm:$0xff]
      %v159 = vld [vmem:[%s147 + $0x8] sm:$0xff]
      %s160 = scalar_lea.vmem %s147, 16
      %v161 = vld [vmem:[%s160] sm:$0xff]
      %v162 = vld [vmem:[%s160 + $0x8] sm:$0xff]
      %v163 = vmax.bf16 %v158, %v161
      %v164 = vmax.bf16 %v159, %v162
      %v167 = vrot.slane %v163, 4
      %v168 = vrot.slane %v164, 4
      %v171 = vmax.bf16 %v163, %v167
      %v172 = vmax.bf16 %v164, %v168
      %173 = vst [vmem:[%s157] sm:$0xf] %v171
      %174 = vst [vmem:[%s157 + $0x4] sm:$0xf] %v172
      %p175 = scmp.lt.s32.totalorder %s16, 1
      %s176 = scalar_select %p175, %s16, 1
      %p177 = scmp.lt.s32.totalorder %s17, 15
      %s178 = scalar_select %p177, %s17, 15
      %s179 = smul.addr %s178, 2
      %s180 = smul.addr %s176, 32
      %s181 = sadd.s32 %s179, %s180
      %s182 = smul.addr %s181, 4
      %s183 = scalar_lea.vmem %s1, %s182
      // Predicated region
      $region25: #{resnet_forward.23} parent=23 // pred_check
        %p184 = pneg %p72
      $region26: #{resnet_forward.23} parent=23 // pred_check_branch
        %186 = sbr.rel (%p184) target = $region28
      $region27: #{resnet_forward.23} parent=23 // pred_region
        _
      $region28: #{resnet_forward.23} parent=23 // pred_fallthru
        _
    $region24: #{resnet_forward.23} parent=5 // pred_fallthru
      _
    %p187 = scmp.le.s32.totalorder 2, %s7
    // Predicated region
    $region29: #{resnet_forward.23} parent=5 // pred_check
      %p188 = pneg %p187
    $region30: #{resnet_forward.23} parent=5 // pred_check_branch
      %190 = sbr.rel (%p188) target = $region32
    $region31: #{resnet_forward.23} parent=5 // pred_region
      %s191 = ssub.s32 %s7, 2
      // Predicated region
      $region33: #{resnet_forward.23} parent=31 // pred_check
        %p192 = pneg %p78
      $region34: #{resnet_forward.23} parent=31 // pred_check_branch
        %194 = sbr.rel (%p192) target = $region36
      $region35: #{resnet_forward.23} parent=31 // pred_region
        %p195 = scmp.lt.s32.totalorder %s18, 1
        %s196 = scalar_select %p195, %s18, 1
        %p197 = scmp.lt.s32.totalorder %s19, 15
        %s198 = scalar_select %p197, %s19, 15
        %s199 = smul.addr %s198, 2
        %s200 = smul.addr %s196, 32
        %s201 = sadd.s32 %s199, %s200
        %s202 = smul.addr %s201, 4
        %s203 = scalar_lea.vmem %s1, %s202
      $region36: #{resnet_forward.23} parent=31 // pred_fallthru
        _
    $region32: #{resnet_forward.23} parent=5 // pred_fallthru
      _
  $region6: #{resnet_forward.23} parent=0 // loop_footer
    %s11 = sadd.s32 1, %s7
  $region7: #{resnet_forward.23} parent=0 // loop_footer_branch
    %6 = sbr.rel target = $region3
  $region8: #{resnet_forward.23} parent=0 // loop_exit
    _

// kernel: resnet_forward.25
$region0: #{resnet_forward.25}
  #allocation0 [shape = 'u32[]', space=smem, size = 0x4, offset = 0x4, fixed_abs, tag = 'smem constant byte address 0x4 - core index']
  #allocation1 [shape = 'u32[144,128]{1,0:T(1,128)}', space=vmem, size = 0x12000, scoped, tag = 'internal scratch']
  #allocation2 [shape = 'f32[16,128]{1,0:T(8,128)}', space=vmem, size = 0x2000, scoped, tag = 'scratch operand']
  %s0 = inlined_call_operand.vmem [shape: bf16[2,16,16,128], index: 0, kind: input, shape index: {}]
  %s1 = inlined_call_operand.vmem [shape: bf16[1,128,128], index: 1, kind: input, shape index: {}]
  %s2 = inlined_call_operand.vmem [shape: f32[1,128], index: 2, kind: input, shape index: {}]
  %s3 = inlined_call_operand.vmem [shape: f32[1,128], index: 3, kind: input, shape index: {}]
  %s4 = inlined_call_operand.vmem [shape: bf16[2,16,16,128], index: 4, kind: output, shape index: {}]
  %s5 = sld [smem:[#allocation0]]
  $region57: #{resnet_forward.25} parent=0
    _
  %s7 = ssub.s32 1, %s5
  %s8 = scalar_select 0, %s7, %s5
  loop: start=0, step=1, limit=34
  $region2: #{resnet_forward.25} parent=0 // loop_pre_header
    _
  $region3: #{resnet_forward.25} parent=0 // loop_header
    %s10 = sphi 0, %s14
    %p11 = scmp.ge.s32.totalorder %s10, 34
    %s17 = sphi 0, %s36
    %s18 = sphi 0, %s32
    %s19 = sphi 0, %s28
    %s20 = sphi 0, %s17
    %s21 = sphi 0, %s18
    %s22 = sphi 0, %s19
    %s23 = sphi 0, %s20
    %s24 = sphi 0, %s21
    %s25 = sphi 0, %s22
    %s43 = sphi 0, %s45
    %s46 = sphi 0, %s43
    %s47 = sphi 0, %s46
    %s63 = sphi 0, %s47
    %s67 = sphi 0, %s67
    %s69 = sphi 0, %s67
    %s70 = sphi 0, %s69
    %s84 = sphi 0, %s70
    %s88 = sphi 0, %s88
    %s90 = sphi 0, %s88
    %s91 = sphi 0, %s90
    %s105 = sphi 0, %s91
    %s109 = sphi 0, %s109
    %s111 = sphi 0, %s109
    %s112 = sphi 0, %s111
    %s126 = sphi 0, %s112
    %s134 = sphi 0, %s136
    %s137 = sphi 0, %s134
    %s138 = sphi 0, %s137
    %s154 = sphi 0, %s138
  $region4: #{resnet_forward.25} parent=0 // loop_header_branch
    %13 = sbr.rel (%p11) target = $region8
  $region5: #{resnet_forward.25} parent=0 // loop_body
    %s15 = ssub.s32 %s10, 1
    %s16 = ssub.s32 %s10, 2
    %s26 = sadd.s32 1, %s19
    %p27 = scmp.ge.s32.totalorder %s26, 1
    %s28 = scalar_select %p27, 0, %s26
    %s29 = sadd.s32 1, %s18
    %s30 = scalar_select %p27, %s29, %s18
    %p31 = scmp.ge.s32.totalorder %s30, 16
    %s32 = scalar_select %p31, 0, %s30
    %s33 = sadd.s32 1, %s17
    %s34 = scalar_select %p31, %s33, %s17
    %p35 = scmp.ge.s32.totalorder %s34, 2
    %s36 = scalar_select %p35, 0, %s34
    %s37 = sadd.s32 %s18, %s19
    %s38 = sadd.s32 %s32, %s28
    %s39 = ssub.s32 %s17, %s36
    %s40 = ssub.s32 %s37, %s38
    %s41 = sor.u32 %s39, %s40
    %p42 = scmp.eq.s32.totalorder %s41, 0
    %s44 = sadd.s32 %s43, 1
    %s45 = scalar_select %p42, %s43, %s44
    %p48 = pneg %p42
    %p49 = scmp.eq.s32.totalorder %s10, 31
    %p50 = por %p48, %p49
    %p51 = scmp.ne.s32.totalorder %s43, %s46
    %p52 = scmp.eq.s32.totalorder %s10, 0
    %p53 = por %p51, %p52
    %p54 = scmp.ne.s32.totalorder %s43, %s46
    %p55 = scmp.eq.s32.totalorder %s15, 31
    %p56 = por %p54, %p55
    %p57 = scmp.ne.s32.totalorder %s46, %s47
    %p58 = scmp.eq.s32.totalorder %s15, 0
    %p59 = por %p57, %p58
    %p60 = scmp.ne.s32.totalorder %s46, %s47
    %p61 = scmp.eq.s32.totalorder %s16, 31
    %p62 = por %p60, %p61
    %p64 = scmp.ne.s32.totalorder %s47, %s63
    %p65 = scmp.eq.s32.totalorder %s16, 0
    %p66 = por %p64, %p65
    %s68 = sadd.s32 %s67, 1
    %p71 = scmp.eq.s32.totalorder %s10, 31
    %p72 = scmp.ne.s32.totalorder %s67, %s69
    %p73 = scmp.eq.s32.totalorder %s10, 0
    %p74 = por %p72, %p73
    %p75 = scmp.ne.s32.totalorder %s67, %s69
    %p76 = scmp.eq.s32.totalorder %s15, 31
    %p77 = por %p75, %p76
    %p78 = scmp.ne.s32.totalorder %s69, %s70
    %p79 = scmp.eq.s32.totalorder %s15, 0
    %p80 = por %p78, %p79
    %p81 = scmp.ne.s32.totalorder %s69, %s70
    %p82 = scmp.eq.s32.totalorder %s16, 31
    %p83 = por %p81, %p82
    %p85 = scmp.ne.s32.totalorder %s70, %s84
    %p86 = scmp.eq.s32.totalorder %s16, 0
    %p87 = por %p85, %p86
    %s89 = sadd.s32 %s88, 1
    %p92 = scmp.eq.s32.totalorder %s10, 31
    %p93 = scmp.ne.s32.totalorder %s88, %s90
    %p94 = scmp.eq.s32.totalorder %s10, 0
    %p95 = por %p93, %p94
    %p96 = scmp.ne.s32.totalorder %s88, %s90
    %p97 = scmp.eq.s32.totalorder %s15, 31
    %p98 = por %p96, %p97
    %p99 = scmp.ne.s32.totalorder %s90, %s91
    %p100 = scmp.eq.s32.totalorder %s15, 0
    %p101 = por %p99, %p100
    %p102 = scmp.ne.s32.totalorder %s90, %s91
    %p103 = scmp.eq.s32.totalorder %s16, 31
    %p104 = por %p102, %p103
    %p106 = scmp.ne.s32.totalorder %s91, %s105
    %p107 = scmp.eq.s32.totalorder %s16, 0
    %p108 = por %p106, %p107
    %s110 = sadd.s32 %s109, 1
    %p113 = scmp.eq.s32.totalorder %s10, 31
    %p114 = scmp.ne.s32.totalorder %s109, %s111
    %p115 = scmp.eq.s32.totalorder %s10, 0
    %p116 = por %p114, %p115
    %p117 = scmp.ne.s32.totalorder %s109, %s111
    %p118 = scmp.eq.s32.totalorder %s15, 31
    %p119 = por %p117, %p118
    %p120 = scmp.ne.s32.totalorder %s111, %s112
    %p121 = scmp.eq.s32.totalorder %s15, 0
    %p122 = por %p120, %p121
    %p123 = scmp.ne.s32.totalorder %s111, %s112
    %p124 = scmp.eq.s32.totalorder %s16, 31
    %p125 = por %p123, %p124
    %p127 = scmp.ne.s32.totalorder %s112, %s126
    %p128 = scmp.eq.s32.totalorder %s16, 0
    %p129 = por %p127, %p128
    %s130 = ssub.s32 %s17, %s36
    %s131 = ssub.s32 %s18, %s32
    %s132 = sor.u32 %s130, %s131
    %p133 = scmp.eq.s32.totalorder %s132, 0
    %s135 = sadd.s32 %s134, 1
    %s136 = scalar_select %p133, %s134, %s135
    %p139 = pneg %p133
    %p140 = scmp.eq.s32.totalorder %s10, 31
    %p141 = por %p139, %p140
    %p142 = scmp.ne.s32.totalorder %s134, %s137
    %p143 = scmp.eq.s32.totalorder %s10, 0
    %p144 = por %p142, %p143
    %p145 = scmp.ne.s32.totalorder %s134, %s137
    %p146 = scmp.eq.s32.totalorder %s15, 31
    %p147 = por %p145, %p146
    %p148 = scmp.ne.s32.totalorder %s137, %s138
    %p149 = scmp.eq.s32.totalorder %s15, 0
    %p150 = por %p148, %p149
    %p151 = scmp.ne.s32.totalorder %s137, %s138
    %p152 = scmp.eq.s32.totalorder %s16, 31
    %p153 = por %p151, %p152
    %p155 = scmp.ne.s32.totalorder %s138, %s154
    %p156 = scmp.eq.s32.totalorder %s16, 0
    %p157 = por %p155, %p156
    %p158 = scmp.le.s32.totalorder 1, %s10
    %p159 = scmp.lt.s32.totalorder %s10, 33
    %p160 = pnand %p158, %p159
    %p161 = pneg %p160
    // Predicated region
    $region9: #{resnet_forward.25} parent=5 // pred_check
      _
    $region10: #{resnet_forward.25} parent=5 // pred_check_branch
      %163 = sbr.rel (%p160) target = $region12
    $region11: #{resnet_forward.25} parent=5 // pred_region
      %s164 = ssub.s32 %s10, 1
      // Predicated region
      $region13: #{resnet_forward.25} parent=11 // pred_check
        %p165 = pneg %p80
      $region14: #{resnet_forward.25} parent=11 // pred_check_branch
        %167 = sbr.rel (%p165) target = $region16
      $region15: #{resnet_forward.25} parent=11 // pred_region
        _
      $region16: #{resnet_forward.25} parent=11 // pred_fallthru
        _
      // Predicated region
      $region17: #{resnet_forward.25} parent=11 // pred_check
        %p168 = pneg %p101
      $region18: #{resnet_forward.25} parent=11 // pred_check_branch
        %170 = sbr.rel (%p168) target = $region20
      $region19: #{resnet_forward.25} parent=11 // pred_region
        _
      $region20: #{resnet_forward.25} parent=11 // pred_fallthru
        _
      // Predicated region
      $region21: #{resnet_forward.25} parent=11 // pred_check
        %p171 = pneg %p122
      $region22: #{resnet_forward.25} parent=11 // pred_check_branch
        %173 = sbr.rel (%p171) target = $region24
      $region23: #{resnet_forward.25} parent=11 // pred_region
        _
      $region24: #{resnet_forward.25} parent=11 // pred_fallthru
        _
    $region12: #{resnet_forward.25} parent=5 // pred_fallthru
      _
    %p174 = scmp.lt.s32.totalorder %s10, 32
    // Predicated region
    $region25: #{resnet_forward.25} parent=5 // pred_check
      %p175 = pneg %p174
    $region26: #{resnet_forward.25} parent=5 // pred_check_branch
      %177 = sbr.rel (%p175) target = $region28
    $region27: #{resnet_forward.25} parent=5 // pred_region
      // Predicated region
      $region29: #{resnet_forward.25} parent=27 // pred_check
        %p178 = pneg %p53
      $region30: #{resnet_forward.25} parent=27 // pred_check_branch
        %180 = sbr.rel (%p178) target = $region32
      $region31: #{resnet_forward.25} parent=27 // pred_region
        %s181 = sadd.s32 %s18, %s19
        %p182 = scmp.lt.s32.totalorder %s17, 1
        %s183 = scalar_select %p182, %s17, 1
        %p184 = scmp.lt.s32.totalorder %s181, 15
        %s185 = scalar_select %p184, %s181, 15
        %s186 = smul.addr %s185, 2
        %s187 = smul.addr %s183, 32
        %s188 = sadd.s32 %s186, %s187
        %s189 = smul.addr %s188, 4
        %s190 = scalar_lea.vmem %s0, %s189
        %s191 = sadd.s32 %s18, %s19
      $region32: #{resnet_forward.25} parent=27 // pred_fallthru
        _
    $region28: #{resnet_forward.25} parent=5 // pred_fallthru
      _
    %p192 = scmp.le.s32.totalorder 1, %s10
    %p193 = scmp.lt.s32.totalorder %s10, 33
    %p194 = pnand %p192, %p193
    %p195 = pneg %p194
    // Predicated region
    $region33: #{resnet_forward.25} parent=5 // pred_check
      _
    $region34: #{resnet_forward.25} parent=5 // pred_check_branch
      %197 = sbr.rel (%p194) target = $region36
    $region35: #{resnet_forward.25} parent=5 // pred_region
      %s198 = ssub.s32 %s10, 1
      %s199 = sadd.s32 %s21, %s22
      %p200 = scmp.lt.s32.totalorder %s20, 1
      %s201 = scalar_select %p200, %s20, 1
      %p202 = scmp.lt.s32.totalorder %s199, 15
      %s203 = scalar_select %p202, %s199, 15
      %s204 = smul.addr %s203, 2
      %s205 = smul.addr %s201, 32
      %s206 = sadd.s32 %s204, %s205
      %s207 = smul.addr %s206, 4
      %s208 = scalar_lea.vmem %s0, %s207
      %p209 = pneg %p59
      %p210 = pneg %p56
      %p211 = pneg %p80
      %p212 = pneg %p77
      %p213 = pneg %p101
      %p214 = pneg %p98
      %p215 = pneg %p122
      %p216 = pneg %p119
      %p217 = pneg %p150
      %p218 = pneg %p147
      %p219 = scmp.lt.s32.totalorder %s20, 1
      %s220 = scalar_select %p219, %s20, 1
      %p221 = scmp.lt.s32.totalorder %s21, 15
      %s222 = scalar_select %p221, %s21, 15
      %s223 = smul.addr %s222, 2
      %s224 = smul.addr %s220, 32
      %s225 = sadd.s32 %s223, %s224
      %s226 = smul.addr %s225, 4
      %s227 = scalar_lea.vmem %s4, %s226
      %s228 = sadd.s32 %s21, %s22
      %p229 = scmp.lt.s32.totalorder %s20, 1
      %s230 = scalar_select %p229, %s20, 1
      %p231 = scmp.lt.s32.totalorder %s228, 15
      %s232 = scalar_select %p231, %s228, 15
      %s233 = smul.addr %s232, 2
      %s234 = smul.addr %s230, 32
      %s235 = sadd.s32 %s233, %s234
      %s236 = smul.addr %s235, 4
      %s237 = scalar_lea.vmem %s0, %s236
      %s238 = sadd.s32 %s21, %s22
      %p239 = scmp.lt.s32.totalorder %s20, 1
      %s240 = scalar_select %p239, %s20, 1
      %p241 = scmp.lt.s32.totalorder %s21, 15
      %s242 = scalar_select %p241, %s21, 15
      %s243 = smul.addr %s242, 2
      %s244 = smul.addr %s240, 32
      %s245 = sadd.s32 %s243, %s244
      %s246 = smul.addr %s245, 4
      %s247 = scalar_lea.vmem %s4, %s246
      %p249 = scmp.eq.s32.totalorder %s22, 0
      // Predicated region
      $region37: #{resnet_forward.25} parent=35 // pred_check
        %p250 = pneg %p249
      $region38: #{resnet_forward.25} parent=35 // pred_check_branch
        %252 = sbr.rel (%p250) target = $region40
      $region39: #{resnet_forward.25} parent=35 // pred_region
        %253 = vst [vmem:[#allocation2] sm:$0xff] 0.0
        %254 = vst [vmem:[#allocation2 + $0x8] sm:$0xff] 0.0
      $region40: #{resnet_forward.25} parent=35 // pred_fallthru
        _
      %v255 = vld [vmem:[%s237] sm:$0xf]
      %v256 = vld [vmem:[%s237 + $0x4] sm:$0xf]
      %v257 = vld [vmem:[#allocation2] sm:$0xff]
      %v258 = vld [vmem:[#allocation2 + $0x8] sm:$0xff]
      %s259 = smul.u32 %s22, 16
      %s260 = smul.addr %s259, 4
      %s261 = scalar_lea.vmem %s1, %s260
      %v262 = vld [vmem:[%s261] sm:$0xf]
      %v263 = vld [vmem:[%s261 + $0x4] sm:$0xf]
      %v264 = vld [vmem:[%s261 + $0x8] sm:$0xf]
      %v265 = vld [vmem:[%s261 + $0xc] sm:$0xf]
      %v266 = vld [vmem:[%s261 + $0x10] sm:$0xf]
      %v267 = vld [vmem:[%s261 + $0x14] sm:$0xf]
      %v268 = vld [vmem:[%s261 + $0x18] sm:$0xf]
      %v269 = vld [vmem:[%s261 + $0x1c] sm:$0xf]
      %v270 = vld [vmem:[%s261 + $0x20] sm:$0xf]
      %v271 = vld [vmem:[%s261 + $0x24] sm:$0xf]
      %v272 = vld [vmem:[%s261 + $0x28] sm:$0xf]
      %v273 = vld [vmem:[%s261 + $0x2c] sm:$0xf]
      %v274 = vld [vmem:[%s261 + $0x30] sm:$0xf]
      %v275 = vld [vmem:[%s261 + $0x34] sm:$0xf]
      %v276 = vld [vmem:[%s261 + $0x38] sm:$0xf]
      %v277 = vld [vmem:[%s261 + $0x3c] sm:$0xf]
      %v280 = vunpack.c.l.b16 %v255
      %v281 = vunpack.c.l.b16 %v256
      %v282 = vpack.c.b16 %v281, %v280
      %v300 = vunpack.c.l.b16 %v262
      %v301 = vunpack.c.l.b16 %v263
      %v302 = vunpack.c.l.b16 %v264
      %v303 = vunpack.c.l.b16 %v265
      %v304 = vunpack.c.l.b16 %v266
      %v305 = vunpack.c.l.b16 %v267
      %v306 = vunpack.c.l.b16 %v268
      %v307 = vunpack.c.l.b16 %v269
      %v308 = vunpack.c.l.b16 %v270
      %v309 = vunpack.c.l.b16 %v271
      %v310 = vunpack.c.l.b16 %v272
      %v311 = vunpack.c.l.b16 %v273
      %v312 = vunpack.c.l.b16 %v274
      %v313 = vunpack.c.l.b16 %v275
      %v314 = vunpack.c.l.b16 %v276
      %v315 = vunpack.c.l.b16 %v277
      %v316 = vpack.c.b16 %v301, %v300
      %v317 = vpack.c.b16 %v303, %v302
      %v318 = vpack.c.b16 %v305, %v304
      %v319 = vpack.c.b16 %v307, %v306
      %v320 = vpack.c.b16 %v309, %v308
      %v321 = vpack.c.b16 %v311, %v310
      %v322 = vpack.c.b16 %v313, %v312
      %v323 = vpack.c.b16 %v315, %v314
      %332 = vmatprep.subr.bf16.mxu0 0
      %333 = vmatpush1.bf16.msra.mxu0 %v323
      %334 = vmatprep.subr.bf16.mxu0 0
      %335 = vmatpush1.bf16.msra.mxu0 %v322
      %336 = vmatprep.subr.bf16.mxu0 0
      %337 = vmatpush1.bf16.msra.mxu0 %v321
      %338 = vmatprep.subr.bf16.mxu0 0
      %339 = vmatpush1.bf16.msra.mxu0 %v320
      %340 = vmatprep.subr.bf16.mxu0 0
      %341 = vmatpush1.bf16.msra.mxu0 %v319
      %342 = vmatprep.subr.bf16.mxu0 0
      %343 = vmatpush1.bf16.msra.mxu0 %v318
      %344 = vmatprep.subr.bf16.mxu0 0
      %345 = vmatpush1.bf16.msra.mxu0 %v317
      %346 = vmatprep.subr.bf16.mxu0 0
      %347 = vmatpush1.bf16.msra.mxu0 %v316
      %348 = vmatprep.subr.bf16.mxu0 0
      %349 = vmatpush2.bf16.msra.mxu0 0
      %350 = vmatprep.subr.bf16.mxu0 0
      %351 = vmatpush2.bf16.msra.mxu0 0
      %352 = vmatprep.subr.bf16.mxu0 0
      %353 = vmatpush2.bf16.msra.mxu0 0
      %354 = vmatprep.subr.bf16.mxu0 0
      %355 = vmatpush2.bf16.msra.mxu0 0
      %356 = vmatprep.subr.bf16.mxu0 0
      %357 = vmatpush2.bf16.msra.mxu0 0
      %358 = vmatprep.subr.bf16.mxu0 0
      %359 = vmatpush2.bf16.msra.mxu0 0
      %360 = vmatprep.subr.bf16.mxu0 0
      %361 = vmatpush2.bf16.msra.mxu0 0
      %362 = vmatprep.subr.bf16.mxu0 0
      %363 = vmatpush2.bf16.msra.mxu0 0
      %364 = vmatprep.mubr.bf16.mxu0 0
      %365 = vmatmul.mubr.bf16.gmra.mxu0 %v282
      %v366 = vpop.f32.mrf.mxu0
      %v367 = vadd.f32 0.0, %v366
      %v368 = vpop.f32.mrf.mxu0
      %v369 = vpop.f32.mrf.mxu0
      %v370 = vadd.f32 0.0, %v369
      %v371 = vpop.f32.mrf.mxu0
      %372 = vdwg.mxu0
      %v373 = vadd.f32 %v257, %v367
      %v374 = vadd.f32 %v258, %v370
      %375 = vst [vmem:[#allocation2] sm:$0xff] %v373
      %376 = vst [vmem:[#allocation2 + $0x8] sm:$0xff] %v374
      // Predicated region
      $region41: #{resnet_forward.25} parent=35 // pred_check
        %p377 = pneg %p249
      $region42: #{resnet_forward.25} parent=35 // pred_check_branch
        %379 = sbr.rel (%p377) target = $region44
      $region43: #{resnet_forward.25} parent=35 // pred_region
        %v380 = vld [vmem:[#allocation2] sm:$0xff]
        %v381 = vld [vmem:[#allocation2 + $0x8] sm:$0xff]
        %v382 = vld [vmem:[%s2] sm:$0x1]
        %v384 = vlaneseq
        %v385 = vshrl.u32 %v384, 7
        %v386 = vsub.s32 0, %v385
        %v387 = vrot.slane %v382, %v386
        %v389 = vmul.f32 %v380, %v387
        %v390 = vmul.f32 %v381, %v387
        %v391 = vld [vmem:[%s3] sm:$0x1]
        %v393 = vlaneseq
        %v394 = vshrl.u32 %v393, 7
        %v395 = vsub.s32 0, %v394
        %v396 = vrot.slane %v391, %v395
        %v398 = vadd.f32 %v389, %v396
        %v399 = vadd.f32 %v390, %v396
        %v400 = vpack.c.bf16 %v399, %v398
        %v402 = vunpack.c.l.b16 %v400
        %v403 = vunpack.c.h.b16 %v400
        %v404 = vpack.c.b16 %v402, %v402
        %v405 = vpack.c.b16 %v403, %v403
        %408 = vst [vmem:[%s247] sm:$0xf] %v404
        %409 = vst [vmem:[%s247 + $0x4] sm:$0xf] %v405
      $region44: #{resnet_forward.25} parent=35 // pred_fallthru
        _
      %p410 = scmp.lt.s32.totalorder %s20, 1
      %s411 = scalar_select %p410, %s20, 1
      %p412 = scmp.lt.s32.totalorder %s21, 15
      %s413 = scalar_select %p412, %s21, 15
      %s414 = smul.addr %s413, 2
      %s415 = smul.addr %s411, 32
      %s416 = sadd.s32 %s414, %s415
      %s417 = smul.addr %s416, 4
      %s418 = scalar_lea.vmem %s4, %s417
      // Predicated region
      $region45: #{resnet_forward.25} parent=35 // pred_check
        %p419 = pneg %p147
      $region46: #{resnet_forward.25} parent=35 // pred_check_branch
        %421 = sbr.rel (%p419) target = $region48
      $region47: #{resnet_forward.25} parent=35 // pred_region
        _
      $region48: #{resnet_forward.25} parent=35 // pred_fallthru
        _
    $region36: #{resnet_forward.25} parent=5 // pred_fallthru
      _
    %p422 = scmp.le.s32.totalorder 2, %s10
    // Predicated region
    $region49: #{resnet_forward.25} parent=5 // pred_check
      %p423 = pneg %p422
    $region50: #{resnet_forward.25} parent=5 // pred_check_branch
      %425 = sbr.rel (%p423) target = $region52
    $region51: #{resnet_forward.25} parent=5 // pred_region
      %s426 = ssub.s32 %s10, 2
      // Predicated region
      $region53: #{resnet_forward.25} parent=51 // pred_check
        %p427 = pneg %p153
      $region54: #{resnet_forward.25} parent=51 // pred_check_branch
        %429 = sbr.rel (%p427) target = $region56
      $region55: #{resnet_forward.25} parent=51 // pred_region
        %p430 = scmp.lt.s32.totalorder %s23, 1
        %s431 = scalar_select %p430, %s23, 1
        %p432 = scmp.lt.s32.totalorder %s24, 15
        %s433 = scalar_select %p432, %s24, 15
        %s434 = smul.addr %s433, 2
        %s435 = smul.addr %s431, 32
        %s436 = sadd.s32 %s434, %s435
        %s437 = smul.addr %s436, 4
        %s438 = scalar_lea.vmem %s4, %s437
      $region56: #{resnet_forward.25} parent=51 // pred_fallthru
        _
    $region52: #{resnet_forward.25} parent=5 // pred_fallthru
      _
  $region6: #{resnet_forward.25} parent=0 // loop_footer
    %s14 = sadd.s32 1, %s10
  $region7: #{resnet_forward.25} parent=0 // loop_footer_branch
    %9 = sbr.rel target = $region3
  $region8: #{resnet_forward.25} parent=0 // loop_exit
    _

// kernel: resnet_forward.24
$region0: #{resnet_forward.24}
  #allocation0 [shape = 'u32[]', space=smem, size = 0x4, offset = 0x4, fixed_abs, tag = 'smem constant byte address 0x4 - core index']
  #allocation1 [shape = 'u32[144,128]{1,0:T(1,128)}', space=vmem, size = 0x12000, scoped, tag = 'internal scratch']
  #allocation2 [shape = 'f32[16,128]{1,0:T(8,128)}', space=vmem, size = 0x2000, scoped, tag = 'scratch operand']
  %s0 = inlined_call_operand.vmem [shape: bf16[2,18,18,128], index: 0, kind: input, shape index: {}]
  %s1 = inlined_call_operand.vmem [shape: bf16[9,128,128], index: 1, kind: input, shape index: {}]
  %s2 = inlined_call_operand.vmem [shape: f32[1,128], index: 2, kind: input, shape index: {}]
  %s3 = inlined_call_operand.vmem [shape: f32[1,128], index: 3, kind: input, shape index: {}]
  %s4 = inlined_call_operand.vmem [shape: bf16[2,16,16,128], index: 4, kind: output, shape index: {}]
  %s5 = sld [smem:[#allocation0]]
  $region57: #{resnet_forward.24} parent=0
    _
  %s7 = ssub.s32 1, %s5
  %s8 = scalar_select 0, %s7, %s5
  loop: start=0, step=1, limit=98
  $region2: #{resnet_forward.24} parent=0 // loop_pre_header
    _
  $region3: #{resnet_forward.24} parent=0 // loop_header
    %s10 = sphi 0, %s14
    %p11 = scmp.ge.s32.totalorder %s10, 98
    %s17 = sphi 0, %s36
    %s18 = sphi 0, %s32
    %s19 = sphi 0, %s28
    %s20 = sphi 0, %s17
    %s21 = sphi 0, %s18
    %s22 = sphi 0, %s19
    %s23 = sphi 0, %s20
    %s24 = sphi 0, %s21
    %s25 = sphi 0, %s22
    %s43 = sphi 0, %s45
    %s46 = sphi 0, %s43
    %s47 = sphi 0, %s46
    %s63 = sphi 0, %s47
    %s67 = sphi 0, %s67
    %s69 = sphi 0, %s67
    %s70 = sphi 0, %s69
    %s84 = sphi 0, %s70
    %s88 = sphi 0, %s88
    %s90 = sphi 0, %s88
    %s91 = sphi 0, %s90
    %s105 = sphi 0, %s91
    %s109 = sphi 0, %s109
    %s111 = sphi 0, %s109
    %s112 = sphi 0, %s111
    %s126 = sphi 0, %s112
    %s134 = sphi 0, %s136
    %s137 = sphi 0, %s134
    %s138 = sphi 0, %s137
    %s154 = sphi 0, %s138
  $region4: #{resnet_forward.24} parent=0 // loop_header_branch
    %13 = sbr.rel (%p11) target = $region8
  $region5: #{resnet_forward.24} parent=0 // loop_body
    %s15 = ssub.s32 %s10, 1
    %s16 = ssub.s32 %s10, 2
    %s26 = sadd.s32 1, %s19
    %p27 = scmp.ge.s32.totalorder %s26, 3
    %s28 = scalar_select %p27, 0, %s26
    %s29 = sadd.s32 1, %s18
    %s30 = scalar_select %p27, %s29, %s18
    %p31 = scmp.ge.s32.totalorder %s30, 16
    %s32 = scalar_select %p31, 0, %s30
    %s33 = sadd.s32 1, %s17
    %s34 = scalar_select %p31, %s33, %s17
    %p35 = scmp.ge.s32.totalorder %s34, 2
    %s36 = scalar_select %p35, 0, %s34
    %s37 = sadd.s32 %s18, %s19
    %s38 = sadd.s32 %s32, %s28
    %s39 = ssub.s32 %s17, %s36
    %s40 = ssub.s32 %s37, %s38
    %s41 = sor.u32 %s39, %s40
    %p42 = scmp.eq.s32.totalorder %s41, 0
    %s44 = sadd.s32 %s43, 1
    %s45 = scalar_select %p42, %s43, %s44
    %p48 = pneg %p42
    %p49 = scmp.eq.s32.totalorder %s10, 95
    %p50 = por %p48, %p49
    %p51 = scmp.ne.s32.totalorder %s43, %s46
    %p52 = scmp.eq.s32.totalorder %s10, 0
    %p53 = por %p51, %p52
    %p54 = scmp.ne.s32.totalorder %s43, %s46
    %p55 = scmp.eq.s32.totalorder %s15, 95
    %p56 = por %p54, %p55
    %p57 = scmp.ne.s32.totalorder %s46, %s47
    %p58 = scmp.eq.s32.totalorder %s15, 0
    %p59 = por %p57, %p58
    %p60 = scmp.ne.s32.totalorder %s46, %s47
    %p61 = scmp.eq.s32.totalorder %s16, 95
    %p62 = por %p60, %p61
    %p64 = scmp.ne.s32.totalorder %s47, %s63
    %p65 = scmp.eq.s32.totalorder %s16, 0
    %p66 = por %p64, %p65
    %s68 = sadd.s32 %s67, 1
    %p71 = scmp.eq.s32.totalorder %s10, 95
    %p72 = scmp.ne.s32.totalorder %s67, %s69
    %p73 = scmp.eq.s32.totalorder %s10, 0
    %p74 = por %p72, %p73
    %p75 = scmp.ne.s32.totalorder %s67, %s69
    %p76 = scmp.eq.s32.totalorder %s15, 95
    %p77 = por %p75, %p76
    %p78 = scmp.ne.s32.totalorder %s69, %s70
    %p79 = scmp.eq.s32.totalorder %s15, 0
    %p80 = por %p78, %p79
    %p81 = scmp.ne.s32.totalorder %s69, %s70
    %p82 = scmp.eq.s32.totalorder %s16, 95
    %p83 = por %p81, %p82
    %p85 = scmp.ne.s32.totalorder %s70, %s84
    %p86 = scmp.eq.s32.totalorder %s16, 0
    %p87 = por %p85, %p86
    %s89 = sadd.s32 %s88, 1
    %p92 = scmp.eq.s32.totalorder %s10, 95
    %p93 = scmp.ne.s32.totalorder %s88, %s90
    %p94 = scmp.eq.s32.totalorder %s10, 0
    %p95 = por %p93, %p94
    %p96 = scmp.ne.s32.totalorder %s88, %s90
    %p97 = scmp.eq.s32.totalorder %s15, 95
    %p98 = por %p96, %p97
    %p99 = scmp.ne.s32.totalorder %s90, %s91
    %p100 = scmp.eq.s32.totalorder %s15, 0
    %p101 = por %p99, %p100
    %p102 = scmp.ne.s32.totalorder %s90, %s91
    %p103 = scmp.eq.s32.totalorder %s16, 95
    %p104 = por %p102, %p103
    %p106 = scmp.ne.s32.totalorder %s91, %s105
    %p107 = scmp.eq.s32.totalorder %s16, 0
    %p108 = por %p106, %p107
    %s110 = sadd.s32 %s109, 1
    %p113 = scmp.eq.s32.totalorder %s10, 95
    %p114 = scmp.ne.s32.totalorder %s109, %s111
    %p115 = scmp.eq.s32.totalorder %s10, 0
    %p116 = por %p114, %p115
    %p117 = scmp.ne.s32.totalorder %s109, %s111
    %p118 = scmp.eq.s32.totalorder %s15, 95
    %p119 = por %p117, %p118
    %p120 = scmp.ne.s32.totalorder %s111, %s112
    %p121 = scmp.eq.s32.totalorder %s15, 0
    %p122 = por %p120, %p121
    %p123 = scmp.ne.s32.totalorder %s111, %s112
    %p124 = scmp.eq.s32.totalorder %s16, 95
    %p125 = por %p123, %p124
    %p127 = scmp.ne.s32.totalorder %s112, %s126
    %p128 = scmp.eq.s32.totalorder %s16, 0
    %p129 = por %p127, %p128
    %s130 = ssub.s32 %s17, %s36
    %s131 = ssub.s32 %s18, %s32
    %s132 = sor.u32 %s130, %s131
    %p133 = scmp.eq.s32.totalorder %s132, 0
    %s135 = sadd.s32 %s134, 1
    %s136 = scalar_select %p133, %s134, %s135
    %p139 = pneg %p133
    %p140 = scmp.eq.s32.totalorder %s10, 95
    %p141 = por %p139, %p140
    %p142 = scmp.ne.s32.totalorder %s134, %s137
    %p143 = scmp.eq.s32.totalorder %s10, 0
    %p144 = por %p142, %p143
    %p145 = scmp.ne.s32.totalorder %s134, %s137
    %p146 = scmp.eq.s32.totalorder %s15, 95
    %p147 = por %p145, %p146
    %p148 = scmp.ne.s32.totalorder %s137, %s138
    %p149 = scmp.eq.s32.totalorder %s15, 0
    %p150 = por %p148, %p149
    %p151 = scmp.ne.s32.totalorder %s137, %s138
    %p152 = scmp.eq.s32.totalorder %s16, 95
    %p153 = por %p151, %p152
    %p155 = scmp.ne.s32.totalorder %s138, %s154
    %p156 = scmp.eq.s32.totalorder %s16, 0
    %p157 = por %p155, %p156
    %p158 = scmp.le.s32.totalorder 1, %s10
    %p159 = scmp.lt.s32.totalorder %s10, 97
    %p160 = pnand %p158, %p159
    %p161 = pneg %p160
    // Predicated region
    $region9: #{resnet_forward.24} parent=5 // pred_check
      _
    $region10: #{resnet_forward.24} parent=5 // pred_check_branch
      %163 = sbr.rel (%p160) target = $region12
    $region11: #{resnet_forward.24} parent=5 // pred_region
      %s164 = ssub.s32 %s10, 1
      // Predicated region
      $region13: #{resnet_forward.24} parent=11 // pred_check
        %p165 = pneg %p80
      $region14: #{resnet_forward.24} parent=11 // pred_check_branch
        %167 = sbr.rel (%p165) target = $region16
      $region15: #{resnet_forward.24} parent=11 // pred_region
        _
      $region16: #{resnet_forward.24} parent=11 // pred_fallthru
        _
      // Predicated region
      $region17: #{resnet_forward.24} parent=11 // pred_check
        %p168 = pneg %p101
      $region18: #{resnet_forward.24} parent=11 // pred_check_branch
        %170 = sbr.rel (%p168) target = $region20
      $region19: #{resnet_forward.24} parent=11 // pred_region
        _
      $region20: #{resnet_forward.24} parent=11 // pred_fallthru
        _
      // Predicated region
      $region21: #{resnet_forward.24} parent=11 // pred_check
        %p171 = pneg %p122
      $region22: #{resnet_forward.24} parent=11 // pred_check_branch
        %173 = sbr.rel (%p171) target = $region24
      $region23: #{resnet_forward.24} parent=11 // pred_region
        _
      $region24: #{resnet_forward.24} parent=11 // pred_fallthru
        _
    $region12: #{resnet_forward.24} parent=5 // pred_fallthru
      _
    %p174 = scmp.lt.s32.totalorder %s10, 96
    // Predicated region
    $region25: #{resnet_forward.24} parent=5 // pred_check
      %p175 = pneg %p174
    $region26: #{resnet_forward.24} parent=5 // pred_check_branch
      %177 = sbr.rel (%p175) target = $region28
    $region27: #{resnet_forward.24} parent=5 // pred_region
      // Predicated region
      $region29: #{resnet_forward.24} parent=27 // pred_check
        %p178 = pneg %p53
      $region30: #{resnet_forward.24} parent=27 // pred_check_branch
        %180 = sbr.rel (%p178) target = $region32
      $region31: #{resnet_forward.24} parent=27 // pred_region
        %s181 = sadd.s32 %s18, %s19
        %p182 = scmp.lt.s32.totalorder %s17, 1
        %s183 = scalar_select %p182, %s17, 1
        %p184 = scmp.lt.s32.totalorder %s181, 17
        %s185 = scalar_select %p184, %s181, 17
        %s186 = smul.addr %s185, 3
        %s187 = smul.addr %s183, 54
        %s188 = sadd.s32 %s186, %s187
        %s189 = smul.addr %s188, 4
        %s190 = scalar_lea.vmem %s0, %s189
        %s191 = sadd.s32 %s18, %s19
      $region32: #{resnet_forward.24} parent=27 // pred_fallthru
        _
    $region28: #{resnet_forward.24} parent=5 // pred_fallthru
      _
    %p192 = scmp.le.s32.totalorder 1, %s10
    %p193 = scmp.lt.s32.totalorder %s10, 97
    %p194 = pnand %p192, %p193
    %p195 = pneg %p194
    // Predicated region
    $region33: #{resnet_forward.24} parent=5 // pred_check
      _
    $region34: #{resnet_forward.24} parent=5 // pred_check_branch
      %197 = sbr.rel (%p194) target = $region36
    $region35: #{resnet_forward.24} parent=5 // pred_region
      %s198 = ssub.s32 %s10, 1
      %s199 = sadd.s32 %s21, %s22
      %p200 = scmp.lt.s32.totalorder %s20, 1
      %s201 = scalar_select %p200, %s20, 1
      %p202 = scmp.lt.s32.totalorder %s199, 17
      %s203 = scalar_select %p202, %s199, 17
      %s204 = smul.addr %s203, 3
      %s205 = smul.addr %s201, 54
      %s206 = sadd.s32 %s204, %s205
      %s207 = smul.addr %s206, 4
      %s208 = scalar_lea.vmem %s0, %s207
      %p209 = pneg %p59
      %p210 = pneg %p56
      %p211 = pneg %p80
      %p212 = pneg %p77
      %p213 = pneg %p101
      %p214 = pneg %p98
      %p215 = pneg %p122
      %p216 = pneg %p119
      %p217 = pneg %p150
      %p218 = pneg %p147
      %p219 = scmp.lt.s32.totalorder %s20, 1
      %s220 = scalar_select %p219, %s20, 1
      %p221 = scmp.lt.s32.totalorder %s21, 15
      %s222 = scalar_select %p221, %s21, 15
      %s223 = smul.addr %s222, 2
      %s224 = smul.addr %s220, 32
      %s225 = sadd.s32 %s223, %s224
      %s226 = smul.addr %s225, 4
      %s227 = scalar_lea.vmem %s4, %s226
      %s228 = sadd.s32 %s21, %s22
      %p229 = scmp.lt.s32.totalorder %s20, 1
      %s230 = scalar_select %p229, %s20, 1
      %p231 = scmp.lt.s32.totalorder %s228, 17
      %s232 = scalar_select %p231, %s228, 17
      %s233 = smul.addr %s232, 3
      %s234 = smul.addr %s230, 54
      %s235 = sadd.s32 %s233, %s234
      %s236 = smul.addr %s235, 4
      %s237 = scalar_lea.vmem %s0, %s236
      %s238 = sadd.s32 %s21, %s22
      %p239 = scmp.lt.s32.totalorder %s20, 1
      %s240 = scalar_select %p239, %s20, 1
      %p241 = scmp.lt.s32.totalorder %s21, 15
      %s242 = scalar_select %p241, %s21, 15
      %s243 = smul.addr %s242, 2
      %s244 = smul.addr %s240, 32
      %s245 = sadd.s32 %s243, %s244
      %s246 = smul.addr %s245, 4
      %s247 = scalar_lea.vmem %s4, %s246
      %p249 = scmp.eq.s32.totalorder %s22, 0
      // Predicated region
      $region37: #{resnet_forward.24} parent=35 // pred_check
        %p250 = pneg %p249
      $region38: #{resnet_forward.24} parent=35 // pred_check_branch
        %252 = sbr.rel (%p250) target = $region40
      $region39: #{resnet_forward.24} parent=35 // pred_region
        %253 = vst [vmem:[#allocation2] sm:$0xff] 0.0
        %254 = vst [vmem:[#allocation2 + $0x8] sm:$0xff] 0.0
      $region40: #{resnet_forward.24} parent=35 // pred_fallthru
        _
      %v255 = vld [vmem:[%s237] sm:$0xf]
      %v256 = vld [vmem:[%s237 + $0x4] sm:$0xf]
      %v257 = vld [vmem:[%s237 + $0x8] sm:$0x1]
      %v258 = vld [vmem:[#allocation2] sm:$0xff]
      %v259 = vld [vmem:[#allocation2 + $0x8] sm:$0xff]
      %s260 = smul.u32 %s22, 3
      %s261 = smul.u32 %s260, 16
      %s262 = smul.addr %s261, 4
      %s263 = scalar_lea.vmem %s1, %s262
      %v264 = vld [vmem:[%s263] sm:$0xf]
      %v265 = vld [vmem:[%s263 + $0x4] sm:$0xf]
      %v266 = vld [vmem:[%s263 + $0x8] sm:$0xf]
      %v267 = vld [vmem:[%s263 + $0xc] sm:$0xf]
      %v268 = vld [vmem:[%s263 + $0x10] sm:$0xf]
      %v269 = vld [vmem:[%s263 + $0x14] sm:$0xf]
      %v270 = vld [vmem:[%s263 + $0x18] sm:$0xf]
      %v271 = vld [vmem:[%s263 + $0x1c] sm:$0xf]
      %v272 = vld [vmem:[%s263 + $0x20] sm:$0xf]
      %v273 = vld [vmem:[%s263 + $0x24] sm:$0xf]
      %v274 = vld [vmem:[%s263 + $0x28] sm:$0xf]
      %v275 = vld [vmem:[%s263 + $0x2c] sm:$0xf]
      %v276 = vld [vmem:[%s263 + $0x30] sm:$0xf]
      %v277 = vld [vmem:[%s263 + $0x34] sm:$0xf]
      %v278 = vld [vmem:[%s263 + $0x38] sm:$0xf]
      %v279 = vld [vmem:[%s263 + $0x3c] sm:$0xf]
      %v282 = vunpack.c.l.b16 %v255
      %v283 = vunpack.c.l.b16 %v256
      %v284 = vpack.c.b16 %v283, %v282
      %v302 = vunpack.c.l.b16 %v264
      %v303 = vunpack.c.l.b16 %v265
      %v304 = vunpack.c.l.b16 %v266
      %v305 = vunpack.c.l.b16 %v267
      %v306 = vunpack.c.l.b16 %v268
      %v307 = vunpack.c.l.b16 %v269
      %v308 = vunpack.c.l.b16 %v270
      %v309 = vunpack.c.l.b16 %v271
      %v310 = vunpack.c.l.b16 %v272
      %v311 = vunpack.c.l.b16 %v273
      %v312 = vunpack.c.l.b16 %v274
      %v313 = vunpack.c.l.b16 %v275
      %v314 = vunpack.c.l.b16 %v276
      %v315 = vunpack.c.l.b16 %v277
      %v316 = vunpack.c.l.b16 %v278
      %v317 = vunpack.c.l.b16 %v279
      %v318 = vpack.c.b16 %v303, %v302
      %v319 = vpack.c.b16 %v305, %v304
      %v320 = vpack.c.b16 %v307, %v306
      %v321 = vpack.c.b16 %v309, %v308
      %v322 = vpack.c.b16 %v311, %v310
      %v323 = vpack.c.b16 %v313, %v312
      %v324 = vpack.c.b16 %v315, %v314
      %v325 = vpack.c.b16 %v317, %v316
      %334 = vmatprep.subr.bf16.mxu0 0
      %335 = vmatpush1.bf16.msra.mxu0 %v325
      %336 = vmatprep.subr.bf16.mxu0 0
      %337 = vmatpush1.bf16.msra.mxu0 %v324
      %338 = vmatprep.subr.bf16.mxu0 0
      %339 = vmatpush1.bf16.msra.mxu0 %v323
      %340 = vmatprep.subr.bf16.mxu0 0
      %341 = vmatpush1.bf16.msra.mxu0 %v322
      %342 = vmatprep.subr.bf16.mxu0 0
      %343 = vmatpush1.bf16.msra.mxu0 %v321
      %344 = vmatprep.subr.bf16.mxu0 0
      %345 = vmatpush1.bf16.msra.mxu0 %v320
      %346 = vmatprep.subr.bf16.mxu0 0
      %347 = vmatpush1.bf16.msra.mxu0 %v319
      %348 = vmatprep.subr.bf16.mxu0 0
      %349 = vmatpush1.bf16.msra.mxu0 %v318
      %350 = vmatprep.subr.bf16.mxu0 0
      %351 = vmatpush2.bf16.msra.mxu0 0
      %352 = vmatprep.subr.bf16.mxu0 0
      %353 = vmatpush2.bf16.msra.mxu0 0
      %354 = vmatprep.subr.bf16.mxu0 0
      %355 = vmatpush2.bf16.msra.mxu0 0
      %356 = vmatprep.subr.bf16.mxu0 0
      %357 = vmatpush2.bf16.msra.mxu0 0
      %358 = vmatprep.subr.bf16.mxu0 0
      %359 = vmatpush2.bf16.msra.mxu0 0
      %360 = vmatprep.subr.bf16.mxu0 0
      %361 = vmatpush2.bf16.msra.mxu0 0
      %362 = vmatprep.subr.bf16.mxu0 0
      %363 = vmatpush2.bf16.msra.mxu0 0
      %364 = vmatprep.subr.bf16.mxu0 0
      %365 = vmatpush2.bf16.msra.mxu0 0
      %366 = vmatprep.mubr.bf16.mxu0 0
      %367 = vmatmul.mubr.bf16.gmra.mxu0 %v284
      %v368 = vpop.f32.mrf.mxu0
      %v369 = vadd.f32 0.0, %v368
      %v370 = vpop.f32.mrf.mxu0
      %v371 = vpop.f32.mrf.mxu0
      %v372 = vadd.f32 0.0, %v371
      %v373 = vpop.f32.mrf.mxu0
      %374 = vdwg.mxu0
      %v375 = vadd.f32 %v258, %v369
      %v376 = vadd.f32 %v259, %v372
      %s377 = sadd.s32 %s260, 1
      %s378 = smul.u32 %s377, 16
      %s379 = smul.addr %s378, 4
      %s380 = scalar_lea.vmem %s1, %s379
      %v381 = vld [vmem:[%s380] sm:$0xf]
      %v382 = vld [vmem:[%s380 + $0x4] sm:$0xf]
      %v383 = vld [vmem:[%s380 + $0x8] sm:$0xf]
      %v384 = vld [vmem:[%s380 + $0xc] sm:$0xf]
      %v385 = vld [vmem:[%s380 + $0x10] sm:$0xf]
      %v386 = vld [vmem:[%s380 + $0x14] sm:$0xf]
      %v387 = vld [vmem:[%s380 + $0x18] sm:$0xf]
      %v388 = vld [vmem:[%s380 + $0x1c] sm:$0xf]
      %v389 = vld [vmem:[%s380 + $0x20] sm:$0xf]
      %v390 = vld [vmem:[%s380 + $0x24] sm:$0xf]
      %v391 = vld [vmem:[%s380 + $0x28] sm:$0xf]
      %v392 = vld [vmem:[%s380 + $0x2c] sm:$0xf]
      %v393 = vld [vmem:[%s380 + $0x30] sm:$0xf]
      %v394 = vld [vmem:[%s380 + $0x34] sm:$0xf]
      %v395 = vld [vmem:[%s380 + $0x38] sm:$0xf]
      %v396 = vld [vmem:[%s380 + $0x3c] sm:$0xf]
      %v398 = vunpack.c.l.b16 %v257
      %v399 = vpack.c.b16 %v398, %v398
      %vm400 = vsmask.f32 7424
      %v402 = vshrl.u32 %v284, 16
      %v404 = vshll.u32 %v284, 16
      %v406 = vrot.slane %v404, 1
      %v407 = vor.u32 %v402, %v406
      %v409 = vshll.u32 %v399, 16
      %v411 = vrot.slane %v409, 1
      %v412 = vsel %vm400, %v407, %v411
      %v430 = vunpack.c.l.b16 %v381
      %v431 = vunpack.c.l.b16 %v382
      %v432 = vunpack.c.l.b16 %v383
      %v433 = vunpack.c.l.b16 %v384
      %v434 = vunpack.c.l.b16 %v385
      %v435 = vunpack.c.l.b16 %v386
      %v436 = vunpack.c.l.b16 %v387
      %v437 = vunpack.c.l.b16 %v388
      %v438 = vunpack.c.l.b16 %v389
      %v439 = vunpack.c.l.b16 %v390
      %v440 = vunpack.c.l.b16 %v391
      %v441 = vunpack.c.l.b16 %v392
      %v442 = vunpack.c.l.b16 %v393
      %v443 = vunpack.c.l.b16 %v394
      %v444 = vunpack.c.l.b16 %v395
      %v445 = vunpack.c.l.b16 %v396
      %v446 = vpack.c.b16 %v431, %v430
      %v447 = vpack.c.b16 %v433, %v432
      %v448 = vpack.c.b16 %v435, %v434
      %v449 = vpack.c.b16 %v437, %v436
      %v450 = vpack.c.b16 %v439, %v438
      %v451 = vpack.c.b16 %v441, %v440
      %v452 = vpack.c.b16 %v443, %v442
      %v453 = vpack.c.b16 %v445, %v444
      %462 = vmatprep.subr.bf16.mxu0 0
      %463 = vmatpush1.bf16.msra.mxu0 %v453
      %464 = vmatprep.subr.bf16.mxu0 0
      %465 = vmatpush1.bf16.msra.mxu0 %v452
      %466 = vmatprep.subr.bf16.mxu0 0
      %467 = vmatpush1.bf16.msra.mxu0 %v451
      %468 = vmatprep.subr.bf16.mxu0 0
      %469 = vmatpush1.bf16.msra.mxu0 %v450
      %470 = vmatprep.subr.bf16.mxu0 0
      %471 = vmatpush1.bf16.msra.mxu0 %v449
      %472 = vmatprep.subr.bf16.mxu0 0
      %473 = vmatpush1.bf16.msra.mxu0 %v448
      %474 = vmatprep.subr.bf16.mxu0 0
      %475 = vmatpush1.bf16.msra.mxu0 %v447
      %476 = vmatprep.subr.bf16.mxu0 0
      %477 = vmatpush1.bf16.msra.mxu0 %v446
      %478 = vmatprep.subr.bf16.mxu0 0
      %479 = vmatpush2.bf16.msra.mxu0 0
      %480 = vmatprep.subr.bf16.mxu0 0
      %481 = vmatpush2.bf16.msra.mxu0 0
      %482 = vmatprep.subr.bf16.mxu0 0
      %483 = vmatpush2.bf16.msra.mxu0 0
      %484 = vmatprep.subr.bf16.mxu0 0
      %485 = vmatpush2.bf16.msra.mxu0 0
      %486 = vmatprep.subr.bf16.mxu0 0
      %487 = vmatpush2.bf16.msra.mxu0 0
      %488 = vmatprep.subr.bf16.mxu0 0
      %489 = vmatpush2.bf16.msra.mxu0 0
      %490 = vmatprep.subr.bf16.mxu0 0
      %491 = vmatpush2.bf16.msra.mxu0 0
      %492 = vmatprep.subr.bf16.mxu0 0
      %493 = vmatpush2.bf16.msra.mxu0 0
      %494 = vmatprep.mubr.bf16.mxu0 0
      %495 = vmatmul.mubr.bf16.gmra.mxu0 %v412
      %v496 = vpop.f32.mrf.mxu0
      %v497 = vadd.f32 0.0, %v496
      %v498 = vpop.f32.mrf.mxu0
      %v499 = vpop.f32.mrf.mxu0
      %v500 = vadd.f32 0.0, %v499
      %v501 = vpop.f32.mrf.mxu0
      %502 = vdwg.mxu0
      %v503 = vadd.f32 %v375, %v497
      %v504 = vadd.f32 %v376, %v500
      %s505 = sadd.s32 %s260, 2
      %s506 = smul.u32 %s505, 16
      %s507 = smul.addr %s506, 4
      %s508 = scalar_lea.vmem %s1, %s507
      %v509 = vld [vmem:[%s508] sm:$0xf]
      %v510 = vld [vmem:[%s508 + $0x4] sm:$0xf]
      %v511 = vld [vmem:[%s508 + $0x8] sm:$0xf]
      %v512 = vld [vmem:[%s508 + $0xc] sm:$0xf]
      %v513 = vld [vmem:[%s508 + $0x10] sm:$0xf]
      %v514 = vld [vmem:[%s508 + $0x14] sm:$0xf]
      %v515 = vld [vmem:[%s508 + $0x18] sm:$0xf]
      %v516 = vld [vmem:[%s508 + $0x1c] sm:$0xf]
      %v517 = vld [vmem:[%s508 + $0x20] sm:$0xf]
      %v518 = vld [vmem:[%s508 + $0x24] sm:$0xf]
      %v519 = vld [vmem:[%s508 + $0x28] sm:$0xf]
      %v520 = vld [vmem:[%s508 + $0x2c] sm:$0xf]
      %v521 = vld [vmem:[%s508 + $0x30] sm:$0xf]
      %v522 = vld [vmem:[%s508 + $0x34] sm:$0xf]
      %v523 = vld [vmem:[%s508 + $0x38] sm:$0xf]
      %v524 = vld [vmem:[%s508 + $0x3c] sm:$0xf]
      %vm525 = vcmask 1046528
      %v526 = vrot.slane %v284, 1
      %v527 = vrot.slane %v399, 1
      %v528 = vsel %vm525, %v526, %v527
      %v546 = vunpack.c.l.b16 %v509
      %v547 = vunpack.c.l.b16 %v510
      %v548 = vunpack.c.l.b16 %v511
      %v549 = vunpack.c.l.b16 %v512
      %v550 = vunpack.c.l.b16 %v513
      %v551 = vunpack.c.l.b16 %v514
      %v552 = vunpack.c.l.b16 %v515
      %v553 = vunpack.c.l.b16 %v516
      %v554 = vunpack.c.l.b16 %v517
      %v555 = vunpack.c.l.b16 %v518
      %v556 = vunpack.c.l.b16 %v519
      %v557 = vunpack.c.l.b16 %v520
      %v558 = vunpack.c.l.b16 %v521
      %v559 = vunpack.c.l.b16 %v522
      %v560 = vunpack.c.l.b16 %v523
      %v561 = vunpack.c.l.b16 %v524
      %v562 = vpack.c.b16 %v547, %v546
      %v563 = vpack.c.b16 %v549, %v548
      %v564 = vpack.c.b16 %v551, %v550
      %v565 = vpack.c.b16 %v553, %v552
      %v566 = vpack.c.b16 %v555, %v554
      %v567 = vpack.c.b16 %v557, %v556
      %v568 = vpack.c.b16 %v559, %v558
      %v569 = vpack.c.b16 %v561, %v560
      %578 = vmatprep.subr.bf16.mxu0 0
      %579 = vmatpush1.bf16.msra.mxu0 %v569
      %580 = vmatprep.subr.bf16.mxu0 0
      %581 = vmatpush1.bf16.msra.mxu0 %v568
      %582 = vmatprep.subr.bf16.mxu0 0
      %583 = vmatpush1.bf16.msra.mxu0 %v567
      %584 = vmatprep.subr.bf16.mxu0 0
      %585 = vmatpush1.bf16.msra.mxu0 %v566
      %586 = vmatprep.subr.bf16.mxu0 0
      %587 = vmatpush1.bf16.msra.mxu0 %v565
      %588 = vmatprep.subr.bf16.mxu0 0
      %589 = vmatpush1.bf16.msra.mxu0 %v564
      %590 = vmatprep.subr.bf16.mxu0 0
      %591 = vmatpush1.bf16.msra.mxu0 %v563
      %592 = vmatprep.subr.bf16.mxu0 0
      %593 = vmatpush1.bf16.msra.mxu0 %v562
      %594 = vmatprep.subr.bf16.mxu0 0
      %595 = vmatpush2.bf16.msra.mxu0 0
      %596 = vmatprep.subr.bf16.mxu0 0
      %597 = vmatpush2.bf16.msra.mxu0 0
      %598 = vmatprep.subr.bf16.mxu0 0
      %599 = vmatpush2.bf16.msra.mxu0 0
      %600 = vmatprep.subr.bf16.mxu0 0
      %601 = vmatpush2.bf16.msra.mxu0 0
      %602 = vmatprep.subr.bf16.mxu0 0
      %603 = vmatpush2.bf16.msra.mxu0 0
      %604 = vmatprep.subr.bf16.mxu0 0
      %605 = vmatpush2.bf16.msra.mxu0 0
      %606 = vmatprep.subr.bf16.mxu0 0
      %607 = vmatpush2.bf16.msra.mxu0 0
      %608 = vmatprep.subr.bf16.mxu0 0
      %609 = vmatpush2.bf16.msra.mxu0 0
      %610 = vmatprep.mubr.bf16.mxu0 0
      %611 = vmatmul.mubr.bf16.gmra.mxu0 %v528
      %v612 = vpop.f32.mrf.mxu0
      %v613 = vadd.f32 0.0, %v612
      %v614 = vpop.f32.mrf.mxu0
      %v615 = vpop.f32.mrf.mxu0
      %v616 = vadd.f32 0.0, %v615
      %v617 = vpop.f32.mrf.mxu0
      %618 = vdwg.mxu0
      %v619 = vadd.f32 %v503, %v613
      %v620 = vadd.f32 %v504, %v616
      %621 = vst [vmem:[#allocation2] sm:$0xff] %v619
      %622 = vst [vmem:[#allocation2 + $0x8] sm:$0xff] %v620
      %p623 = scmp.eq.s32.totalorder %s22, 2
      // Predicated region
      $region41: #{resnet_forward.24} parent=35 // pred_check
        %p624 = pneg %p623
      $region42: #{resnet_forward.24} parent=35 // pred_check_branch
        %626 = sbr.rel (%p624) target = $region44
      $region43: #{resnet_forward.24} parent=35 // pred_region
        %v627 = vld [vmem:[#allocation2] sm:$0xff]
        %v628 = vld [vmem:[#allocation2 + $0x8] sm:$0xff]
        %v629 = vld [vmem:[%s2] sm:$0x1]
        %v631 = vlaneseq
        %v632 = vshrl.u32 %v631, 7
        %v633 = vsub.s32 0, %v632
        %v634 = vrot.slane %v629, %v633
        %v636 = vmul.f32 %v627, %v634
        %v637 = vmul.f32 %v628, %v634
        %v638 = vld [vmem:[%s3] sm:$0x1]
        %v640 = vlaneseq
        %v641 = vshrl.u32 %v640, 7
        %v642 = vsub.s32 0, %v641
        %v643 = vrot.slane %v638, %v642
        %v645 = vadd.f32 %v636, %v643
        %v646 = vadd.f32 %v637, %v643
        %v647 = vmax.f32 %v645, 0.0
        %v648 = vmax.f32 %v646, 0.0
        %v649 = vpack.c.bf16 %v648, %v647
        %v651 = vunpack.c.l.b16 %v649
        %v652 = vunpack.c.h.b16 %v649
        %v653 = vpack.c.b16 %v651, %v651
        %v654 = vpack.c.b16 %v652, %v652
        %657 = vst [vmem:[%s247] sm:$0xf] %v653
        %658 = vst [vmem:[%s247 + $0x4] sm:$0xf] %v654
      $region44: #{resnet_forward.24} parent=35 // pred_fallthru
        _
      %p659 = scmp.lt.s32.totalorder %s20, 1
      %s660 = scalar_select %p659, %s20, 1
      %p661 = scmp.lt.s32.totalorder %s21, 15
      %s662 = scalar_select %p661, %s21, 15
      %s663 = smul.addr %s662, 2
      %s664 = smul.addr %s660, 32
      %s665 = sadd.s32 %s663, %s664
      %s666 = smul.addr %s665, 4
      %s667 = scalar_lea.vmem %s4, %s666
      // Predicated region
      $region45: #{resnet_forward.24} parent=35 // pred_check
        %p668 = pneg %p147
      $region46: #{resnet_forward.24} parent=35 // pred_check_branch
        %670 = sbr.rel (%p668) target = $region48
      $region47: #{resnet_forward.24} parent=35 // pred_region
        _
      $region48: #{resnet_forward.24} parent=35 // pred_fallthru
        _
    $region36: #{resnet_forward.24} parent=5 // pred_fallthru
      _
    %p671 = scmp.le.s32.totalorder 2, %s10
    // Predicated region
    $region49: #{resnet_forward.24} parent=5 // pred_check
      %p672 = pneg %p671
    $region50: #{resnet_forward.24} parent=5 // pred_check_branch
      %674 = sbr.rel (%p672) target = $region52
    $region51: #{resnet_forward.24} parent=5 // pred_region
      %s675 = ssub.s32 %s10, 2
      // Predicated region
      $region53: #{resnet_forward.24} parent=51 // pred_check
        %p676 = pneg %p153
      $region54: #{resnet_forward.24} parent=51 // pred_check_branch
        %678 = sbr.rel (%p676) target = $region56
      $region55: #{resnet_forward.24} parent=51 // pred_region
        %p679 = scmp.lt.s32.totalorder %s23, 1
        %s680 = scalar_select %p679, %s23, 1
        %p681 = scmp.lt.s32.totalorder %s24, 15
        %s682 = scalar_select %p681, %s24, 15
        %s683 = smul.addr %s682, 2
        %s684 = smul.addr %s680, 32
        %s685 = sadd.s32 %s683, %s684
        %s686 = smul.addr %s685, 4
        %s687 = scalar_lea.vmem %s4, %s686
      $region56: #{resnet_forward.24} parent=51 // pred_fallthru
        _
    $region52: #{resnet_forward.24} parent=5 // pred_fallthru
      _
  $region6: #{resnet_forward.24} parent=0 // loop_footer
    %s14 = sadd.s32 1, %s10
  $region7: #{resnet_forward.24} parent=0 // loop_footer_branch
    %9 = sbr.rel target = $region3
  $region8: #{resnet_forward.24} parent=0 // loop_exit
    _

// kernel: resnet_forward.26
$region0: #{resnet_forward.26}
  #allocation0 [shape = 'u32[]', space=smem, size = 0x4, offset = 0x4, fixed_abs, tag = 'smem constant byte address 0x4 - core index']
  #allocation1 [shape = 'u32[144,128]{1,0:T(1,128)}', space=vmem, size = 0x12000, scoped, tag = 'internal scratch']
  #allocation2 [shape = 'f32[16,128]{1,0:T(8,128)}', space=vmem, size = 0x2000, scoped, tag = 'scratch operand']
  %s0 = inlined_call_operand.vmem [shape: bf16[2,18,18,128], index: 0, kind: input, shape index: {}]
  %s1 = inlined_call_operand.vmem [shape: bf16[9,128,128], index: 1, kind: input, shape index: {}]
  %s2 = inlined_call_operand.vmem [shape: f32[1,128], index: 2, kind: input, shape index: {}]
  %s3 = inlined_call_operand.vmem [shape: f32[1,128], index: 3, kind: input, shape index: {}]
  %s4 = inlined_call_operand.vmem [shape: bf16[2,16,16,128], index: 4, kind: input, shape index: {}]
  %s5 = inlined_call_operand.vmem [shape: bf16[2,16,16,128], index: 5, kind: output, shape index: {}]
  %s6 = sld [smem:[#allocation0]]
  $region61: #{resnet_forward.26} parent=0
    _
  %s8 = ssub.s32 1, %s6
  %s9 = scalar_select 0, %s8, %s6
  loop: start=0, step=1, limit=98
  $region2: #{resnet_forward.26} parent=0 // loop_pre_header
    _
  $region3: #{resnet_forward.26} parent=0 // loop_header
    %s11 = sphi 0, %s15
    %p12 = scmp.ge.s32.totalorder %s11, 98
    %s18 = sphi 0, %s37
    %s19 = sphi 0, %s33
    %s20 = sphi 0, %s29
    %s21 = sphi 0, %s18
    %s22 = sphi 0, %s19
    %s23 = sphi 0, %s20
    %s24 = sphi 0, %s21
    %s25 = sphi 0, %s22
    %s26 = sphi 0, %s23
    %s44 = sphi 0, %s46
    %s47 = sphi 0, %s44
    %s48 = sphi 0, %s47
    %s64 = sphi 0, %s48
    %s68 = sphi 0, %s68
    %s70 = sphi 0, %s68
    %s71 = sphi 0, %s70
    %s85 = sphi 0, %s71
    %s89 = sphi 0, %s89
    %s91 = sphi 0, %s89
    %s92 = sphi 0, %s91
    %s106 = sphi 0, %s92
    %s110 = sphi 0, %s110
    %s112 = sphi 0, %s110
    %s113 = sphi 0, %s112
    %s127 = sphi 0, %s113
    %s135 = sphi 0, %s137
    %s138 = sphi 0, %s135
    %s139 = sphi 0, %s138
    %s155 = sphi 0, %s139
    %s163 = sphi 0, %s165
    %s166 = sphi 0, %s163
    %s167 = sphi 0, %s166
    %s183 = sphi 0, %s167
  $region4: #{resnet_forward.26} parent=0 // loop_header_branch
    %14 = sbr.rel (%p12) target = $region8
  $region5: #{resnet_forward.26} parent=0 // loop_body
    %s16 = ssub.s32 %s11, 1
    %s17 = ssub.s32 %s11, 2
    %s27 = sadd.s32 1, %s20
    %p28 = scmp.ge.s32.totalorder %s27, 3
    %s29 = scalar_select %p28, 0, %s27
    %s30 = sadd.s32 1, %s19
    %s31 = scalar_select %p28, %s30, %s19
    %p32 = scmp.ge.s32.totalorder %s31, 16
    %s33 = scalar_select %p32, 0, %s31
    %s34 = sadd.s32 1, %s18
    %s35 = scalar_select %p32, %s34, %s18
    %p36 = scmp.ge.s32.totalorder %s35, 2
    %s37 = scalar_select %p36, 0, %s35
    %s38 = sadd.s32 %s19, %s20
    %s39 = sadd.s32 %s33, %s29
    %s40 = ssub.s32 %s18, %s37
    %s41 = ssub.s32 %s38, %s39
    %s42 = sor.u32 %s40, %s41
    %p43 = scmp.eq.s32.totalorder %s42, 0
    %s45 = sadd.s32 %s44, 1
    %s46 = scalar_select %p43, %s44, %s45
    %p49 = pneg %p43
    %p50 = scmp.eq.s32.totalorder %s11, 95
    %p51 = por %p49, %p50
    %p52 = scmp.ne.s32.totalorder %s44, %s47
    %p53 = scmp.eq.s32.totalorder %s11, 0
    %p54 = por %p52, %p53
    %p55 = scmp.ne.s32.totalorder %s44, %s47
    %p56 = scmp.eq.s32.totalorder %s16, 95
    %p57 = por %p55, %p56
    %p58 = scmp.ne.s32.totalorder %s47, %s48
    %p59 = scmp.eq.s32.totalorder %s16, 0
    %p60 = por %p58, %p59
    %p61 = scmp.ne.s32.totalorder %s47, %s48
    %p62 = scmp.eq.s32.totalorder %s17, 95
    %p63 = por %p61, %p62
    %p65 = scmp.ne.s32.totalorder %s48, %s64
    %p66 = scmp.eq.s32.totalorder %s17, 0
    %p67 = por %p65, %p66
    %s69 = sadd.s32 %s68, 1
    %p72 = scmp.eq.s32.totalorder %s11, 95
    %p73 = scmp.ne.s32.totalorder %s68, %s70
    %p74 = scmp.eq.s32.totalorder %s11, 0
    %p75 = por %p73, %p74
    %p76 = scmp.ne.s32.totalorder %s68, %s70
    %p77 = scmp.eq.s32.totalorder %s16, 95
    %p78 = por %p76, %p77
    %p79 = scmp.ne.s32.totalorder %s70, %s71
    %p80 = scmp.eq.s32.totalorder %s16, 0
    %p81 = por %p79, %p80
    %p82 = scmp.ne.s32.totalorder %s70, %s71
    %p83 = scmp.eq.s32.totalorder %s17, 95
    %p84 = por %p82, %p83
    %p86 = scmp.ne.s32.totalorder %s71, %s85
    %p87 = scmp.eq.s32.totalorder %s17, 0
    %p88 = por %p86, %p87
    %s90 = sadd.s32 %s89, 1
    %p93 = scmp.eq.s32.totalorder %s11, 95
    %p94 = scmp.ne.s32.totalorder %s89, %s91
    %p95 = scmp.eq.s32.totalorder %s11, 0
    %p96 = por %p94, %p95
    %p97 = scmp.ne.s32.totalorder %s89, %s91
    %p98 = scmp.eq.s32.totalorder %s16, 95
    %p99 = por %p97, %p98
    %p100 = scmp.ne.s32.totalorder %s91, %s92
    %p101 = scmp.eq.s32.totalorder %s16, 0
    %p102 = por %p100, %p101
    %p103 = scmp.ne.s32.totalorder %s91, %s92
    %p104 = scmp.eq.s32.totalorder %s17, 95
    %p105 = por %p103, %p104
    %p107 = scmp.ne.s32.totalorder %s92, %s106
    %p108 = scmp.eq.s32.totalorder %s17, 0
    %p109 = por %p107, %p108
    %s111 = sadd.s32 %s110, 1
    %p114 = scmp.eq.s32.totalorder %s11, 95
    %p115 = scmp.ne.s32.totalorder %s110, %s112
    %p116 = scmp.eq.s32.totalorder %s11, 0
    %p117 = por %p115, %p116
    %p118 = scmp.ne.s32.totalorder %s110, %s112
    %p119 = scmp.eq.s32.totalorder %s16, 95
    %p120 = por %p118, %p119
    %p121 = scmp.ne.s32.totalorder %s112, %s113
    %p122 = scmp.eq.s32.totalorder %s16, 0
    %p123 = por %p121, %p122
    %p124 = scmp.ne.s32.totalorder %s112, %s113
    %p125 = scmp.eq.s32.totalorder %s17, 95
    %p126 = por %p124, %p125
    %p128 = scmp.ne.s32.totalorder %s113, %s127
    %p129 = scmp.eq.s32.totalorder %s17, 0
    %p130 = por %p128, %p129
    %s131 = ssub.s32 %s18, %s37
    %s132 = ssub.s32 %s19, %s33
    %s133 = sor.u32 %s131, %s132
    %p134 = scmp.eq.s32.totalorder %s133, 0
    %s136 = sadd.s32 %s135, 1
    %s137 = scalar_select %p134, %s135, %s136
    %p140 = pneg %p134
    %p141 = scmp.eq.s32.totalorder %s11, 95
    %p142 = por %p140, %p141
    %p143 = scmp.ne.s32.totalorder %s135, %s138
    %p144 = scmp.eq.s32.totalorder %s11, 0
    %p145 = por %p143, %p144
    %p146 = scmp.ne.s32.totalorder %s135, %s138
    %p147 = scmp.eq.s32.totalorder %s16, 95
    %p148 = por %p146, %p147
    %p149 = scmp.ne.s32.totalorder %s138, %s139
    %p150 = scmp.eq.s32.totalorder %s16, 0
    %p151 = por %p149, %p150
    %p152 = scmp.ne.s32.totalorder %s138, %s139
    %p153 = scmp.eq.s32.totalorder %s17, 95
    %p154 = por %p152, %p153
    %p156 = scmp.ne.s32.totalorder %s139, %s155
    %p157 = scmp.eq.s32.totalorder %s17, 0
    %p158 = por %p156, %p157
    %s159 = ssub.s32 %s18, %s37
    %s160 = ssub.s32 %s19, %s33
    %s161 = sor.u32 %s159, %s160
    %p162 = scmp.eq.s32.totalorder %s161, 0
    %s164 = sadd.s32 %s163, 1
    %s165 = scalar_select %p162, %s163, %s164
    %p168 = pneg %p162
    %p169 = scmp.eq.s32.totalorder %s11, 95
    %p170 = por %p168, %p169
    %p171 = scmp.ne.s32.totalorder %s163, %s166
    %p172 = scmp.eq.s32.totalorder %s11, 0
    %p173 = por %p171, %p172
    %p174 = scmp.ne.s32.totalorder %s163, %s166
    %p175 = scmp.eq.s32.totalorder %s16, 95
    %p176 = por %p174, %p175
    %p177 = scmp.ne.s32.totalorder %s166, %s167
    %p178 = scmp.eq.s32.totalorder %s16, 0
    %p179 = por %p177, %p178
    %p180 = scmp.ne.s32.totalorder %s166, %s167
    %p181 = scmp.eq.s32.totalorder %s17, 95
    %p182 = por %p180, %p181
    %p184 = scmp.ne.s32.totalorder %s167, %s183
    %p185 = scmp.eq.s32.totalorder %s17, 0
    %p186 = por %p184, %p185
    %p187 = scmp.le.s32.totalorder 1, %s11
    %p188 = scmp.lt.s32.totalorder %s11, 97
    %p189 = pnand %p187, %p188
    %p190 = pneg %p189
    // Predicated region
    $region9: #{resnet_forward.26} parent=5 // pred_check
      _
    $region10: #{resnet_forward.26} parent=5 // pred_check_branch
      %192 = sbr.rel (%p189) target = $region12
    $region11: #{resnet_forward.26} parent=5 // pred_region
      %s193 = ssub.s32 %s11, 1
      // Predicated region
      $region13: #{resnet_forward.26} parent=11 // pred_check
        %p194 = pneg %p81
      $region14: #{resnet_forward.26} parent=11 // pred_check_branch
        %196 = sbr.rel (%p194) target = $region16
      $region15: #{resnet_forward.26} parent=11 // pred_region
        _
      $region16: #{resnet_forward.26} parent=11 // pred_fallthru
        _
      // Predicated region
      $region17: #{resnet_forward.26} parent=11 // pred_check
        %p197 = pneg %p102
      $region18: #{resnet_forward.26} parent=11 // pred_check_branch
        %199 = sbr.rel (%p197) target = $region20
      $region19: #{resnet_forward.26} parent=11 // pred_region
        _
      $region20: #{resnet_forward.26} parent=11 // pred_fallthru
        _
      // Predicated region
      $region21: #{resnet_forward.26} parent=11 // pred_check
        %p200 = pneg %p123
      $region22: #{resnet_forward.26} parent=11 // pred_check_branch
        %202 = sbr.rel (%p200) target = $region24
      $region23: #{resnet_forward.26} parent=11 // pred_region
        _
      $region24: #{resnet_forward.26} parent=11 // pred_fallthru
        _
    $region12: #{resnet_forward.26} parent=5 // pred_fallthru
      _
    %p203 = scmp.lt.s32.totalorder %s11, 96
    // Predicated region
    $region25: #{resnet_forward.26} parent=5 // pred_check
      %p204 = pneg %p203
    $region26: #{resnet_forward.26} parent=5 // pred_check_branch
      %206 = sbr.rel (%p204) target = $region28
    $region27: #{resnet_forward.26} parent=5 // pred_region
      // Predicated region
      $region29: #{resnet_forward.26} parent=27 // pred_check
        %p207 = pneg %p54
      $region30: #{resnet_forward.26} parent=27 // pred_check_branch
        %209 = sbr.rel (%p207) target = $region32
      $region31: #{resnet_forward.26} parent=27 // pred_region
        %s210 = sadd.s32 %s19, %s20
        %p211 = scmp.lt.s32.totalorder %s18, 1
        %s212 = scalar_select %p211, %s18, 1
        %p213 = scmp.lt.s32.totalorder %s210, 17
        %s214 = scalar_select %p213, %s210, 17
        %s215 = smul.addr %s214, 3
        %s216 = smul.addr %s212, 54
        %s217 = sadd.s32 %s215, %s216
        %s218 = smul.addr %s217, 4
        %s219 = scalar_lea.vmem %s0, %s218
        %s220 = sadd.s32 %s19, %s20
      $region32: #{resnet_forward.26} parent=27 // pred_fallthru
        _
      // Predicated region
      $region33: #{resnet_forward.26} parent=27 // pred_check
        %p221 = pneg %p145
      $region34: #{resnet_forward.26} parent=27 // pred_check_branch
        %223 = sbr.rel (%p221) target = $region36
      $region35: #{resnet_forward.26} parent=27 // pred_region
        %p224 = scmp.lt.s32.totalorder %s18, 1
        %s225 = scalar_select %p224, %s18, 1
        %p226 = scmp.lt.s32.totalorder %s19, 15
        %s227 = scalar_select %p226, %s19, 15
        %s228 = smul.addr %s227, 2
        %s229 = smul.addr %s225, 32
        %s230 = sadd.s32 %s228, %s229
        %s231 = smul.addr %s230, 4
        %s232 = scalar_lea.vmem %s4, %s231
      $region36: #{resnet_forward.26} parent=27 // pred_fallthru
        _
    $region28: #{resnet_forward.26} parent=5 // pred_fallthru
      _
    %p233 = scmp.le.s32.totalorder 1, %s11
    %p234 = scmp.lt.s32.totalorder %s11, 97
    %p235 = pnand %p233, %p234
    %p236 = pneg %p235
    // Predicated region
    $region37: #{resnet_forward.26} parent=5 // pred_check
      _
    $region38: #{resnet_forward.26} parent=5 // pred_check_branch
      %238 = sbr.rel (%p235) target = $region40
    $region39: #{resnet_forward.26} parent=5 // pred_region
      %s239 = ssub.s32 %s11, 1
      %s240 = sadd.s32 %s22, %s23
      %p241 = scmp.lt.s32.totalorder %s21, 1
      %s242 = scalar_select %p241, %s21, 1
      %p243 = scmp.lt.s32.totalorder %s240, 17
      %s244 = scalar_select %p243, %s240, 17
      %s245 = smul.addr %s244, 3
      %s246 = smul.addr %s242, 54
      %s247 = sadd.s32 %s245, %s246
      %s248 = smul.addr %s247, 4
      %s249 = scalar_lea.vmem %s0, %s248
      %p250 = pneg %p60
      %p251 = pneg %p57
      %p252 = pneg %p81
      %p253 = pneg %p78
      %p254 = pneg %p102
      %p255 = pneg %p99
      %p256 = pneg %p123
      %p257 = pneg %p120
      %p258 = scmp.lt.s32.totalorder %s21, 1
      %s259 = scalar_select %p258, %s21, 1
      %p260 = scmp.lt.s32.totalorder %s22, 15
      %s261 = scalar_select %p260, %s22, 15
      %s262 = smul.addr %s261, 2
      %s263 = smul.addr %s259, 32
      %s264 = sadd.s32 %s262, %s263
      %s265 = smul.addr %s264, 4
      %s266 = scalar_lea.vmem %s4, %s265
      %p267 = pneg %p151
      %p268 = pneg %p148
      %p269 = pneg %p179
      %p270 = pneg %p176
      %p271 = scmp.lt.s32.totalorder %s21, 1
      %s272 = scalar_select %p271, %s21, 1
      %p273 = scmp.lt.s32.totalorder %s22, 15
      %s274 = scalar_select %p273, %s22, 15
      %s275 = smul.addr %s274, 2
      %s276 = smul.addr %s272, 32
      %s277 = sadd.s32 %s275, %s276
      %s278 = smul.addr %s277, 4
      %s279 = scalar_lea.vmem %s5, %s278
      %s280 = sadd.s32 %s22, %s23
      %p281 = scmp.lt.s32.totalorder %s21, 1
      %s282 = scalar_select %p281, %s21, 1
      %p283 = scmp.lt.s32.totalorder %s280, 17
      %s284 = scalar_select %p283, %s280, 17
      %s285 = smul.addr %s284, 3
      %s286 = smul.addr %s282, 54
      %s287 = sadd.s32 %s285, %s286
      %s288 = smul.addr %s287, 4
      %s289 = scalar_lea.vmem %s0, %s288
      %s290 = sadd.s32 %s22, %s23
      %p291 = scmp.lt.s32.totalorder %s21, 1
      %s292 = scalar_select %p291, %s21, 1
      %p293 = scmp.lt.s32.totalorder %s22, 15
      %s294 = scalar_select %p293, %s22, 15
      %s295 = smul.addr %s294, 2
      %s296 = smul.addr %s292, 32
      %s297 = sadd.s32 %s295, %s296
      %s298 = smul.addr %s297, 4
      %s299 = scalar_lea.vmem %s4, %s298
      %p300 = scmp.lt.s32.totalorder %s21, 1
      %s301 = scalar_select %p300, %s21, 1
      %p302 = scmp.lt.s32.totalorder %s22, 15
      %s303 = scalar_select %p302, %s22, 15
      %s304 = smul.addr %s303, 2
      %s305 = smul.addr %s301, 32
      %s306 = sadd.s32 %s304, %s305
      %s307 = smul.addr %s306, 4
      %s308 = scalar_lea.vmem %s5, %s307
      %p310 = scmp.eq.s32.totalorder %s23, 0
      // Predicated region
      $region41: #{resnet_forward.26} parent=39 // pred_check
        %p311 = pneg %p310
      $region42: #{resnet_forward.26} parent=39 // pred_check_branch
        %313 = sbr.rel (%p311) target = $region44
      $region43: #{resnet_forward.26} parent=39 // pred_region
        %314 = vst [vmem:[#allocation2] sm:$0xff] 0.0
        %315 = vst [vmem:[#allocation2 + $0x8] sm:$0xff] 0.0
      $region44: #{resnet_forward.26} parent=39 // pred_fallthru
        _
      %v316 = vld [vmem:[%s289] sm:$0xf]
      %v317 = vld [vmem:[%s289 + $0x4] sm:$0xf]
      %v318 = vld [vmem:[%s289 + $0x8] sm:$0x1]
      %v319 = vld [vmem:[#allocation2] sm:$0xff]
      %v320 = vld [vmem:[#allocation2 + $0x8] sm:$0xff]
      %s321 = smul.u32 %s23, 3
      %s322 = smul.u32 %s321, 16
      %s323 = smul.addr %s322, 4
      %s324 = scalar_lea.vmem %s1, %s323
      %v325 = vld [vmem:[%s324] sm:$0xf]
      %v326 = vld [vmem:[%s324 + $0x4] sm:$0xf]
      %v327 = vld [vmem:[%s324 + $0x8] sm:$0xf]
      %v328 = vld [vmem:[%s324 + $0xc] sm:$0xf]
      %v329 = vld [vmem:[%s324 + $0x10] sm:$0xf]
      %v330 = vld [vmem:[%s324 + $0x14] sm:$0xf]
      %v331 = vld [vmem:[%s324 + $0x18] sm:$0xf]
      %v332 = vld [vmem:[%s324 + $0x1c] sm:$0xf]
      %v333 = vld [vmem:[%s324 + $0x20] sm:$0xf]
      %v334 = vld [vmem:[%s324 + $0x24] sm:$0xf]
      %v335 = vld [vmem:[%s324 + $0x28] sm:$0xf]
      %v336 = vld [vmem:[%s324 + $0x2c] sm:$0xf]
      %v337 = vld [vmem:[%s324 + $0x30] sm:$0xf]
      %v338 = vld [vmem:[%s324 + $0x34] sm:$0xf]
      %v339 = vld [vmem:[%s324 + $0x38] sm:$0xf]
      %v340 = vld [vmem:[%s324 + $0x3c] sm:$0xf]
      %v343 = vunpack.c.l.b16 %v316
      %v344 = vunpack.c.l.b16 %v317
      %v345 = vpack.c.b16 %v344, %v343
      %v363 = vunpack.c.l.b16 %v325
      %v364 = vunpack.c.l.b16 %v326
      %v365 = vunpack.c.l.b16 %v327
      %v366 = vunpack.c.l.b16 %v328
      %v367 = vunpack.c.l.b16 %v329
      %v368 = vunpack.c.l.b16 %v330
      %v369 = vunpack.c.l.b16 %v331
      %v370 = vunpack.c.l.b16 %v332
      %v371 = vunpack.c.l.b16 %v333
      %v372 = vunpack.c.l.b16 %v334
      %v373 = vunpack.c.l.b16 %v335
      %v374 = vunpack.c.l.b16 %v336
      %v375 = vunpack.c.l.b16 %v337
      %v376 = vunpack.c.l.b16 %v338
      %v377 = vunpack.c.l.b16 %v339
      %v378 = vunpack.c.l.b16 %v340
      %v379 = vpack.c.b16 %v364, %v363
      %v380 = vpack.c.b16 %v366, %v365
      %v381 = vpack.c.b16 %v368, %v367
      %v382 = vpack.c.b16 %v370, %v369
      %v383 = vpack.c.b16 %v372, %v371
      %v384 = vpack.c.b16 %v374, %v373
      %v385 = vpack.c.b16 %v376, %v375
      %v386 = vpack.c.b16 %v378, %v377
      %395 = vmatprep.subr.bf16.mxu0 0
      %396 = vmatpush1.bf16.msra.mxu0 %v386
      %397 = vmatprep.subr.bf16.mxu0 0
      %398 = vmatpush1.bf16.msra.mxu0 %v385
      %399 = vmatprep.subr.bf16.mxu0 0
      %400 = vmatpush1.bf16.msra.mxu0 %v384
      %401 = vmatprep.subr.bf16.mxu0 0
      %402 = vmatpush1.bf16.msra.mxu0 %v383
      %403 = vmatprep.subr.bf16.mxu0 0
      %404 = vmatpush1.bf16.msra.mxu0 %v382
      %405 = vmatprep.subr.bf16.mxu0 0
      %406 = vmatpush1.bf16.msra.mxu0 %v381
      %407 = vmatprep.subr.bf16.mxu0 0
      %408 = vmatpush1.bf16.msra.mxu0 %v380
      %409 = vmatprep.subr.bf16.mxu0 0
      %410 = vmatpush1.bf16.msra.mxu0 %v379
      %411 = vmatprep.subr.bf16.mxu0 0
      %412 = vmatpush2.bf16.msra.mxu0 0
      %413 = vmatprep.subr.bf16.mxu0 0
      %414 = vmatpush2.bf16.msra.mxu0 0
      %415 = vmatprep.subr.bf16.mxu0 0
      %416 = vmatpush2.bf16.msra.mxu0 0
      %417 = vmatprep.subr.bf16.mxu0 0
      %418 = vmatpush2.bf16.msra.mxu0 0
      %419 = vmatprep.subr.bf16.mxu0 0
      %420 = vmatpush2.bf16.msra.mxu0 0
      %421 = vmatprep.subr.bf16.mxu0 0
      %422 = vmatpush2.bf16.msra.mxu0 0
      %423 = vmatprep.subr.bf16.mxu0 0
      %424 = vmatpush2.bf16.msra.mxu0 0
      %425 = vmatprep.subr.bf16.mxu0 0
      %426 = vmatpush2.bf16.msra.mxu0 0
      %427 = vmatprep.mubr.bf16.mxu0 0
      %428 = vmatmul.mubr.bf16.gmra.mxu0 %v345
      %v429 = vpop.f32.mrf.mxu0
      %v430 = vadd.f32 0.0, %v429
      %v431 = vpop.f32.mrf.mxu0
      %v432 = vpop.f32.mrf.mxu0
      %v433 = vadd.f32 0.0, %v432
      %v434 = vpop.f32.mrf.mxu0
      %435 = vdwg.mxu0
      %v436 = vadd.f32 %v319, %v430
      %v437 = vadd.f32 %v320, %v433
      %s438 = sadd.s32 %s321, 1
      %s439 = smul.u32 %s438, 16
      %s440 = smul.addr %s439, 4
      %s441 = scalar_lea.vmem %s1, %s440
      %v442 = vld [vmem:[%s441] sm:$0xf]
      %v443 = vld [vmem:[%s441 + $0x4] sm:$0xf]
      %v444 = vld [vmem:[%s441 + $0x8] sm:$0xf]
      %v445 = vld [vmem:[%s441 + $0xc] sm:$0xf]
      %v446 = vld [vmem:[%s441 + $0x10] sm:$0xf]
      %v447 = vld [vmem:[%s441 + $0x14] sm:$0xf]
      %v448 = vld [vmem:[%s441 + $0x18] sm:$0xf]
      %v449 = vld [vmem:[%s441 + $0x1c] sm:$0xf]
      %v450 = vld [vmem:[%s441 + $0x20] sm:$0xf]
      %v451 = vld [vmem:[%s441 + $0x24] sm:$0xf]
      %v452 = vld [vmem:[%s441 + $0x28] sm:$0xf]
      %v453 = vld [vmem:[%s441 + $0x2c] sm:$0xf]
      %v454 = vld [vmem:[%s441 + $0x30] sm:$0xf]
      %v455 = vld [vmem:[%s441 + $0x34] sm:$0xf]
      %v456 = vld [vmem:[%s441 + $0x38] sm:$0xf]
      %v457 = vld [vmem:[%s441 + $0x3c] sm:$0xf]
      %v459 = vunpack.c.l.b16 %v318
      %v460 = vpack.c.b16 %v459, %v459
      %vm461 = vsmask.f32 7424
      %v463 = vshrl.u32 %v345, 16
      %v465 = vshll.u32 %v345, 16
      %v467 = vrot.slane %v465, 1
      %v468 = vor.u32 %v463, %v467
      %v470 = vshll.u32 %v460, 16
      %v472 = vrot.slane %v470, 1
      %v473 = vsel %vm461, %v468, %v472
      %v491 = vunpack.c.l.b16 %v442
      %v492 = vunpack.c.l.b16 %v443
      %v493 = vunpack.c.l.b16 %v444
      %v494 = vunpack.c.l.b16 %v445
      %v495 = vunpack.c.l.b16 %v446
      %v496 = vunpack.c.l.b16 %v447
      %v497 = vunpack.c.l.b16 %v448
      %v498 = vunpack.c.l.b16 %v449
      %v499 = vunpack.c.l.b16 %v450
      %v500 = vunpack.c.l.b16 %v451
      %v501 = vunpack.c.l.b16 %v452
      %v502 = vunpack.c.l.b16 %v453
      %v503 = vunpack.c.l.b16 %v454
      %v504 = vunpack.c.l.b16 %v455
      %v505 = vunpack.c.l.b16 %v456
      %v506 = vunpack.c.l.b16 %v457
      %v507 = vpack.c.b16 %v492, %v491
      %v508 = vpack.c.b16 %v494, %v493
      %v509 = vpack.c.b16 %v496, %v495
      %v510 = vpack.c.b16 %v498, %v497
      %v511 = vpack.c.b16 %v500, %v499
      %v512 = vpack.c.b16 %v502, %v501
      %v513 = vpack.c.b16 %v504, %v503
      %v514 = vpack.c.b16 %v506, %v505
      %523 = vmatprep.subr.bf16.mxu0 0
      %524 = vmatpush1.bf16.msra.mxu0 %v514
      %525 = vmatprep.subr.bf16.mxu0 0
      %526 = vmatpush1.bf16.msra.mxu0 %v513
      %527 = vmatprep.subr.bf16.mxu0 0
      %528 = vmatpush1.bf16.msra.mxu0 %v512
      %529 = vmatprep.subr.bf16.mxu0 0
      %530 = vmatpush1.bf16.msra.mxu0 %v511
      %531 = vmatprep.subr.bf16.mxu0 0
      %532 = vmatpush1.bf16.msra.mxu0 %v510
      %533 = vmatprep.subr.bf16.mxu0 0
      %534 = vmatpush1.bf16.msra.mxu0 %v509
      %535 = vmatprep.subr.bf16.mxu0 0
      %536 = vmatpush1.bf16.msra.mxu0 %v508
      %537 = vmatprep.subr.bf16.mxu0 0
      %538 = vmatpush1.bf16.msra.mxu0 %v507
      %539 = vmatprep.subr.bf16.mxu0 0
      %540 = vmatpush2.bf16.msra.mxu0 0
      %541 = vmatprep.subr.bf16.mxu0 0
      %542 = vmatpush2.bf16.msra.mxu0 0
      %543 = vmatprep.subr.bf16.mxu0 0
      %544 = vmatpush2.bf16.msra.mxu0 0
      %545 = vmatprep.subr.bf16.mxu0 0
      %546 = vmatpush2.bf16.msra.mxu0 0
      %547 = vmatprep.subr.bf16.mxu0 0
      %548 = vmatpush2.bf16.msra.mxu0 0
      %549 = vmatprep.subr.bf16.mxu0 0
      %550 = vmatpush2.bf16.msra.mxu0 0
      %551 = vmatprep.subr.bf16.mxu0 0
      %552 = vmatpush2.bf16.msra.mxu0 0
      %553 = vmatprep.subr.bf16.mxu0 0
      %554 = vmatpush2.bf16.msra.mxu0 0
      %555 = vmatprep.mubr.bf16.mxu0 0
      %556 = vmatmul.mubr.bf16.gmra.mxu0 %v473
      %v557 = vpop.f32.mrf.mxu0
      %v558 = vadd.f32 0.0, %v557
      %v559 = vpop.f32.mrf.mxu0
      %v560 = vpop.f32.mrf.mxu0
      %v561 = vadd.f32 0.0, %v560
      %v562 = vpop.f32.mrf.mxu0
      %563 = vdwg.mxu0
      %v564 = vadd.f32 %v436, %v558
      %v565 = vadd.f32 %v437, %v561
      %s566 = sadd.s32 %s321, 2
      %s567 = smul.u32 %s566, 16
      %s568 = smul.addr %s567, 4
      %s569 = scalar_lea.vmem %s1, %s568
      %v570 = vld [vmem:[%s569] sm:$0xf]
      %v571 = vld [vmem:[%s569 + $0x4] sm:$0xf]
      %v572 = vld [vmem:[%s569 + $0x8] sm:$0xf]
      %v573 = vld [vmem:[%s569 + $0xc] sm:$0xf]
      %v574 = vld [vmem:[%s569 + $0x10] sm:$0xf]
      %v575 = vld [vmem:[%s569 + $0x14] sm:$0xf]
      %v576 = vld [vmem:[%s569 + $0x18] sm:$0xf]
      %v577 = vld [vmem:[%s569 + $0x1c] sm:$0xf]
      %v578 = vld [vmem:[%s569 + $0x20] sm:$0xf]
      %v579 = vld [vmem:[%s569 + $0x24] sm:$0xf]
      %v580 = vld [vmem:[%s569 + $0x28] sm:$0xf]
      %v581 = vld [vmem:[%s569 + $0x2c] sm:$0xf]
      %v582 = vld [vmem:[%s569 + $0x30] sm:$0xf]
      %v583 = vld [vmem:[%s569 + $0x34] sm:$0xf]
      %v584 = vld [vmem:[%s569 + $0x38] sm:$0xf]
      %v585 = vld [vmem:[%s569 + $0x3c] sm:$0xf]
      %vm586 = vcmask 1046528
      %v587 = vrot.slane %v345, 1
      %v588 = vrot.slane %v460, 1
      %v589 = vsel %vm586, %v587, %v588
      %v607 = vunpack.c.l.b16 %v570
      %v608 = vunpack.c.l.b16 %v571
      %v609 = vunpack.c.l.b16 %v572
      %v610 = vunpack.c.l.b16 %v573
      %v611 = vunpack.c.l.b16 %v574
      %v612 = vunpack.c.l.b16 %v575
      %v613 = vunpack.c.l.b16 %v576
      %v614 = vunpack.c.l.b16 %v577
      %v615 = vunpack.c.l.b16 %v578
      %v616 = vunpack.c.l.b16 %v579
      %v617 = vunpack.c.l.b16 %v580
      %v618 = vunpack.c.l.b16 %v581
      %v619 = vunpack.c.l.b16 %v582
      %v620 = vunpack.c.l.b16 %v583
      %v621 = vunpack.c.l.b16 %v584
      %v622 = vunpack.c.l.b16 %v585
      %v623 = vpack.c.b16 %v608, %v607
      %v624 = vpack.c.b16 %v610, %v609
      %v625 = vpack.c.b16 %v612, %v611
      %v626 = vpack.c.b16 %v614, %v613
      %v627 = vpack.c.b16 %v616, %v615
      %v628 = vpack.c.b16 %v618, %v617
      %v629 = vpack.c.b16 %v620, %v619
      %v630 = vpack.c.b16 %v622, %v621
      %639 = vmatprep.subr.bf16.mxu0 0
      %640 = vmatpush1.bf16.msra.mxu0 %v630
      %641 = vmatprep.subr.bf16.mxu0 0
      %642 = vmatpush1.bf16.msra.mxu0 %v629
      %643 = vmatprep.subr.bf16.mxu0 0
      %644 = vmatpush1.bf16.msra.mxu0 %v628
      %645 = vmatprep.subr.bf16.mxu0 0
      %646 = vmatpush1.bf16.msra.mxu0 %v627
      %647 = vmatprep.subr.bf16.mxu0 0
      %648 = vmatpush1.bf16.msra.mxu0 %v626
      %649 = vmatprep.subr.bf16.mxu0 0
      %650 = vmatpush1.bf16.msra.mxu0 %v625
      %651 = vmatprep.subr.bf16.mxu0 0
      %652 = vmatpush1.bf16.msra.mxu0 %v624
      %653 = vmatprep.subr.bf16.mxu0 0
      %654 = vmatpush1.bf16.msra.mxu0 %v623
      %655 = vmatprep.subr.bf16.mxu0 0
      %656 = vmatpush2.bf16.msra.mxu0 0
      %657 = vmatprep.subr.bf16.mxu0 0
      %658 = vmatpush2.bf16.msra.mxu0 0
      %659 = vmatprep.subr.bf16.mxu0 0
      %660 = vmatpush2.bf16.msra.mxu0 0
      %661 = vmatprep.subr.bf16.mxu0 0
      %662 = vmatpush2.bf16.msra.mxu0 0
      %663 = vmatprep.subr.bf16.mxu0 0
      %664 = vmatpush2.bf16.msra.mxu0 0
      %665 = vmatprep.subr.bf16.mxu0 0
      %666 = vmatpush2.bf16.msra.mxu0 0
      %667 = vmatprep.subr.bf16.mxu0 0
      %668 = vmatpush2.bf16.msra.mxu0 0
      %669 = vmatprep.subr.bf16.mxu0 0
      %670 = vmatpush2.bf16.msra.mxu0 0
      %671 = vmatprep.mubr.bf16.mxu0 0
      %672 = vmatmul.mubr.bf16.gmra.mxu0 %v589
      %v673 = vpop.f32.mrf.mxu0
      %v674 = vadd.f32 0.0, %v673
      %v675 = vpop.f32.mrf.mxu0
      %v676 = vpop.f32.mrf.mxu0
      %v677 = vadd.f32 0.0, %v676
      %v678 = vpop.f32.mrf.mxu0
      %679 = vdwg.mxu0
      %v680 = vadd.f32 %v564, %v674
      %v681 = vadd.f32 %v565, %v677
      %682 = vst [vmem:[#allocation2] sm:$0xff] %v680
      %683 = vst [vmem:[#allocation2 + $0x8] sm:$0xff] %v681
      %p684 = scmp.eq.s32.totalorder %s23, 2
      // Predicated region
      $region45: #{resnet_forward.26} parent=39 // pred_check
        %p685 = pneg %p684
      $region46: #{resnet_forward.26} parent=39 // pred_check_branch
        %687 = sbr.rel (%p685) target = $region48
      $region47: #{resnet_forward.26} parent=39 // pred_region
        %v688 = vld [vmem:[#allocation2] sm:$0xff]
        %v689 = vld [vmem:[#allocation2 + $0x8] sm:$0xff]
        %v690 = vld [vmem:[%s2] sm:$0x1]
        %v692 = vlaneseq
        %v693 = vshrl.u32 %v692, 7
        %v694 = vsub.s32 0, %v693
        %v695 = vrot.slane %v690, %v694
        %v697 = vmul.f32 %v688, %v695
        %v698 = vmul.f32 %v689, %v695
        %v699 = vld [vmem:[%s3] sm:$0x1]
        %v701 = vlaneseq
        %v702 = vshrl.u32 %v701, 7
        %v703 = vsub.s32 0, %v702
        %v704 = vrot.slane %v699, %v703
        %v706 = vadd.f32 %v697, %v704
        %v707 = vadd.f32 %v698, %v704
        %v708 = vld [vmem:[%s299] sm:$0xf]
        %v709 = vld [vmem:[%s299 + $0x4] sm:$0xf]
        %v710 = vunpack.c.l.bf16 %v708
        %v711 = vunpack.c.l.bf16 %v709
        %v712 = vadd.f32 %v706, %v710
        %v713 = vadd.f32 %v707, %v711
        %v714 = vmax.f32 %v712, 0.0
        %v715 = vmax.f32 %v713, 0.0
        %v716 = vpack.c.bf16 %v715, %v714
        %v718 = vunpack.c.l.b16 %v716
        %v719 = vunpack.c.h.b16 %v716
        %v720 = vpack.c.b16 %v718, %v718
        %v721 = vpack.c.b16 %v719, %v719
        %724 = vst [vmem:[%s308] sm:$0xf] %v720
        %725 = vst [vmem:[%s308 + $0x4] sm:$0xf] %v721
      $region48: #{resnet_forward.26} parent=39 // pred_fallthru
        _
      %p726 = scmp.lt.s32.totalorder %s21, 1
      %s727 = scalar_select %p726, %s21, 1
      %p728 = scmp.lt.s32.totalorder %s22, 15
      %s729 = scalar_select %p728, %s22, 15
      %s730 = smul.addr %s729, 2
      %s731 = smul.addr %s727, 32
      %s732 = sadd.s32 %s730, %s731
      %s733 = smul.addr %s732, 4
      %s734 = scalar_lea.vmem %s5, %s733
      // Predicated region
      $region49: #{resnet_forward.26} parent=39 // pred_check
        %p735 = pneg %p176
      $region50: #{resnet_forward.26} parent=39 // pred_check_branch
        %737 = sbr.rel (%p735) target = $region52
      $region51: #{resnet_forward.26} parent=39 // pred_region
        _
      $region52: #{resnet_forward.26} parent=39 // pred_fallthru
        _
    $region40: #{resnet_forward.26} parent=5 // pred_fallthru
      _
    %p738 = scmp.le.s32.totalorder 2, %s11
    // Predicated region
    $region53: #{resnet_forward.26} parent=5 // pred_check
      %p739 = pneg %p738
    $region54: #{resnet_forward.26} parent=5 // pred_check_branch
      %741 = sbr.rel (%p739) target = $region56
    $region55: #{resnet_forward.26} parent=5 // pred_region
      %s742 = ssub.s32 %s11, 2
      // Predicated region
      $region57: #{resnet_forward.26} parent=55 // pred_check
        %p743 = pneg %p182
      $region58: #{resnet_forward.26} parent=55 // pred_check_branch
        %745 = sbr.rel (%p743) target = $region60
      $region59: #{resnet_forward.26} parent=55 // pred_region
        %p746 = scmp.lt.s32.totalorder %s24, 1
        %s747 = scalar_select %p746, %s24, 1
        %p748 = scmp.lt.s32.totalorder %s25, 15
        %s749 = scalar_select %p748, %s25, 15
        %s750 = smul.addr %s749, 2
        %s751 = smul.addr %s747, 32
        %s752 = sadd.s32 %s750, %s751
        %s753 = smul.addr %s752, 4
        %s754 = scalar_lea.vmem %s5, %s753
      $region60: #{resnet_forward.26} parent=55 // pred_fallthru
        _
    $region56: #{resnet_forward.26} parent=5 // pred_fallthru
      _
  $region6: #{resnet_forward.26} parent=0 // loop_footer
    %s15 = sadd.s32 1, %s11
  $region7: #{resnet_forward.26} parent=0 // loop_footer_branch
    %10 = sbr.rel target = $region3
  $region8: #{resnet_forward.26} parent=0 // loop_exit
    _

// kernel: resnet_forward.28
$region0: #{resnet_forward.28}
  #allocation0 [shape = 'u32[]', space=smem, size = 0x4, offset = 0x4, fixed_abs, tag = 'smem constant byte address 0x4 - core index']
  #allocation1 [shape = 'u32[144,128]{1,0:T(1,128)}', space=vmem, size = 0x12000, scoped, tag = 'internal scratch']
  %s0 = inlined_call_operand.vmem [shape: bf16[2,16,8,256], index: 0, kind: input, shape index: {}]
  %s1 = inlined_call_operand.vmem [shape: bf16[2,8,8,128], index: 1, kind: output, shape index: {}]
  %s2 = sld [smem:[#allocation0]]
  $region37: #{resnet_forward.28} parent=0
    _
  %s4 = ssub.s32 1, %s2
  %s5 = scalar_select 0, %s4, %s2
  loop: start=0, step=1, limit=18
  $region2: #{resnet_forward.28} parent=0 // loop_pre_header
    _
  $region3: #{resnet_forward.28} parent=0 // loop_header
    %s7 = sphi 0, %s11
    %p8 = scmp.ge.s32.totalorder %s7, 18
    %s14 = sphi 0, %s26
    %s15 = sphi 0, %s22
    %s16 = sphi 0, %s14
    %s17 = sphi 0, %s15
    %s18 = sphi 0, %s16
    %s19 = sphi 0, %s17
    %s31 = sphi 0, %s33
    %s34 = sphi 0, %s31
    %s35 = sphi 0, %s34
    %s51 = sphi 0, %s35
    %s59 = sphi 0, %s61
    %s62 = sphi 0, %s59
    %s63 = sphi 0, %s62
    %s79 = sphi 0, %s63
  $region4: #{resnet_forward.28} parent=0 // loop_header_branch
    %10 = sbr.rel (%p8) target = $region8
  $region5: #{resnet_forward.28} parent=0 // loop_body
    %s12 = ssub.s32 %s7, 1
    %s13 = ssub.s32 %s7, 2
    %s20 = sadd.s32 1, %s15
    %p21 = scmp.ge.s32.totalorder %s20, 8
    %s22 = scalar_select %p21, 0, %s20
    %s23 = sadd.s32 1, %s14
    %s24 = scalar_select %p21, %s23, %s14
    %p25 = scmp.ge.s32.totalorder %s24, 2
    %s26 = scalar_select %p25, 0, %s24
    %s27 = ssub.s32 %s14, %s26
    %s28 = ssub.s32 %s15, %s22
    %s29 = sor.u32 %s27, %s28
    %p30 = scmp.eq.s32.totalorder %s29, 0
    %s32 = sadd.s32 %s31, 1
    %s33 = scalar_select %p30, %s31, %s32
    %p36 = pneg %p30
    %p37 = scmp.eq.s32.totalorder %s7, 15
    %p38 = por %p36, %p37
    %p39 = scmp.ne.s32.totalorder %s31, %s34
    %p40 = scmp.eq.s32.totalorder %s7, 0
    %p41 = por %p39, %p40
    %p42 = scmp.ne.s32.totalorder %s31, %s34
    %p43 = scmp.eq.s32.totalorder %s12, 15
    %p44 = por %p42, %p43
    %p45 = scmp.ne.s32.totalorder %s34, %s35
    %p46 = scmp.eq.s32.totalorder %s12, 0
    %p47 = por %p45, %p46
    %p48 = scmp.ne.s32.totalorder %s34, %s35
    %p49 = scmp.eq.s32.totalorder %s13, 15
    %p50 = por %p48, %p49
    %p52 = scmp.ne.s32.totalorder %s35, %s51
    %p53 = scmp.eq.s32.totalorder %s13, 0
    %p54 = por %p52, %p53
    %s55 = ssub.s32 %s14, %s26
    %s56 = ssub.s32 %s15, %s22
    %s57 = sor.u32 %s55, %s56
    %p58 = scmp.eq.s32.totalorder %s57, 0
    %s60 = sadd.s32 %s59, 1
    %s61 = scalar_select %p58, %s59, %s60
    %p64 = pneg %p58
    %p65 = scmp.eq.s32.totalorder %s7, 15
    %p66 = por %p64, %p65
    %p67 = scmp.ne.s32.totalorder %s59, %s62
    %p68 = scmp.eq.s32.totalorder %s7, 0
    %p69 = por %p67, %p68
    %p70 = scmp.ne.s32.totalorder %s59, %s62
    %p71 = scmp.eq.s32.totalorder %s12, 15
    %p72 = por %p70, %p71
    %p73 = scmp.ne.s32.totalorder %s62, %s63
    %p74 = scmp.eq.s32.totalorder %s12, 0
    %p75 = por %p73, %p74
    %p76 = scmp.ne.s32.totalorder %s62, %s63
    %p77 = scmp.eq.s32.totalorder %s13, 15
    %p78 = por %p76, %p77
    %p80 = scmp.ne.s32.totalorder %s63, %s79
    %p81 = scmp.eq.s32.totalorder %s13, 0
    %p82 = por %p80, %p81
    %p83 = scmp.le.s32.totalorder 1, %s7
    %p84 = scmp.lt.s32.totalorder %s7, 17
    %p85 = pnand %p83, %p84
    %p86 = pneg %p85
    // Predicated region
    $region9: #{resnet_forward.28} parent=5 // pred_check
      _
    $region10: #{resnet_forward.28} parent=5 // pred_check_branch
      %88 = sbr.rel (%p85) target = $region12
    $region11: #{resnet_forward.28} parent=5 // pred_region
      %s89 = ssub.s32 %s7, 1
    $region12: #{resnet_forward.28} parent=5 // pred_fallthru
      _
    %p90 = scmp.lt.s32.totalorder %s7, 16
    // Predicated region
    $region13: #{resnet_forward.28} parent=5 // pred_check
      %p91 = pneg %p90
    $region14: #{resnet_forward.28} parent=5 // pred_check_branch
      %93 = sbr.rel (%p91) target = $region16
    $region15: #{resnet_forward.28} parent=5 // pred_region
      // Predicated region
      $region17: #{resnet_forward.28} parent=15 // pred_check
        %p94 = pneg %p41
      $region18: #{resnet_forward.28} parent=15 // pred_check_branch
        %96 = sbr.rel (%p94) target = $region20
      $region19: #{resnet_forward.28} parent=15 // pred_region
        %s97 = smul.u32 2, %s15
        %p98 = scmp.lt.s32.totalorder %s14, 1
        %s99 = scalar_select %p98, %s14, 1
        %p100 = scmp.lt.s32.totalorder %s97, 15
        %s101 = scalar_select %p100, %s97, 15
        %s102 = smul.addr %s101, 2
        %s103 = smul.addr %s99, 32
        %s104 = sadd.s32 %s102, %s103
        %s105 = smul.addr %s104, 4
        %s106 = scalar_lea.vmem %s0, %s105
        %s107 = smul.u32 2, %s15
      $region20: #{resnet_forward.28} parent=15 // pred_fallthru
        _
    $region16: #{resnet_forward.28} parent=5 // pred_fallthru
      _
    %p108 = scmp.le.s32.totalorder 1, %s7
    %p109 = scmp.lt.s32.totalorder %s7, 17
    %p110 = pnand %p108, %p109
    %p111 = pneg %p110
    // Predicated region
    $region21: #{resnet_forward.28} parent=5 // pred_check
      _
    $region22: #{resnet_forward.28} parent=5 // pred_check_branch
      %113 = sbr.rel (%p110) target = $region24
    $region23: #{resnet_forward.28} parent=5 // pred_region
      %s114 = ssub.s32 %s7, 1
      %s115 = smul.u32 2, %s17
      %p116 = scmp.lt.s32.totalorder %s16, 1
      %s117 = scalar_select %p116, %s16, 1
      %p118 = scmp.lt.s32.totalorder %s115, 15
      %s119 = scalar_select %p118, %s115, 15
      %s120 = smul.addr %s119, 2
      %s121 = smul.addr %s117, 32
      %s122 = sadd.s32 %s120, %s121
      %s123 = smul.addr %s122, 4
      %s124 = scalar_lea.vmem %s0, %s123
      %p125 = pneg %p47
      %p126 = pneg %p44
      %p127 = pneg %p75
      %p128 = pneg %p72
      %p129 = scmp.lt.s32.totalorder %s16, 1
      %s130 = scalar_select %p129, %s16, 1
      %p131 = scmp.lt.s32.totalorder %s17, 7
      %s132 = scalar_select %p131, %s17, 7
      %s133 = smul.addr %s130, 8
      %s134 = sadd.s32 %s132, %s133
      %s135 = smul.addr %s134, 4
      %s136 = scalar_lea.vmem %s1, %s135
      %s137 = smul.u32 2, %s17
      %p138 = scmp.lt.s32.totalorder %s16, 1
      %s139 = scalar_select %p138, %s16, 1
      %p140 = scmp.lt.s32.totalorder %s137, 15
      %s141 = scalar_select %p140, %s137, 15
      %s142 = smul.addr %s141, 2
      %s143 = smul.addr %s139, 32
      %s144 = sadd.s32 %s142, %s143
      %s145 = smul.addr %s144, 4
      %s146 = scalar_lea.vmem %s0, %s145
      %s147 = smul.u32 2, %s17
      %p148 = scmp.lt.s32.totalorder %s16, 1
      %s149 = scalar_select %p148, %s16, 1
      %p150 = scmp.lt.s32.totalorder %s17, 7
      %s151 = scalar_select %p150, %s17, 7
      %s152 = smul.addr %s149, 8
      %s153 = sadd.s32 %s151, %s152
      %s154 = smul.addr %s153, 4
      %s155 = scalar_lea.vmem %s1, %s154
      %v156 = vld [vmem:[%s146] sm:$0xff]
      %s157 = scalar_lea.vmem %s146, 8
      %v158 = vld [vmem:[%s157] sm:$0xff]
      %v159 = vmax.bf16 %v156, %v158
      %v161 = vrot.slane %v159, 4
      %v163 = vmax.bf16 %v159, %v161
      %164 = vst [vmem:[%s155] sm:$0xf] %v163
      %p165 = scmp.lt.s32.totalorder %s16, 1
      %s166 = scalar_select %p165, %s16, 1
      %p167 = scmp.lt.s32.totalorder %s17, 7
      %s168 = scalar_select %p167, %s17, 7
      %s169 = smul.addr %s166, 8
      %s170 = sadd.s32 %s168, %s169
      %s171 = smul.addr %s170, 4
      %s172 = scalar_lea.vmem %s1, %s171
      // Predicated region
      $region25: #{resnet_forward.28} parent=23 // pred_check
        %p173 = pneg %p72
      $region26: #{resnet_forward.28} parent=23 // pred_check_branch
        %175 = sbr.rel (%p173) target = $region28
      $region27: #{resnet_forward.28} parent=23 // pred_region
        _
      $region28: #{resnet_forward.28} parent=23 // pred_fallthru
        _
    $region24: #{resnet_forward.28} parent=5 // pred_fallthru
      _
    %p176 = scmp.le.s32.totalorder 2, %s7
    // Predicated region
    $region29: #{resnet_forward.28} parent=5 // pred_check
      %p177 = pneg %p176
    $region30: #{resnet_forward.28} parent=5 // pred_check_branch
      %179 = sbr.rel (%p177) target = $region32
    $region31: #{resnet_forward.28} parent=5 // pred_region
      %s180 = ssub.s32 %s7, 2
      // Predicated region
      $region33: #{resnet_forward.28} parent=31 // pred_check
        %p181 = pneg %p78
      $region34: #{resnet_forward.28} parent=31 // pred_check_branch
        %183 = sbr.rel (%p181) target = $region36
      $region35: #{resnet_forward.28} parent=31 // pred_region
        %p184 = scmp.lt.s32.totalorder %s18, 1
        %s185 = scalar_select %p184, %s18, 1
        %p186 = scmp.lt.s32.totalorder %s19, 7
        %s187 = scalar_select %p186, %s19, 7
        %s188 = smul.addr %s185, 8
        %s189 = sadd.s32 %s187, %s188
        %s190 = smul.addr %s189, 4
        %s191 = scalar_lea.vmem %s1, %s190
      $region36: #{resnet_forward.28} parent=31 // pred_fallthru
        _
    $region32: #{resnet_forward.28} parent=5 // pred_fallthru
      _
  $region6: #{resnet_forward.28} parent=0 // loop_footer
    %s11 = sadd.s32 1, %s7
  $region7: #{resnet_forward.28} parent=0 // loop_footer_branch
    %6 = sbr.rel target = $region3
  $region8: #{resnet_forward.28} parent=0 // loop_exit
    _

// kernel: resnet_forward.29
$region0: #{resnet_forward.29}
  #allocation0 [shape = 'u32[]', space=smem, size = 0x4, offset = 0x4, fixed_abs, tag = 'smem constant byte address 0x4 - core index']
  #allocation1 [shape = 'u32[144,128]{1,0:T(1,128)}', space=vmem, size = 0x12000, scoped, tag = 'internal scratch']
  #allocation2 [shape = 'f32[8,128]{1,0:T(8,128)}', space=vmem, size = 0x1000, scoped, tag = 'scratch operand']
  %s0 = inlined_call_operand.vmem [shape: bf16[2,10,10,128], index: 0, kind: input, shape index: {}]
  %s1 = inlined_call_operand.vmem [shape: bf16[9,128,128], index: 1, kind: input, shape index: {}]
  %s2 = inlined_call_operand.vmem [shape: f32[1,128], index: 2, kind: input, shape index: {}]
  %s3 = inlined_call_operand.vmem [shape: f32[1,128], index: 3, kind: input, shape index: {}]
  %s4 = inlined_call_operand.vmem [shape: bf16[2,8,8,128], index: 4, kind: output, shape index: {}]
  %s5 = sld [smem:[#allocation0]]
  $region57: #{resnet_forward.29} parent=0
    _
  %s7 = ssub.s32 1, %s5
  %s8 = scalar_select 0, %s7, %s5
  loop: start=0, step=1, limit=50
  $region2: #{resnet_forward.29} parent=0 // loop_pre_header
    _
  $region3: #{resnet_forward.29} parent=0 // loop_header
    %s10 = sphi 0, %s14
    %p11 = scmp.ge.s32.totalorder %s10, 50
    %s17 = sphi 0, %s36
    %s18 = sphi 0, %s32
    %s19 = sphi 0, %s28
    %s20 = sphi 0, %s17
    %s21 = sphi 0, %s18
    %s22 = sphi 0, %s19
    %s23 = sphi 0, %s20
    %s24 = sphi 0, %s21
    %s25 = sphi 0, %s22
    %s43 = sphi 0, %s45
    %s46 = sphi 0, %s43
    %s47 = sphi 0, %s46
    %s63 = sphi 0, %s47
    %s67 = sphi 0, %s67
    %s69 = sphi 0, %s67
    %s70 = sphi 0, %s69
    %s84 = sphi 0, %s70
    %s88 = sphi 0, %s88
    %s90 = sphi 0, %s88
    %s91 = sphi 0, %s90
    %s105 = sphi 0, %s91
    %s109 = sphi 0, %s109
    %s111 = sphi 0, %s109
    %s112 = sphi 0, %s111
    %s126 = sphi 0, %s112
    %s134 = sphi 0, %s136
    %s137 = sphi 0, %s134
    %s138 = sphi 0, %s137
    %s154 = sphi 0, %s138
  $region4: #{resnet_forward.29} parent=0 // loop_header_branch
    %13 = sbr.rel (%p11) target = $region8
  $region5: #{resnet_forward.29} parent=0 // loop_body
    %s15 = ssub.s32 %s10, 1
    %s16 = ssub.s32 %s10, 2
    %s26 = sadd.s32 1, %s19
    %p27 = scmp.ge.s32.totalorder %s26, 3
    %s28 = scalar_select %p27, 0, %s26
    %s29 = sadd.s32 1, %s18
    %s30 = scalar_select %p27, %s29, %s18
    %p31 = scmp.ge.s32.totalorder %s30, 8
    %s32 = scalar_select %p31, 0, %s30
    %s33 = sadd.s32 1, %s17
    %s34 = scalar_select %p31, %s33, %s17
    %p35 = scmp.ge.s32.totalorder %s34, 2
    %s36 = scalar_select %p35, 0, %s34
    %s37 = sadd.s32 %s18, %s19
    %s38 = sadd.s32 %s32, %s28
    %s39 = ssub.s32 %s17, %s36
    %s40 = ssub.s32 %s37, %s38
    %s41 = sor.u32 %s39, %s40
    %p42 = scmp.eq.s32.totalorder %s41, 0
    %s44 = sadd.s32 %s43, 1
    %s45 = scalar_select %p42, %s43, %s44
    %p48 = pneg %p42
    %p49 = scmp.eq.s32.totalorder %s10, 47
    %p50 = por %p48, %p49
    %p51 = scmp.ne.s32.totalorder %s43, %s46
    %p52 = scmp.eq.s32.totalorder %s10, 0
    %p53 = por %p51, %p52
    %p54 = scmp.ne.s32.totalorder %s43, %s46
    %p55 = scmp.eq.s32.totalorder %s15, 47
    %p56 = por %p54, %p55
    %p57 = scmp.ne.s32.totalorder %s46, %s47
    %p58 = scmp.eq.s32.totalorder %s15, 0
    %p59 = por %p57, %p58
    %p60 = scmp.ne.s32.totalorder %s46, %s47
    %p61 = scmp.eq.s32.totalorder %s16, 47
    %p62 = por %p60, %p61
    %p64 = scmp.ne.s32.totalorder %s47, %s63
    %p65 = scmp.eq.s32.totalorder %s16, 0
    %p66 = por %p64, %p65
    %s68 = sadd.s32 %s67, 1
    %p71 = scmp.eq.s32.totalorder %s10, 47
    %p72 = scmp.ne.s32.totalorder %s67, %s69
    %p73 = scmp.eq.s32.totalorder %s10, 0
    %p74 = por %p72, %p73
    %p75 = scmp.ne.s32.totalorder %s67, %s69
    %p76 = scmp.eq.s32.totalorder %s15, 47
    %p77 = por %p75, %p76
    %p78 = scmp.ne.s32.totalorder %s69, %s70
    %p79 = scmp.eq.s32.totalorder %s15, 0
    %p80 = por %p78, %p79
    %p81 = scmp.ne.s32.totalorder %s69, %s70
    %p82 = scmp.eq.s32.totalorder %s16, 47
    %p83 = por %p81, %p82
    %p85 = scmp.ne.s32.totalorder %s70, %s84
    %p86 = scmp.eq.s32.totalorder %s16, 0
    %p87 = por %p85, %p86
    %s89 = sadd.s32 %s88, 1
    %p92 = scmp.eq.s32.totalorder %s10, 47
    %p93 = scmp.ne.s32.totalorder %s88, %s90
    %p94 = scmp.eq.s32.totalorder %s10, 0
    %p95 = por %p93, %p94
    %p96 = scmp.ne.s32.totalorder %s88, %s90
    %p97 = scmp.eq.s32.totalorder %s15, 47
    %p98 = por %p96, %p97
    %p99 = scmp.ne.s32.totalorder %s90, %s91
    %p100 = scmp.eq.s32.totalorder %s15, 0
    %p101 = por %p99, %p100
    %p102 = scmp.ne.s32.totalorder %s90, %s91
    %p103 = scmp.eq.s32.totalorder %s16, 47
    %p104 = por %p102, %p103
    %p106 = scmp.ne.s32.totalorder %s91, %s105
    %p107 = scmp.eq.s32.totalorder %s16, 0
    %p108 = por %p106, %p107
    %s110 = sadd.s32 %s109, 1
    %p113 = scmp.eq.s32.totalorder %s10, 47
    %p114 = scmp.ne.s32.totalorder %s109, %s111
    %p115 = scmp.eq.s32.totalorder %s10, 0
    %p116 = por %p114, %p115
    %p117 = scmp.ne.s32.totalorder %s109, %s111
    %p118 = scmp.eq.s32.totalorder %s15, 47
    %p119 = por %p117, %p118
    %p120 = scmp.ne.s32.totalorder %s111, %s112
    %p121 = scmp.eq.s32.totalorder %s15, 0
    %p122 = por %p120, %p121
    %p123 = scmp.ne.s32.totalorder %s111, %s112
    %p124 = scmp.eq.s32.totalorder %s16, 47
    %p125 = por %p123, %p124
    %p127 = scmp.ne.s32.totalorder %s112, %s126
    %p128 = scmp.eq.s32.totalorder %s16, 0
    %p129 = por %p127, %p128
    %s130 = ssub.s32 %s17, %s36
    %s131 = ssub.s32 %s18, %s32
    %s132 = sor.u32 %s130, %s131
    %p133 = scmp.eq.s32.totalorder %s132, 0
    %s135 = sadd.s32 %s134, 1
    %s136 = scalar_select %p133, %s134, %s135
    %p139 = pneg %p133
    %p140 = scmp.eq.s32.totalorder %s10, 47
    %p141 = por %p139, %p140
    %p142 = scmp.ne.s32.totalorder %s134, %s137
    %p143 = scmp.eq.s32.totalorder %s10, 0
    %p144 = por %p142, %p143
    %p145 = scmp.ne.s32.totalorder %s134, %s137
    %p146 = scmp.eq.s32.totalorder %s15, 47
    %p147 = por %p145, %p146
    %p148 = scmp.ne.s32.totalorder %s137, %s138
    %p149 = scmp.eq.s32.totalorder %s15, 0
    %p150 = por %p148, %p149
    %p151 = scmp.ne.s32.totalorder %s137, %s138
    %p152 = scmp.eq.s32.totalorder %s16, 47
    %p153 = por %p151, %p152
    %p155 = scmp.ne.s32.totalorder %s138, %s154
    %p156 = scmp.eq.s32.totalorder %s16, 0
    %p157 = por %p155, %p156
    %p158 = scmp.le.s32.totalorder 1, %s10
    %p159 = scmp.lt.s32.totalorder %s10, 49
    %p160 = pnand %p158, %p159
    %p161 = pneg %p160
    // Predicated region
    $region9: #{resnet_forward.29} parent=5 // pred_check
      _
    $region10: #{resnet_forward.29} parent=5 // pred_check_branch
      %163 = sbr.rel (%p160) target = $region12
    $region11: #{resnet_forward.29} parent=5 // pred_region
      %s164 = ssub.s32 %s10, 1
      // Predicated region
      $region13: #{resnet_forward.29} parent=11 // pred_check
        %p165 = pneg %p80
      $region14: #{resnet_forward.29} parent=11 // pred_check_branch
        %167 = sbr.rel (%p165) target = $region16
      $region15: #{resnet_forward.29} parent=11 // pred_region
        _
      $region16: #{resnet_forward.29} parent=11 // pred_fallthru
        _
      // Predicated region
      $region17: #{resnet_forward.29} parent=11 // pred_check
        %p168 = pneg %p101
      $region18: #{resnet_forward.29} parent=11 // pred_check_branch
        %170 = sbr.rel (%p168) target = $region20
      $region19: #{resnet_forward.29} parent=11 // pred_region
        _
      $region20: #{resnet_forward.29} parent=11 // pred_fallthru
        _
      // Predicated region
      $region21: #{resnet_forward.29} parent=11 // pred_check
        %p171 = pneg %p122
      $region22: #{resnet_forward.29} parent=11 // pred_check_branch
        %173 = sbr.rel (%p171) target = $region24
      $region23: #{resnet_forward.29} parent=11 // pred_region
        _
      $region24: #{resnet_forward.29} parent=11 // pred_fallthru
        _
    $region12: #{resnet_forward.29} parent=5 // pred_fallthru
      _
    %p174 = scmp.lt.s32.totalorder %s10, 48
    // Predicated region
    $region25: #{resnet_forward.29} parent=5 // pred_check
      %p175 = pneg %p174
    $region26: #{resnet_forward.29} parent=5 // pred_check_branch
      %177 = sbr.rel (%p175) target = $region28
    $region27: #{resnet_forward.29} parent=5 // pred_region
      // Predicated region
      $region29: #{resnet_forward.29} parent=27 // pred_check
        %p178 = pneg %p53
      $region30: #{resnet_forward.29} parent=27 // pred_check_branch
        %180 = sbr.rel (%p178) target = $region32
      $region31: #{resnet_forward.29} parent=27 // pred_region
        %s181 = sadd.s32 %s18, %s19
        %p182 = scmp.lt.s32.totalorder %s17, 1
        %s183 = scalar_select %p182, %s17, 1
        %p184 = scmp.lt.s32.totalorder %s181, 9
        %s185 = scalar_select %p184, %s181, 9
        %s186 = smul.addr %s185, 2
        %s187 = smul.addr %s183, 20
        %s188 = sadd.s32 %s186, %s187
        %s189 = smul.addr %s188, 4
        %s190 = scalar_lea.vmem %s0, %s189
        %s191 = sadd.s32 %s18, %s19
      $region32: #{resnet_forward.29} parent=27 // pred_fallthru
        _
    $region28: #{resnet_forward.29} parent=5 // pred_fallthru
      _
    %p192 = scmp.le.s32.totalorder 1, %s10
    %p193 = scmp.lt.s32.totalorder %s10, 49
    %p194 = pnand %p192, %p193
    %p195 = pneg %p194
    // Predicated region
    $region33: #{resnet_forward.29} parent=5 // pred_check
      _
    $region34: #{resnet_forward.29} parent=5 // pred_check_branch
      %197 = sbr.rel (%p194) target = $region36
    $region35: #{resnet_forward.29} parent=5 // pred_region
      %s198 = ssub.s32 %s10, 1
      %s199 = sadd.s32 %s21, %s22
      %p200 = scmp.lt.s32.totalorder %s20, 1
      %s201 = scalar_select %p200, %s20, 1
      %p202 = scmp.lt.s32.totalorder %s199, 9
      %s203 = scalar_select %p202, %s199, 9
      %s204 = smul.addr %s203, 2
      %s205 = smul.addr %s201, 20
      %s206 = sadd.s32 %s204, %s205
      %s207 = smul.addr %s206, 4
      %s208 = scalar_lea.vmem %s0, %s207
      %p209 = pneg %p59
      %p210 = pneg %p56
      %p211 = pneg %p80
      %p212 = pneg %p77
      %p213 = pneg %p101
      %p214 = pneg %p98
      %p215 = pneg %p122
      %p216 = pneg %p119
      %p217 = pneg %p150
      %p218 = pneg %p147
      %p219 = scmp.lt.s32.totalorder %s20, 1
      %s220 = scalar_select %p219, %s20, 1
      %p221 = scmp.lt.s32.totalorder %s21, 7
      %s222 = scalar_select %p221, %s21, 7
      %s223 = smul.addr %s220, 8
      %s224 = sadd.s32 %s222, %s223
      %s225 = smul.addr %s224, 4
      %s226 = scalar_lea.vmem %s4, %s225
      %s227 = sadd.s32 %s21, %s22
      %p228 = scmp.lt.s32.totalorder %s20, 1
      %s229 = scalar_select %p228, %s20, 1
      %p230 = scmp.lt.s32.totalorder %s227, 9
      %s231 = scalar_select %p230, %s227, 9
      %s232 = smul.addr %s231, 2
      %s233 = smul.addr %s229, 20
      %s234 = sadd.s32 %s232, %s233
      %s235 = smul.addr %s234, 4
      %s236 = scalar_lea.vmem %s0, %s235
      %s237 = sadd.s32 %s21, %s22
      %p238 = scmp.lt.s32.totalorder %s20, 1
      %s239 = scalar_select %p238, %s20, 1
      %p240 = scmp.lt.s32.totalorder %s21, 7
      %s241 = scalar_select %p240, %s21, 7
      %s242 = smul.addr %s239, 8
      %s243 = sadd.s32 %s241, %s242
      %s244 = smul.addr %s243, 4
      %s245 = scalar_lea.vmem %s4, %s244
      %p247 = scmp.eq.s32.totalorder %s22, 0
      // Predicated region
      $region37: #{resnet_forward.29} parent=35 // pred_check
        %p248 = pneg %p247
      $region38: #{resnet_forward.29} parent=35 // pred_check_branch
        %250 = sbr.rel (%p248) target = $region40
      $region39: #{resnet_forward.29} parent=35 // pred_region
        %251 = vst [vmem:[#allocation2] sm:$0xff] 0.0
      $region40: #{resnet_forward.29} parent=35 // pred_fallthru
        _
      %v252 = vld [vmem:[%s236] sm:$0xf]
      %v253 = vld [vmem:[%s236 + $0x4] sm:$0x1]
      %v254 = vld [vmem:[#allocation2] sm:$0xff]
      %s255 = smul.u32 %s22, 3
      %s256 = smul.u32 %s255, 16
      %s257 = smul.addr %s256, 4
      %s258 = scalar_lea.vmem %s1, %s257
      %v259 = vld [vmem:[%s258] sm:$0xf]
      %v260 = vld [vmem:[%s258 + $0x4] sm:$0xf]
      %v261 = vld [vmem:[%s258 + $0x8] sm:$0xf]
      %v262 = vld [vmem:[%s258 + $0xc] sm:$0xf]
      %v263 = vld [vmem:[%s258 + $0x10] sm:$0xf]
      %v264 = vld [vmem:[%s258 + $0x14] sm:$0xf]
      %v265 = vld [vmem:[%s258 + $0x18] sm:$0xf]
      %v266 = vld [vmem:[%s258 + $0x1c] sm:$0xf]
      %v267 = vld [vmem:[%s258 + $0x20] sm:$0xf]
      %v268 = vld [vmem:[%s258 + $0x24] sm:$0xf]
      %v269 = vld [vmem:[%s258 + $0x28] sm:$0xf]
      %v270 = vld [vmem:[%s258 + $0x2c] sm:$0xf]
      %v271 = vld [vmem:[%s258 + $0x30] sm:$0xf]
      %v272 = vld [vmem:[%s258 + $0x34] sm:$0xf]
      %v273 = vld [vmem:[%s258 + $0x38] sm:$0xf]
      %v274 = vld [vmem:[%s258 + $0x3c] sm:$0xf]
      %v291 = vunpack.c.l.b16 %v259
      %v292 = vunpack.c.l.b16 %v260
      %v293 = vunpack.c.l.b16 %v261
      %v294 = vunpack.c.l.b16 %v262
      %v295 = vunpack.c.l.b16 %v263
      %v296 = vunpack.c.l.b16 %v264
      %v297 = vunpack.c.l.b16 %v265
      %v298 = vunpack.c.l.b16 %v266
      %v299 = vunpack.c.l.b16 %v267
      %v300 = vunpack.c.l.b16 %v268
      %v301 = vunpack.c.l.b16 %v269
      %v302 = vunpack.c.l.b16 %v270
      %v303 = vunpack.c.l.b16 %v271
      %v304 = vunpack.c.l.b16 %v272
      %v305 = vunpack.c.l.b16 %v273
      %v306 = vunpack.c.l.b16 %v274
      %v307 = vpack.c.b16 %v292, %v291
      %v308 = vpack.c.b16 %v294, %v293
      %v309 = vpack.c.b16 %v296, %v295
      %v310 = vpack.c.b16 %v298, %v297
      %v311 = vpack.c.b16 %v300, %v299
      %v312 = vpack.c.b16 %v302, %v301
      %v313 = vpack.c.b16 %v304, %v303
      %v314 = vpack.c.b16 %v306, %v305
      %323 = vmatprep.subr.bf16.mxu0 0
      %324 = vmatpush1.bf16.msra.mxu0 %v314
      %325 = vmatprep.subr.bf16.mxu0 0
      %326 = vmatpush1.bf16.msra.mxu0 %v313
      %327 = vmatprep.subr.bf16.mxu0 0
      %328 = vmatpush1.bf16.msra.mxu0 %v312
      %329 = vmatprep.subr.bf16.mxu0 0
      %330 = vmatpush1.bf16.msra.mxu0 %v311
      %331 = vmatprep.subr.bf16.mxu0 0
      %332 = vmatpush1.bf16.msra.mxu0 %v310
      %333 = vmatprep.subr.bf16.mxu0 0
      %334 = vmatpush1.bf16.msra.mxu0 %v309
      %335 = vmatprep.subr.bf16.mxu0 0
      %336 = vmatpush1.bf16.msra.mxu0 %v308
      %337 = vmatprep.subr.bf16.mxu0 0
      %338 = vmatpush1.bf16.msra.mxu0 %v307
      %339 = vmatprep.subr.bf16.mxu0 0
      %340 = vmatpush2.bf16.msra.mxu0 0
      %341 = vmatprep.subr.bf16.mxu0 0
      %342 = vmatpush2.bf16.msra.mxu0 0
      %343 = vmatprep.subr.bf16.mxu0 0
      %344 = vmatpush2.bf16.msra.mxu0 0
      %345 = vmatprep.subr.bf16.mxu0 0
      %346 = vmatpush2.bf16.msra.mxu0 0
      %347 = vmatprep.subr.bf16.mxu0 0
      %348 = vmatpush2.bf16.msra.mxu0 0
      %349 = vmatprep.subr.bf16.mxu0 0
      %350 = vmatpush2.bf16.msra.mxu0 0
      %351 = vmatprep.subr.bf16.mxu0 0
      %352 = vmatpush2.bf16.msra.mxu0 0
      %353 = vmatprep.subr.bf16.mxu0 0
      %354 = vmatpush2.bf16.msra.mxu0 0
      %355 = vmatprep.mubr.bf16.mxu0 0
      %356 = vmatmul.mubr.bf16.gmra.mxu0 %v252
      %v357 = vpop.f32.mrf.mxu0
      %v358 = vadd.f32 0.0, %v357
      %v359 = vpop.f32.mrf.mxu0
      %v360 = vpop.f32.mrf.mxu0
      %v361 = vpop.f32.mrf.mxu0
      %362 = vdwg.mxu0
      %v363 = vadd.f32 %v254, %v358
      %s364 = sadd.s32 %s255, 1
      %s365 = smul.u32 %s364, 16
      %s366 = smul.addr %s365, 4
      %s367 = scalar_lea.vmem %s1, %s366
      %v368 = vld [vmem:[%s367] sm:$0xf]
      %v369 = vld [vmem:[%s367 + $0x4] sm:$0xf]
      %v370 = vld [vmem:[%s367 + $0x8] sm:$0xf]
      %v371 = vld [vmem:[%s367 + $0xc] sm:$0xf]
      %v372 = vld [vmem:[%s367 + $0x10] sm:$0xf]
      %v373 = vld [vmem:[%s367 + $0x14] sm:$0xf]
      %v374 = vld [vmem:[%s367 + $0x18] sm:$0xf]
      %v375 = vld [vmem:[%s367 + $0x1c] sm:$0xf]
      %v376 = vld [vmem:[%s367 + $0x20] sm:$0xf]
      %v377 = vld [vmem:[%s367 + $0x24] sm:$0xf]
      %v378 = vld [vmem:[%s367 + $0x28] sm:$0xf]
      %v379 = vld [vmem:[%s367 + $0x2c] sm:$0xf]
      %v380 = vld [vmem:[%s367 + $0x30] sm:$0xf]
      %v381 = vld [vmem:[%s367 + $0x34] sm:$0xf]
      %v382 = vld [vmem:[%s367 + $0x38] sm:$0xf]
      %v383 = vld [vmem:[%s367 + $0x3c] sm:$0xf]
      %v386 = vunpack.c.l.b16 %v252
      %v387 = vunpack.c.l.b16 %v253
      %v388 = vpack.c.b16 %v387, %v386
      %v390 = vshrl.u32 %v388, 16
      %v392 = vshll.u32 %v388, 16
      %v394 = vrot.slane %v392, 1
      %v395 = vor.u32 %v390, %v394
      %v413 = vunpack.c.l.b16 %v368
      %v414 = vunpack.c.l.b16 %v369
      %v415 = vunpack.c.l.b16 %v370
      %v416 = vunpack.c.l.b16 %v371
      %v417 = vunpack.c.l.b16 %v372
      %v418 = vunpack.c.l.b16 %v373
      %v419 = vunpack.c.l.b16 %v374
      %v420 = vunpack.c.l.b16 %v375
      %v421 = vunpack.c.l.b16 %v376
      %v422 = vunpack.c.l.b16 %v377
      %v423 = vunpack.c.l.b16 %v378
      %v424 = vunpack.c.l.b16 %v379
      %v425 = vunpack.c.l.b16 %v380
      %v426 = vunpack.c.l.b16 %v381
      %v427 = vunpack.c.l.b16 %v382
      %v428 = vunpack.c.l.b16 %v383
      %v429 = vpack.c.b16 %v414, %v413
      %v430 = vpack.c.b16 %v416, %v415
      %v431 = vpack.c.b16 %v418, %v417
      %v432 = vpack.c.b16 %v420, %v419
      %v433 = vpack.c.b16 %v422, %v421
      %v434 = vpack.c.b16 %v424, %v423
      %v435 = vpack.c.b16 %v426, %v425
      %v436 = vpack.c.b16 %v428, %v427
      %445 = vmatprep.subr.bf16.mxu0 0
      %446 = vmatpush1.bf16.msra.mxu0 %v436
      %447 = vmatprep.subr.bf16.mxu0 0
      %448 = vmatpush1.bf16.msra.mxu0 %v435
      %449 = vmatprep.subr.bf16.mxu0 0
      %450 = vmatpush1.bf16.msra.mxu0 %v434
      %451 = vmatprep.subr.bf16.mxu0 0
      %452 = vmatpush1.bf16.msra.mxu0 %v433
      %453 = vmatprep.subr.bf16.mxu0 0
      %454 = vmatpush1.bf16.msra.mxu0 %v432
      %455 = vmatprep.subr.bf16.mxu0 0
      %456 = vmatpush1.bf16.msra.mxu0 %v431
      %457 = vmatprep.subr.bf16.mxu0 0
      %458 = vmatpush1.bf16.msra.mxu0 %v430
      %459 = vmatprep.subr.bf16.mxu0 0
      %460 = vmatpush1.bf16.msra.mxu0 %v429
      %461 = vmatprep.subr.bf16.mxu0 0
      %462 = vmatpush2.bf16.msra.mxu0 0
      %463 = vmatprep.subr.bf16.mxu0 0
      %464 = vmatpush2.bf16.msra.mxu0 0
      %465 = vmatprep.subr.bf16.mxu0 0
      %466 = vmatpush2.bf16.msra.mxu0 0
      %467 = vmatprep.subr.bf16.mxu0 0
      %468 = vmatpush2.bf16.msra.mxu0 0
      %469 = vmatprep.subr.bf16.mxu0 0
      %470 = vmatpush2.bf16.msra.mxu0 0
      %471 = vmatprep.subr.bf16.mxu0 0
      %472 = vmatpush2.bf16.msra.mxu0 0
      %473 = vmatprep.subr.bf16.mxu0 0
      %474 = vmatpush2.bf16.msra.mxu0 0
      %475 = vmatprep.subr.bf16.mxu0 0
      %476 = vmatpush2.bf16.msra.mxu0 0
      %477 = vmatprep.mubr.bf16.mxu0 0
      %478 = vmatmul.mubr.bf16.gmra.mxu0 %v395
      %v479 = vpop.f32.mrf.mxu0
      %v480 = vadd.f32 0.0, %v479
      %v481 = vpop.f32.mrf.mxu0
      %v482 = vpop.f32.mrf.mxu0
      %v483 = vpop.f32.mrf.mxu0
      %484 = vdwg.mxu0
      %v485 = vadd.f32 %v363, %v480
      %s486 = sadd.s32 %s255, 2
      %s487 = smul.u32 %s486, 16
      %s488 = smul.addr %s487, 4
      %s489 = scalar_lea.vmem %s1, %s488
      %v490 = vld [vmem:[%s489] sm:$0xf]
      %v491 = vld [vmem:[%s489 + $0x4] sm:$0xf]
      %v492 = vld [vmem:[%s489 + $0x8] sm:$0xf]
      %v493 = vld [vmem:[%s489 + $0xc] sm:$0xf]
      %v494 = vld [vmem:[%s489 + $0x10] sm:$0xf]
      %v495 = vld [vmem:[%s489 + $0x14] sm:$0xf]
      %v496 = vld [vmem:[%s489 + $0x18] sm:$0xf]
      %v497 = vld [vmem:[%s489 + $0x1c] sm:$0xf]
      %v498 = vld [vmem:[%s489 + $0x20] sm:$0xf]
      %v499 = vld [vmem:[%s489 + $0x24] sm:$0xf]
      %v500 = vld [vmem:[%s489 + $0x28] sm:$0xf]
      %v501 = vld [vmem:[%s489 + $0x2c] sm:$0xf]
      %v502 = vld [vmem:[%s489 + $0x30] sm:$0xf]
      %v503 = vld [vmem:[%s489 + $0x34] sm:$0xf]
      %v504 = vld [vmem:[%s489 + $0x38] sm:$0xf]
      %v505 = vld [vmem:[%s489 + $0x3c] sm:$0xf]
      %v506 = vrot.slane %v388, 1
      %v524 = vunpack.c.l.b16 %v490
      %v525 = vunpack.c.l.b16 %v491
      %v526 = vunpack.c.l.b16 %v492
      %v527 = vunpack.c.l.b16 %v493
      %v528 = vunpack.c.l.b16 %v494
      %v529 = vunpack.c.l.b16 %v495
      %v530 = vunpack.c.l.b16 %v496
      %v531 = vunpack.c.l.b16 %v497
      %v532 = vunpack.c.l.b16 %v498
      %v533 = vunpack.c.l.b16 %v499
      %v534 = vunpack.c.l.b16 %v500
      %v535 = vunpack.c.l.b16 %v501
      %v536 = vunpack.c.l.b16 %v502
      %v537 = vunpack.c.l.b16 %v503
      %v538 = vunpack.c.l.b16 %v504
      %v539 = vunpack.c.l.b16 %v505
      %v540 = vpack.c.b16 %v525, %v524
      %v541 = vpack.c.b16 %v527, %v526
      %v542 = vpack.c.b16 %v529, %v528
      %v543 = vpack.c.b16 %v531, %v530
      %v544 = vpack.c.b16 %v533, %v532
      %v545 = vpack.c.b16 %v535, %v534
      %v546 = vpack.c.b16 %v537, %v536
      %v547 = vpack.c.b16 %v539, %v538
      %556 = vmatprep.subr.bf16.mxu0 0
      %557 = vmatpush1.bf16.msra.mxu0 %v547
      %558 = vmatprep.subr.bf16.mxu0 0
      %559 = vmatpush1.bf16.msra.mxu0 %v546
      %560 = vmatprep.subr.bf16.mxu0 0
      %561 = vmatpush1.bf16.msra.mxu0 %v545
      %562 = vmatprep.subr.bf16.mxu0 0
      %563 = vmatpush1.bf16.msra.mxu0 %v544
      %564 = vmatprep.subr.bf16.mxu0 0
      %565 = vmatpush1.bf16.msra.mxu0 %v543
      %566 = vmatprep.subr.bf16.mxu0 0
      %567 = vmatpush1.bf16.msra.mxu0 %v542
      %568 = vmatprep.subr.bf16.mxu0 0
      %569 = vmatpush1.bf16.msra.mxu0 %v541
      %570 = vmatprep.subr.bf16.mxu0 0
      %571 = vmatpush1.bf16.msra.mxu0 %v540
      %572 = vmatprep.subr.bf16.mxu0 0
      %573 = vmatpush2.bf16.msra.mxu0 0
      %574 = vmatprep.subr.bf16.mxu0 0
      %575 = vmatpush2.bf16.msra.mxu0 0
      %576 = vmatprep.subr.bf16.mxu0 0
      %577 = vmatpush2.bf16.msra.mxu0 0
      %578 = vmatprep.subr.bf16.mxu0 0
      %579 = vmatpush2.bf16.msra.mxu0 0
      %580 = vmatprep.subr.bf16.mxu0 0
      %581 = vmatpush2.bf16.msra.mxu0 0
      %582 = vmatprep.subr.bf16.mxu0 0
      %583 = vmatpush2.bf16.msra.mxu0 0
      %584 = vmatprep.subr.bf16.mxu0 0
      %585 = vmatpush2.bf16.msra.mxu0 0
      %586 = vmatprep.subr.bf16.mxu0 0
      %587 = vmatpush2.bf16.msra.mxu0 0
      %588 = vmatprep.mubr.bf16.mxu0 0
      %589 = vmatmul.mubr.bf16.gmra.mxu0 %v506
      %v590 = vpop.f32.mrf.mxu0
      %v591 = vadd.f32 0.0, %v590
      %v592 = vpop.f32.mrf.mxu0
      %v593 = vpop.f32.mrf.mxu0
      %v594 = vpop.f32.mrf.mxu0
      %595 = vdwg.mxu0
      %v596 = vadd.f32 %v485, %v591
      %597 = vst [vmem:[#allocation2] sm:$0xff] %v596
      %p598 = scmp.eq.s32.totalorder %s22, 2
      // Predicated region
      $region41: #{resnet_forward.29} parent=35 // pred_check
        %p599 = pneg %p598
      $region42: #{resnet_forward.29} parent=35 // pred_check_branch
        %601 = sbr.rel (%p599) target = $region44
      $region43: #{resnet_forward.29} parent=35 // pred_region
        %v602 = vld [vmem:[#allocation2] sm:$0xff]
        %v603 = vld [vmem:[%s2] sm:$0x1]
        %v605 = vlaneseq
        %v606 = vshrl.u32 %v605, 7
        %v607 = vsub.s32 0, %v606
        %v608 = vrot.slane %v603, %v607
        %v610 = vmul.f32 %v602, %v608
        %v611 = vld [vmem:[%s3] sm:$0x1]
        %v613 = vlaneseq
        %v614 = vshrl.u32 %v613, 7
        %v615 = vsub.s32 0, %v614
        %v616 = vrot.slane %v611, %v615
        %v618 = vadd.f32 %v610, %v616
        %v619 = vmax.f32 %v618, 0.0
        %v620 = vpack.c.bf16 %v619, %v619
        %621 = vst [vmem:[%s245] sm:$0xf] %v620
      $region44: #{resnet_forward.29} parent=35 // pred_fallthru
        _
      %p622 = scmp.lt.s32.totalorder %s20, 1
      %s623 = scalar_select %p622, %s20, 1
      %p624 = scmp.lt.s32.totalorder %s21, 7
      %s625 = scalar_select %p624, %s21, 7
      %s626 = smul.addr %s623, 8
      %s627 = sadd.s32 %s625, %s626
      %s628 = smul.addr %s627, 4
      %s629 = scalar_lea.vmem %s4, %s628
      // Predicated region
      $region45: #{resnet_forward.29} parent=35 // pred_check
        %p630 = pneg %p147
      $region46: #{resnet_forward.29} parent=35 // pred_check_branch
        %632 = sbr.rel (%p630) target = $region48
      $region47: #{resnet_forward.29} parent=35 // pred_region
        _
      $region48: #{resnet_forward.29} parent=35 // pred_fallthru
        _
    $region36: #{resnet_forward.29} parent=5 // pred_fallthru
      _
    %p633 = scmp.le.s32.totalorder 2, %s10
    // Predicated region
    $region49: #{resnet_forward.29} parent=5 // pred_check
      %p634 = pneg %p633
    $region50: #{resnet_forward.29} parent=5 // pred_check_branch
      %636 = sbr.rel (%p634) target = $region52
    $region51: #{resnet_forward.29} parent=5 // pred_region
      %s637 = ssub.s32 %s10, 2
      // Predicated region
      $region53: #{resnet_forward.29} parent=51 // pred_check
        %p638 = pneg %p153
      $region54: #{resnet_forward.29} parent=51 // pred_check_branch
        %640 = sbr.rel (%p638) target = $region56
      $region55: #{resnet_forward.29} parent=51 // pred_region
        %p641 = scmp.lt.s32.totalorder %s23, 1
        %s642 = scalar_select %p641, %s23, 1
        %p643 = scmp.lt.s32.totalorder %s24, 7
        %s644 = scalar_select %p643, %s24, 7
        %s645 = smul.addr %s642, 8
        %s646 = sadd.s32 %s644, %s645
        %s647 = smul.addr %s646, 4
        %s648 = scalar_lea.vmem %s4, %s647
      $region56: #{resnet_forward.29} parent=51 // pred_fallthru
        _
    $region52: #{resnet_forward.29} parent=5 // pred_fallthru
      _
  $region6: #{resnet_forward.29} parent=0 // loop_footer
    %s14 = sadd.s32 1, %s10
  $region7: #{resnet_forward.29} parent=0 // loop_footer_branch
    %9 = sbr.rel target = $region3
  $region8: #{resnet_forward.29} parent=0 // loop_exit
    _

// kernel: resnet_forward.30
$region0: #{resnet_forward.30}
  #allocation0 [shape = 'u32[]', space=smem, size = 0x4, offset = 0x4, fixed_abs, tag = 'smem constant byte address 0x4 - core index']
  #allocation1 [shape = 'u32[144,128]{1,0:T(1,128)}', space=vmem, size = 0x12000, scoped, tag = 'internal scratch']
  #allocation2 [shape = 'f32[8,128]{1,0:T(8,128)}', space=vmem, size = 0x1000, scoped, tag = 'scratch operand']
  %s0 = inlined_call_operand.vmem [shape: bf16[2,8,8,128], index: 0, kind: input, shape index: {}]
  %s1 = inlined_call_operand.vmem [shape: bf16[1,128,128], index: 1, kind: input, shape index: {}]
  %s2 = inlined_call_operand.vmem [shape: f32[1,128], index: 2, kind: input, shape index: {}]
  %s3 = inlined_call_operand.vmem [shape: f32[1,128], index: 3, kind: input, shape index: {}]
  %s4 = inlined_call_operand.vmem [shape: bf16[2,8,8,128], index: 4, kind: output, shape index: {}]
  %s5 = sld [smem:[#allocation0]]
  $region57: #{resnet_forward.30} parent=0
    _
  %s7 = ssub.s32 1, %s5
  %s8 = scalar_select 0, %s7, %s5
  loop: start=0, step=1, limit=18
  $region2: #{resnet_forward.30} parent=0 // loop_pre_header
    _
  $region3: #{resnet_forward.30} parent=0 // loop_header
    %s10 = sphi 0, %s14
    %p11 = scmp.ge.s32.totalorder %s10, 18
    %s17 = sphi 0, %s36
    %s18 = sphi 0, %s32
    %s19 = sphi 0, %s28
    %s20 = sphi 0, %s17
    %s21 = sphi 0, %s18
    %s22 = sphi 0, %s19
    %s23 = sphi 0, %s20
    %s24 = sphi 0, %s21
    %s25 = sphi 0, %s22
    %s43 = sphi 0, %s45
    %s46 = sphi 0, %s43
    %s47 = sphi 0, %s46
    %s63 = sphi 0, %s47
    %s67 = sphi 0, %s67
    %s69 = sphi 0, %s67
    %s70 = sphi 0, %s69
    %s84 = sphi 0, %s70
    %s88 = sphi 0, %s88
    %s90 = sphi 0, %s88
    %s91 = sphi 0, %s90
    %s105 = sphi 0, %s91
    %s109 = sphi 0, %s109
    %s111 = sphi 0, %s109
    %s112 = sphi 0, %s111
    %s126 = sphi 0, %s112
    %s134 = sphi 0, %s136
    %s137 = sphi 0, %s134
    %s138 = sphi 0, %s137
    %s154 = sphi 0, %s138
  $region4: #{resnet_forward.30} parent=0 // loop_header_branch
    %13 = sbr.rel (%p11) target = $region8
  $region5: #{resnet_forward.30} parent=0 // loop_body
    %s15 = ssub.s32 %s10, 1
    %s16 = ssub.s32 %s10, 2
    %s26 = sadd.s32 1, %s19
    %p27 = scmp.ge.s32.totalorder %s26, 1
    %s28 = scalar_select %p27, 0, %s26
    %s29 = sadd.s32 1, %s18
    %s30 = scalar_select %p27, %s29, %s18
    %p31 = scmp.ge.s32.totalorder %s30, 8
    %s32 = scalar_select %p31, 0, %s30
    %s33 = sadd.s32 1, %s17
    %s34 = scalar_select %p31, %s33, %s17
    %p35 = scmp.ge.s32.totalorder %s34, 2
    %s36 = scalar_select %p35, 0, %s34
    %s37 = sadd.s32 %s18, %s19
    %s38 = sadd.s32 %s32, %s28
    %s39 = ssub.s32 %s17, %s36
    %s40 = ssub.s32 %s37, %s38
    %s41 = sor.u32 %s39, %s40
    %p42 = scmp.eq.s32.totalorder %s41, 0
    %s44 = sadd.s32 %s43, 1
    %s45 = scalar_select %p42, %s43, %s44
    %p48 = pneg %p42
    %p49 = scmp.eq.s32.totalorder %s10, 15
    %p50 = por %p48, %p49
    %p51 = scmp.ne.s32.totalorder %s43, %s46
    %p52 = scmp.eq.s32.totalorder %s10, 0
    %p53 = por %p51, %p52
    %p54 = scmp.ne.s32.totalorder %s43, %s46
    %p55 = scmp.eq.s32.totalorder %s15, 15
    %p56 = por %p54, %p55
    %p57 = scmp.ne.s32.totalorder %s46, %s47
    %p58 = scmp.eq.s32.totalorder %s15, 0
    %p59 = por %p57, %p58
    %p60 = scmp.ne.s32.totalorder %s46, %s47
    %p61 = scmp.eq.s32.totalorder %s16, 15
    %p62 = por %p60, %p61
    %p64 = scmp.ne.s32.totalorder %s47, %s63
    %p65 = scmp.eq.s32.totalorder %s16, 0
    %p66 = por %p64, %p65
    %s68 = sadd.s32 %s67, 1
    %p71 = scmp.eq.s32.totalorder %s10, 15
    %p72 = scmp.ne.s32.totalorder %s67, %s69
    %p73 = scmp.eq.s32.totalorder %s10, 0
    %p74 = por %p72, %p73
    %p75 = scmp.ne.s32.totalorder %s67, %s69
    %p76 = scmp.eq.s32.totalorder %s15, 15
    %p77 = por %p75, %p76
    %p78 = scmp.ne.s32.totalorder %s69, %s70
    %p79 = scmp.eq.s32.totalorder %s15, 0
    %p80 = por %p78, %p79
    %p81 = scmp.ne.s32.totalorder %s69, %s70
    %p82 = scmp.eq.s32.totalorder %s16, 15
    %p83 = por %p81, %p82
    %p85 = scmp.ne.s32.totalorder %s70, %s84
    %p86 = scmp.eq.s32.totalorder %s16, 0
    %p87 = por %p85, %p86
    %s89 = sadd.s32 %s88, 1
    %p92 = scmp.eq.s32.totalorder %s10, 15
    %p93 = scmp.ne.s32.totalorder %s88, %s90
    %p94 = scmp.eq.s32.totalorder %s10, 0
    %p95 = por %p93, %p94
    %p96 = scmp.ne.s32.totalorder %s88, %s90
    %p97 = scmp.eq.s32.totalorder %s15, 15
    %p98 = por %p96, %p97
    %p99 = scmp.ne.s32.totalorder %s90, %s91
    %p100 = scmp.eq.s32.totalorder %s15, 0
    %p101 = por %p99, %p100
    %p102 = scmp.ne.s32.totalorder %s90, %s91
    %p103 = scmp.eq.s32.totalorder %s16, 15
    %p104 = por %p102, %p103
    %p106 = scmp.ne.s32.totalorder %s91, %s105
    %p107 = scmp.eq.s32.totalorder %s16, 0
    %p108 = por %p106, %p107
    %s110 = sadd.s32 %s109, 1
    %p113 = scmp.eq.s32.totalorder %s10, 15
    %p114 = scmp.ne.s32.totalorder %s109, %s111
    %p115 = scmp.eq.s32.totalorder %s10, 0
    %p116 = por %p114, %p115
    %p117 = scmp.ne.s32.totalorder %s109, %s111
    %p118 = scmp.eq.s32.totalorder %s15, 15
    %p119 = por %p117, %p118
    %p120 = scmp.ne.s32.totalorder %s111, %s112
    %p121 = scmp.eq.s32.totalorder %s15, 0
    %p122 = por %p120, %p121
    %p123 = scmp.ne.s32.totalorder %s111, %s112
    %p124 = scmp.eq.s32.totalorder %s16, 15
    %p125 = por %p123, %p124
    %p127 = scmp.ne.s32.totalorder %s112, %s126
    %p128 = scmp.eq.s32.totalorder %s16, 0
    %p129 = por %p127, %p128
    %s130 = ssub.s32 %s17, %s36
    %s131 = ssub.s32 %s18, %s32
    %s132 = sor.u32 %s130, %s131
    %p133 = scmp.eq.s32.totalorder %s132, 0
    %s135 = sadd.s32 %s134, 1
    %s136 = scalar_select %p133, %s134, %s135
    %p139 = pneg %p133
    %p140 = scmp.eq.s32.totalorder %s10, 15
    %p141 = por %p139, %p140
    %p142 = scmp.ne.s32.totalorder %s134, %s137
    %p143 = scmp.eq.s32.totalorder %s10, 0
    %p144 = por %p142, %p143
    %p145 = scmp.ne.s32.totalorder %s134, %s137
    %p146 = scmp.eq.s32.totalorder %s15, 15
    %p147 = por %p145, %p146
    %p148 = scmp.ne.s32.totalorder %s137, %s138
    %p149 = scmp.eq.s32.totalorder %s15, 0
    %p150 = por %p148, %p149
    %p151 = scmp.ne.s32.totalorder %s137, %s138
    %p152 = scmp.eq.s32.totalorder %s16, 15
    %p153 = por %p151, %p152
    %p155 = scmp.ne.s32.totalorder %s138, %s154
    %p156 = scmp.eq.s32.totalorder %s16, 0
    %p157 = por %p155, %p156
    %p158 = scmp.le.s32.totalorder 1, %s10
    %p159 = scmp.lt.s32.totalorder %s10, 17
    %p160 = pnand %p158, %p159
    %p161 = pneg %p160
    // Predicated region
    $region9: #{resnet_forward.30} parent=5 // pred_check
      _
    $region10: #{resnet_forward.30} parent=5 // pred_check_branch
      %163 = sbr.rel (%p160) target = $region12
    $region11: #{resnet_forward.30} parent=5 // pred_region
      %s164 = ssub.s32 %s10, 1
      // Predicated region
      $region13: #{resnet_forward.30} parent=11 // pred_check
        %p165 = pneg %p80
      $region14: #{resnet_forward.30} parent=11 // pred_check_branch
        %167 = sbr.rel (%p165) target = $region16
      $region15: #{resnet_forward.30} parent=11 // pred_region
        _
      $region16: #{resnet_forward.30} parent=11 // pred_fallthru
        _
      // Predicated region
      $region17: #{resnet_forward.30} parent=11 // pred_check
        %p168 = pneg %p101
      $region18: #{resnet_forward.30} parent=11 // pred_check_branch
        %170 = sbr.rel (%p168) target = $region20
      $region19: #{resnet_forward.30} parent=11 // pred_region
        _
      $region20: #{resnet_forward.30} parent=11 // pred_fallthru
        _
      // Predicated region
      $region21: #{resnet_forward.30} parent=11 // pred_check
        %p171 = pneg %p122
      $region22: #{resnet_forward.30} parent=11 // pred_check_branch
        %173 = sbr.rel (%p171) target = $region24
      $region23: #{resnet_forward.30} parent=11 // pred_region
        _
      $region24: #{resnet_forward.30} parent=11 // pred_fallthru
        _
    $region12: #{resnet_forward.30} parent=5 // pred_fallthru
      _
    %p174 = scmp.lt.s32.totalorder %s10, 16
    // Predicated region
    $region25: #{resnet_forward.30} parent=5 // pred_check
      %p175 = pneg %p174
    $region26: #{resnet_forward.30} parent=5 // pred_check_branch
      %177 = sbr.rel (%p175) target = $region28
    $region27: #{resnet_forward.30} parent=5 // pred_region
      // Predicated region
      $region29: #{resnet_forward.30} parent=27 // pred_check
        %p178 = pneg %p53
      $region30: #{resnet_forward.30} parent=27 // pred_check_branch
        %180 = sbr.rel (%p178) target = $region32
      $region31: #{resnet_forward.30} parent=27 // pred_region
        %s181 = sadd.s32 %s18, %s19
        %p182 = scmp.lt.s32.totalorder %s17, 1
        %s183 = scalar_select %p182, %s17, 1
        %p184 = scmp.lt.s32.totalorder %s181, 7
        %s185 = scalar_select %p184, %s181, 7
        %s186 = smul.addr %s183, 8
        %s187 = sadd.s32 %s185, %s186
        %s188 = smul.addr %s187, 4
        %s189 = scalar_lea.vmem %s0, %s188
        %s190 = sadd.s32 %s18, %s19
      $region32: #{resnet_forward.30} parent=27 // pred_fallthru
        _
    $region28: #{resnet_forward.30} parent=5 // pred_fallthru
      _
    %p191 = scmp.le.s32.totalorder 1, %s10
    %p192 = scmp.lt.s32.totalorder %s10, 17
    %p193 = pnand %p191, %p192
    %p194 = pneg %p193
    // Predicated region
    $region33: #{resnet_forward.30} parent=5 // pred_check
      _
    $region34: #{resnet_forward.30} parent=5 // pred_check_branch
      %196 = sbr.rel (%p193) target = $region36
    $region35: #{resnet_forward.30} parent=5 // pred_region
      %s197 = ssub.s32 %s10, 1
      %s198 = sadd.s32 %s21, %s22
      %p199 = scmp.lt.s32.totalorder %s20, 1
      %s200 = scalar_select %p199, %s20, 1
      %p201 = scmp.lt.s32.totalorder %s198, 7
      %s202 = scalar_select %p201, %s198, 7
      %s203 = smul.addr %s200, 8
      %s204 = sadd.s32 %s202, %s203
      %s205 = smul.addr %s204, 4
      %s206 = scalar_lea.vmem %s0, %s205
      %p207 = pneg %p59
      %p208 = pneg %p56
      %p209 = pneg %p80
      %p210 = pneg %p77
      %p211 = pneg %p101
      %p212 = pneg %p98
      %p213 = pneg %p122
      %p214 = pneg %p119
      %p215 = pneg %p150
      %p216 = pneg %p147
      %p217 = scmp.lt.s32.totalorder %s20, 1
      %s218 = scalar_select %p217, %s20, 1
      %p219 = scmp.lt.s32.totalorder %s21, 7
      %s220 = scalar_select %p219, %s21, 7
      %s221 = smul.addr %s218, 8
      %s222 = sadd.s32 %s220, %s221
      %s223 = smul.addr %s222, 4
      %s224 = scalar_lea.vmem %s4, %s223
      %s225 = sadd.s32 %s21, %s22
      %p226 = scmp.lt.s32.totalorder %s20, 1
      %s227 = scalar_select %p226, %s20, 1
      %p228 = scmp.lt.s32.totalorder %s225, 7
      %s229 = scalar_select %p228, %s225, 7
      %s230 = smul.addr %s227, 8
      %s231 = sadd.s32 %s229, %s230
      %s232 = smul.addr %s231, 4
      %s233 = scalar_lea.vmem %s0, %s232
      %s234 = sadd.s32 %s21, %s22
      %p235 = scmp.lt.s32.totalorder %s20, 1
      %s236 = scalar_select %p235, %s20, 1
      %p237 = scmp.lt.s32.totalorder %s21, 7
      %s238 = scalar_select %p237, %s21, 7
      %s239 = smul.addr %s236, 8
      %s240 = sadd.s32 %s238, %s239
      %s241 = smul.addr %s240, 4
      %s242 = scalar_lea.vmem %s4, %s241
      %p244 = scmp.eq.s32.totalorder %s22, 0
      // Predicated region
      $region37: #{resnet_forward.30} parent=35 // pred_check
        %p245 = pneg %p244
      $region38: #{resnet_forward.30} parent=35 // pred_check_branch
        %247 = sbr.rel (%p245) target = $region40
      $region39: #{resnet_forward.30} parent=35 // pred_region
        %248 = vst [vmem:[#allocation2] sm:$0xff] 0.0
      $region40: #{resnet_forward.30} parent=35 // pred_fallthru
        _
      %v249 = vld [vmem:[%s233] sm:$0xf]
      %v250 = vld [vmem:[#allocation2] sm:$0xff]
      %s251 = smul.u32 %s22, 16
      %s252 = smul.addr %s251, 4
      %s253 = scalar_lea.vmem %s1, %s252
      %v254 = vld [vmem:[%s253] sm:$0xf]
      %v255 = vld [vmem:[%s253 + $0x4] sm:$0xf]
      %v256 = vld [vmem:[%s253 + $0x8] sm:$0xf]
      %v257 = vld [vmem:[%s253 + $0xc] sm:$0xf]
      %v258 = vld [vmem:[%s253 + $0x10] sm:$0xf]
      %v259 = vld [vmem:[%s253 + $0x14] sm:$0xf]
      %v260 = vld [vmem:[%s253 + $0x18] sm:$0xf]
      %v261 = vld [vmem:[%s253 + $0x1c] sm:$0xf]
      %v262 = vld [vmem:[%s253 + $0x20] sm:$0xf]
      %v263 = vld [vmem:[%s253 + $0x24] sm:$0xf]
      %v264 = vld [vmem:[%s253 + $0x28] sm:$0xf]
      %v265 = vld [vmem:[%s253 + $0x2c] sm:$0xf]
      %v266 = vld [vmem:[%s253 + $0x30] sm:$0xf]
      %v267 = vld [vmem:[%s253 + $0x34] sm:$0xf]
      %v268 = vld [vmem:[%s253 + $0x38] sm:$0xf]
      %v269 = vld [vmem:[%s253 + $0x3c] sm:$0xf]
      %v286 = vunpack.c.l.b16 %v254
      %v287 = vunpack.c.l.b16 %v255
      %v288 = vunpack.c.l.b16 %v256
      %v289 = vunpack.c.l.b16 %v257
      %v290 = vunpack.c.l.b16 %v258
      %v291 = vunpack.c.l.b16 %v259
      %v292 = vunpack.c.l.b16 %v260
      %v293 = vunpack.c.l.b16 %v261
      %v294 = vunpack.c.l.b16 %v262
      %v295 = vunpack.c.l.b16 %v263
      %v296 = vunpack.c.l.b16 %v264
      %v297 = vunpack.c.l.b16 %v265
      %v298 = vunpack.c.l.b16 %v266
      %v299 = vunpack.c.l.b16 %v267
      %v300 = vunpack.c.l.b16 %v268
      %v301 = vunpack.c.l.b16 %v269
      %v302 = vpack.c.b16 %v287, %v286
      %v303 = vpack.c.b16 %v289, %v288
      %v304 = vpack.c.b16 %v291, %v290
      %v305 = vpack.c.b16 %v293, %v292
      %v306 = vpack.c.b16 %v295, %v294
      %v307 = vpack.c.b16 %v297, %v296
      %v308 = vpack.c.b16 %v299, %v298
      %v309 = vpack.c.b16 %v301, %v300
      %318 = vmatprep.subr.bf16.mxu0 0
      %319 = vmatpush1.bf16.msra.mxu0 %v309
      %320 = vmatprep.subr.bf16.mxu0 0
      %321 = vmatpush1.bf16.msra.mxu0 %v308
      %322 = vmatprep.subr.bf16.mxu0 0
      %323 = vmatpush1.bf16.msra.mxu0 %v307
      %324 = vmatprep.subr.bf16.mxu0 0
      %325 = vmatpush1.bf16.msra.mxu0 %v306
      %326 = vmatprep.subr.bf16.mxu0 0
      %327 = vmatpush1.bf16.msra.mxu0 %v305
      %328 = vmatprep.subr.bf16.mxu0 0
      %329 = vmatpush1.bf16.msra.mxu0 %v304
      %330 = vmatprep.subr.bf16.mxu0 0
      %331 = vmatpush1.bf16.msra.mxu0 %v303
      %332 = vmatprep.subr.bf16.mxu0 0
      %333 = vmatpush1.bf16.msra.mxu0 %v302
      %334 = vmatprep.subr.bf16.mxu0 0
      %335 = vmatpush2.bf16.msra.mxu0 0
      %336 = vmatprep.subr.bf16.mxu0 0
      %337 = vmatpush2.bf16.msra.mxu0 0
      %338 = vmatprep.subr.bf16.mxu0 0
      %339 = vmatpush2.bf16.msra.mxu0 0
      %340 = vmatprep.subr.bf16.mxu0 0
      %341 = vmatpush2.bf16.msra.mxu0 0
      %342 = vmatprep.subr.bf16.mxu0 0
      %343 = vmatpush2.bf16.msra.mxu0 0
      %344 = vmatprep.subr.bf16.mxu0 0
      %345 = vmatpush2.bf16.msra.mxu0 0
      %346 = vmatprep.subr.bf16.mxu0 0
      %347 = vmatpush2.bf16.msra.mxu0 0
      %348 = vmatprep.subr.bf16.mxu0 0
      %349 = vmatpush2.bf16.msra.mxu0 0
      %350 = vmatprep.mubr.bf16.mxu0 0
      %351 = vmatmul.mubr.bf16.gmra.mxu0 %v249
      %v352 = vpop.f32.mrf.mxu0
      %v353 = vadd.f32 0.0, %v352
      %v354 = vpop.f32.mrf.mxu0
      %v355 = vpop.f32.mrf.mxu0
      %v356 = vpop.f32.mrf.mxu0
      %357 = vdwg.mxu0
      %v358 = vadd.f32 %v250, %v353
      %359 = vst [vmem:[#allocation2] sm:$0xff] %v358
      // Predicated region
      $region41: #{resnet_forward.30} parent=35 // pred_check
        %p360 = pneg %p244
      $region42: #{resnet_forward.30} parent=35 // pred_check_branch
        %362 = sbr.rel (%p360) target = $region44
      $region43: #{resnet_forward.30} parent=35 // pred_region
        %v363 = vld [vmem:[#allocation2] sm:$0xff]
        %v364 = vld [vmem:[%s2] sm:$0x1]
        %v366 = vlaneseq
        %v367 = vshrl.u32 %v366, 7
        %v368 = vsub.s32 0, %v367
        %v369 = vrot.slane %v364, %v368
        %v371 = vmul.f32 %v363, %v369
        %v372 = vld [vmem:[%s3] sm:$0x1]
        %v374 = vlaneseq
        %v375 = vshrl.u32 %v374, 7
        %v376 = vsub.s32 0, %v375
        %v377 = vrot.slane %v372, %v376
        %v379 = vadd.f32 %v371, %v377
        %v380 = vpack.c.bf16 %v379, %v379
        %381 = vst [vmem:[%s242] sm:$0xf] %v380
      $region44: #{resnet_forward.30} parent=35 // pred_fallthru
        _
      %p382 = scmp.lt.s32.totalorder %s20, 1
      %s383 = scalar_select %p382, %s20, 1
      %p384 = scmp.lt.s32.totalorder %s21, 7
      %s385 = scalar_select %p384, %s21, 7
      %s386 = smul.addr %s383, 8
      %s387 = sadd.s32 %s385, %s386
      %s388 = smul.addr %s387, 4
      %s389 = scalar_lea.vmem %s4, %s388
      // Predicated region
      $region45: #{resnet_forward.30} parent=35 // pred_check
        %p390 = pneg %p147
      $region46: #{resnet_forward.30} parent=35 // pred_check_branch
        %392 = sbr.rel (%p390) target = $region48
      $region47: #{resnet_forward.30} parent=35 // pred_region
        _
      $region48: #{resnet_forward.30} parent=35 // pred_fallthru
        _
    $region36: #{resnet_forward.30} parent=5 // pred_fallthru
      _
    %p393 = scmp.le.s32.totalorder 2, %s10
    // Predicated region
    $region49: #{resnet_forward.30} parent=5 // pred_check
      %p394 = pneg %p393
    $region50: #{resnet_forward.30} parent=5 // pred_check_branch
      %396 = sbr.rel (%p394) target = $region52
    $region51: #{resnet_forward.30} parent=5 // pred_region
      %s397 = ssub.s32 %s10, 2
      // Predicated region
      $region53: #{resnet_forward.30} parent=51 // pred_check
        %p398 = pneg %p153
      $region54: #{resnet_forward.30} parent=51 // pred_check_branch
        %400 = sbr.rel (%p398) target = $region56
      $region55: #{resnet_forward.30} parent=51 // pred_region
        %p401 = scmp.lt.s32.totalorder %s23, 1
        %s402 = scalar_select %p401, %s23, 1
        %p403 = scmp.lt.s32.totalorder %s24, 7
        %s404 = scalar_select %p403, %s24, 7
        %s405 = smul.addr %s402, 8
        %s406 = sadd.s32 %s404, %s405
        %s407 = smul.addr %s406, 4
        %s408 = scalar_lea.vmem %s4, %s407
      $region56: #{resnet_forward.30} parent=51 // pred_fallthru
        _
    $region52: #{resnet_forward.30} parent=5 // pred_fallthru
      _
  $region6: #{resnet_forward.30} parent=0 // loop_footer
    %s14 = sadd.s32 1, %s10
  $region7: #{resnet_forward.30} parent=0 // loop_footer_branch
    %9 = sbr.rel target = $region3
  $region8: #{resnet_forward.30} parent=0 // loop_exit
    _

// kernel: resnet_forward.33
$region0: #{resnet_forward.33}
  #allocation0 [shape = 'u32[]', space=smem, size = 0x4, offset = 0x4, fixed_abs, tag = 'smem constant byte address 0x4 - core index']
  #allocation1 [shape = 'u32[144,128]{1,0:T(1,128)}', space=vmem, size = 0x12000, scoped, tag = 'internal scratch']
  %s0 = inlined_call_operand.vmem [shape: bf16[2,8,10,128], index: 0, kind: input, shape index: {}]
  %s1 = inlined_call_operand.vmem [shape: bf16[2,4,9,128], index: 1, kind: output, shape index: {}]
  %s2 = sld [smem:[#allocation0]]
  $region37: #{resnet_forward.33} parent=0
    _
  %s4 = ssub.s32 1, %s2
  %s5 = scalar_select 0, %s4, %s2
  loop: start=0, step=1, limit=10
  $region2: #{resnet_forward.33} parent=0 // loop_pre_header
    _
  $region3: #{resnet_forward.33} parent=0 // loop_header
    %s7 = sphi 0, %s11
    %p8 = scmp.ge.s32.totalorder %s7, 10
    %s14 = sphi 0, %s26
    %s15 = sphi 0, %s22
    %s16 = sphi 0, %s14
    %s17 = sphi 0, %s15
    %s18 = sphi 0, %s16
    %s19 = sphi 0, %s17
    %s31 = sphi 0, %s33
    %s34 = sphi 0, %s31
    %s35 = sphi 0, %s34
    %s51 = sphi 0, %s35
    %s59 = sphi 0, %s61
    %s62 = sphi 0, %s59
    %s63 = sphi 0, %s62
    %s79 = sphi 0, %s63
  $region4: #{resnet_forward.33} parent=0 // loop_header_branch
    %10 = sbr.rel (%p8) target = $region8
  $region5: #{resnet_forward.33} parent=0 // loop_body
    %s12 = ssub.s32 %s7, 1
    %s13 = ssub.s32 %s7, 2
    %s20 = sadd.s32 1, %s15
    %p21 = scmp.ge.s32.totalorder %s20, 4
    %s22 = scalar_select %p21, 0, %s20
    %s23 = sadd.s32 1, %s14
    %s24 = scalar_select %p21, %s23, %s14
    %p25 = scmp.ge.s32.totalorder %s24, 2
    %s26 = scalar_select %p25, 0, %s24
    %s27 = ssub.s32 %s14, %s26
    %s28 = ssub.s32 %s15, %s22
    %s29 = sor.u32 %s27, %s28
    %p30 = scmp.eq.s32.totalorder %s29, 0
    %s32 = sadd.s32 %s31, 1
    %s33 = scalar_select %p30, %s31, %s32
    %p36 = pneg %p30
    %p37 = scmp.eq.s32.totalorder %s7, 7
    %p38 = por %p36, %p37
    %p39 = scmp.ne.s32.totalorder %s31, %s34
    %p40 = scmp.eq.s32.totalorder %s7, 0
    %p41 = por %p39, %p40
    %p42 = scmp.ne.s32.totalorder %s31, %s34
    %p43 = scmp.eq.s32.totalorder %s12, 7
    %p44 = por %p42, %p43
    %p45 = scmp.ne.s32.totalorder %s34, %s35
    %p46 = scmp.eq.s32.totalorder %s12, 0
    %p47 = por %p45, %p46
    %p48 = scmp.ne.s32.totalorder %s34, %s35
    %p49 = scmp.eq.s32.totalorder %s13, 7
    %p50 = por %p48, %p49
    %p52 = scmp.ne.s32.totalorder %s35, %s51
    %p53 = scmp.eq.s32.totalorder %s13, 0
    %p54 = por %p52, %p53
    %s55 = ssub.s32 %s14, %s26
    %s56 = ssub.s32 %s15, %s22
    %s57 = sor.u32 %s55, %s56
    %p58 = scmp.eq.s32.totalorder %s57, 0
    %s60 = sadd.s32 %s59, 1
    %s61 = scalar_select %p58, %s59, %s60
    %p64 = pneg %p58
    %p65 = scmp.eq.s32.totalorder %s7, 7
    %p66 = por %p64, %p65
    %p67 = scmp.ne.s32.totalorder %s59, %s62
    %p68 = scmp.eq.s32.totalorder %s7, 0
    %p69 = por %p67, %p68
    %p70 = scmp.ne.s32.totalorder %s59, %s62
    %p71 = scmp.eq.s32.totalorder %s12, 7
    %p72 = por %p70, %p71
    %p73 = scmp.ne.s32.totalorder %s62, %s63
    %p74 = scmp.eq.s32.totalorder %s12, 0
    %p75 = por %p73, %p74
    %p76 = scmp.ne.s32.totalorder %s62, %s63
    %p77 = scmp.eq.s32.totalorder %s13, 7
    %p78 = por %p76, %p77
    %p80 = scmp.ne.s32.totalorder %s63, %s79
    %p81 = scmp.eq.s32.totalorder %s13, 0
    %p82 = por %p80, %p81
    %p83 = scmp.le.s32.totalorder 1, %s7
    %p84 = scmp.lt.s32.totalorder %s7, 9
    %p85 = pnand %p83, %p84
    %p86 = pneg %p85
    // Predicated region
    $region9: #{resnet_forward.33} parent=5 // pred_check
      _
    $region10: #{resnet_forward.33} parent=5 // pred_check_branch
      %88 = sbr.rel (%p85) target = $region12
    $region11: #{resnet_forward.33} parent=5 // pred_region
      %s89 = ssub.s32 %s7, 1
    $region12: #{resnet_forward.33} parent=5 // pred_fallthru
      _
    %p90 = scmp.lt.s32.totalorder %s7, 8
    // Predicated region
    $region13: #{resnet_forward.33} parent=5 // pred_check
      %p91 = pneg %p90
    $region14: #{resnet_forward.33} parent=5 // pred_check_branch
      %93 = sbr.rel (%p91) target = $region16
    $region15: #{resnet_forward.33} parent=5 // pred_region
      // Predicated region
      $region17: #{resnet_forward.33} parent=15 // pred_check
        %p94 = pneg %p41
      $region18: #{resnet_forward.33} parent=15 // pred_check_branch
        %96 = sbr.rel (%p94) target = $region20
      $region19: #{resnet_forward.33} parent=15 // pred_region
        %s97 = smul.u32 2, %s15
        %p98 = scmp.lt.s32.totalorder %s14, 1
        %s99 = scalar_select %p98, %s14, 1
        %p100 = scmp.lt.s32.totalorder %s97, 7
        %s101 = scalar_select %p100, %s97, 7
        %s102 = smul.addr %s101, 2
        %s103 = smul.addr %s99, 16
        %s104 = sadd.s32 %s102, %s103
        %s105 = smul.addr %s104, 4
        %s106 = scalar_lea.vmem %s0, %s105
        %s107 = smul.u32 2, %s15
      $region20: #{resnet_forward.33} parent=15 // pred_fallthru
        _
    $region16: #{resnet_forward.33} parent=5 // pred_fallthru
      _
    %p108 = scmp.le.s32.totalorder 1, %s7
    %p109 = scmp.lt.s32.totalorder %s7, 9
    %p110 = pnand %p108, %p109
    %p111 = pneg %p110
    // Predicated region
    $region21: #{resnet_forward.33} parent=5 // pred_check
      _
    $region22: #{resnet_forward.33} parent=5 // pred_check_branch
      %113 = sbr.rel (%p110) target = $region24
    $region23: #{resnet_forward.33} parent=5 // pred_region
      %s114 = ssub.s32 %s7, 1
      %s115 = smul.u32 2, %s17
      %p116 = scmp.lt.s32.totalorder %s16, 1
      %s117 = scalar_select %p116, %s16, 1
      %p118 = scmp.lt.s32.totalorder %s115, 7
      %s119 = scalar_select %p118, %s115, 7
      %s120 = smul.addr %s119, 2
      %s121 = smul.addr %s117, 16
      %s122 = sadd.s32 %s120, %s121
      %s123 = smul.addr %s122, 4
      %s124 = scalar_lea.vmem %s0, %s123
      %p125 = pneg %p47
      %p126 = pneg %p44
      %p127 = pneg %p75
      %p128 = pneg %p72
      %p129 = scmp.lt.s32.totalorder %s16, 1
      %s130 = scalar_select %p129, %s16, 1
      %p131 = scmp.lt.s32.totalorder %s17, 3
      %s132 = scalar_select %p131, %s17, 3
      %s133 = smul.addr %s132, 2
      %s134 = smul.addr %s130, 8
      %s135 = sadd.s32 %s133, %s134
      %s136 = smul.addr %s135, 4
      %s137 = scalar_lea.vmem %s1, %s136
      %s138 = smul.u32 2, %s17
      %p139 = scmp.lt.s32.totalorder %s16, 1
      %s140 = scalar_select %p139, %s16, 1
      %p141 = scmp.lt.s32.totalorder %s138, 7
      %s142 = scalar_select %p141, %s138, 7
      %s143 = smul.addr %s142, 2
      %s144 = smul.addr %s140, 16
      %s145 = sadd.s32 %s143, %s144
      %s146 = smul.addr %s145, 4
      %s147 = scalar_lea.vmem %s0, %s146
      %s148 = smul.u32 2, %s17
      %p149 = scmp.lt.s32.totalorder %s16, 1
      %s150 = scalar_select %p149, %s16, 1
      %p151 = scmp.lt.s32.totalorder %s17, 3
      %s152 = scalar_select %p151, %s17, 3
      %s153 = smul.addr %s152, 2
      %s154 = smul.addr %s150, 8
      %s155 = sadd.s32 %s153, %s154
      %s156 = smul.addr %s155, 4
      %s157 = scalar_lea.vmem %s1, %s156
      %v158 = vld [vmem:[%s147] sm:$0xf]
      %v159 = vld [vmem:[%s147 + $0x4] sm:$0x1]
      %s160 = scalar_lea.vmem %s147, 8
      %v161 = vld [vmem:[%s160] sm:$0xf]
      %v162 = vld [vmem:[%s160 + $0x4] sm:$0x1]
      %v163 = vmax.bf16 %v158, %v161
      %v164 = vmax.bf16 %v159, %v162
      %vm165 = vsmask.f32 3328
      %vm166 = vsmask.f32 7440
      %vm167 = vmor %vm165, %vm166
      %v169 = vshrl.u32 %v163, 16
      %v171 = vrot.slane %v169, 4
      %v172 = vshll.u32 %v163, 16
      %v174 = vrot.slane %v172, 5
      %v175 = vor.u32 %v171, %v174
      %v176 = vrot.slane %v175, 4
      %v178 = vshll.u32 %v164, 16
      %v180 = vrot.slane %v178, 5
      %v181 = vsel %vm167, %v176, %v180
      %v182 = vshrl.u32 %v164, 16
      %v184 = vrot.slane %v182, 4
      %v185 = vrot.slane %v184, 4
      %v188 = vmax.bf16 %v163, %v181
      %v189 = vmax.bf16 %v164, %v185
      %190 = vst [vmem:[%s157] sm:$0xf] %v188
      %vm191 = vcmask 1040384
      %vm192 = vsmask.f32 256
      %vm193 = vmand %vm191, %vm192
      %v194 = vld [vmem:[%s157 + $0x4] sm:$0x1]
      %v195 = vsel %vm193, %v189, %v194
      %196 = vst [vmem:[%s157 + $0x4] sm:$0x1] %v195
      %p197 = scmp.lt.s32.totalorder %s16, 1
      %s198 = scalar_select %p197, %s16, 1
      %p199 = scmp.lt.s32.totalorder %s17, 3
      %s200 = scalar_select %p199, %s17, 3
      %s201 = smul.addr %s200, 2
      %s202 = smul.addr %s198, 8
      %s203 = sadd.s32 %s201, %s202
      %s204 = smul.addr %s203, 4
      %s205 = scalar_lea.vmem %s1, %s204
      // Predicated region
      $region25: #{resnet_forward.33} parent=23 // pred_check
        %p206 = pneg %p72
      $region26: #{resnet_forward.33} parent=23 // pred_check_branch
        %208 = sbr.rel (%p206) target = $region28
      $region27: #{resnet_forward.33} parent=23 // pred_region
        _
      $region28: #{resnet_forward.33} parent=23 // pred_fallthru
        _
    $region24: #{resnet_forward.33} parent=5 // pred_fallthru
      _
    %p209 = scmp.le.s32.totalorder 2, %s7
    // Predicated region
    $region29: #{resnet_forward.33} parent=5 // pred_check
      %p210 = pneg %p209
    $region30: #{resnet_forward.33} parent=5 // pred_check_branch
      %212 = sbr.rel (%p210) target = $region32
    $region31: #{resnet_forward.33} parent=5 // pred_region
      %s213 = ssub.s32 %s7, 2
      // Predicated region
      $region33: #{resnet_forward.33} parent=31 // pred_check
        %p214 = pneg %p78
      $region34: #{resnet_forward.33} parent=31 // pred_check_branch
        %216 = sbr.rel (%p214) target = $region36
      $region35: #{resnet_forward.33} parent=31 // pred_region
        %p217 = scmp.lt.s32.totalorder %s18, 1
        %s218 = scalar_select %p217, %s18, 1
        %p219 = scmp.lt.s32.totalorder %s19, 3
        %s220 = scalar_select %p219, %s19, 3
        %s221 = smul.addr %s220, 2
        %s222 = smul.addr %s218, 8
        %s223 = sadd.s32 %s221, %s222
        %s224 = smul.addr %s223, 4
        %s225 = scalar_lea.vmem %s1, %s224
      $region36: #{resnet_forward.33} parent=31 // pred_fallthru
        _
    $region32: #{resnet_forward.33} parent=5 // pred_fallthru
      _
  $region6: #{resnet_forward.33} parent=0 // loop_footer
    %s11 = sadd.s32 1, %s7
  $region7: #{resnet_forward.33} parent=0 // loop_footer_branch
    %6 = sbr.rel target = $region3
  $region8: #{resnet_forward.33} parent=0 // loop_exit
    _

// kernel: resnet_forward.31
$region0: #{resnet_forward.31}
  #allocation0 [shape = 'u32[]', space=smem, size = 0x4, offset = 0x4, fixed_abs, tag = 'smem constant byte address 0x4 - core index']
  #allocation1 [shape = 'u32[144,128]{1,0:T(1,128)}', space=vmem, size = 0x12000, scoped, tag = 'internal scratch']
  #allocation2 [shape = 'f32[8,128]{1,0:T(8,128)}', space=vmem, size = 0x1000, scoped, tag = 'scratch operand']
  %s0 = inlined_call_operand.vmem [shape: bf16[2,10,10,128], index: 0, kind: input, shape index: {}]
  %s1 = inlined_call_operand.vmem [shape: bf16[9,128,128], index: 1, kind: input, shape index: {}]
  %s2 = inlined_call_operand.vmem [shape: f32[1,128], index: 2, kind: input, shape index: {}]
  %s3 = inlined_call_operand.vmem [shape: f32[1,128], index: 3, kind: input, shape index: {}]
  %s4 = inlined_call_operand.vmem [shape: bf16[2,8,8,128], index: 4, kind: input, shape index: {}]
  %s5 = inlined_call_operand.vmem [shape: bf16[2,8,8,128], index: 5, kind: output, shape index: {}]
  %s6 = sld [smem:[#allocation0]]
  $region61: #{resnet_forward.31} parent=0
    _
  %s8 = ssub.s32 1, %s6
  %s9 = scalar_select 0, %s8, %s6
  loop: start=0, step=1, limit=50
  $region2: #{resnet_forward.31} parent=0 // loop_pre_header
    _
  $region3: #{resnet_forward.31} parent=0 // loop_header
    %s11 = sphi 0, %s15
    %p12 = scmp.ge.s32.totalorder %s11, 50
    %s18 = sphi 0, %s37
    %s19 = sphi 0, %s33
    %s20 = sphi 0, %s29
    %s21 = sphi 0, %s18
    %s22 = sphi 0, %s19
    %s23 = sphi 0, %s20
    %s24 = sphi 0, %s21
    %s25 = sphi 0, %s22
    %s26 = sphi 0, %s23
    %s44 = sphi 0, %s46
    %s47 = sphi 0, %s44
    %s48 = sphi 0, %s47
    %s64 = sphi 0, %s48
    %s68 = sphi 0, %s68
    %s70 = sphi 0, %s68
    %s71 = sphi 0, %s70
    %s85 = sphi 0, %s71
    %s89 = sphi 0, %s89
    %s91 = sphi 0, %s89
    %s92 = sphi 0, %s91
    %s106 = sphi 0, %s92
    %s110 = sphi 0, %s110
    %s112 = sphi 0, %s110
    %s113 = sphi 0, %s112
    %s127 = sphi 0, %s113
    %s135 = sphi 0, %s137
    %s138 = sphi 0, %s135
    %s139 = sphi 0, %s138
    %s155 = sphi 0, %s139
    %s163 = sphi 0, %s165
    %s166 = sphi 0, %s163
    %s167 = sphi 0, %s166
    %s183 = sphi 0, %s167
  $region4: #{resnet_forward.31} parent=0 // loop_header_branch
    %14 = sbr.rel (%p12) target = $region8
  $region5: #{resnet_forward.31} parent=0 // loop_body
    %s16 = ssub.s32 %s11, 1
    %s17 = ssub.s32 %s11, 2
    %s27 = sadd.s32 1, %s20
    %p28 = scmp.ge.s32.totalorder %s27, 3
    %s29 = scalar_select %p28, 0, %s27
    %s30 = sadd.s32 1, %s19
    %s31 = scalar_select %p28, %s30, %s19
    %p32 = scmp.ge.s32.totalorder %s31, 8
    %s33 = scalar_select %p32, 0, %s31
    %s34 = sadd.s32 1, %s18
    %s35 = scalar_select %p32, %s34, %s18
    %p36 = scmp.ge.s32.totalorder %s35, 2
    %s37 = scalar_select %p36, 0, %s35
    %s38 = sadd.s32 %s19, %s20
    %s39 = sadd.s32 %s33, %s29
    %s40 = ssub.s32 %s18, %s37
    %s41 = ssub.s32 %s38, %s39
    %s42 = sor.u32 %s40, %s41
    %p43 = scmp.eq.s32.totalorder %s42, 0
    %s45 = sadd.s32 %s44, 1
    %s46 = scalar_select %p43, %s44, %s45
    %p49 = pneg %p43
    %p50 = scmp.eq.s32.totalorder %s11, 47
    %p51 = por %p49, %p50
    %p52 = scmp.ne.s32.totalorder %s44, %s47
    %p53 = scmp.eq.s32.totalorder %s11, 0
    %p54 = por %p52, %p53
    %p55 = scmp.ne.s32.totalorder %s44, %s47
    %p56 = scmp.eq.s32.totalorder %s16, 47
    %p57 = por %p55, %p56
    %p58 = scmp.ne.s32.totalorder %s47, %s48
    %p59 = scmp.eq.s32.totalorder %s16, 0
    %p60 = por %p58, %p59
    %p61 = scmp.ne.s32.totalorder %s47, %s48
    %p62 = scmp.eq.s32.totalorder %s17, 47
    %p63 = por %p61, %p62
    %p65 = scmp.ne.s32.totalorder %s48, %s64
    %p66 = scmp.eq.s32.totalorder %s17, 0
    %p67 = por %p65, %p66
    %s69 = sadd.s32 %s68, 1
    %p72 = scmp.eq.s32.totalorder %s11, 47
    %p73 = scmp.ne.s32.totalorder %s68, %s70
    %p74 = scmp.eq.s32.totalorder %s11, 0
    %p75 = por %p73, %p74
    %p76 = scmp.ne.s32.totalorder %s68, %s70
    %p77 = scmp.eq.s32.totalorder %s16, 47
    %p78 = por %p76, %p77
    %p79 = scmp.ne.s32.totalorder %s70, %s71
    %p80 = scmp.eq.s32.totalorder %s16, 0
    %p81 = por %p79, %p80
    %p82 = scmp.ne.s32.totalorder %s70, %s71
    %p83 = scmp.eq.s32.totalorder %s17, 47
    %p84 = por %p82, %p83
    %p86 = scmp.ne.s32.totalorder %s71, %s85
    %p87 = scmp.eq.s32.totalorder %s17, 0
    %p88 = por %p86, %p87
    %s90 = sadd.s32 %s89, 1
    %p93 = scmp.eq.s32.totalorder %s11, 47
    %p94 = scmp.ne.s32.totalorder %s89, %s91
    %p95 = scmp.eq.s32.totalorder %s11, 0
    %p96 = por %p94, %p95
    %p97 = scmp.ne.s32.totalorder %s89, %s91
    %p98 = scmp.eq.s32.totalorder %s16, 47
    %p99 = por %p97, %p98
    %p100 = scmp.ne.s32.totalorder %s91, %s92
    %p101 = scmp.eq.s32.totalorder %s16, 0
    %p102 = por %p100, %p101
    %p103 = scmp.ne.s32.totalorder %s91, %s92
    %p104 = scmp.eq.s32.totalorder %s17, 47
    %p105 = por %p103, %p104
    %p107 = scmp.ne.s32.totalorder %s92, %s106
    %p108 = scmp.eq.s32.totalorder %s17, 0
    %p109 = por %p107, %p108
    %s111 = sadd.s32 %s110, 1
    %p114 = scmp.eq.s32.totalorder %s11, 47
    %p115 = scmp.ne.s32.totalorder %s110, %s112
    %p116 = scmp.eq.s32.totalorder %s11, 0
    %p117 = por %p115, %p116
    %p118 = scmp.ne.s32.totalorder %s110, %s112
    %p119 = scmp.eq.s32.totalorder %s16, 47
    %p120 = por %p118, %p119
    %p121 = scmp.ne.s32.totalorder %s112, %s113
    %p122 = scmp.eq.s32.totalorder %s16, 0
    %p123 = por %p121, %p122
    %p124 = scmp.ne.s32.totalorder %s112, %s113
    %p125 = scmp.eq.s32.totalorder %s17, 47
    %p126 = por %p124, %p125
    %p128 = scmp.ne.s32.totalorder %s113, %s127
    %p129 = scmp.eq.s32.totalorder %s17, 0
    %p130 = por %p128, %p129
    %s131 = ssub.s32 %s18, %s37
    %s132 = ssub.s32 %s19, %s33
    %s133 = sor.u32 %s131, %s132
    %p134 = scmp.eq.s32.totalorder %s133, 0
    %s136 = sadd.s32 %s135, 1
    %s137 = scalar_select %p134, %s135, %s136
    %p140 = pneg %p134
    %p141 = scmp.eq.s32.totalorder %s11, 47
    %p142 = por %p140, %p141
    %p143 = scmp.ne.s32.totalorder %s135, %s138
    %p144 = scmp.eq.s32.totalorder %s11, 0
    %p145 = por %p143, %p144
    %p146 = scmp.ne.s32.totalorder %s135, %s138
    %p147 = scmp.eq.s32.totalorder %s16, 47
    %p148 = por %p146, %p147
    %p149 = scmp.ne.s32.totalorder %s138, %s139
    %p150 = scmp.eq.s32.totalorder %s16, 0
    %p151 = por %p149, %p150
    %p152 = scmp.ne.s32.totalorder %s138, %s139
    %p153 = scmp.eq.s32.totalorder %s17, 47
    %p154 = por %p152, %p153
    %p156 = scmp.ne.s32.totalorder %s139, %s155
    %p157 = scmp.eq.s32.totalorder %s17, 0
    %p158 = por %p156, %p157
    %s159 = ssub.s32 %s18, %s37
    %s160 = ssub.s32 %s19, %s33
    %s161 = sor.u32 %s159, %s160
    %p162 = scmp.eq.s32.totalorder %s161, 0
    %s164 = sadd.s32 %s163, 1
    %s165 = scalar_select %p162, %s163, %s164
    %p168 = pneg %p162
    %p169 = scmp.eq.s32.totalorder %s11, 47
    %p170 = por %p168, %p169
    %p171 = scmp.ne.s32.totalorder %s163, %s166
    %p172 = scmp.eq.s32.totalorder %s11, 0
    %p173 = por %p171, %p172
    %p174 = scmp.ne.s32.totalorder %s163, %s166
    %p175 = scmp.eq.s32.totalorder %s16, 47
    %p176 = por %p174, %p175
    %p177 = scmp.ne.s32.totalorder %s166, %s167
    %p178 = scmp.eq.s32.totalorder %s16, 0
    %p179 = por %p177, %p178
    %p180 = scmp.ne.s32.totalorder %s166, %s167
    %p181 = scmp.eq.s32.totalorder %s17, 47
    %p182 = por %p180, %p181
    %p184 = scmp.ne.s32.totalorder %s167, %s183
    %p185 = scmp.eq.s32.totalorder %s17, 0
    %p186 = por %p184, %p185
    %p187 = scmp.le.s32.totalorder 1, %s11
    %p188 = scmp.lt.s32.totalorder %s11, 49
    %p189 = pnand %p187, %p188
    %p190 = pneg %p189
    // Predicated region
    $region9: #{resnet_forward.31} parent=5 // pred_check
      _
    $region10: #{resnet_forward.31} parent=5 // pred_check_branch
      %192 = sbr.rel (%p189) target = $region12
    $region11: #{resnet_forward.31} parent=5 // pred_region
      %s193 = ssub.s32 %s11, 1
      // Predicated region
      $region13: #{resnet_forward.31} parent=11 // pred_check
        %p194 = pneg %p81
      $region14: #{resnet_forward.31} parent=11 // pred_check_branch
        %196 = sbr.rel (%p194) target = $region16
      $region15: #{resnet_forward.31} parent=11 // pred_region
        _
      $region16: #{resnet_forward.31} parent=11 // pred_fallthru
        _
      // Predicated region
      $region17: #{resnet_forward.31} parent=11 // pred_check
        %p197 = pneg %p102
      $region18: #{resnet_forward.31} parent=11 // pred_check_branch
        %199 = sbr.rel (%p197) target = $region20
      $region19: #{resnet_forward.31} parent=11 // pred_region
        _
      $region20: #{resnet_forward.31} parent=11 // pred_fallthru
        _
      // Predicated region
      $region21: #{resnet_forward.31} parent=11 // pred_check
        %p200 = pneg %p123
      $region22: #{resnet_forward.31} parent=11 // pred_check_branch
        %202 = sbr.rel (%p200) target = $region24
      $region23: #{resnet_forward.31} parent=11 // pred_region
        _
      $region24: #{resnet_forward.31} parent=11 // pred_fallthru
        _
    $region12: #{resnet_forward.31} parent=5 // pred_fallthru
      _
    %p203 = scmp.lt.s32.totalorder %s11, 48
    // Predicated region
    $region25: #{resnet_forward.31} parent=5 // pred_check
      %p204 = pneg %p203
    $region26: #{resnet_forward.31} parent=5 // pred_check_branch
      %206 = sbr.rel (%p204) target = $region28
    $region27: #{resnet_forward.31} parent=5 // pred_region
      // Predicated region
      $region29: #{resnet_forward.31} parent=27 // pred_check
        %p207 = pneg %p54
      $region30: #{resnet_forward.31} parent=27 // pred_check_branch
        %209 = sbr.rel (%p207) target = $region32
      $region31: #{resnet_forward.31} parent=27 // pred_region
        %s210 = sadd.s32 %s19, %s20
        %p211 = scmp.lt.s32.totalorder %s18, 1
        %s212 = scalar_select %p211, %s18, 1
        %p213 = scmp.lt.s32.totalorder %s210, 9
        %s214 = scalar_select %p213, %s210, 9
        %s215 = smul.addr %s214, 2
        %s216 = smul.addr %s212, 20
        %s217 = sadd.s32 %s215, %s216
        %s218 = smul.addr %s217, 4
        %s219 = scalar_lea.vmem %s0, %s218
        %s220 = sadd.s32 %s19, %s20
      $region32: #{resnet_forward.31} parent=27 // pred_fallthru
        _
      // Predicated region
      $region33: #{resnet_forward.31} parent=27 // pred_check
        %p221 = pneg %p145
      $region34: #{resnet_forward.31} parent=27 // pred_check_branch
        %223 = sbr.rel (%p221) target = $region36
      $region35: #{resnet_forward.31} parent=27 // pred_region
        %p224 = scmp.lt.s32.totalorder %s18, 1
        %s225 = scalar_select %p224, %s18, 1
        %p226 = scmp.lt.s32.totalorder %s19, 7
        %s227 = scalar_select %p226, %s19, 7
        %s228 = smul.addr %s225, 8
        %s229 = sadd.s32 %s227, %s228
        %s230 = smul.addr %s229, 4
        %s231 = scalar_lea.vmem %s4, %s230
      $region36: #{resnet_forward.31} parent=27 // pred_fallthru
        _
    $region28: #{resnet_forward.31} parent=5 // pred_fallthru
      _
    %p232 = scmp.le.s32.totalorder 1, %s11
    %p233 = scmp.lt.s32.totalorder %s11, 49
    %p234 = pnand %p232, %p233
    %p235 = pneg %p234
    // Predicated region
    $region37: #{resnet_forward.31} parent=5 // pred_check
      _
    $region38: #{resnet_forward.31} parent=5 // pred_check_branch
      %237 = sbr.rel (%p234) target = $region40
    $region39: #{resnet_forward.31} parent=5 // pred_region
      %s238 = ssub.s32 %s11, 1
      %s239 = sadd.s32 %s22, %s23
      %p240 = scmp.lt.s32.totalorder %s21, 1
      %s241 = scalar_select %p240, %s21, 1
      %p242 = scmp.lt.s32.totalorder %s239, 9
      %s243 = scalar_select %p242, %s239, 9
      %s244 = smul.addr %s243, 2
      %s245 = smul.addr %s241, 20
      %s246 = sadd.s32 %s244, %s245
      %s247 = smul.addr %s246, 4
      %s248 = scalar_lea.vmem %s0, %s247
      %p249 = pneg %p60
      %p250 = pneg %p57
      %p251 = pneg %p81
      %p252 = pneg %p78
      %p253 = pneg %p102
      %p254 = pneg %p99
      %p255 = pneg %p123
      %p256 = pneg %p120
      %p257 = scmp.lt.s32.totalorder %s21, 1
      %s258 = scalar_select %p257, %s21, 1
      %p259 = scmp.lt.s32.totalorder %s22, 7
      %s260 = scalar_select %p259, %s22, 7
      %s261 = smul.addr %s258, 8
      %s262 = sadd.s32 %s260, %s261
      %s263 = smul.addr %s262, 4
      %s264 = scalar_lea.vmem %s4, %s263
      %p265 = pneg %p151
      %p266 = pneg %p148
      %p267 = pneg %p179
      %p268 = pneg %p176
      %p269 = scmp.lt.s32.totalorder %s21, 1
      %s270 = scalar_select %p269, %s21, 1
      %p271 = scmp.lt.s32.totalorder %s22, 7
      %s272 = scalar_select %p271, %s22, 7
      %s273 = smul.addr %s270, 8
      %s274 = sadd.s32 %s272, %s273
      %s275 = smul.addr %s274, 4
      %s276 = scalar_lea.vmem %s5, %s275
      %s277 = sadd.s32 %s22, %s23
      %p278 = scmp.lt.s32.totalorder %s21, 1
      %s279 = scalar_select %p278, %s21, 1
      %p280 = scmp.lt.s32.totalorder %s277, 9
      %s281 = scalar_select %p280, %s277, 9
      %s282 = smul.addr %s281, 2
      %s283 = smul.addr %s279, 20
      %s284 = sadd.s32 %s282, %s283
      %s285 = smul.addr %s284, 4
      %s286 = scalar_lea.vmem %s0, %s285
      %s287 = sadd.s32 %s22, %s23
      %p288 = scmp.lt.s32.totalorder %s21, 1
      %s289 = scalar_select %p288, %s21, 1
      %p290 = scmp.lt.s32.totalorder %s22, 7
      %s291 = scalar_select %p290, %s22, 7
      %s292 = smul.addr %s289, 8
      %s293 = sadd.s32 %s291, %s292
      %s294 = smul.addr %s293, 4
      %s295 = scalar_lea.vmem %s4, %s294
      %p296 = scmp.lt.s32.totalorder %s21, 1
      %s297 = scalar_select %p296, %s21, 1
      %p298 = scmp.lt.s32.totalorder %s22, 7
      %s299 = scalar_select %p298, %s22, 7
      %s300 = smul.addr %s297, 8
      %s301 = sadd.s32 %s299, %s300
      %s302 = smul.addr %s301, 4
      %s303 = scalar_lea.vmem %s5, %s302
      %p305 = scmp.eq.s32.totalorder %s23, 0
      // Predicated region
      $region41: #{resnet_forward.31} parent=39 // pred_check
        %p306 = pneg %p305
      $region42: #{resnet_forward.31} parent=39 // pred_check_branch
        %308 = sbr.rel (%p306) target = $region44
      $region43: #{resnet_forward.31} parent=39 // pred_region
        %309 = vst [vmem:[#allocation2] sm:$0xff] 0.0
      $region44: #{resnet_forward.31} parent=39 // pred_fallthru
        _
      %v310 = vld [vmem:[%s286] sm:$0xf]
      %v311 = vld [vmem:[%s286 + $0x4] sm:$0x1]
      %v312 = vld [vmem:[#allocation2] sm:$0xff]
      %s313 = smul.u32 %s23, 3
      %s314 = smul.u32 %s313, 16
      %s315 = smul.addr %s314, 4
      %s316 = scalar_lea.vmem %s1, %s315
      %v317 = vld [vmem:[%s316] sm:$0xf]
      %v318 = vld [vmem:[%s316 + $0x4] sm:$0xf]
      %v319 = vld [vmem:[%s316 + $0x8] sm:$0xf]
      %v320 = vld [vmem:[%s316 + $0xc] sm:$0xf]
      %v321 = vld [vmem:[%s316 + $0x10] sm:$0xf]
      %v322 = vld [vmem:[%s316 + $0x14] sm:$0xf]
      %v323 = vld [vmem:[%s316 + $0x18] sm:$0xf]
      %v324 = vld [vmem:[%s316 + $0x1c] sm:$0xf]
      %v325 = vld [vmem:[%s316 + $0x20] sm:$0xf]
      %v326 = vld [vmem:[%s316 + $0x24] sm:$0xf]
      %v327 = vld [vmem:[%s316 + $0x28] sm:$0xf]
      %v328 = vld [vmem:[%s316 + $0x2c] sm:$0xf]
      %v329 = vld [vmem:[%s316 + $0x30] sm:$0xf]
      %v330 = vld [vmem:[%s316 + $0x34] sm:$0xf]
      %v331 = vld [vmem:[%s316 + $0x38] sm:$0xf]
      %v332 = vld [vmem:[%s316 + $0x3c] sm:$0xf]
      %v349 = vunpack.c.l.b16 %v317
      %v350 = vunpack.c.l.b16 %v318
      %v351 = vunpack.c.l.b16 %v319
      %v352 = vunpack.c.l.b16 %v320
      %v353 = vunpack.c.l.b16 %v321
      %v354 = vunpack.c.l.b16 %v322
      %v355 = vunpack.c.l.b16 %v323
      %v356 = vunpack.c.l.b16 %v324
      %v357 = vunpack.c.l.b16 %v325
      %v358 = vunpack.c.l.b16 %v326
      %v359 = vunpack.c.l.b16 %v327
      %v360 = vunpack.c.l.b16 %v328
      %v361 = vunpack.c.l.b16 %v329
      %v362 = vunpack.c.l.b16 %v330
      %v363 = vunpack.c.l.b16 %v331
      %v364 = vunpack.c.l.b16 %v332
      %v365 = vpack.c.b16 %v350, %v349
      %v366 = vpack.c.b16 %v352, %v351
      %v367 = vpack.c.b16 %v354, %v353
      %v368 = vpack.c.b16 %v356, %v355
      %v369 = vpack.c.b16 %v358, %v357
      %v370 = vpack.c.b16 %v360, %v359
      %v371 = vpack.c.b16 %v362, %v361
      %v372 = vpack.c.b16 %v364, %v363
      %381 = vmatprep.subr.bf16.mxu0 0
      %382 = vmatpush1.bf16.msra.mxu0 %v372
      %383 = vmatprep.subr.bf16.mxu0 0
      %384 = vmatpush1.bf16.msra.mxu0 %v371
      %385 = vmatprep.subr.bf16.mxu0 0
      %386 = vmatpush1.bf16.msra.mxu0 %v370
      %387 = vmatprep.subr.bf16.mxu0 0
      %388 = vmatpush1.bf16.msra.mxu0 %v369
      %389 = vmatprep.subr.bf16.mxu0 0
      %390 = vmatpush1.bf16.msra.mxu0 %v368
      %391 = vmatprep.subr.bf16.mxu0 0
      %392 = vmatpush1.bf16.msra.mxu0 %v367
      %393 = vmatprep.subr.bf16.mxu0 0
      %394 = vmatpush1.bf16.msra.mxu0 %v366
      %395 = vmatprep.subr.bf16.mxu0 0
      %396 = vmatpush1.bf16.msra.mxu0 %v365
      %397 = vmatprep.subr.bf16.mxu0 0
      %398 = vmatpush2.bf16.msra.mxu0 0
      %399 = vmatprep.subr.bf16.mxu0 0
      %400 = vmatpush2.bf16.msra.mxu0 0
      %401 = vmatprep.subr.bf16.mxu0 0
      %402 = vmatpush2.bf16.msra.mxu0 0
      %403 = vmatprep.subr.bf16.mxu0 0
      %404 = vmatpush2.bf16.msra.mxu0 0
      %405 = vmatprep.subr.bf16.mxu0 0
      %406 = vmatpush2.bf16.msra.mxu0 0
      %407 = vmatprep.subr.bf16.mxu0 0
      %408 = vmatpush2.bf16.msra.mxu0 0
      %409 = vmatprep.subr.bf16.mxu0 0
      %410 = vmatpush2.bf16.msra.mxu0 0
      %411 = vmatprep.subr.bf16.mxu0 0
      %412 = vmatpush2.bf16.msra.mxu0 0
      %413 = vmatprep.mubr.bf16.mxu0 0
      %414 = vmatmul.mubr.bf16.gmra.mxu0 %v310
      %v415 = vpop.f32.mrf.mxu0
      %v416 = vadd.f32 0.0, %v415
      %v417 = vpop.f32.mrf.mxu0
      %v418 = vpop.f32.mrf.mxu0
      %v419 = vpop.f32.mrf.mxu0
      %420 = vdwg.mxu0
      %v421 = vadd.f32 %v312, %v416
      %s422 = sadd.s32 %s313, 1
      %s423 = smul.u32 %s422, 16
      %s424 = smul.addr %s423, 4
      %s425 = scalar_lea.vmem %s1, %s424
      %v426 = vld [vmem:[%s425] sm:$0xf]
      %v427 = vld [vmem:[%s425 + $0x4] sm:$0xf]
      %v428 = vld [vmem:[%s425 + $0x8] sm:$0xf]
      %v429 = vld [vmem:[%s425 + $0xc] sm:$0xf]
      %v430 = vld [vmem:[%s425 + $0x10] sm:$0xf]
      %v431 = vld [vmem:[%s425 + $0x14] sm:$0xf]
      %v432 = vld [vmem:[%s425 + $0x18] sm:$0xf]
      %v433 = vld [vmem:[%s425 + $0x1c] sm:$0xf]
      %v434 = vld [vmem:[%s425 + $0x20] sm:$0xf]
      %v435 = vld [vmem:[%s425 + $0x24] sm:$0xf]
      %v436 = vld [vmem:[%s425 + $0x28] sm:$0xf]
      %v437 = vld [vmem:[%s425 + $0x2c] sm:$0xf]
      %v438 = vld [vmem:[%s425 + $0x30] sm:$0xf]
      %v439 = vld [vmem:[%s425 + $0x34] sm:$0xf]
      %v440 = vld [vmem:[%s425 + $0x38] sm:$0xf]
      %v441 = vld [vmem:[%s425 + $0x3c] sm:$0xf]
      %v444 = vunpack.c.l.b16 %v310
      %v445 = vunpack.c.l.b16 %v311
      %v446 = vpack.c.b16 %v445, %v444
      %v448 = vshrl.u32 %v446, 16
      %v450 = vshll.u32 %v446, 16
      %v452 = vrot.slane %v450, 1
      %v453 = vor.u32 %v448, %v452
      %v471 = vunpack.c.l.b16 %v426
      %v472 = vunpack.c.l.b16 %v427
      %v473 = vunpack.c.l.b16 %v428
      %v474 = vunpack.c.l.b16 %v429
      %v475 = vunpack.c.l.b16 %v430
      %v476 = vunpack.c.l.b16 %v431
      %v477 = vunpack.c.l.b16 %v432
      %v478 = vunpack.c.l.b16 %v433
      %v479 = vunpack.c.l.b16 %v434
      %v480 = vunpack.c.l.b16 %v435
      %v481 = vunpack.c.l.b16 %v436
      %v482 = vunpack.c.l.b16 %v437
      %v483 = vunpack.c.l.b16 %v438
      %v484 = vunpack.c.l.b16 %v439
      %v485 = vunpack.c.l.b16 %v440
      %v486 = vunpack.c.l.b16 %v441
      %v487 = vpack.c.b16 %v472, %v471
      %v488 = vpack.c.b16 %v474, %v473
      %v489 = vpack.c.b16 %v476, %v475
      %v490 = vpack.c.b16 %v478, %v477
      %v491 = vpack.c.b16 %v480, %v479
      %v492 = vpack.c.b16 %v482, %v481
      %v493 = vpack.c.b16 %v484, %v483
      %v494 = vpack.c.b16 %v486, %v485
      %503 = vmatprep.subr.bf16.mxu0 0
      %504 = vmatpush1.bf16.msra.mxu0 %v494
      %505 = vmatprep.subr.bf16.mxu0 0
      %506 = vmatpush1.bf16.msra.mxu0 %v493
      %507 = vmatprep.subr.bf16.mxu0 0
      %508 = vmatpush1.bf16.msra.mxu0 %v492
      %509 = vmatprep.subr.bf16.mxu0 0
      %510 = vmatpush1.bf16.msra.mxu0 %v491
      %511 = vmatprep.subr.bf16.mxu0 0
      %512 = vmatpush1.bf16.msra.mxu0 %v490
      %513 = vmatprep.subr.bf16.mxu0 0
      %514 = vmatpush1.bf16.msra.mxu0 %v489
      %515 = vmatprep.subr.bf16.mxu0 0
      %516 = vmatpush1.bf16.msra.mxu0 %v488
      %517 = vmatprep.subr.bf16.mxu0 0
      %518 = vmatpush1.bf16.msra.mxu0 %v487
      %519 = vmatprep.subr.bf16.mxu0 0
      %520 = vmatpush2.bf16.msra.mxu0 0
      %521 = vmatprep.subr.bf16.mxu0 0
      %522 = vmatpush2.bf16.msra.mxu0 0
      %523 = vmatprep.subr.bf16.mxu0 0
      %524 = vmatpush2.bf16.msra.mxu0 0
      %525 = vmatprep.subr.bf16.mxu0 0
      %526 = vmatpush2.bf16.msra.mxu0 0
      %527 = vmatprep.subr.bf16.mxu0 0
      %528 = vmatpush2.bf16.msra.mxu0 0
      %529 = vmatprep.subr.bf16.mxu0 0
      %530 = vmatpush2.bf16.msra.mxu0 0
      %531 = vmatprep.subr.bf16.mxu0 0
      %532 = vmatpush2.bf16.msra.mxu0 0
      %533 = vmatprep.subr.bf16.mxu0 0
      %534 = vmatpush2.bf16.msra.mxu0 0
      %535 = vmatprep.mubr.bf16.mxu0 0
      %536 = vmatmul.mubr.bf16.gmra.mxu0 %v453
      %v537 = vpop.f32.mrf.mxu0
      %v538 = vadd.f32 0.0, %v537
      %v539 = vpop.f32.mrf.mxu0
      %v540 = vpop.f32.mrf.mxu0
      %v541 = vpop.f32.mrf.mxu0
      %542 = vdwg.mxu0
      %v543 = vadd.f32 %v421, %v538
      %s544 = sadd.s32 %s313, 2
      %s545 = smul.u32 %s544, 16
      %s546 = smul.addr %s545, 4
      %s547 = scalar_lea.vmem %s1, %s546
      %v548 = vld [vmem:[%s547] sm:$0xf]
      %v549 = vld [vmem:[%s547 + $0x4] sm:$0xf]
      %v550 = vld [vmem:[%s547 + $0x8] sm:$0xf]
      %v551 = vld [vmem:[%s547 + $0xc] sm:$0xf]
      %v552 = vld [vmem:[%s547 + $0x10] sm:$0xf]
      %v553 = vld [vmem:[%s547 + $0x14] sm:$0xf]
      %v554 = vld [vmem:[%s547 + $0x18] sm:$0xf]
      %v555 = vld [vmem:[%s547 + $0x1c] sm:$0xf]
      %v556 = vld [vmem:[%s547 + $0x20] sm:$0xf]
      %v557 = vld [vmem:[%s547 + $0x24] sm:$0xf]
      %v558 = vld [vmem:[%s547 + $0x28] sm:$0xf]
      %v559 = vld [vmem:[%s547 + $0x2c] sm:$0xf]
      %v560 = vld [vmem:[%s547 + $0x30] sm:$0xf]
      %v561 = vld [vmem:[%s547 + $0x34] sm:$0xf]
      %v562 = vld [vmem:[%s547 + $0x38] sm:$0xf]
      %v563 = vld [vmem:[%s547 + $0x3c] sm:$0xf]
      %v564 = vrot.slane %v446, 1
      %v582 = vunpack.c.l.b16 %v548
      %v583 = vunpack.c.l.b16 %v549
      %v584 = vunpack.c.l.b16 %v550
      %v585 = vunpack.c.l.b16 %v551
      %v586 = vunpack.c.l.b16 %v552
      %v587 = vunpack.c.l.b16 %v553
      %v588 = vunpack.c.l.b16 %v554
      %v589 = vunpack.c.l.b16 %v555
      %v590 = vunpack.c.l.b16 %v556
      %v591 = vunpack.c.l.b16 %v557
      %v592 = vunpack.c.l.b16 %v558
      %v593 = vunpack.c.l.b16 %v559
      %v594 = vunpack.c.l.b16 %v560
      %v595 = vunpack.c.l.b16 %v561
      %v596 = vunpack.c.l.b16 %v562
      %v597 = vunpack.c.l.b16 %v563
      %v598 = vpack.c.b16 %v583, %v582
      %v599 = vpack.c.b16 %v585, %v584
      %v600 = vpack.c.b16 %v587, %v586
      %v601 = vpack.c.b16 %v589, %v588
      %v602 = vpack.c.b16 %v591, %v590
      %v603 = vpack.c.b16 %v593, %v592
      %v604 = vpack.c.b16 %v595, %v594
      %v605 = vpack.c.b16 %v597, %v596
      %614 = vmatprep.subr.bf16.mxu0 0
      %615 = vmatpush1.bf16.msra.mxu0 %v605
      %616 = vmatprep.subr.bf16.mxu0 0
      %617 = vmatpush1.bf16.msra.mxu0 %v604
      %618 = vmatprep.subr.bf16.mxu0 0
      %619 = vmatpush1.bf16.msra.mxu0 %v603
      %620 = vmatprep.subr.bf16.mxu0 0
      %621 = vmatpush1.bf16.msra.mxu0 %v602
      %622 = vmatprep.subr.bf16.mxu0 0
      %623 = vmatpush1.bf16.msra.mxu0 %v601
      %624 = vmatprep.subr.bf16.mxu0 0
      %625 = vmatpush1.bf16.msra.mxu0 %v600
      %626 = vmatprep.subr.bf16.mxu0 0
      %627 = vmatpush1.bf16.msra.mxu0 %v599
      %628 = vmatprep.subr.bf16.mxu0 0
      %629 = vmatpush1.bf16.msra.mxu0 %v598
      %630 = vmatprep.subr.bf16.mxu0 0
      %631 = vmatpush2.bf16.msra.mxu0 0
      %632 = vmatprep.subr.bf16.mxu0 0
      %633 = vmatpush2.bf16.msra.mxu0 0
      %634 = vmatprep.subr.bf16.mxu0 0
      %635 = vmatpush2.bf16.msra.mxu0 0
      %636 = vmatprep.subr.bf16.mxu0 0
      %637 = vmatpush2.bf16.msra.mxu0 0
      %638 = vmatprep.subr.bf16.mxu0 0
      %639 = vmatpush2.bf16.msra.mxu0 0
      %640 = vmatprep.subr.bf16.mxu0 0
      %641 = vmatpush2.bf16.msra.mxu0 0
      %642 = vmatprep.subr.bf16.mxu0 0
      %643 = vmatpush2.bf16.msra.mxu0 0
      %644 = vmatprep.subr.bf16.mxu0 0
      %645 = vmatpush2.bf16.msra.mxu0 0
      %646 = vmatprep.mubr.bf16.mxu0 0
      %647 = vmatmul.mubr.bf16.gmra.mxu0 %v564
      %v648 = vpop.f32.mrf.mxu0
      %v649 = vadd.f32 0.0, %v648
      %v650 = vpop.f32.mrf.mxu0
      %v651 = vpop.f32.mrf.mxu0
      %v652 = vpop.f32.mrf.mxu0
      %653 = vdwg.mxu0
      %v654 = vadd.f32 %v543, %v649
      %655 = vst [vmem:[#allocation2] sm:$0xff] %v654
      %p656 = scmp.eq.s32.totalorder %s23, 2
      // Predicated region
      $region45: #{resnet_forward.31} parent=39 // pred_check
        %p657 = pneg %p656
      $region46: #{resnet_forward.31} parent=39 // pred_check_branch
        %659 = sbr.rel (%p657) target = $region48
      $region47: #{resnet_forward.31} parent=39 // pred_region
        %v660 = vld [vmem:[#allocation2] sm:$0xff]
        %v661 = vld [vmem:[%s2] sm:$0x1]
        %v663 = vlaneseq
        %v664 = vshrl.u32 %v663, 7
        %v665 = vsub.s32 0, %v664
        %v666 = vrot.slane %v661, %v665
        %v668 = vmul.f32 %v660, %v666
        %v669 = vld [vmem:[%s3] sm:$0x1]
        %v671 = vlaneseq
        %v672 = vshrl.u32 %v671, 7
        %v673 = vsub.s32 0, %v672
        %v674 = vrot.slane %v669, %v673
        %v676 = vadd.f32 %v668, %v674
        %v677 = vld [vmem:[%s295] sm:$0xf]
        %v678 = vunpack.c.l.bf16 %v677
        %v679 = vadd.f32 %v676, %v678
        %v680 = vmax.f32 %v679, 0.0
        %v681 = vpack.c.bf16 %v680, %v680
        %682 = vst [vmem:[%s303] sm:$0xf] %v681
      $region48: #{resnet_forward.31} parent=39 // pred_fallthru
        _
      %p683 = scmp.lt.s32.totalorder %s21, 1
      %s684 = scalar_select %p683, %s21, 1
      %p685 = scmp.lt.s32.totalorder %s22, 7
      %s686 = scalar_select %p685, %s22, 7
      %s687 = smul.addr %s684, 8
      %s688 = sadd.s32 %s686, %s687
      %s689 = smul.addr %s688, 4
      %s690 = scalar_lea.vmem %s5, %s689
      // Predicated region
      $region49: #{resnet_forward.31} parent=39 // pred_check
        %p691 = pneg %p176
      $region50: #{resnet_forward.31} parent=39 // pred_check_branch
        %693 = sbr.rel (%p691) target = $region52
      $region51: #{resnet_forward.31} parent=39 // pred_region
        _
      $region52: #{resnet_forward.31} parent=39 // pred_fallthru
        _
    $region40: #{resnet_forward.31} parent=5 // pred_fallthru
      _
    %p694 = scmp.le.s32.totalorder 2, %s11
    // Predicated region
    $region53: #{resnet_forward.31} parent=5 // pred_check
      %p695 = pneg %p694
    $region54: #{resnet_forward.31} parent=5 // pred_check_branch
      %697 = sbr.rel (%p695) target = $region56
    $region55: #{resnet_forward.31} parent=5 // pred_region
      %s698 = ssub.s32 %s11, 2
      // Predicated region
      $region57: #{resnet_forward.31} parent=55 // pred_check
        %p699 = pneg %p182
      $region58: #{resnet_forward.31} parent=55 // pred_check_branch
        %701 = sbr.rel (%p699) target = $region60
      $region59: #{resnet_forward.31} parent=55 // pred_region
        %p702 = scmp.lt.s32.totalorder %s24, 1
        %s703 = scalar_select %p702, %s24, 1
        %p704 = scmp.lt.s32.totalorder %s25, 7
        %s705 = scalar_select %p704, %s25, 7
        %s706 = smul.addr %s703, 8
        %s707 = sadd.s32 %s705, %s706
        %s708 = smul.addr %s707, 4
        %s709 = scalar_lea.vmem %s5, %s708
      $region60: #{resnet_forward.31} parent=55 // pred_fallthru
        _
    $region56: #{resnet_forward.31} parent=5 // pred_fallthru
      _
  $region6: #{resnet_forward.31} parent=0 // loop_footer
    %s15 = sadd.s32 1, %s11
  $region7: #{resnet_forward.31} parent=0 // loop_footer_branch
    %10 = sbr.rel target = $region3
  $region8: #{resnet_forward.31} parent=0 // loop_exit
    _

// kernel: resnet_forward.34
$region0: #{resnet_forward.34}
  #allocation0 [shape = 'u32[]', space=smem, size = 0x4, offset = 0x4, fixed_abs, tag = 'smem constant byte address 0x4 - core index']
  #allocation1 [shape = 'u32[144,128]{1,0:T(1,128)}', space=vmem, size = 0x12000, scoped, tag = 'internal scratch']
  #allocation2 [shape = 'f32[9,128]{1,0:T(8,128)}', space=vmem, size = 0x2000, scoped, tag = 'scratch operand']
  %s0 = inlined_call_operand.vmem [shape: bf16[2,6,11,128], index: 0, kind: input, shape index: {}]
  %s1 = inlined_call_operand.vmem [shape: bf16[9,128,128], index: 1, kind: input, shape index: {}]
  %s2 = inlined_call_operand.vmem [shape: f32[1,128], index: 2, kind: input, shape index: {}]
  %s3 = inlined_call_operand.vmem [shape: f32[1,128], index: 3, kind: input, shape index: {}]
  %s4 = inlined_call_operand.vmem [shape: bf16[2,4,9,128], index: 4, kind: output, shape index: {}]
  %s5 = sld [smem:[#allocation0]]
  $region57: #{resnet_forward.34} parent=0
    _
  %s7 = ssub.s32 1, %s5
  %s8 = scalar_select 0, %s7, %s5
  loop: start=0, step=1, limit=26
  $region2: #{resnet_forward.34} parent=0 // loop_pre_header
    _
  $region3: #{resnet_forward.34} parent=0 // loop_header
    %s10 = sphi 0, %s14
    %p11 = scmp.ge.s32.totalorder %s10, 26
    %s17 = sphi 0, %s36
    %s18 = sphi 0, %s32
    %s19 = sphi 0, %s28
    %s20 = sphi 0, %s17
    %s21 = sphi 0, %s18
    %s22 = sphi 0, %s19
    %s23 = sphi 0, %s20
    %s24 = sphi 0, %s21
    %s25 = sphi 0, %s22
    %s43 = sphi 0, %s45
    %s46 = sphi 0, %s43
    %s47 = sphi 0, %s46
    %s63 = sphi 0, %s47
    %s67 = sphi 0, %s67
    %s69 = sphi 0, %s67
    %s70 = sphi 0, %s69
    %s84 = sphi 0, %s70
    %s88 = sphi 0, %s88
    %s90 = sphi 0, %s88
    %s91 = sphi 0, %s90
    %s105 = sphi 0, %s91
    %s109 = sphi 0, %s109
    %s111 = sphi 0, %s109
    %s112 = sphi 0, %s111
    %s126 = sphi 0, %s112
    %s134 = sphi 0, %s136
    %s137 = sphi 0, %s134
    %s138 = sphi 0, %s137
    %s154 = sphi 0, %s138
  $region4: #{resnet_forward.34} parent=0 // loop_header_branch
    %13 = sbr.rel (%p11) target = $region8
  $region5: #{resnet_forward.34} parent=0 // loop_body
    %s15 = ssub.s32 %s10, 1
    %s16 = ssub.s32 %s10, 2
    %s26 = sadd.s32 1, %s19
    %p27 = scmp.ge.s32.totalorder %s26, 3
    %s28 = scalar_select %p27, 0, %s26
    %s29 = sadd.s32 1, %s18
    %s30 = scalar_select %p27, %s29, %s18
    %p31 = scmp.ge.s32.totalorder %s30, 4
    %s32 = scalar_select %p31, 0, %s30
    %s33 = sadd.s32 1, %s17
    %s34 = scalar_select %p31, %s33, %s17
    %p35 = scmp.ge.s32.totalorder %s34, 2
    %s36 = scalar_select %p35, 0, %s34
    %s37 = sadd.s32 %s18, %s19
    %s38 = sadd.s32 %s32, %s28
    %s39 = ssub.s32 %s17, %s36
    %s40 = ssub.s32 %s37, %s38
    %s41 = sor.u32 %s39, %s40
    %p42 = scmp.eq.s32.totalorder %s41, 0
    %s44 = sadd.s32 %s43, 1
    %s45 = scalar_select %p42, %s43, %s44
    %p48 = pneg %p42
    %p49 = scmp.eq.s32.totalorder %s10, 23
    %p50 = por %p48, %p49
    %p51 = scmp.ne.s32.totalorder %s43, %s46
    %p52 = scmp.eq.s32.totalorder %s10, 0
    %p53 = por %p51, %p52
    %p54 = scmp.ne.s32.totalorder %s43, %s46
    %p55 = scmp.eq.s32.totalorder %s15, 23
    %p56 = por %p54, %p55
    %p57 = scmp.ne.s32.totalorder %s46, %s47
    %p58 = scmp.eq.s32.totalorder %s15, 0
    %p59 = por %p57, %p58
    %p60 = scmp.ne.s32.totalorder %s46, %s47
    %p61 = scmp.eq.s32.totalorder %s16, 23
    %p62 = por %p60, %p61
    %p64 = scmp.ne.s32.totalorder %s47, %s63
    %p65 = scmp.eq.s32.totalorder %s16, 0
    %p66 = por %p64, %p65
    %s68 = sadd.s32 %s67, 1
    %p71 = scmp.eq.s32.totalorder %s10, 23
    %p72 = scmp.ne.s32.totalorder %s67, %s69
    %p73 = scmp.eq.s32.totalorder %s10, 0
    %p74 = por %p72, %p73
    %p75 = scmp.ne.s32.totalorder %s67, %s69
    %p76 = scmp.eq.s32.totalorder %s15, 23
    %p77 = por %p75, %p76
    %p78 = scmp.ne.s32.totalorder %s69, %s70
    %p79 = scmp.eq.s32.totalorder %s15, 0
    %p80 = por %p78, %p79
    %p81 = scmp.ne.s32.totalorder %s69, %s70
    %p82 = scmp.eq.s32.totalorder %s16, 23
    %p83 = por %p81, %p82
    %p85 = scmp.ne.s32.totalorder %s70, %s84
    %p86 = scmp.eq.s32.totalorder %s16, 0
    %p87 = por %p85, %p86
    %s89 = sadd.s32 %s88, 1
    %p92 = scmp.eq.s32.totalorder %s10, 23
    %p93 = scmp.ne.s32.totalorder %s88, %s90
    %p94 = scmp.eq.s32.totalorder %s10, 0
    %p95 = por %p93, %p94
    %p96 = scmp.ne.s32.totalorder %s88, %s90
    %p97 = scmp.eq.s32.totalorder %s15, 23
    %p98 = por %p96, %p97
    %p99 = scmp.ne.s32.totalorder %s90, %s91
    %p100 = scmp.eq.s32.totalorder %s15, 0
    %p101 = por %p99, %p100
    %p102 = scmp.ne.s32.totalorder %s90, %s91
    %p103 = scmp.eq.s32.totalorder %s16, 23
    %p104 = por %p102, %p103
    %p106 = scmp.ne.s32.totalorder %s91, %s105
    %p107 = scmp.eq.s32.totalorder %s16, 0
    %p108 = por %p106, %p107
    %s110 = sadd.s32 %s109, 1
    %p113 = scmp.eq.s32.totalorder %s10, 23
    %p114 = scmp.ne.s32.totalorder %s109, %s111
    %p115 = scmp.eq.s32.totalorder %s10, 0
    %p116 = por %p114, %p115
    %p117 = scmp.ne.s32.totalorder %s109, %s111
    %p118 = scmp.eq.s32.totalorder %s15, 23
    %p119 = por %p117, %p118
    %p120 = scmp.ne.s32.totalorder %s111, %s112
    %p121 = scmp.eq.s32.totalorder %s15, 0
    %p122 = por %p120, %p121
    %p123 = scmp.ne.s32.totalorder %s111, %s112
    %p124 = scmp.eq.s32.totalorder %s16, 23
    %p125 = por %p123, %p124
    %p127 = scmp.ne.s32.totalorder %s112, %s126
    %p128 = scmp.eq.s32.totalorder %s16, 0
    %p129 = por %p127, %p128
    %s130 = ssub.s32 %s17, %s36
    %s131 = ssub.s32 %s18, %s32
    %s132 = sor.u32 %s130, %s131
    %p133 = scmp.eq.s32.totalorder %s132, 0
    %s135 = sadd.s32 %s134, 1
    %s136 = scalar_select %p133, %s134, %s135
    %p139 = pneg %p133
    %p140 = scmp.eq.s32.totalorder %s10, 23
    %p141 = por %p139, %p140
    %p142 = scmp.ne.s32.totalorder %s134, %s137
    %p143 = scmp.eq.s32.totalorder %s10, 0
    %p144 = por %p142, %p143
    %p145 = scmp.ne.s32.totalorder %s134, %s137
    %p146 = scmp.eq.s32.totalorder %s15, 23
    %p147 = por %p145, %p146
    %p148 = scmp.ne.s32.totalorder %s137, %s138
    %p149 = scmp.eq.s32.totalorder %s15, 0
    %p150 = por %p148, %p149
    %p151 = scmp.ne.s32.totalorder %s137, %s138
    %p152 = scmp.eq.s32.totalorder %s16, 23
    %p153 = por %p151, %p152
    %p155 = scmp.ne.s32.totalorder %s138, %s154
    %p156 = scmp.eq.s32.totalorder %s16, 0
    %p157 = por %p155, %p156
    %p158 = scmp.le.s32.totalorder 1, %s10
    %p159 = scmp.lt.s32.totalorder %s10, 25
    %p160 = pnand %p158, %p159
    %p161 = pneg %p160
    // Predicated region
    $region9: #{resnet_forward.34} parent=5 // pred_check
      _
    $region10: #{resnet_forward.34} parent=5 // pred_check_branch
      %163 = sbr.rel (%p160) target = $region12
    $region11: #{resnet_forward.34} parent=5 // pred_region
      %s164 = ssub.s32 %s10, 1
      // Predicated region
      $region13: #{resnet_forward.34} parent=11 // pred_check
        %p165 = pneg %p80
      $region14: #{resnet_forward.34} parent=11 // pred_check_branch
        %167 = sbr.rel (%p165) target = $region16
      $region15: #{resnet_forward.34} parent=11 // pred_region
        _
      $region16: #{resnet_forward.34} parent=11 // pred_fallthru
        _
      // Predicated region
      $region17: #{resnet_forward.34} parent=11 // pred_check
        %p168 = pneg %p101
      $region18: #{resnet_forward.34} parent=11 // pred_check_branch
        %170 = sbr.rel (%p168) target = $region20
      $region19: #{resnet_forward.34} parent=11 // pred_region
        _
      $region20: #{resnet_forward.34} parent=11 // pred_fallthru
        _
      // Predicated region
      $region21: #{resnet_forward.34} parent=11 // pred_check
        %p171 = pneg %p122
      $region22: #{resnet_forward.34} parent=11 // pred_check_branch
        %173 = sbr.rel (%p171) target = $region24
      $region23: #{resnet_forward.34} parent=11 // pred_region
        _
      $region24: #{resnet_forward.34} parent=11 // pred_fallthru
        _
    $region12: #{resnet_forward.34} parent=5 // pred_fallthru
      _
    %p174 = scmp.lt.s32.totalorder %s10, 24
    // Predicated region
    $region25: #{resnet_forward.34} parent=5 // pred_check
      %p175 = pneg %p174
    $region26: #{resnet_forward.34} parent=5 // pred_check_branch
      %177 = sbr.rel (%p175) target = $region28
    $region27: #{resnet_forward.34} parent=5 // pred_region
      // Predicated region
      $region29: #{resnet_forward.34} parent=27 // pred_check
        %p178 = pneg %p53
      $region30: #{resnet_forward.34} parent=27 // pred_check_branch
        %180 = sbr.rel (%p178) target = $region32
      $region31: #{resnet_forward.34} parent=27 // pred_region
        %s181 = sadd.s32 %s18, %s19
        %p182 = scmp.lt.s32.totalorder %s17, 1
        %s183 = scalar_select %p182, %s17, 1
        %p184 = scmp.lt.s32.totalorder %s181, 5
        %s185 = scalar_select %p184, %s181, 5
        %s186 = smul.addr %s185, 2
        %s187 = smul.addr %s183, 12
        %s188 = sadd.s32 %s186, %s187
        %s189 = smul.addr %s188, 4
        %s190 = scalar_lea.vmem %s0, %s189
        %s191 = sadd.s32 %s18, %s19
      $region32: #{resnet_forward.34} parent=27 // pred_fallthru
        _
    $region28: #{resnet_forward.34} parent=5 // pred_fallthru
      _
    %p192 = scmp.le.s32.totalorder 1, %s10
    %p193 = scmp.lt.s32.totalorder %s10, 25
    %p194 = pnand %p192, %p193
    %p195 = pneg %p194
    // Predicated region
    $region33: #{resnet_forward.34} parent=5 // pred_check
      _
    $region34: #{resnet_forward.34} parent=5 // pred_check_branch
      %197 = sbr.rel (%p194) target = $region36
    $region35: #{resnet_forward.34} parent=5 // pred_region
      %s198 = ssub.s32 %s10, 1
      %s199 = sadd.s32 %s21, %s22
      %p200 = scmp.lt.s32.totalorder %s20, 1
      %s201 = scalar_select %p200, %s20, 1
      %p202 = scmp.lt.s32.totalorder %s199, 5
      %s203 = scalar_select %p202, %s199, 5
      %s204 = smul.addr %s203, 2
      %s205 = smul.addr %s201, 12
      %s206 = sadd.s32 %s204, %s205
      %s207 = smul.addr %s206, 4
      %s208 = scalar_lea.vmem %s0, %s207
      %p209 = pneg %p59
      %p210 = pneg %p56
      %p211 = pneg %p80
      %p212 = pneg %p77
      %p213 = pneg %p101
      %p214 = pneg %p98
      %p215 = pneg %p122
      %p216 = pneg %p119
      %p217 = pneg %p150
      %p218 = pneg %p147
      %p219 = scmp.lt.s32.totalorder %s20, 1
      %s220 = scalar_select %p219, %s20, 1
      %p221 = scmp.lt.s32.totalorder %s21, 3
      %s222 = scalar_select %p221, %s21, 3
      %s223 = smul.addr %s222, 2
      %s224 = smul.addr %s220, 8
      %s225 = sadd.s32 %s223, %s224
      %s226 = smul.addr %s225, 4
      %s227 = scalar_lea.vmem %s4, %s226
      %s228 = sadd.s32 %s21, %s22
      %p229 = scmp.lt.s32.totalorder %s20, 1
      %s230 = scalar_select %p229, %s20, 1
      %p231 = scmp.lt.s32.totalorder %s228, 5
      %s232 = scalar_select %p231, %s228, 5
      %s233 = smul.addr %s232, 2
      %s234 = smul.addr %s230, 12
      %s235 = sadd.s32 %s233, %s234
      %s236 = smul.addr %s235, 4
      %s237 = scalar_lea.vmem %s0, %s236
      %s238 = sadd.s32 %s21, %s22
      %p239 = scmp.lt.s32.totalorder %s20, 1
      %s240 = scalar_select %p239, %s20, 1
      %p241 = scmp.lt.s32.totalorder %s21, 3
      %s242 = scalar_select %p241, %s21, 3
      %s243 = smul.addr %s242, 2
      %s244 = smul.addr %s240, 8
      %s245 = sadd.s32 %s243, %s244
      %s246 = smul.addr %s245, 4
      %s247 = scalar_lea.vmem %s4, %s246
      %p249 = scmp.eq.s32.totalorder %s22, 0
      // Predicated region
      $region37: #{resnet_forward.34} parent=35 // pred_check
        %p250 = pneg %p249
      $region38: #{resnet_forward.34} parent=35 // pred_check_branch
        %252 = sbr.rel (%p250) target = $region40
      $region39: #{resnet_forward.34} parent=35 // pred_region
        %253 = vst [vmem:[#allocation2] sm:$0xff] 0.0
        %254 = vst [vmem:[#allocation2 + $0x8] sm:$0x1] 0.0
      $region40: #{resnet_forward.34} parent=35 // pred_fallthru
        _
      %v255 = vld [vmem:[%s237] sm:$0xf]
      %v256 = vld [vmem:[%s237 + $0x4] sm:$0x3]
      %v257 = vld [vmem:[#allocation2] sm:$0xff]
      %v258 = vld [vmem:[#allocation2 + $0x8] sm:$0x1]
      %s259 = smul.u32 %s22, 3
      %s260 = smul.u32 %s259, 16
      %s261 = smul.addr %s260, 4
      %s262 = scalar_lea.vmem %s1, %s261
      %v263 = vld [vmem:[%s262] sm:$0xf]
      %v264 = vld [vmem:[%s262 + $0x4] sm:$0xf]
      %v265 = vld [vmem:[%s262 + $0x8] sm:$0xf]
      %v266 = vld [vmem:[%s262 + $0xc] sm:$0xf]
      %v267 = vld [vmem:[%s262 + $0x10] sm:$0xf]
      %v268 = vld [vmem:[%s262 + $0x14] sm:$0xf]
      %v269 = vld [vmem:[%s262 + $0x18] sm:$0xf]
      %v270 = vld [vmem:[%s262 + $0x1c] sm:$0xf]
      %v271 = vld [vmem:[%s262 + $0x20] sm:$0xf]
      %v272 = vld [vmem:[%s262 + $0x24] sm:$0xf]
      %v273 = vld [vmem:[%s262 + $0x28] sm:$0xf]
      %v274 = vld [vmem:[%s262 + $0x2c] sm:$0xf]
      %v275 = vld [vmem:[%s262 + $0x30] sm:$0xf]
      %v276 = vld [vmem:[%s262 + $0x34] sm:$0xf]
      %v277 = vld [vmem:[%s262 + $0x38] sm:$0xf]
      %v278 = vld [vmem:[%s262 + $0x3c] sm:$0xf]
      %v281 = vunpack.c.l.b16 %v255
      %v282 = vunpack.c.l.b16 %v256
      %v283 = vpack.c.b16 %v282, %v281
      %v301 = vunpack.c.l.b16 %v263
      %v302 = vunpack.c.l.b16 %v264
      %v303 = vunpack.c.l.b16 %v265
      %v304 = vunpack.c.l.b16 %v266
      %v305 = vunpack.c.l.b16 %v267
      %v306 = vunpack.c.l.b16 %v268
      %v307 = vunpack.c.l.b16 %v269
      %v308 = vunpack.c.l.b16 %v270
      %v309 = vunpack.c.l.b16 %v271
      %v310 = vunpack.c.l.b16 %v272
      %v311 = vunpack.c.l.b16 %v273
      %v312 = vunpack.c.l.b16 %v274
      %v313 = vunpack.c.l.b16 %v275
      %v314 = vunpack.c.l.b16 %v276
      %v315 = vunpack.c.l.b16 %v277
      %v316 = vunpack.c.l.b16 %v278
      %v317 = vpack.c.b16 %v302, %v301
      %v318 = vpack.c.b16 %v304, %v303
      %v319 = vpack.c.b16 %v306, %v305
      %v320 = vpack.c.b16 %v308, %v307
      %v321 = vpack.c.b16 %v310, %v309
      %v322 = vpack.c.b16 %v312, %v311
      %v323 = vpack.c.b16 %v314, %v313
      %v324 = vpack.c.b16 %v316, %v315
      %333 = vmatprep.subr.bf16.mxu0 0
      %334 = vmatpush1.bf16.msra.mxu0 %v324
      %335 = vmatprep.subr.bf16.mxu0 0
      %336 = vmatpush1.bf16.msra.mxu0 %v323
      %337 = vmatprep.subr.bf16.mxu0 0
      %338 = vmatpush1.bf16.msra.mxu0 %v322
      %339 = vmatprep.subr.bf16.mxu0 0
      %340 = vmatpush1.bf16.msra.mxu0 %v321
      %341 = vmatprep.subr.bf16.mxu0 0
      %342 = vmatpush1.bf16.msra.mxu0 %v320
      %343 = vmatprep.subr.bf16.mxu0 0
      %344 = vmatpush1.bf16.msra.mxu0 %v319
      %345 = vmatprep.subr.bf16.mxu0 0
      %346 = vmatpush1.bf16.msra.mxu0 %v318
      %347 = vmatprep.subr.bf16.mxu0 0
      %348 = vmatpush1.bf16.msra.mxu0 %v317
      %349 = vmatprep.subr.bf16.mxu0 0
      %350 = vmatpush2.bf16.msra.mxu0 0
      %351 = vmatprep.subr.bf16.mxu0 0
      %352 = vmatpush2.bf16.msra.mxu0 0
      %353 = vmatprep.subr.bf16.mxu0 0
      %354 = vmatpush2.bf16.msra.mxu0 0
      %355 = vmatprep.subr.bf16.mxu0 0
      %356 = vmatpush2.bf16.msra.mxu0 0
      %357 = vmatprep.subr.bf16.mxu0 0
      %358 = vmatpush2.bf16.msra.mxu0 0
      %359 = vmatprep.subr.bf16.mxu0 0
      %360 = vmatpush2.bf16.msra.mxu0 0
      %361 = vmatprep.subr.bf16.mxu0 0
      %362 = vmatpush2.bf16.msra.mxu0 0
      %363 = vmatprep.subr.bf16.mxu0 0
      %364 = vmatpush2.bf16.msra.mxu0 0
      %365 = vmatprep.mubr.bf16.mxu0 0
      %366 = vmatmul.mubr.bf16.gmra.mxu0 %v283
      %v367 = vpop.f32.mrf.mxu0
      %v368 = vadd.f32 0.0, %v367
      %v369 = vpop.f32.mrf.mxu0
      %v370 = vpop.f32.mrf.mxu0
      %v371 = vadd.f32 0.0, %v370
      %v372 = vpop.f32.mrf.mxu0
      %373 = vdwg.mxu0
      %v374 = vadd.f32 %v257, %v368
      %v375 = vadd.f32 %v258, %v371
      %s376 = sadd.s32 %s259, 1
      %s377 = smul.u32 %s376, 16
      %s378 = smul.addr %s377, 4
      %s379 = scalar_lea.vmem %s1, %s378
      %v380 = vld [vmem:[%s379] sm:$0xf]
      %v381 = vld [vmem:[%s379 + $0x4] sm:$0xf]
      %v382 = vld [vmem:[%s379 + $0x8] sm:$0xf]
      %v383 = vld [vmem:[%s379 + $0xc] sm:$0xf]
      %v384 = vld [vmem:[%s379 + $0x10] sm:$0xf]
      %v385 = vld [vmem:[%s379 + $0x14] sm:$0xf]
      %v386 = vld [vmem:[%s379 + $0x18] sm:$0xf]
      %v387 = vld [vmem:[%s379 + $0x1c] sm:$0xf]
      %v388 = vld [vmem:[%s379 + $0x20] sm:$0xf]
      %v389 = vld [vmem:[%s379 + $0x24] sm:$0xf]
      %v390 = vld [vmem:[%s379 + $0x28] sm:$0xf]
      %v391 = vld [vmem:[%s379 + $0x2c] sm:$0xf]
      %v392 = vld [vmem:[%s379 + $0x30] sm:$0xf]
      %v393 = vld [vmem:[%s379 + $0x34] sm:$0xf]
      %v394 = vld [vmem:[%s379 + $0x38] sm:$0xf]
      %v395 = vld [vmem:[%s379 + $0x3c] sm:$0xf]
      %v397 = vshrl.u32 %v283, 16
      %v399 = vshll.u32 %v283, 16
      %v401 = vrot.slane %v399, 1
      %v402 = vor.u32 %v397, %v401
      %v420 = vunpack.c.l.b16 %v380
      %v421 = vunpack.c.l.b16 %v381
      %v422 = vunpack.c.l.b16 %v382
      %v423 = vunpack.c.l.b16 %v383
      %v424 = vunpack.c.l.b16 %v384
      %v425 = vunpack.c.l.b16 %v385
      %v426 = vunpack.c.l.b16 %v386
      %v427 = vunpack.c.l.b16 %v387
      %v428 = vunpack.c.l.b16 %v388
      %v429 = vunpack.c.l.b16 %v389
      %v430 = vunpack.c.l.b16 %v390
      %v431 = vunpack.c.l.b16 %v391
      %v432 = vunpack.c.l.b16 %v392
      %v433 = vunpack.c.l.b16 %v393
      %v434 = vunpack.c.l.b16 %v394
      %v435 = vunpack.c.l.b16 %v395
      %v436 = vpack.c.b16 %v421, %v420
      %v437 = vpack.c.b16 %v423, %v422
      %v438 = vpack.c.b16 %v425, %v424
      %v439 = vpack.c.b16 %v427, %v426
      %v440 = vpack.c.b16 %v429, %v428
      %v441 = vpack.c.b16 %v431, %v430
      %v442 = vpack.c.b16 %v433, %v432
      %v443 = vpack.c.b16 %v435, %v434
      %452 = vmatprep.subr.bf16.mxu0 0
      %453 = vmatpush1.bf16.msra.mxu0 %v443
      %454 = vmatprep.subr.bf16.mxu0 0
      %455 = vmatpush1.bf16.msra.mxu0 %v442
      %456 = vmatprep.subr.bf16.mxu0 0
      %457 = vmatpush1.bf16.msra.mxu0 %v441
      %458 = vmatprep.subr.bf16.mxu0 0
      %459 = vmatpush1.bf16.msra.mxu0 %v440
      %460 = vmatprep.subr.bf16.mxu0 0
      %461 = vmatpush1.bf16.msra.mxu0 %v439
      %462 = vmatprep.subr.bf16.mxu0 0
      %463 = vmatpush1.bf16.msra.mxu0 %v438
      %464 = vmatprep.subr.bf16.mxu0 0
      %465 = vmatpush1.bf16.msra.mxu0 %v437
      %466 = vmatprep.subr.bf16.mxu0 0
      %467 = vmatpush1.bf16.msra.mxu0 %v436
      %468 = vmatprep.subr.bf16.mxu0 0
      %469 = vmatpush2.bf16.msra.mxu0 0
      %470 = vmatprep.subr.bf16.mxu0 0
      %471 = vmatpush2.bf16.msra.mxu0 0
      %472 = vmatprep.subr.bf16.mxu0 0
      %473 = vmatpush2.bf16.msra.mxu0 0
      %474 = vmatprep.subr.bf16.mxu0 0
      %475 = vmatpush2.bf16.msra.mxu0 0
      %476 = vmatprep.subr.bf16.mxu0 0
      %477 = vmatpush2.bf16.msra.mxu0 0
      %478 = vmatprep.subr.bf16.mxu0 0
      %479 = vmatpush2.bf16.msra.mxu0 0
      %480 = vmatprep.subr.bf16.mxu0 0
      %481 = vmatpush2.bf16.msra.mxu0 0
      %482 = vmatprep.subr.bf16.mxu0 0
      %483 = vmatpush2.bf16.msra.mxu0 0
      %484 = vmatprep.mubr.bf16.mxu0 0
      %485 = vmatmul.mubr.bf16.gmra.mxu0 %v402
      %v486 = vpop.f32.mrf.mxu0
      %v487 = vadd.f32 0.0, %v486
      %v488 = vpop.f32.mrf.mxu0
      %v489 = vpop.f32.mrf.mxu0
      %v490 = vadd.f32 0.0, %v489
      %v491 = vpop.f32.mrf.mxu0
      %492 = vdwg.mxu0
      %v493 = vadd.f32 %v374, %v487
      %v494 = vadd.f32 %v375, %v490
      %s495 = sadd.s32 %s259, 2
      %s496 = smul.u32 %s495, 16
      %s497 = smul.addr %s496, 4
      %s498 = scalar_lea.vmem %s1, %s497
      %v499 = vld [vmem:[%s498] sm:$0xf]
      %v500 = vld [vmem:[%s498 + $0x4] sm:$0xf]
      %v501 = vld [vmem:[%s498 + $0x8] sm:$0xf]
      %v502 = vld [vmem:[%s498 + $0xc] sm:$0xf]
      %v503 = vld [vmem:[%s498 + $0x10] sm:$0xf]
      %v504 = vld [vmem:[%s498 + $0x14] sm:$0xf]
      %v505 = vld [vmem:[%s498 + $0x18] sm:$0xf]
      %v506 = vld [vmem:[%s498 + $0x1c] sm:$0xf]
      %v507 = vld [vmem:[%s498 + $0x20] sm:$0xf]
      %v508 = vld [vmem:[%s498 + $0x24] sm:$0xf]
      %v509 = vld [vmem:[%s498 + $0x28] sm:$0xf]
      %v510 = vld [vmem:[%s498 + $0x2c] sm:$0xf]
      %v511 = vld [vmem:[%s498 + $0x30] sm:$0xf]
      %v512 = vld [vmem:[%s498 + $0x34] sm:$0xf]
      %v513 = vld [vmem:[%s498 + $0x38] sm:$0xf]
      %v514 = vld [vmem:[%s498 + $0x3c] sm:$0xf]
      %v515 = vrot.slane %v283, 1
      %v533 = vunpack.c.l.b16 %v499
      %v534 = vunpack.c.l.b16 %v500
      %v535 = vunpack.c.l.b16 %v501
      %v536 = vunpack.c.l.b16 %v502
      %v537 = vunpack.c.l.b16 %v503
      %v538 = vunpack.c.l.b16 %v504
      %v539 = vunpack.c.l.b16 %v505
      %v540 = vunpack.c.l.b16 %v506
      %v541 = vunpack.c.l.b16 %v507
      %v542 = vunpack.c.l.b16 %v508
      %v543 = vunpack.c.l.b16 %v509
      %v544 = vunpack.c.l.b16 %v510
      %v545 = vunpack.c.l.b16 %v511
      %v546 = vunpack.c.l.b16 %v512
      %v547 = vunpack.c.l.b16 %v513
      %v548 = vunpack.c.l.b16 %v514
      %v549 = vpack.c.b16 %v534, %v533
      %v550 = vpack.c.b16 %v536, %v535
      %v551 = vpack.c.b16 %v538, %v537
      %v552 = vpack.c.b16 %v540, %v539
      %v553 = vpack.c.b16 %v542, %v541
      %v554 = vpack.c.b16 %v544, %v543
      %v555 = vpack.c.b16 %v546, %v545
      %v556 = vpack.c.b16 %v548, %v547
      %565 = vmatprep.subr.bf16.mxu0 0
      %566 = vmatpush1.bf16.msra.mxu0 %v556
      %567 = vmatprep.subr.bf16.mxu0 0
      %568 = vmatpush1.bf16.msra.mxu0 %v555
      %569 = vmatprep.subr.bf16.mxu0 0
      %570 = vmatpush1.bf16.msra.mxu0 %v554
      %571 = vmatprep.subr.bf16.mxu0 0
      %572 = vmatpush1.bf16.msra.mxu0 %v553
      %573 = vmatprep.subr.bf16.mxu0 0
      %574 = vmatpush1.bf16.msra.mxu0 %v552
      %575 = vmatprep.subr.bf16.mxu0 0
      %576 = vmatpush1.bf16.msra.mxu0 %v551
      %577 = vmatprep.subr.bf16.mxu0 0
      %578 = vmatpush1.bf16.msra.mxu0 %v550
      %579 = vmatprep.subr.bf16.mxu0 0
      %580 = vmatpush1.bf16.msra.mxu0 %v549
      %581 = vmatprep.subr.bf16.mxu0 0
      %582 = vmatpush2.bf16.msra.mxu0 0
      %583 = vmatprep.subr.bf16.mxu0 0
      %584 = vmatpush2.bf16.msra.mxu0 0
      %585 = vmatprep.subr.bf16.mxu0 0
      %586 = vmatpush2.bf16.msra.mxu0 0
      %587 = vmatprep.subr.bf16.mxu0 0
      %588 = vmatpush2.bf16.msra.mxu0 0
      %589 = vmatprep.subr.bf16.mxu0 0
      %590 = vmatpush2.bf16.msra.mxu0 0
      %591 = vmatprep.subr.bf16.mxu0 0
      %592 = vmatpush2.bf16.msra.mxu0 0
      %593 = vmatprep.subr.bf16.mxu0 0
      %594 = vmatpush2.bf16.msra.mxu0 0
      %595 = vmatprep.subr.bf16.mxu0 0
      %596 = vmatpush2.bf16.msra.mxu0 0
      %597 = vmatprep.mubr.bf16.mxu0 0
      %598 = vmatmul.mubr.bf16.gmra.mxu0 %v515
      %v599 = vpop.f32.mrf.mxu0
      %v600 = vadd.f32 0.0, %v599
      %v601 = vpop.f32.mrf.mxu0
      %v602 = vpop.f32.mrf.mxu0
      %v603 = vadd.f32 0.0, %v602
      %v604 = vpop.f32.mrf.mxu0
      %605 = vdwg.mxu0
      %v606 = vadd.f32 %v493, %v600
      %v607 = vadd.f32 %v494, %v603
      %608 = vst [vmem:[#allocation2] sm:$0xff] %v606
      %609 = vst [vmem:[#allocation2 + $0x8] sm:$0x1] %v607
      %p610 = scmp.eq.s32.totalorder %s22, 2
      // Predicated region
      $region41: #{resnet_forward.34} parent=35 // pred_check
        %p611 = pneg %p610
      $region42: #{resnet_forward.34} parent=35 // pred_check_branch
        %613 = sbr.rel (%p611) target = $region44
      $region43: #{resnet_forward.34} parent=35 // pred_region
        %v614 = vld [vmem:[#allocation2] sm:$0xff]
        %v615 = vld [vmem:[#allocation2 + $0x8] sm:$0x1]
        %v616 = vld [vmem:[%s2] sm:$0x1]
        %v618 = vlaneseq
        %v619 = vshrl.u32 %v618, 7
        %v620 = vsub.s32 0, %v619
        %v621 = vrot.slane %v616, %v620
        %v623 = vmul.f32 %v614, %v621
        %v624 = vmul.f32 %v615, %v621
        %v625 = vld [vmem:[%s3] sm:$0x1]
        %v627 = vlaneseq
        %v628 = vshrl.u32 %v627, 7
        %v629 = vsub.s32 0, %v628
        %v630 = vrot.slane %v625, %v629
        %v632 = vadd.f32 %v623, %v630
        %v633 = vadd.f32 %v624, %v630
        %v634 = vmax.f32 %v632, 0.0
        %v635 = vmax.f32 %v633, 0.0
        %v636 = vpack.c.bf16 %v635, %v634
        %v638 = vunpack.c.l.b16 %v636
        %v639 = vunpack.c.h.b16 %v636
        %v640 = vpack.c.b16 %v638, %v638
        %v641 = vpack.c.b16 %v639, %v639
        %644 = vst [vmem:[%s247] sm:$0xf] %v640
        %vm645 = vcmask 1040384
        %vm646 = vsmask.f32 256
        %vm647 = vmand %vm645, %vm646
        %v648 = vld [vmem:[%s247 + $0x4] sm:$0x1]
        %v649 = vsel %vm647, %v641, %v648
        %650 = vst [vmem:[%s247 + $0x4] sm:$0x1] %v649
      $region44: #{resnet_forward.34} parent=35 // pred_fallthru
        _
      %p651 = scmp.lt.s32.totalorder %s20, 1
      %s652 = scalar_select %p651, %s20, 1
      %p653 = scmp.lt.s32.totalorder %s21, 3
      %s654 = scalar_select %p653, %s21, 3
      %s655 = smul.addr %s654, 2
      %s656 = smul.addr %s652, 8
      %s657 = sadd.s32 %s655, %s656
      %s658 = smul.addr %s657, 4
      %s659 = scalar_lea.vmem %s4, %s658
      // Predicated region
      $region45: #{resnet_forward.34} parent=35 // pred_check
        %p660 = pneg %p147
      $region46: #{resnet_forward.34} parent=35 // pred_check_branch
        %662 = sbr.rel (%p660) target = $region48
      $region47: #{resnet_forward.34} parent=35 // pred_region
        _
      $region48: #{resnet_forward.34} parent=35 // pred_fallthru
        _
    $region36: #{resnet_forward.34} parent=5 // pred_fallthru
      _
    %p663 = scmp.le.s32.totalorder 2, %s10
    // Predicated region
    $region49: #{resnet_forward.34} parent=5 // pred_check
      %p664 = pneg %p663
    $region50: #{resnet_forward.34} parent=5 // pred_check_branch
      %666 = sbr.rel (%p664) target = $region52
    $region51: #{resnet_forward.34} parent=5 // pred_region
      %s667 = ssub.s32 %s10, 2
      // Predicated region
      $region53: #{resnet_forward.34} parent=51 // pred_check
        %p668 = pneg %p153
      $region54: #{resnet_forward.34} parent=51 // pred_check_branch
        %670 = sbr.rel (%p668) target = $region56
      $region55: #{resnet_forward.34} parent=51 // pred_region
        %p671 = scmp.lt.s32.totalorder %s23, 1
        %s672 = scalar_select %p671, %s23, 1
        %p673 = scmp.lt.s32.totalorder %s24, 3
        %s674 = scalar_select %p673, %s24, 3
        %s675 = smul.addr %s674, 2
        %s676 = smul.addr %s672, 8
        %s677 = sadd.s32 %s675, %s676
        %s678 = smul.addr %s677, 4
        %s679 = scalar_lea.vmem %s4, %s678
      $region56: #{resnet_forward.34} parent=51 // pred_fallthru
        _
    $region52: #{resnet_forward.34} parent=5 // pred_fallthru
      _
  $region6: #{resnet_forward.34} parent=0 // loop_footer
    %s14 = sadd.s32 1, %s10
  $region7: #{resnet_forward.34} parent=0 // loop_footer_branch
    %9 = sbr.rel target = $region3
  $region8: #{resnet_forward.34} parent=0 // loop_exit
    _

// kernel: resnet_forward.35
$region0: #{resnet_forward.35}
  #allocation0 [shape = 'u32[]', space=smem, size = 0x4, offset = 0x4, fixed_abs, tag = 'smem constant byte address 0x4 - core index']
  #allocation1 [shape = 'u32[144,128]{1,0:T(1,128)}', space=vmem, size = 0x12000, scoped, tag = 'internal scratch']
  #allocation2 [shape = 'f32[9,128]{1,0:T(8,128)}', space=vmem, size = 0x2000, scoped, tag = 'scratch operand']
  %s0 = inlined_call_operand.vmem [shape: bf16[2,4,9,128], index: 0, kind: input, shape index: {}]
  %s1 = inlined_call_operand.vmem [shape: bf16[1,128,128], index: 1, kind: input, shape index: {}]
  %s2 = inlined_call_operand.vmem [shape: f32[1,128], index: 2, kind: input, shape index: {}]
  %s3 = inlined_call_operand.vmem [shape: f32[1,128], index: 3, kind: input, shape index: {}]
  %s4 = inlined_call_operand.vmem [shape: bf16[2,4,9,128], index: 4, kind: output, shape index: {}]
  %s5 = sld [smem:[#allocation0]]
  $region57: #{resnet_forward.35} parent=0
    _
  %s7 = ssub.s32 1, %s5
  %s8 = scalar_select 0, %s7, %s5
  loop: start=0, step=1, limit=10
  $region2: #{resnet_forward.35} parent=0 // loop_pre_header
    _
  $region3: #{resnet_forward.35} parent=0 // loop_header
    %s10 = sphi 0, %s14
    %p11 = scmp.ge.s32.totalorder %s10, 10
    %s17 = sphi 0, %s36
    %s18 = sphi 0, %s32
    %s19 = sphi 0, %s28
    %s20 = sphi 0, %s17
    %s21 = sphi 0, %s18
    %s22 = sphi 0, %s19
    %s23 = sphi 0, %s20
    %s24 = sphi 0, %s21
    %s25 = sphi 0, %s22
    %s43 = sphi 0, %s45
    %s46 = sphi 0, %s43
    %s47 = sphi 0, %s46
    %s63 = sphi 0, %s47
    %s67 = sphi 0, %s67
    %s69 = sphi 0, %s67
    %s70 = sphi 0, %s69
    %s84 = sphi 0, %s70
    %s88 = sphi 0, %s88
    %s90 = sphi 0, %s88
    %s91 = sphi 0, %s90
    %s105 = sphi 0, %s91
    %s109 = sphi 0, %s109
    %s111 = sphi 0, %s109
    %s112 = sphi 0, %s111
    %s126 = sphi 0, %s112
    %s134 = sphi 0, %s136
    %s137 = sphi 0, %s134
    %s138 = sphi 0, %s137
    %s154 = sphi 0, %s138
  $region4: #{resnet_forward.35} parent=0 // loop_header_branch
    %13 = sbr.rel (%p11) target = $region8
  $region5: #{resnet_forward.35} parent=0 // loop_body
    %s15 = ssub.s32 %s10, 1
    %s16 = ssub.s32 %s10, 2
    %s26 = sadd.s32 1, %s19
    %p27 = scmp.ge.s32.totalorder %s26, 1
    %s28 = scalar_select %p27, 0, %s26
    %s29 = sadd.s32 1, %s18
    %s30 = scalar_select %p27, %s29, %s18
    %p31 = scmp.ge.s32.totalorder %s30, 4
    %s32 = scalar_select %p31, 0, %s30
    %s33 = sadd.s32 1, %s17
    %s34 = scalar_select %p31, %s33, %s17
    %p35 = scmp.ge.s32.totalorder %s34, 2
    %s36 = scalar_select %p35, 0, %s34
    %s37 = sadd.s32 %s18, %s19
    %s38 = sadd.s32 %s32, %s28
    %s39 = ssub.s32 %s17, %s36
    %s40 = ssub.s32 %s37, %s38
    %s41 = sor.u32 %s39, %s40
    %p42 = scmp.eq.s32.totalorder %s41, 0
    %s44 = sadd.s32 %s43, 1
    %s45 = scalar_select %p42, %s43, %s44
    %p48 = pneg %p42
    %p49 = scmp.eq.s32.totalorder %s10, 7
    %p50 = por %p48, %p49
    %p51 = scmp.ne.s32.totalorder %s43, %s46
    %p52 = scmp.eq.s32.totalorder %s10, 0
    %p53 = por %p51, %p52
    %p54 = scmp.ne.s32.totalorder %s43, %s46
    %p55 = scmp.eq.s32.totalorder %s15, 7
    %p56 = por %p54, %p55
    %p57 = scmp.ne.s32.totalorder %s46, %s47
    %p58 = scmp.eq.s32.totalorder %s15, 0
    %p59 = por %p57, %p58
    %p60 = scmp.ne.s32.totalorder %s46, %s47
    %p61 = scmp.eq.s32.totalorder %s16, 7
    %p62 = por %p60, %p61
    %p64 = scmp.ne.s32.totalorder %s47, %s63
    %p65 = scmp.eq.s32.totalorder %s16, 0
    %p66 = por %p64, %p65
    %s68 = sadd.s32 %s67, 1
    %p71 = scmp.eq.s32.totalorder %s10, 7
    %p72 = scmp.ne.s32.totalorder %s67, %s69
    %p73 = scmp.eq.s32.totalorder %s10, 0
    %p74 = por %p72, %p73
    %p75 = scmp.ne.s32.totalorder %s67, %s69
    %p76 = scmp.eq.s32.totalorder %s15, 7
    %p77 = por %p75, %p76
    %p78 = scmp.ne.s32.totalorder %s69, %s70
    %p79 = scmp.eq.s32.totalorder %s15, 0
    %p80 = por %p78, %p79
    %p81 = scmp.ne.s32.totalorder %s69, %s70
    %p82 = scmp.eq.s32.totalorder %s16, 7
    %p83 = por %p81, %p82
    %p85 = scmp.ne.s32.totalorder %s70, %s84
    %p86 = scmp.eq.s32.totalorder %s16, 0
    %p87 = por %p85, %p86
    %s89 = sadd.s32 %s88, 1
    %p92 = scmp.eq.s32.totalorder %s10, 7
    %p93 = scmp.ne.s32.totalorder %s88, %s90
    %p94 = scmp.eq.s32.totalorder %s10, 0
    %p95 = por %p93, %p94
    %p96 = scmp.ne.s32.totalorder %s88, %s90
    %p97 = scmp.eq.s32.totalorder %s15, 7
    %p98 = por %p96, %p97
    %p99 = scmp.ne.s32.totalorder %s90, %s91
    %p100 = scmp.eq.s32.totalorder %s15, 0
    %p101 = por %p99, %p100
    %p102 = scmp.ne.s32.totalorder %s90, %s91
    %p103 = scmp.eq.s32.totalorder %s16, 7
    %p104 = por %p102, %p103
    %p106 = scmp.ne.s32.totalorder %s91, %s105
    %p107 = scmp.eq.s32.totalorder %s16, 0
    %p108 = por %p106, %p107
    %s110 = sadd.s32 %s109, 1
    %p113 = scmp.eq.s32.totalorder %s10, 7
    %p114 = scmp.ne.s32.totalorder %s109, %s111
    %p115 = scmp.eq.s32.totalorder %s10, 0
    %p116 = por %p114, %p115
    %p117 = scmp.ne.s32.totalorder %s109, %s111
    %p118 = scmp.eq.s32.totalorder %s15, 7
    %p119 = por %p117, %p118
    %p120 = scmp.ne.s32.totalorder %s111, %s112
    %p121 = scmp.eq.s32.totalorder %s15, 0
    %p122 = por %p120, %p121
    %p123 = scmp.ne.s32.totalorder %s111, %s112
    %p124 = scmp.eq.s32.totalorder %s16, 7
    %p125 = por %p123, %p124
    %p127 = scmp.ne.s32.totalorder %s112, %s126
    %p128 = scmp.eq.s32.totalorder %s16, 0
    %p129 = por %p127, %p128
    %s130 = ssub.s32 %s17, %s36
    %s131 = ssub.s32 %s18, %s32
    %s132 = sor.u32 %s130, %s131
    %p133 = scmp.eq.s32.totalorder %s132, 0
    %s135 = sadd.s32 %s134, 1
    %s136 = scalar_select %p133, %s134, %s135
    %p139 = pneg %p133
    %p140 = scmp.eq.s32.totalorder %s10, 7
    %p141 = por %p139, %p140
    %p142 = scmp.ne.s32.totalorder %s134, %s137
    %p143 = scmp.eq.s32.totalorder %s10, 0
    %p144 = por %p142, %p143
    %p145 = scmp.ne.s32.totalorder %s134, %s137
    %p146 = scmp.eq.s32.totalorder %s15, 7
    %p147 = por %p145, %p146
    %p148 = scmp.ne.s32.totalorder %s137, %s138
    %p149 = scmp.eq.s32.totalorder %s15, 0
    %p150 = por %p148, %p149
    %p151 = scmp.ne.s32.totalorder %s137, %s138
    %p152 = scmp.eq.s32.totalorder %s16, 7
    %p153 = por %p151, %p152
    %p155 = scmp.ne.s32.totalorder %s138, %s154
    %p156 = scmp.eq.s32.totalorder %s16, 0
    %p157 = por %p155, %p156
    %p158 = scmp.le.s32.totalorder 1, %s10
    %p159 = scmp.lt.s32.totalorder %s10, 9
    %p160 = pnand %p158, %p159
    %p161 = pneg %p160
    // Predicated region
    $region9: #{resnet_forward.35} parent=5 // pred_check
      _
    $region10: #{resnet_forward.35} parent=5 // pred_check_branch
      %163 = sbr.rel (%p160) target = $region12
    $region11: #{resnet_forward.35} parent=5 // pred_region
      %s164 = ssub.s32 %s10, 1
      // Predicated region
      $region13: #{resnet_forward.35} parent=11 // pred_check
        %p165 = pneg %p80
      $region14: #{resnet_forward.35} parent=11 // pred_check_branch
        %167 = sbr.rel (%p165) target = $region16
      $region15: #{resnet_forward.35} parent=11 // pred_region
        _
      $region16: #{resnet_forward.35} parent=11 // pred_fallthru
        _
      // Predicated region
      $region17: #{resnet_forward.35} parent=11 // pred_check
        %p168 = pneg %p101
      $region18: #{resnet_forward.35} parent=11 // pred_check_branch
        %170 = sbr.rel (%p168) target = $region20
      $region19: #{resnet_forward.35} parent=11 // pred_region
        _
      $region20: #{resnet_forward.35} parent=11 // pred_fallthru
        _
      // Predicated region
      $region21: #{resnet_forward.35} parent=11 // pred_check
        %p171 = pneg %p122
      $region22: #{resnet_forward.35} parent=11 // pred_check_branch
        %173 = sbr.rel (%p171) target = $region24
      $region23: #{resnet_forward.35} parent=11 // pred_region
        _
      $region24: #{resnet_forward.35} parent=11 // pred_fallthru
        _
    $region12: #{resnet_forward.35} parent=5 // pred_fallthru
      _
    %p174 = scmp.lt.s32.totalorder %s10, 8
    // Predicated region
    $region25: #{resnet_forward.35} parent=5 // pred_check
      %p175 = pneg %p174
    $region26: #{resnet_forward.35} parent=5 // pred_check_branch
      %177 = sbr.rel (%p175) target = $region28
    $region27: #{resnet_forward.35} parent=5 // pred_region
      // Predicated region
      $region29: #{resnet_forward.35} parent=27 // pred_check
        %p178 = pneg %p53
      $region30: #{resnet_forward.35} parent=27 // pred_check_branch
        %180 = sbr.rel (%p178) target = $region32
      $region31: #{resnet_forward.35} parent=27 // pred_region
        %s181 = sadd.s32 %s18, %s19
        %p182 = scmp.lt.s32.totalorder %s17, 1
        %s183 = scalar_select %p182, %s17, 1
        %p184 = scmp.lt.s32.totalorder %s181, 3
        %s185 = scalar_select %p184, %s181, 3
        %s186 = smul.addr %s185, 2
        %s187 = smul.addr %s183, 8
        %s188 = sadd.s32 %s186, %s187
        %s189 = smul.addr %s188, 4
        %s190 = scalar_lea.vmem %s0, %s189
        %s191 = sadd.s32 %s18, %s19
      $region32: #{resnet_forward.35} parent=27 // pred_fallthru
        _
    $region28: #{resnet_forward.35} parent=5 // pred_fallthru
      _
    %p192 = scmp.le.s32.totalorder 1, %s10
    %p193 = scmp.lt.s32.totalorder %s10, 9
    %p194 = pnand %p192, %p193
    %p195 = pneg %p194
    // Predicated region
    $region33: #{resnet_forward.35} parent=5 // pred_check
      _
    $region34: #{resnet_forward.35} parent=5 // pred_check_branch
      %197 = sbr.rel (%p194) target = $region36
    $region35: #{resnet_forward.35} parent=5 // pred_region
      %s198 = ssub.s32 %s10, 1
      %s199 = sadd.s32 %s21, %s22
      %p200 = scmp.lt.s32.totalorder %s20, 1
      %s201 = scalar_select %p200, %s20, 1
      %p202 = scmp.lt.s32.totalorder %s199, 3
      %s203 = scalar_select %p202, %s199, 3
      %s204 = smul.addr %s203, 2
      %s205 = smul.addr %s201, 8
      %s206 = sadd.s32 %s204, %s205
      %s207 = smul.addr %s206, 4
      %s208 = scalar_lea.vmem %s0, %s207
      %p209 = pneg %p59
      %p210 = pneg %p56
      %p211 = pneg %p80
      %p212 = pneg %p77
      %p213 = pneg %p101
      %p214 = pneg %p98
      %p215 = pneg %p122
      %p216 = pneg %p119
      %p217 = pneg %p150
      %p218 = pneg %p147
      %p219 = scmp.lt.s32.totalorder %s20, 1
      %s220 = scalar_select %p219, %s20, 1
      %p221 = scmp.lt.s32.totalorder %s21, 3
      %s222 = scalar_select %p221, %s21, 3
      %s223 = smul.addr %s222, 2
      %s224 = smul.addr %s220, 8
      %s225 = sadd.s32 %s223, %s224
      %s226 = smul.addr %s225, 4
      %s227 = scalar_lea.vmem %s4, %s226
      %s228 = sadd.s32 %s21, %s22
      %p229 = scmp.lt.s32.totalorder %s20, 1
      %s230 = scalar_select %p229, %s20, 1
      %p231 = scmp.lt.s32.totalorder %s228, 3
      %s232 = scalar_select %p231, %s228, 3
      %s233 = smul.addr %s232, 2
      %s234 = smul.addr %s230, 8
      %s235 = sadd.s32 %s233, %s234
      %s236 = smul.addr %s235, 4
      %s237 = scalar_lea.vmem %s0, %s236
      %s238 = sadd.s32 %s21, %s22
      %p239 = scmp.lt.s32.totalorder %s20, 1
      %s240 = scalar_select %p239, %s20, 1
      %p241 = scmp.lt.s32.totalorder %s21, 3
      %s242 = scalar_select %p241, %s21, 3
      %s243 = smul.addr %s242, 2
      %s244 = smul.addr %s240, 8
      %s245 = sadd.s32 %s243, %s244
      %s246 = smul.addr %s245, 4
      %s247 = scalar_lea.vmem %s4, %s246
      %p249 = scmp.eq.s32.totalorder %s22, 0
      // Predicated region
      $region37: #{resnet_forward.35} parent=35 // pred_check
        %p250 = pneg %p249
      $region38: #{resnet_forward.35} parent=35 // pred_check_branch
        %252 = sbr.rel (%p250) target = $region40
      $region39: #{resnet_forward.35} parent=35 // pred_region
        %253 = vst [vmem:[#allocation2] sm:$0xff] 0.0
        %254 = vst [vmem:[#allocation2 + $0x8] sm:$0x1] 0.0
      $region40: #{resnet_forward.35} parent=35 // pred_fallthru
        _
      %v255 = vld [vmem:[%s237] sm:$0xf]
      %v256 = vld [vmem:[%s237 + $0x4] sm:$0x1]
      %v257 = vld [vmem:[#allocation2] sm:$0xff]
      %v258 = vld [vmem:[#allocation2 + $0x8] sm:$0x1]
      %s259 = smul.u32 %s22, 16
      %s260 = smul.addr %s259, 4
      %s261 = scalar_lea.vmem %s1, %s260
      %v262 = vld [vmem:[%s261] sm:$0xf]
      %v263 = vld [vmem:[%s261 + $0x4] sm:$0xf]
      %v264 = vld [vmem:[%s261 + $0x8] sm:$0xf]
      %v265 = vld [vmem:[%s261 + $0xc] sm:$0xf]
      %v266 = vld [vmem:[%s261 + $0x10] sm:$0xf]
      %v267 = vld [vmem:[%s261 + $0x14] sm:$0xf]
      %v268 = vld [vmem:[%s261 + $0x18] sm:$0xf]
      %v269 = vld [vmem:[%s261 + $0x1c] sm:$0xf]
      %v270 = vld [vmem:[%s261 + $0x20] sm:$0xf]
      %v271 = vld [vmem:[%s261 + $0x24] sm:$0xf]
      %v272 = vld [vmem:[%s261 + $0x28] sm:$0xf]
      %v273 = vld [vmem:[%s261 + $0x2c] sm:$0xf]
      %v274 = vld [vmem:[%s261 + $0x30] sm:$0xf]
      %v275 = vld [vmem:[%s261 + $0x34] sm:$0xf]
      %v276 = vld [vmem:[%s261 + $0x38] sm:$0xf]
      %v277 = vld [vmem:[%s261 + $0x3c] sm:$0xf]
      %v280 = vunpack.c.l.b16 %v255
      %v281 = vunpack.c.l.b16 %v256
      %v282 = vpack.c.b16 %v281, %v280
      %v300 = vunpack.c.l.b16 %v262
      %v301 = vunpack.c.l.b16 %v263
      %v302 = vunpack.c.l.b16 %v264
      %v303 = vunpack.c.l.b16 %v265
      %v304 = vunpack.c.l.b16 %v266
      %v305 = vunpack.c.l.b16 %v267
      %v306 = vunpack.c.l.b16 %v268
      %v307 = vunpack.c.l.b16 %v269
      %v308 = vunpack.c.l.b16 %v270
      %v309 = vunpack.c.l.b16 %v271
      %v310 = vunpack.c.l.b16 %v272
      %v311 = vunpack.c.l.b16 %v273
      %v312 = vunpack.c.l.b16 %v274
      %v313 = vunpack.c.l.b16 %v275
      %v314 = vunpack.c.l.b16 %v276
      %v315 = vunpack.c.l.b16 %v277
      %v316 = vpack.c.b16 %v301, %v300
      %v317 = vpack.c.b16 %v303, %v302
      %v318 = vpack.c.b16 %v305, %v304
      %v319 = vpack.c.b16 %v307, %v306
      %v320 = vpack.c.b16 %v309, %v308
      %v321 = vpack.c.b16 %v311, %v310
      %v322 = vpack.c.b16 %v313, %v312
      %v323 = vpack.c.b16 %v315, %v314
      %332 = vmatprep.subr.bf16.mxu0 0
      %333 = vmatpush1.bf16.msra.mxu0 %v323
      %334 = vmatprep.subr.bf16.mxu0 0
      %335 = vmatpush1.bf16.msra.mxu0 %v322
      %336 = vmatprep.subr.bf16.mxu0 0
      %337 = vmatpush1.bf16.msra.mxu0 %v321
      %338 = vmatprep.subr.bf16.mxu0 0
      %339 = vmatpush1.bf16.msra.mxu0 %v320
      %340 = vmatprep.subr.bf16.mxu0 0
      %341 = vmatpush1.bf16.msra.mxu0 %v319
      %342 = vmatprep.subr.bf16.mxu0 0
      %343 = vmatpush1.bf16.msra.mxu0 %v318
      %344 = vmatprep.subr.bf16.mxu0 0
      %345 = vmatpush1.bf16.msra.mxu0 %v317
      %346 = vmatprep.subr.bf16.mxu0 0
      %347 = vmatpush1.bf16.msra.mxu0 %v316
      %348 = vmatprep.subr.bf16.mxu0 0
      %349 = vmatpush2.bf16.msra.mxu0 0
      %350 = vmatprep.subr.bf16.mxu0 0
      %351 = vmatpush2.bf16.msra.mxu0 0
      %352 = vmatprep.subr.bf16.mxu0 0
      %353 = vmatpush2.bf16.msra.mxu0 0
      %354 = vmatprep.subr.bf16.mxu0 0
      %355 = vmatpush2.bf16.msra.mxu0 0
      %356 = vmatprep.subr.bf16.mxu0 0
      %357 = vmatpush2.bf16.msra.mxu0 0
      %358 = vmatprep.subr.bf16.mxu0 0
      %359 = vmatpush2.bf16.msra.mxu0 0
      %360 = vmatprep.subr.bf16.mxu0 0
      %361 = vmatpush2.bf16.msra.mxu0 0
      %362 = vmatprep.subr.bf16.mxu0 0
      %363 = vmatpush2.bf16.msra.mxu0 0
      %364 = vmatprep.mubr.bf16.mxu0 0
      %365 = vmatmul.mubr.bf16.gmra.mxu0 %v282
      %v366 = vpop.f32.mrf.mxu0
      %v367 = vadd.f32 0.0, %v366
      %v368 = vpop.f32.mrf.mxu0
      %v369 = vpop.f32.mrf.mxu0
      %v370 = vadd.f32 0.0, %v369
      %v371 = vpop.f32.mrf.mxu0
      %372 = vdwg.mxu0
      %v373 = vadd.f32 %v257, %v367
      %v374 = vadd.f32 %v258, %v370
      %375 = vst [vmem:[#allocation2] sm:$0xff] %v373
      %376 = vst [vmem:[#allocation2 + $0x8] sm:$0x1] %v374
      // Predicated region
      $region41: #{resnet_forward.35} parent=35 // pred_check
        %p377 = pneg %p249
      $region42: #{resnet_forward.35} parent=35 // pred_check_branch
        %379 = sbr.rel (%p377) target = $region44
      $region43: #{resnet_forward.35} parent=35 // pred_region
        %v380 = vld [vmem:[#allocation2] sm:$0xff]
        %v381 = vld [vmem:[#allocation2 + $0x8] sm:$0x1]
        %v382 = vld [vmem:[%s2] sm:$0x1]
        %v384 = vlaneseq
        %v385 = vshrl.u32 %v384, 7
        %v386 = vsub.s32 0, %v385
        %v387 = vrot.slane %v382, %v386
        %v389 = vmul.f32 %v380, %v387
        %v390 = vmul.f32 %v381, %v387
        %v391 = vld [vmem:[%s3] sm:$0x1]
        %v393 = vlaneseq
        %v394 = vshrl.u32 %v393, 7
        %v395 = vsub.s32 0, %v394
        %v396 = vrot.slane %v391, %v395
        %v398 = vadd.f32 %v389, %v396
        %v399 = vadd.f32 %v390, %v396
        %v400 = vpack.c.bf16 %v399, %v398
        %v402 = vunpack.c.l.b16 %v400
        %v403 = vunpack.c.h.b16 %v400
        %v404 = vpack.c.b16 %v402, %v402
        %v405 = vpack.c.b16 %v403, %v403
        %408 = vst [vmem:[%s247] sm:$0xf] %v404
        %vm409 = vcmask 1040384
        %vm410 = vsmask.f32 256
        %vm411 = vmand %vm409, %vm410
        %v412 = vld [vmem:[%s247 + $0x4] sm:$0x1]
        %v413 = vsel %vm411, %v405, %v412
        %414 = vst [vmem:[%s247 + $0x4] sm:$0x1] %v413
      $region44: #{resnet_forward.35} parent=35 // pred_fallthru
        _
      %p415 = scmp.lt.s32.totalorder %s20, 1
      %s416 = scalar_select %p415, %s20, 1
      %p417 = scmp.lt.s32.totalorder %s21, 3
      %s418 = scalar_select %p417, %s21, 3
      %s419 = smul.addr %s418, 2
      %s420 = smul.addr %s416, 8
      %s421 = sadd.s32 %s419, %s420
      %s422 = smul.addr %s421, 4
      %s423 = scalar_lea.vmem %s4, %s422
      // Predicated region
      $region45: #{resnet_forward.35} parent=35 // pred_check
        %p424 = pneg %p147
      $region46: #{resnet_forward.35} parent=35 // pred_check_branch
        %426 = sbr.rel (%p424) target = $region48
      $region47: #{resnet_forward.35} parent=35 // pred_region
        _
      $region48: #{resnet_forward.35} parent=35 // pred_fallthru
        _
    $region36: #{resnet_forward.35} parent=5 // pred_fallthru
      _
    %p427 = scmp.le.s32.totalorder 2, %s10
    // Predicated region
    $region49: #{resnet_forward.35} parent=5 // pred_check
      %p428 = pneg %p427
    $region50: #{resnet_forward.35} parent=5 // pred_check_branch
      %430 = sbr.rel (%p428) target = $region52
    $region51: #{resnet_forward.35} parent=5 // pred_region
      %s431 = ssub.s32 %s10, 2
      // Predicated region
      $region53: #{resnet_forward.35} parent=51 // pred_check
        %p432 = pneg %p153
      $region54: #{resnet_forward.35} parent=51 // pred_check_branch
        %434 = sbr.rel (%p432) target = $region56
      $region55: #{resnet_forward.35} parent=51 // pred_region
        %p435 = scmp.lt.s32.totalorder %s23, 1
        %s436 = scalar_select %p435, %s23, 1
        %p437 = scmp.lt.s32.totalorder %s24, 3
        %s438 = scalar_select %p437, %s24, 3
        %s439 = smul.addr %s438, 2
        %s440 = smul.addr %s436, 8
        %s441 = sadd.s32 %s439, %s440
        %s442 = smul.addr %s441, 4
        %s443 = scalar_lea.vmem %s4, %s442
      $region56: #{resnet_forward.35} parent=51 // pred_fallthru
        _
    $region52: #{resnet_forward.35} parent=5 // pred_fallthru
      _
  $region6: #{resnet_forward.35} parent=0 // loop_footer
    %s14 = sadd.s32 1, %s10
  $region7: #{resnet_forward.35} parent=0 // loop_footer_branch
    %9 = sbr.rel target = $region3
  $region8: #{resnet_forward.35} parent=0 // loop_exit
    _

// kernel: resnet_forward.36
$region0: #{resnet_forward.36}
  #allocation0 [shape = 'u32[]', space=smem, size = 0x4, offset = 0x4, fixed_abs, tag = 'smem constant byte address 0x4 - core index']
  #allocation1 [shape = 'u32[144,128]{1,0:T(1,128)}', space=vmem, size = 0x12000, scoped, tag = 'internal scratch']
  #allocation2 [shape = 'f32[9,128]{1,0:T(8,128)}', space=vmem, size = 0x2000, scoped, tag = 'scratch operand']
  %s0 = inlined_call_operand.vmem [shape: bf16[2,6,11,128], index: 0, kind: input, shape index: {}]
  %s1 = inlined_call_operand.vmem [shape: bf16[9,128,128], index: 1, kind: input, shape index: {}]
  %s2 = inlined_call_operand.vmem [shape: f32[1,128], index: 2, kind: input, shape index: {}]
  %s3 = inlined_call_operand.vmem [shape: f32[1,128], index: 3, kind: input, shape index: {}]
  %s4 = inlined_call_operand.vmem [shape: bf16[2,4,9,128], index: 4, kind: input, shape index: {}]
  %s5 = inlined_call_operand.vmem [shape: bf16[2,4,9,128], index: 5, kind: output, shape index: {}]
  %s6 = sld [smem:[#allocation0]]
  $region61: #{resnet_forward.36} parent=0
    _
  %s8 = ssub.s32 1, %s6
  %s9 = scalar_select 0, %s8, %s6
  loop: start=0, step=1, limit=26
  $region2: #{resnet_forward.36} parent=0 // loop_pre_header
    _
  $region3: #{resnet_forward.36} parent=0 // loop_header
    %s11 = sphi 0, %s15
    %p12 = scmp.ge.s32.totalorder %s11, 26
    %s18 = sphi 0, %s37
    %s19 = sphi 0, %s33
    %s20 = sphi 0, %s29
    %s21 = sphi 0, %s18
    %s22 = sphi 0, %s19
    %s23 = sphi 0, %s20
    %s24 = sphi 0, %s21
    %s25 = sphi 0, %s22
    %s26 = sphi 0, %s23
    %s44 = sphi 0, %s46
    %s47 = sphi 0, %s44
    %s48 = sphi 0, %s47
    %s64 = sphi 0, %s48
    %s68 = sphi 0, %s68
    %s70 = sphi 0, %s68
    %s71 = sphi 0, %s70
    %s85 = sphi 0, %s71
    %s89 = sphi 0, %s89
    %s91 = sphi 0, %s89
    %s92 = sphi 0, %s91
    %s106 = sphi 0, %s92
    %s110 = sphi 0, %s110
    %s112 = sphi 0, %s110
    %s113 = sphi 0, %s112
    %s127 = sphi 0, %s113
    %s135 = sphi 0, %s137
    %s138 = sphi 0, %s135
    %s139 = sphi 0, %s138
    %s155 = sphi 0, %s139
    %s163 = sphi 0, %s165
    %s166 = sphi 0, %s163
    %s167 = sphi 0, %s166
    %s183 = sphi 0, %s167
  $region4: #{resnet_forward.36} parent=0 // loop_header_branch
    %14 = sbr.rel (%p12) target = $region8
  $region5: #{resnet_forward.36} parent=0 // loop_body
    %s16 = ssub.s32 %s11, 1
    %s17 = ssub.s32 %s11, 2
    %s27 = sadd.s32 1, %s20
    %p28 = scmp.ge.s32.totalorder %s27, 3
    %s29 = scalar_select %p28, 0, %s27
    %s30 = sadd.s32 1, %s19
    %s31 = scalar_select %p28, %s30, %s19
    %p32 = scmp.ge.s32.totalorder %s31, 4
    %s33 = scalar_select %p32, 0, %s31
    %s34 = sadd.s32 1, %s18
    %s35 = scalar_select %p32, %s34, %s18
    %p36 = scmp.ge.s32.totalorder %s35, 2
    %s37 = scalar_select %p36, 0, %s35
    %s38 = sadd.s32 %s19, %s20
    %s39 = sadd.s32 %s33, %s29
    %s40 = ssub.s32 %s18, %s37
    %s41 = ssub.s32 %s38, %s39
    %s42 = sor.u32 %s40, %s41
    %p43 = scmp.eq.s32.totalorder %s42, 0
    %s45 = sadd.s32 %s44, 1
    %s46 = scalar_select %p43, %s44, %s45
    %p49 = pneg %p43
    %p50 = scmp.eq.s32.totalorder %s11, 23
    %p51 = por %p49, %p50
    %p52 = scmp.ne.s32.totalorder %s44, %s47
    %p53 = scmp.eq.s32.totalorder %s11, 0
    %p54 = por %p52, %p53
    %p55 = scmp.ne.s32.totalorder %s44, %s47
    %p56 = scmp.eq.s32.totalorder %s16, 23
    %p57 = por %p55, %p56
    %p58 = scmp.ne.s32.totalorder %s47, %s48
    %p59 = scmp.eq.s32.totalorder %s16, 0
    %p60 = por %p58, %p59
    %p61 = scmp.ne.s32.totalorder %s47, %s48
    %p62 = scmp.eq.s32.totalorder %s17, 23
    %p63 = por %p61, %p62
    %p65 = scmp.ne.s32.totalorder %s48, %s64
    %p66 = scmp.eq.s32.totalorder %s17, 0
    %p67 = por %p65, %p66
    %s69 = sadd.s32 %s68, 1
    %p72 = scmp.eq.s32.totalorder %s11, 23
    %p73 = scmp.ne.s32.totalorder %s68, %s70
    %p74 = scmp.eq.s32.totalorder %s11, 0
    %p75 = por %p73, %p74
    %p76 = scmp.ne.s32.totalorder %s68, %s70
    %p77 = scmp.eq.s32.totalorder %s16, 23
    %p78 = por %p76, %p77
    %p79 = scmp.ne.s32.totalorder %s70, %s71
    %p80 = scmp.eq.s32.totalorder %s16, 0
    %p81 = por %p79, %p80
    %p82 = scmp.ne.s32.totalorder %s70, %s71
    %p83 = scmp.eq.s32.totalorder %s17, 23
    %p84 = por %p82, %p83
    %p86 = scmp.ne.s32.totalorder %s71, %s85
    %p87 = scmp.eq.s32.totalorder %s17, 0
    %p88 = por %p86, %p87
    %s90 = sadd.s32 %s89, 1
    %p93 = scmp.eq.s32.totalorder %s11, 23
    %p94 = scmp.ne.s32.totalorder %s89, %s91
    %p95 = scmp.eq.s32.totalorder %s11, 0
    %p96 = por %p94, %p95
    %p97 = scmp.ne.s32.totalorder %s89, %s91
    %p98 = scmp.eq.s32.totalorder %s16, 23
    %p99 = por %p97, %p98
    %p100 = scmp.ne.s32.totalorder %s91, %s92
    %p101 = scmp.eq.s32.totalorder %s16, 0
    %p102 = por %p100, %p101
    %p103 = scmp.ne.s32.totalorder %s91, %s92
    %p104 = scmp.eq.s32.totalorder %s17, 23
    %p105 = por %p103, %p104
    %p107 = scmp.ne.s32.totalorder %s92, %s106
    %p108 = scmp.eq.s32.totalorder %s17, 0
    %p109 = por %p107, %p108
    %s111 = sadd.s32 %s110, 1
    %p114 = scmp.eq.s32.totalorder %s11, 23
    %p115 = scmp.ne.s32.totalorder %s110, %s112
    %p116 = scmp.eq.s32.totalorder %s11, 0
    %p117 = por %p115, %p116
    %p118 = scmp.ne.s32.totalorder %s110, %s112
    %p119 = scmp.eq.s32.totalorder %s16, 23
    %p120 = por %p118, %p119
    %p121 = scmp.ne.s32.totalorder %s112, %s113
    %p122 = scmp.eq.s32.totalorder %s16, 0
    %p123 = por %p121, %p122
    %p124 = scmp.ne.s32.totalorder %s112, %s113
    %p125 = scmp.eq.s32.totalorder %s17, 23
    %p126 = por %p124, %p125
    %p128 = scmp.ne.s32.totalorder %s113, %s127
    %p129 = scmp.eq.s32.totalorder %s17, 0
    %p130 = por %p128, %p129
    %s131 = ssub.s32 %s18, %s37
    %s132 = ssub.s32 %s19, %s33
    %s133 = sor.u32 %s131, %s132
    %p134 = scmp.eq.s32.totalorder %s133, 0
    %s136 = sadd.s32 %s135, 1
    %s137 = scalar_select %p134, %s135, %s136
    %p140 = pneg %p134
    %p141 = scmp.eq.s32.totalorder %s11, 23
    %p142 = por %p140, %p141
    %p143 = scmp.ne.s32.totalorder %s135, %s138
    %p144 = scmp.eq.s32.totalorder %s11, 0
    %p145 = por %p143, %p144
    %p146 = scmp.ne.s32.totalorder %s135, %s138
    %p147 = scmp.eq.s32.totalorder %s16, 23
    %p148 = por %p146, %p147
    %p149 = scmp.ne.s32.totalorder %s138, %s139
    %p150 = scmp.eq.s32.totalorder %s16, 0
    %p151 = por %p149, %p150
    %p152 = scmp.ne.s32.totalorder %s138, %s139
    %p153 = scmp.eq.s32.totalorder %s17, 23
    %p154 = por %p152, %p153
    %p156 = scmp.ne.s32.totalorder %s139, %s155
    %p157 = scmp.eq.s32.totalorder %s17, 0
    %p158 = por %p156, %p157
    %s159 = ssub.s32 %s18, %s37
    %s160 = ssub.s32 %s19, %s33
    %s161 = sor.u32 %s159, %s160
    %p162 = scmp.eq.s32.totalorder %s161, 0
    %s164 = sadd.s32 %s163, 1
    %s165 = scalar_select %p162, %s163, %s164
    %p168 = pneg %p162
    %p169 = scmp.eq.s32.totalorder %s11, 23
    %p170 = por %p168, %p169
    %p171 = scmp.ne.s32.totalorder %s163, %s166
    %p172 = scmp.eq.s32.totalorder %s11, 0
    %p173 = por %p171, %p172
    %p174 = scmp.ne.s32.totalorder %s163, %s166
    %p175 = scmp.eq.s32.totalorder %s16, 23
    %p176 = por %p174, %p175
    %p177 = scmp.ne.s32.totalorder %s166, %s167
    %p178 = scmp.eq.s32.totalorder %s16, 0
    %p179 = por %p177, %p178
    %p180 = scmp.ne.s32.totalorder %s166, %s167
    %p181 = scmp.eq.s32.totalorder %s17, 23
    %p182 = por %p180, %p181
    %p184 = scmp.ne.s32.totalorder %s167, %s183
    %p185 = scmp.eq.s32.totalorder %s17, 0
    %p186 = por %p184, %p185
    %p187 = scmp.le.s32.totalorder 1, %s11
    %p188 = scmp.lt.s32.totalorder %s11, 25
    %p189 = pnand %p187, %p188
    %p190 = pneg %p189
    // Predicated region
    $region9: #{resnet_forward.36} parent=5 // pred_check
      _
    $region10: #{resnet_forward.36} parent=5 // pred_check_branch
      %192 = sbr.rel (%p189) target = $region12
    $region11: #{resnet_forward.36} parent=5 // pred_region
      %s193 = ssub.s32 %s11, 1
      // Predicated region
      $region13: #{resnet_forward.36} parent=11 // pred_check
        %p194 = pneg %p81
      $region14: #{resnet_forward.36} parent=11 // pred_check_branch
        %196 = sbr.rel (%p194) target = $region16
      $region15: #{resnet_forward.36} parent=11 // pred_region
        _
      $region16: #{resnet_forward.36} parent=11 // pred_fallthru
        _
      // Predicated region
      $region17: #{resnet_forward.36} parent=11 // pred_check
        %p197 = pneg %p102
      $region18: #{resnet_forward.36} parent=11 // pred_check_branch
        %199 = sbr.rel (%p197) target = $region20
      $region19: #{resnet_forward.36} parent=11 // pred_region
        _
      $region20: #{resnet_forward.36} parent=11 // pred_fallthru
        _
      // Predicated region
      $region21: #{resnet_forward.36} parent=11 // pred_check
        %p200 = pneg %p123
      $region22: #{resnet_forward.36} parent=11 // pred_check_branch
        %202 = sbr.rel (%p200) target = $region24
      $region23: #{resnet_forward.36} parent=11 // pred_region
        _
      $region24: #{resnet_forward.36} parent=11 // pred_fallthru
        _
    $region12: #{resnet_forward.36} parent=5 // pred_fallthru
      _
    %p203 = scmp.lt.s32.totalorder %s11, 24
    // Predicated region
    $region25: #{resnet_forward.36} parent=5 // pred_check
      %p204 = pneg %p203
    $region26: #{resnet_forward.36} parent=5 // pred_check_branch
      %206 = sbr.rel (%p204) target = $region28
    $region27: #{resnet_forward.36} parent=5 // pred_region
      // Predicated region
      $region29: #{resnet_forward.36} parent=27 // pred_check
        %p207 = pneg %p54
      $region30: #{resnet_forward.36} parent=27 // pred_check_branch
        %209 = sbr.rel (%p207) target = $region32
      $region31: #{resnet_forward.36} parent=27 // pred_region
        %s210 = sadd.s32 %s19, %s20
        %p211 = scmp.lt.s32.totalorder %s18, 1
        %s212 = scalar_select %p211, %s18, 1
        %p213 = scmp.lt.s32.totalorder %s210, 5
        %s214 = scalar_select %p213, %s210, 5
        %s215 = smul.addr %s214, 2
        %s216 = smul.addr %s212, 12
        %s217 = sadd.s32 %s215, %s216
        %s218 = smul.addr %s217, 4
        %s219 = scalar_lea.vmem %s0, %s218
        %s220 = sadd.s32 %s19, %s20
      $region32: #{resnet_forward.36} parent=27 // pred_fallthru
        _
      // Predicated region
      $region33: #{resnet_forward.36} parent=27 // pred_check
        %p221 = pneg %p145
      $region34: #{resnet_forward.36} parent=27 // pred_check_branch
        %223 = sbr.rel (%p221) target = $region36
      $region35: #{resnet_forward.36} parent=27 // pred_region
        %p224 = scmp.lt.s32.totalorder %s18, 1
        %s225 = scalar_select %p224, %s18, 1
        %p226 = scmp.lt.s32.totalorder %s19, 3
        %s227 = scalar_select %p226, %s19, 3
        %s228 = smul.addr %s227, 2
        %s229 = smul.addr %s225, 8
        %s230 = sadd.s32 %s228, %s229
        %s231 = smul.addr %s230, 4
        %s232 = scalar_lea.vmem %s4, %s231
      $region36: #{resnet_forward.36} parent=27 // pred_fallthru
        _
    $region28: #{resnet_forward.36} parent=5 // pred_fallthru
      _
    %p233 = scmp.le.s32.totalorder 1, %s11
    %p234 = scmp.lt.s32.totalorder %s11, 25
    %p235 = pnand %p233, %p234
    %p236 = pneg %p235
    // Predicated region
    $region37: #{resnet_forward.36} parent=5 // pred_check
      _
    $region38: #{resnet_forward.36} parent=5 // pred_check_branch
      %238 = sbr.rel (%p235) target = $region40
    $region39: #{resnet_forward.36} parent=5 // pred_region
      %s239 = ssub.s32 %s11, 1
      %s240 = sadd.s32 %s22, %s23
      %p241 = scmp.lt.s32.totalorder %s21, 1
      %s242 = scalar_select %p241, %s21, 1
      %p243 = scmp.lt.s32.totalorder %s240, 5
      %s244 = scalar_select %p243, %s240, 5
      %s245 = smul.addr %s244, 2
      %s246 = smul.addr %s242, 12
      %s247 = sadd.s32 %s245, %s246
      %s248 = smul.addr %s247, 4
      %s249 = scalar_lea.vmem %s0, %s248
      %p250 = pneg %p60
      %p251 = pneg %p57
      %p252 = pneg %p81
      %p253 = pneg %p78
      %p254 = pneg %p102
      %p255 = pneg %p99
      %p256 = pneg %p123
      %p257 = pneg %p120
      %p258 = scmp.lt.s32.totalorder %s21, 1
      %s259 = scalar_select %p258, %s21, 1
      %p260 = scmp.lt.s32.totalorder %s22, 3
      %s261 = scalar_select %p260, %s22, 3
      %s262 = smul.addr %s261, 2
      %s263 = smul.addr %s259, 8
      %s264 = sadd.s32 %s262, %s263
      %s265 = smul.addr %s264, 4
      %s266 = scalar_lea.vmem %s4, %s265
      %p267 = pneg %p151
      %p268 = pneg %p148
      %p269 = pneg %p179
      %p270 = pneg %p176
      %p271 = scmp.lt.s32.totalorder %s21, 1
      %s272 = scalar_select %p271, %s21, 1
      %p273 = scmp.lt.s32.totalorder %s22, 3
      %s274 = scalar_select %p273, %s22, 3
      %s275 = smul.addr %s274, 2
      %s276 = smul.addr %s272, 8
      %s277 = sadd.s32 %s275, %s276
      %s278 = smul.addr %s277, 4
      %s279 = scalar_lea.vmem %s5, %s278
      %s280 = sadd.s32 %s22, %s23
      %p281 = scmp.lt.s32.totalorder %s21, 1
      %s282 = scalar_select %p281, %s21, 1
      %p283 = scmp.lt.s32.totalorder %s280, 5
      %s284 = scalar_select %p283, %s280, 5
      %s285 = smul.addr %s284, 2
      %s286 = smul.addr %s282, 12
      %s287 = sadd.s32 %s285, %s286
      %s288 = smul.addr %s287, 4
      %s289 = scalar_lea.vmem %s0, %s288
      %s290 = sadd.s32 %s22, %s23
      %p291 = scmp.lt.s32.totalorder %s21, 1
      %s292 = scalar_select %p291, %s21, 1
      %p293 = scmp.lt.s32.totalorder %s22, 3
      %s294 = scalar_select %p293, %s22, 3
      %s295 = smul.addr %s294, 2
      %s296 = smul.addr %s292, 8
      %s297 = sadd.s32 %s295, %s296
      %s298 = smul.addr %s297, 4
      %s299 = scalar_lea.vmem %s4, %s298
      %p300 = scmp.lt.s32.totalorder %s21, 1
      %s301 = scalar_select %p300, %s21, 1
      %p302 = scmp.lt.s32.totalorder %s22, 3
      %s303 = scalar_select %p302, %s22, 3
      %s304 = smul.addr %s303, 2
      %s305 = smul.addr %s301, 8
      %s306 = sadd.s32 %s304, %s305
      %s307 = smul.addr %s306, 4
      %s308 = scalar_lea.vmem %s5, %s307
      %p310 = scmp.eq.s32.totalorder %s23, 0
      // Predicated region
      $region41: #{resnet_forward.36} parent=39 // pred_check
        %p311 = pneg %p310
      $region42: #{resnet_forward.36} parent=39 // pred_check_branch
        %313 = sbr.rel (%p311) target = $region44
      $region43: #{resnet_forward.36} parent=39 // pred_region
        %314 = vst [vmem:[#allocation2] sm:$0xff] 0.0
        %315 = vst [vmem:[#allocation2 + $0x8] sm:$0x1] 0.0
      $region44: #{resnet_forward.36} parent=39 // pred_fallthru
        _
      %v316 = vld [vmem:[%s289] sm:$0xf]
      %v317 = vld [vmem:[%s289 + $0x4] sm:$0x3]
      %v318 = vld [vmem:[#allocation2] sm:$0xff]
      %v319 = vld [vmem:[#allocation2 + $0x8] sm:$0x1]
      %s320 = smul.u32 %s23, 3
      %s321 = smul.u32 %s320, 16
      %s322 = smul.addr %s321, 4
      %s323 = scalar_lea.vmem %s1, %s322
      %v324 = vld [vmem:[%s323] sm:$0xf]
      %v325 = vld [vmem:[%s323 + $0x4] sm:$0xf]
      %v326 = vld [vmem:[%s323 + $0x8] sm:$0xf]
      %v327 = vld [vmem:[%s323 + $0xc] sm:$0xf]
      %v328 = vld [vmem:[%s323 + $0x10] sm:$0xf]
      %v329 = vld [vmem:[%s323 + $0x14] sm:$0xf]
      %v330 = vld [vmem:[%s323 + $0x18] sm:$0xf]
      %v331 = vld [vmem:[%s323 + $0x1c] sm:$0xf]
      %v332 = vld [vmem:[%s323 + $0x20] sm:$0xf]
      %v333 = vld [vmem:[%s323 + $0x24] sm:$0xf]
      %v334 = vld [vmem:[%s323 + $0x28] sm:$0xf]
      %v335 = vld [vmem:[%s323 + $0x2c] sm:$0xf]
      %v336 = vld [vmem:[%s323 + $0x30] sm:$0xf]
      %v337 = vld [vmem:[%s323 + $0x34] sm:$0xf]
      %v338 = vld [vmem:[%s323 + $0x38] sm:$0xf]
      %v339 = vld [vmem:[%s323 + $0x3c] sm:$0xf]
      %v342 = vunpack.c.l.b16 %v316
      %v343 = vunpack.c.l.b16 %v317
      %v344 = vpack.c.b16 %v343, %v342
      %v362 = vunpack.c.l.b16 %v324
      %v363 = vunpack.c.l.b16 %v325
      %v364 = vunpack.c.l.b16 %v326
      %v365 = vunpack.c.l.b16 %v327
      %v366 = vunpack.c.l.b16 %v328
      %v367 = vunpack.c.l.b16 %v329
      %v368 = vunpack.c.l.b16 %v330
      %v369 = vunpack.c.l.b16 %v331
      %v370 = vunpack.c.l.b16 %v332
      %v371 = vunpack.c.l.b16 %v333
      %v372 = vunpack.c.l.b16 %v334
      %v373 = vunpack.c.l.b16 %v335
      %v374 = vunpack.c.l.b16 %v336
      %v375 = vunpack.c.l.b16 %v337
      %v376 = vunpack.c.l.b16 %v338
      %v377 = vunpack.c.l.b16 %v339
      %v378 = vpack.c.b16 %v363, %v362
      %v379 = vpack.c.b16 %v365, %v364
      %v380 = vpack.c.b16 %v367, %v366
      %v381 = vpack.c.b16 %v369, %v368
      %v382 = vpack.c.b16 %v371, %v370
      %v383 = vpack.c.b16 %v373, %v372
      %v384 = vpack.c.b16 %v375, %v374
      %v385 = vpack.c.b16 %v377, %v376
      %394 = vmatprep.subr.bf16.mxu0 0
      %395 = vmatpush1.bf16.msra.mxu0 %v385
      %396 = vmatprep.subr.bf16.mxu0 0
      %397 = vmatpush1.bf16.msra.mxu0 %v384
      %398 = vmatprep.subr.bf16.mxu0 0
      %399 = vmatpush1.bf16.msra.mxu0 %v383
      %400 = vmatprep.subr.bf16.mxu0 0
      %401 = vmatpush1.bf16.msra.mxu0 %v382
      %402 = vmatprep.subr.bf16.mxu0 0
      %403 = vmatpush1.bf16.msra.mxu0 %v381
      %404 = vmatprep.subr.bf16.mxu0 0
      %405 = vmatpush1.bf16.msra.mxu0 %v380
      %406 = vmatprep.subr.bf16.mxu0 0
      %407 = vmatpush1.bf16.msra.mxu0 %v379
      %408 = vmatprep.subr.bf16.mxu0 0
      %409 = vmatpush1.bf16.msra.mxu0 %v378
      %410 = vmatprep.subr.bf16.mxu0 0
      %411 = vmatpush2.bf16.msra.mxu0 0
      %412 = vmatprep.subr.bf16.mxu0 0
      %413 = vmatpush2.bf16.msra.mxu0 0
      %414 = vmatprep.subr.bf16.mxu0 0
      %415 = vmatpush2.bf16.msra.mxu0 0
      %416 = vmatprep.subr.bf16.mxu0 0
      %417 = vmatpush2.bf16.msra.mxu0 0
      %418 = vmatprep.subr.bf16.mxu0 0
      %419 = vmatpush2.bf16.msra.mxu0 0
      %420 = vmatprep.subr.bf16.mxu0 0
      %421 = vmatpush2.bf16.msra.mxu0 0
      %422 = vmatprep.subr.bf16.mxu0 0
      %423 = vmatpush2.bf16.msra.mxu0 0
      %424 = vmatprep.subr.bf16.mxu0 0
      %425 = vmatpush2.bf16.msra.mxu0 0
      %426 = vmatprep.mubr.bf16.mxu0 0
      %427 = vmatmul.mubr.bf16.gmra.mxu0 %v344
      %v428 = vpop.f32.mrf.mxu0
      %v429 = vadd.f32 0.0, %v428
      %v430 = vpop.f32.mrf.mxu0
      %v431 = vpop.f32.mrf.mxu0
      %v432 = vadd.f32 0.0, %v431
      %v433 = vpop.f32.mrf.mxu0
      %434 = vdwg.mxu0
      %v435 = vadd.f32 %v318, %v429
      %v436 = vadd.f32 %v319, %v432
      %s437 = sadd.s32 %s320, 1
      %s438 = smul.u32 %s437, 16
      %s439 = smul.addr %s438, 4
      %s440 = scalar_lea.vmem %s1, %s439
      %v441 = vld [vmem:[%s440] sm:$0xf]
      %v442 = vld [vmem:[%s440 + $0x4] sm:$0xf]
      %v443 = vld [vmem:[%s440 + $0x8] sm:$0xf]
      %v444 = vld [vmem:[%s440 + $0xc] sm:$0xf]
      %v445 = vld [vmem:[%s440 + $0x10] sm:$0xf]
      %v446 = vld [vmem:[%s440 + $0x14] sm:$0xf]
      %v447 = vld [vmem:[%s440 + $0x18] sm:$0xf]
      %v448 = vld [vmem:[%s440 + $0x1c] sm:$0xf]
      %v449 = vld [vmem:[%s440 + $0x20] sm:$0xf]
      %v450 = vld [vmem:[%s440 + $0x24] sm:$0xf]
      %v451 = vld [vmem:[%s440 + $0x28] sm:$0xf]
      %v452 = vld [vmem:[%s440 + $0x2c] sm:$0xf]
      %v453 = vld [vmem:[%s440 + $0x30] sm:$0xf]
      %v454 = vld [vmem:[%s440 + $0x34] sm:$0xf]
      %v455 = vld [vmem:[%s440 + $0x38] sm:$0xf]
      %v456 = vld [vmem:[%s440 + $0x3c] sm:$0xf]
      %v458 = vshrl.u32 %v344, 16
      %v460 = vshll.u32 %v344, 16
      %v462 = vrot.slane %v460, 1
      %v463 = vor.u32 %v458, %v462
      %v481 = vunpack.c.l.b16 %v441
      %v482 = vunpack.c.l.b16 %v442
      %v483 = vunpack.c.l.b16 %v443
      %v484 = vunpack.c.l.b16 %v444
      %v485 = vunpack.c.l.b16 %v445
      %v486 = vunpack.c.l.b16 %v446
      %v487 = vunpack.c.l.b16 %v447
      %v488 = vunpack.c.l.b16 %v448
      %v489 = vunpack.c.l.b16 %v449
      %v490 = vunpack.c.l.b16 %v450
      %v491 = vunpack.c.l.b16 %v451
      %v492 = vunpack.c.l.b16 %v452
      %v493 = vunpack.c.l.b16 %v453
      %v494 = vunpack.c.l.b16 %v454
      %v495 = vunpack.c.l.b16 %v455
      %v496 = vunpack.c.l.b16 %v456
      %v497 = vpack.c.b16 %v482, %v481
      %v498 = vpack.c.b16 %v484, %v483
      %v499 = vpack.c.b16 %v486, %v485
      %v500 = vpack.c.b16 %v488, %v487
      %v501 = vpack.c.b16 %v490, %v489
      %v502 = vpack.c.b16 %v492, %v491
      %v503 = vpack.c.b16 %v494, %v493
      %v504 = vpack.c.b16 %v496, %v495
      %513 = vmatprep.subr.bf16.mxu0 0
      %514 = vmatpush1.bf16.msra.mxu0 %v504
      %515 = vmatprep.subr.bf16.mxu0 0
      %516 = vmatpush1.bf16.msra.mxu0 %v503
      %517 = vmatprep.subr.bf16.mxu0 0
      %518 = vmatpush1.bf16.msra.mxu0 %v502
      %519 = vmatprep.subr.bf16.mxu0 0
      %520 = vmatpush1.bf16.msra.mxu0 %v501
      %521 = vmatprep.subr.bf16.mxu0 0
      %522 = vmatpush1.bf16.msra.mxu0 %v500
      %523 = vmatprep.subr.bf16.mxu0 0
      %524 = vmatpush1.bf16.msra.mxu0 %v499
      %525 = vmatprep.subr.bf16.mxu0 0
      %526 = vmatpush1.bf16.msra.mxu0 %v498
      %527 = vmatprep.subr.bf16.mxu0 0
      %528 = vmatpush1.bf16.msra.mxu0 %v497
      %529 = vmatprep.subr.bf16.mxu0 0
      %530 = vmatpush2.bf16.msra.mxu0 0
      %531 = vmatprep.subr.bf16.mxu0 0
      %532 = vmatpush2.bf16.msra.mxu0 0
      %533 = vmatprep.subr.bf16.mxu0 0
      %534 = vmatpush2.bf16.msra.mxu0 0
      %535 = vmatprep.subr.bf16.mxu0 0
      %536 = vmatpush2.bf16.msra.mxu0 0
      %537 = vmatprep.subr.bf16.mxu0 0
      %538 = vmatpush2.bf16.msra.mxu0 0
      %539 = vmatprep.subr.bf16.mxu0 0
      %540 = vmatpush2.bf16.msra.mxu0 0
      %541 = vmatprep.subr.bf16.mxu0 0
      %542 = vmatpush2.bf16.msra.mxu0 0
      %543 = vmatprep.subr.bf16.mxu0 0
      %544 = vmatpush2.bf16.msra.mxu0 0
      %545 = vmatprep.mubr.bf16.mxu0 0
      %546 = vmatmul.mubr.bf16.gmra.mxu0 %v463
      %v547 = vpop.f32.mrf.mxu0
      %v548 = vadd.f32 0.0, %v547
      %v549 = vpop.f32.mrf.mxu0
      %v550 = vpop.f32.mrf.mxu0
      %v551 = vadd.f32 0.0, %v550
      %v552 = vpop.f32.mrf.mxu0
      %553 = vdwg.mxu0
      %v554 = vadd.f32 %v435, %v548
      %v555 = vadd.f32 %v436, %v551
      %s556 = sadd.s32 %s320, 2
      %s557 = smul.u32 %s556, 16
      %s558 = smul.addr %s557, 4
      %s559 = scalar_lea.vmem %s1, %s558
      %v560 = vld [vmem:[%s559] sm:$0xf]
      %v561 = vld [vmem:[%s559 + $0x4] sm:$0xf]
      %v562 = vld [vmem:[%s559 + $0x8] sm:$0xf]
      %v563 = vld [vmem:[%s559 + $0xc] sm:$0xf]
      %v564 = vld [vmem:[%s559 + $0x10] sm:$0xf]
      %v565 = vld [vmem:[%s559 + $0x14] sm:$0xf]
      %v566 = vld [vmem:[%s559 + $0x18] sm:$0xf]
      %v567 = vld [vmem:[%s559 + $0x1c] sm:$0xf]
      %v568 = vld [vmem:[%s559 + $0x20] sm:$0xf]
      %v569 = vld [vmem:[%s559 + $0x24] sm:$0xf]
      %v570 = vld [vmem:[%s559 + $0x28] sm:$0xf]
      %v571 = vld [vmem:[%s559 + $0x2c] sm:$0xf]
      %v572 = vld [vmem:[%s559 + $0x30] sm:$0xf]
      %v573 = vld [vmem:[%s559 + $0x34] sm:$0xf]
      %v574 = vld [vmem:[%s559 + $0x38] sm:$0xf]
      %v575 = vld [vmem:[%s559 + $0x3c] sm:$0xf]
      %v576 = vrot.slane %v344, 1
      %v594 = vunpack.c.l.b16 %v560
      %v595 = vunpack.c.l.b16 %v561
      %v596 = vunpack.c.l.b16 %v562
      %v597 = vunpack.c.l.b16 %v563
      %v598 = vunpack.c.l.b16 %v564
      %v599 = vunpack.c.l.b16 %v565
      %v600 = vunpack.c.l.b16 %v566
      %v601 = vunpack.c.l.b16 %v567
      %v602 = vunpack.c.l.b16 %v568
      %v603 = vunpack.c.l.b16 %v569
      %v604 = vunpack.c.l.b16 %v570
      %v605 = vunpack.c.l.b16 %v571
      %v606 = vunpack.c.l.b16 %v572
      %v607 = vunpack.c.l.b16 %v573
      %v608 = vunpack.c.l.b16 %v574
      %v609 = vunpack.c.l.b16 %v575
      %v610 = vpack.c.b16 %v595, %v594
      %v611 = vpack.c.b16 %v597, %v596
      %v612 = vpack.c.b16 %v599, %v598
      %v613 = vpack.c.b16 %v601, %v600
      %v614 = vpack.c.b16 %v603, %v602
      %v615 = vpack.c.b16 %v605, %v604
      %v616 = vpack.c.b16 %v607, %v606
      %v617 = vpack.c.b16 %v609, %v608
      %626 = vmatprep.subr.bf16.mxu0 0
      %627 = vmatpush1.bf16.msra.mxu0 %v617
      %628 = vmatprep.subr.bf16.mxu0 0
      %629 = vmatpush1.bf16.msra.mxu0 %v616
      %630 = vmatprep.subr.bf16.mxu0 0
      %631 = vmatpush1.bf16.msra.mxu0 %v615
      %632 = vmatprep.subr.bf16.mxu0 0
      %633 = vmatpush1.bf16.msra.mxu0 %v614
      %634 = vmatprep.subr.bf16.mxu0 0
      %635 = vmatpush1.bf16.msra.mxu0 %v613
      %636 = vmatprep.subr.bf16.mxu0 0
      %637 = vmatpush1.bf16.msra.mxu0 %v612
      %638 = vmatprep.subr.bf16.mxu0 0
      %639 = vmatpush1.bf16.msra.mxu0 %v611
      %640 = vmatprep.subr.bf16.mxu0 0
      %641 = vmatpush1.bf16.msra.mxu0 %v610
      %642 = vmatprep.subr.bf16.mxu0 0
      %643 = vmatpush2.bf16.msra.mxu0 0
      %644 = vmatprep.subr.bf16.mxu0 0
      %645 = vmatpush2.bf16.msra.mxu0 0
      %646 = vmatprep.subr.bf16.mxu0 0
      %647 = vmatpush2.bf16.msra.mxu0 0
      %648 = vmatprep.subr.bf16.mxu0 0
      %649 = vmatpush2.bf16.msra.mxu0 0
      %650 = vmatprep.subr.bf16.mxu0 0
      %651 = vmatpush2.bf16.msra.mxu0 0
      %652 = vmatprep.subr.bf16.mxu0 0
      %653 = vmatpush2.bf16.msra.mxu0 0
      %654 = vmatprep.subr.bf16.mxu0 0
      %655 = vmatpush2.bf16.msra.mxu0 0
      %656 = vmatprep.subr.bf16.mxu0 0
      %657 = vmatpush2.bf16.msra.mxu0 0
      %658 = vmatprep.mubr.bf16.mxu0 0
      %659 = vmatmul.mubr.bf16.gmra.mxu0 %v576
      %v660 = vpop.f32.mrf.mxu0
      %v661 = vadd.f32 0.0, %v660
      %v662 = vpop.f32.mrf.mxu0
      %v663 = vpop.f32.mrf.mxu0
      %v664 = vadd.f32 0.0, %v663
      %v665 = vpop.f32.mrf.mxu0
      %666 = vdwg.mxu0
      %v667 = vadd.f32 %v554, %v661
      %v668 = vadd.f32 %v555, %v664
      %669 = vst [vmem:[#allocation2] sm:$0xff] %v667
      %670 = vst [vmem:[#allocation2 + $0x8] sm:$0x1] %v668
      %p671 = scmp.eq.s32.totalorder %s23, 2
      // Predicated region
      $region45: #{resnet_forward.36} parent=39 // pred_check
        %p672 = pneg %p671
      $region46: #{resnet_forward.36} parent=39 // pred_check_branch
        %674 = sbr.rel (%p672) target = $region48
      $region47: #{resnet_forward.36} parent=39 // pred_region
        %v675 = vld [vmem:[#allocation2] sm:$0xff]
        %v676 = vld [vmem:[#allocation2 + $0x8] sm:$0x1]
        %v677 = vld [vmem:[%s2] sm:$0x1]
        %v679 = vlaneseq
        %v680 = vshrl.u32 %v679, 7
        %v681 = vsub.s32 0, %v680
        %v682 = vrot.slane %v677, %v681
        %v684 = vmul.f32 %v675, %v682
        %v685 = vmul.f32 %v676, %v682
        %v686 = vld [vmem:[%s3] sm:$0x1]
        %v688 = vlaneseq
        %v689 = vshrl.u32 %v688, 7
        %v690 = vsub.s32 0, %v689
        %v691 = vrot.slane %v686, %v690
        %v693 = vadd.f32 %v684, %v691
        %v694 = vadd.f32 %v685, %v691
        %v695 = vld [vmem:[%s299] sm:$0xf]
        %v696 = vld [vmem:[%s299 + $0x4] sm:$0x1]
        %v697 = vunpack.c.l.bf16 %v695
        %v698 = vunpack.c.l.bf16 %v696
        %v699 = vadd.f32 %v693, %v697
        %v700 = vadd.f32 %v694, %v698
        %v701 = vmax.f32 %v699, 0.0
        %v702 = vmax.f32 %v700, 0.0
        %v703 = vpack.c.bf16 %v702, %v701
        %v705 = vunpack.c.l.b16 %v703
        %v706 = vunpack.c.h.b16 %v703
        %v707 = vpack.c.b16 %v705, %v705
        %v708 = vpack.c.b16 %v706, %v706
        %711 = vst [vmem:[%s308] sm:$0xf] %v707
        %vm712 = vcmask 1040384
        %vm713 = vsmask.f32 256
        %vm714 = vmand %vm712, %vm713
        %v715 = vld [vmem:[%s308 + $0x4] sm:$0x1]
        %v716 = vsel %vm714, %v708, %v715
        %717 = vst [vmem:[%s308 + $0x4] sm:$0x1] %v716
      $region48: #{resnet_forward.36} parent=39 // pred_fallthru
        _
      %p718 = scmp.lt.s32.totalorder %s21, 1
      %s719 = scalar_select %p718, %s21, 1
      %p720 = scmp.lt.s32.totalorder %s22, 3
      %s721 = scalar_select %p720, %s22, 3
      %s722 = smul.addr %s721, 2
      %s723 = smul.addr %s719, 8
      %s724 = sadd.s32 %s722, %s723
      %s725 = smul.addr %s724, 4
      %s726 = scalar_lea.vmem %s5, %s725
      // Predicated region
      $region49: #{resnet_forward.36} parent=39 // pred_check
        %p727 = pneg %p176
      $region50: #{resnet_forward.36} parent=39 // pred_check_branch
        %729 = sbr.rel (%p727) target = $region52
      $region51: #{resnet_forward.36} parent=39 // pred_region
        _
      $region52: #{resnet_forward.36} parent=39 // pred_fallthru
        _
    $region40: #{resnet_forward.36} parent=5 // pred_fallthru
      _
    %p730 = scmp.le.s32.totalorder 2, %s11
    // Predicated region
    $region53: #{resnet_forward.36} parent=5 // pred_check
      %p731 = pneg %p730
    $region54: #{resnet_forward.36} parent=5 // pred_check_branch
      %733 = sbr.rel (%p731) target = $region56
    $region55: #{resnet_forward.36} parent=5 // pred_region
      %s734 = ssub.s32 %s11, 2
      // Predicated region
      $region57: #{resnet_forward.36} parent=55 // pred_check
        %p735 = pneg %p182
      $region58: #{resnet_forward.36} parent=55 // pred_check_branch
        %737 = sbr.rel (%p735) target = $region60
      $region59: #{resnet_forward.36} parent=55 // pred_region
        %p738 = scmp.lt.s32.totalorder %s24, 1
        %s739 = scalar_select %p738, %s24, 1
        %p740 = scmp.lt.s32.totalorder %s25, 3
        %s741 = scalar_select %p740, %s25, 3
        %s742 = smul.addr %s741, 2
        %s743 = smul.addr %s739, 8
        %s744 = sadd.s32 %s742, %s743
        %s745 = smul.addr %s744, 4
        %s746 = scalar_lea.vmem %s5, %s745
      $region60: #{resnet_forward.36} parent=55 // pred_fallthru
        _
    $region56: #{resnet_forward.36} parent=5 // pred_fallthru
      _
  $region6: #{resnet_forward.36} parent=0 // loop_footer
    %s15 = sadd.s32 1, %s11
  $region7: #{resnet_forward.36} parent=0 // loop_footer_branch
    %10 = sbr.rel target = $region3
  $region8: #{resnet_forward.36} parent=0 // loop_exit
    _

// kernel: resnet_forward.40
$region0: #{resnet_forward.40}
  #allocation0 [shape = 'u32[]', space=smem, size = 0x4, offset = 0x4, fixed_abs, tag = 'smem constant byte address 0x4 - core index']
  #allocation1 [shape = 'u32[144,128]{1,0:T(1,128)}', space=vmem, size = 0x12000, scoped, tag = 'internal scratch']
  #allocation2 [shape = 'f32[10,128]{1,0:T(8,128)}', space=vmem, size = 0x2000, scoped, tag = 'scratch operand']
  %s0 = inlined_call_operand.vmem [shape: bf16[2,4,11,128], index: 0, kind: input, shape index: {}]
  %s1 = inlined_call_operand.vmem [shape: bf16[4,128,128], index: 1, kind: input, shape index: {}]
  %s2 = inlined_call_operand.vmem [shape: f32[1,128], index: 2, kind: input, shape index: {}]
  %s3 = inlined_call_operand.vmem [shape: f32[1,128], index: 3, kind: input, shape index: {}]
  %s4 = inlined_call_operand.vmem [shape: bf16[2,2,10,128], index: 4, kind: output, shape index: {}]
  %s5 = sld [smem:[#allocation0]]
  $region57: #{resnet_forward.40} parent=0
    _
  %s7 = ssub.s32 1, %s5
  %s8 = scalar_select 0, %s7, %s5
  loop: start=0, step=1, limit=10
  $region2: #{resnet_forward.40} parent=0 // loop_pre_header
    _
  $region3: #{resnet_forward.40} parent=0 // loop_header
    %s10 = sphi 0, %s14
    %p11 = scmp.ge.s32.totalorder %s10, 10
    %s17 = sphi 0, %s36
    %s18 = sphi 0, %s32
    %s19 = sphi 0, %s28
    %s20 = sphi 0, %s17
    %s21 = sphi 0, %s18
    %s22 = sphi 0, %s19
    %s23 = sphi 0, %s20
    %s24 = sphi 0, %s21
    %s25 = sphi 0, %s22
    %s45 = sphi 0, %s47
    %s48 = sphi 0, %s45
    %s49 = sphi 0, %s48
    %s65 = sphi 0, %s49
    %s69 = sphi 0, %s69
    %s71 = sphi 0, %s69
    %s72 = sphi 0, %s71
    %s86 = sphi 0, %s72
    %s90 = sphi 0, %s90
    %s92 = sphi 0, %s90
    %s93 = sphi 0, %s92
    %s107 = sphi 0, %s93
    %s111 = sphi 0, %s111
    %s113 = sphi 0, %s111
    %s114 = sphi 0, %s113
    %s128 = sphi 0, %s114
    %s136 = sphi 0, %s138
    %s139 = sphi 0, %s136
    %s140 = sphi 0, %s139
    %s156 = sphi 0, %s140
  $region4: #{resnet_forward.40} parent=0 // loop_header_branch
    %13 = sbr.rel (%p11) target = $region8
  $region5: #{resnet_forward.40} parent=0 // loop_body
    %s15 = ssub.s32 %s10, 1
    %s16 = ssub.s32 %s10, 2
    %s26 = sadd.s32 1, %s19
    %p27 = scmp.ge.s32.totalorder %s26, 2
    %s28 = scalar_select %p27, 0, %s26
    %s29 = sadd.s32 1, %s18
    %s30 = scalar_select %p27, %s29, %s18
    %p31 = scmp.ge.s32.totalorder %s30, 2
    %s32 = scalar_select %p31, 0, %s30
    %s33 = sadd.s32 1, %s17
    %s34 = scalar_select %p31, %s33, %s17
    %p35 = scmp.ge.s32.totalorder %s34, 2
    %s36 = scalar_select %p35, 0, %s34
    %s37 = smul.u32 %s18, 2
    %s38 = sadd.s32 %s37, %s19
    %s39 = smul.u32 %s32, 2
    %s40 = sadd.s32 %s39, %s28
    %s41 = ssub.s32 %s17, %s36
    %s42 = ssub.s32 %s38, %s40
    %s43 = sor.u32 %s41, %s42
    %p44 = scmp.eq.s32.totalorder %s43, 0
    %s46 = sadd.s32 %s45, 1
    %s47 = scalar_select %p44, %s45, %s46
    %p50 = pneg %p44
    %p51 = scmp.eq.s32.totalorder %s10, 7
    %p52 = por %p50, %p51
    %p53 = scmp.ne.s32.totalorder %s45, %s48
    %p54 = scmp.eq.s32.totalorder %s10, 0
    %p55 = por %p53, %p54
    %p56 = scmp.ne.s32.totalorder %s45, %s48
    %p57 = scmp.eq.s32.totalorder %s15, 7
    %p58 = por %p56, %p57
    %p59 = scmp.ne.s32.totalorder %s48, %s49
    %p60 = scmp.eq.s32.totalorder %s15, 0
    %p61 = por %p59, %p60
    %p62 = scmp.ne.s32.totalorder %s48, %s49
    %p63 = scmp.eq.s32.totalorder %s16, 7
    %p64 = por %p62, %p63
    %p66 = scmp.ne.s32.totalorder %s49, %s65
    %p67 = scmp.eq.s32.totalorder %s16, 0
    %p68 = por %p66, %p67
    %s70 = sadd.s32 %s69, 1
    %p73 = scmp.eq.s32.totalorder %s10, 7
    %p74 = scmp.ne.s32.totalorder %s69, %s71
    %p75 = scmp.eq.s32.totalorder %s10, 0
    %p76 = por %p74, %p75
    %p77 = scmp.ne.s32.totalorder %s69, %s71
    %p78 = scmp.eq.s32.totalorder %s15, 7
    %p79 = por %p77, %p78
    %p80 = scmp.ne.s32.totalorder %s71, %s72
    %p81 = scmp.eq.s32.totalorder %s15, 0
    %p82 = por %p80, %p81
    %p83 = scmp.ne.s32.totalorder %s71, %s72
    %p84 = scmp.eq.s32.totalorder %s16, 7
    %p85 = por %p83, %p84
    %p87 = scmp.ne.s32.totalorder %s72, %s86
    %p88 = scmp.eq.s32.totalorder %s16, 0
    %p89 = por %p87, %p88
    %s91 = sadd.s32 %s90, 1
    %p94 = scmp.eq.s32.totalorder %s10, 7
    %p95 = scmp.ne.s32.totalorder %s90, %s92
    %p96 = scmp.eq.s32.totalorder %s10, 0
    %p97 = por %p95, %p96
    %p98 = scmp.ne.s32.totalorder %s90, %s92
    %p99 = scmp.eq.s32.totalorder %s15, 7
    %p100 = por %p98, %p99
    %p101 = scmp.ne.s32.totalorder %s92, %s93
    %p102 = scmp.eq.s32.totalorder %s15, 0
    %p103 = por %p101, %p102
    %p104 = scmp.ne.s32.totalorder %s92, %s93
    %p105 = scmp.eq.s32.totalorder %s16, 7
    %p106 = por %p104, %p105
    %p108 = scmp.ne.s32.totalorder %s93, %s107
    %p109 = scmp.eq.s32.totalorder %s16, 0
    %p110 = por %p108, %p109
    %s112 = sadd.s32 %s111, 1
    %p115 = scmp.eq.s32.totalorder %s10, 7
    %p116 = scmp.ne.s32.totalorder %s111, %s113
    %p117 = scmp.eq.s32.totalorder %s10, 0
    %p118 = por %p116, %p117
    %p119 = scmp.ne.s32.totalorder %s111, %s113
    %p120 = scmp.eq.s32.totalorder %s15, 7
    %p121 = por %p119, %p120
    %p122 = scmp.ne.s32.totalorder %s113, %s114
    %p123 = scmp.eq.s32.totalorder %s15, 0
    %p124 = por %p122, %p123
    %p125 = scmp.ne.s32.totalorder %s113, %s114
    %p126 = scmp.eq.s32.totalorder %s16, 7
    %p127 = por %p125, %p126
    %p129 = scmp.ne.s32.totalorder %s114, %s128
    %p130 = scmp.eq.s32.totalorder %s16, 0
    %p131 = por %p129, %p130
    %s132 = ssub.s32 %s17, %s36
    %s133 = ssub.s32 %s18, %s32
    %s134 = sor.u32 %s132, %s133
    %p135 = scmp.eq.s32.totalorder %s134, 0
    %s137 = sadd.s32 %s136, 1
    %s138 = scalar_select %p135, %s136, %s137
    %p141 = pneg %p135
    %p142 = scmp.eq.s32.totalorder %s10, 7
    %p143 = por %p141, %p142
    %p144 = scmp.ne.s32.totalorder %s136, %s139
    %p145 = scmp.eq.s32.totalorder %s10, 0
    %p146 = por %p144, %p145
    %p147 = scmp.ne.s32.totalorder %s136, %s139
    %p148 = scmp.eq.s32.totalorder %s15, 7
    %p149 = por %p147, %p148
    %p150 = scmp.ne.s32.totalorder %s139, %s140
    %p151 = scmp.eq.s32.totalorder %s15, 0
    %p152 = por %p150, %p151
    %p153 = scmp.ne.s32.totalorder %s139, %s140
    %p154 = scmp.eq.s32.totalorder %s16, 7
    %p155 = por %p153, %p154
    %p157 = scmp.ne.s32.totalorder %s140, %s156
    %p158 = scmp.eq.s32.totalorder %s16, 0
    %p159 = por %p157, %p158
    %p160 = scmp.le.s32.totalorder 1, %s10
    %p161 = scmp.lt.s32.totalorder %s10, 9
    %p162 = pnand %p160, %p161
    %p163 = pneg %p162
    // Predicated region
    $region9: #{resnet_forward.40} parent=5 // pred_check
      _
    $region10: #{resnet_forward.40} parent=5 // pred_check_branch
      %165 = sbr.rel (%p162) target = $region12
    $region11: #{resnet_forward.40} parent=5 // pred_region
      %s166 = ssub.s32 %s10, 1
      // Predicated region
      $region13: #{resnet_forward.40} parent=11 // pred_check
        %p167 = pneg %p82
      $region14: #{resnet_forward.40} parent=11 // pred_check_branch
        %169 = sbr.rel (%p167) target = $region16
      $region15: #{resnet_forward.40} parent=11 // pred_region
        _
      $region16: #{resnet_forward.40} parent=11 // pred_fallthru
        _
      // Predicated region
      $region17: #{resnet_forward.40} parent=11 // pred_check
        %p170 = pneg %p103
      $region18: #{resnet_forward.40} parent=11 // pred_check_branch
        %172 = sbr.rel (%p170) target = $region20
      $region19: #{resnet_forward.40} parent=11 // pred_region
        _
      $region20: #{resnet_forward.40} parent=11 // pred_fallthru
        _
      // Predicated region
      $region21: #{resnet_forward.40} parent=11 // pred_check
        %p173 = pneg %p124
      $region22: #{resnet_forward.40} parent=11 // pred_check_branch
        %175 = sbr.rel (%p173) target = $region24
      $region23: #{resnet_forward.40} parent=11 // pred_region
        _
      $region24: #{resnet_forward.40} parent=11 // pred_fallthru
        _
    $region12: #{resnet_forward.40} parent=5 // pred_fallthru
      _
    %p176 = scmp.lt.s32.totalorder %s10, 8
    // Predicated region
    $region25: #{resnet_forward.40} parent=5 // pred_check
      %p177 = pneg %p176
    $region26: #{resnet_forward.40} parent=5 // pred_check_branch
      %179 = sbr.rel (%p177) target = $region28
    $region27: #{resnet_forward.40} parent=5 // pred_region
      // Predicated region
      $region29: #{resnet_forward.40} parent=27 // pred_check
        %p180 = pneg %p55
      $region30: #{resnet_forward.40} parent=27 // pred_check_branch
        %182 = sbr.rel (%p180) target = $region32
      $region31: #{resnet_forward.40} parent=27 // pred_region
        %s183 = smul.u32 %s18, 2
        %s184 = sadd.s32 %s183, %s19
        %p185 = scmp.lt.s32.totalorder %s17, 1
        %s186 = scalar_select %p185, %s17, 1
        %p187 = scmp.lt.s32.totalorder %s184, 3
        %s188 = scalar_select %p187, %s184, 3
        %s189 = smul.addr %s188, 2
        %s190 = smul.addr %s186, 8
        %s191 = sadd.s32 %s189, %s190
        %s192 = smul.addr %s191, 4
        %s193 = scalar_lea.vmem %s0, %s192
        %s194 = smul.u32 %s18, 2
        %s195 = sadd.s32 %s194, %s19
      $region32: #{resnet_forward.40} parent=27 // pred_fallthru
        _
    $region28: #{resnet_forward.40} parent=5 // pred_fallthru
      _
    %p196 = scmp.le.s32.totalorder 1, %s10
    %p197 = scmp.lt.s32.totalorder %s10, 9
    %p198 = pnand %p196, %p197
    %p199 = pneg %p198
    // Predicated region
    $region33: #{resnet_forward.40} parent=5 // pred_check
      _
    $region34: #{resnet_forward.40} parent=5 // pred_check_branch
      %201 = sbr.rel (%p198) target = $region36
    $region35: #{resnet_forward.40} parent=5 // pred_region
      %s202 = ssub.s32 %s10, 1
      %s203 = smul.u32 %s21, 2
      %s204 = sadd.s32 %s203, %s22
      %p205 = scmp.lt.s32.totalorder %s20, 1
      %s206 = scalar_select %p205, %s20, 1
      %p207 = scmp.lt.s32.totalorder %s204, 3
      %s208 = scalar_select %p207, %s204, 3
      %s209 = smul.addr %s208, 2
      %s210 = smul.addr %s206, 8
      %s211 = sadd.s32 %s209, %s210
      %s212 = smul.addr %s211, 4
      %s213 = scalar_lea.vmem %s0, %s212
      %p214 = pneg %p61
      %p215 = pneg %p58
      %p216 = pneg %p82
      %p217 = pneg %p79
      %p218 = pneg %p103
      %p219 = pneg %p100
      %p220 = pneg %p124
      %p221 = pneg %p121
      %p222 = pneg %p152
      %p223 = pneg %p149
      %p224 = scmp.lt.s32.totalorder %s20, 1
      %s225 = scalar_select %p224, %s20, 1
      %p226 = scmp.lt.s32.totalorder %s21, 1
      %s227 = scalar_select %p226, %s21, 1
      %s228 = smul.addr %s227, 2
      %s229 = smul.addr %s225, 4
      %s230 = sadd.s32 %s228, %s229
      %s231 = smul.addr %s230, 4
      %s232 = scalar_lea.vmem %s4, %s231
      %s233 = smul.u32 %s21, 2
      %s234 = sadd.s32 %s233, %s22
      %p235 = scmp.lt.s32.totalorder %s20, 1
      %s236 = scalar_select %p235, %s20, 1
      %p237 = scmp.lt.s32.totalorder %s234, 3
      %s238 = scalar_select %p237, %s234, 3
      %s239 = smul.addr %s238, 2
      %s240 = smul.addr %s236, 8
      %s241 = sadd.s32 %s239, %s240
      %s242 = smul.addr %s241, 4
      %s243 = scalar_lea.vmem %s0, %s242
      %s244 = smul.u32 %s21, 2
      %s245 = sadd.s32 %s244, %s22
      %p246 = scmp.lt.s32.totalorder %s20, 1
      %s247 = scalar_select %p246, %s20, 1
      %p248 = scmp.lt.s32.totalorder %s21, 1
      %s249 = scalar_select %p248, %s21, 1
      %s250 = smul.addr %s249, 2
      %s251 = smul.addr %s247, 4
      %s252 = sadd.s32 %s250, %s251
      %s253 = smul.addr %s252, 4
      %s254 = scalar_lea.vmem %s4, %s253
      %p256 = scmp.eq.s32.totalorder %s22, 0
      // Predicated region
      $region37: #{resnet_forward.40} parent=35 // pred_check
        %p257 = pneg %p256
      $region38: #{resnet_forward.40} parent=35 // pred_check_branch
        %259 = sbr.rel (%p257) target = $region40
      $region39: #{resnet_forward.40} parent=35 // pred_region
        %260 = vst [vmem:[#allocation2] sm:$0xff] 0.0
        %261 = vst [vmem:[#allocation2 + $0x8] sm:$0x3] 0.0
      $region40: #{resnet_forward.40} parent=35 // pred_fallthru
        _
      %v262 = vld [vmem:[%s243] sm:$0xf]
      %v263 = vld [vmem:[%s243 + $0x4] sm:$0x3]
      %v264 = vld [vmem:[#allocation2] sm:$0xff]
      %v265 = vld [vmem:[#allocation2 + $0x8] sm:$0x3]
      %s266 = smul.u32 %s22, 2
      %s267 = smul.u32 %s266, 16
      %s268 = smul.addr %s267, 4
      %s269 = scalar_lea.vmem %s1, %s268
      %v270 = vld [vmem:[%s269] sm:$0xf]
      %v271 = vld [vmem:[%s269 + $0x4] sm:$0xf]
      %v272 = vld [vmem:[%s269 + $0x8] sm:$0xf]
      %v273 = vld [vmem:[%s269 + $0xc] sm:$0xf]
      %v274 = vld [vmem:[%s269 + $0x10] sm:$0xf]
      %v275 = vld [vmem:[%s269 + $0x14] sm:$0xf]
      %v276 = vld [vmem:[%s269 + $0x18] sm:$0xf]
      %v277 = vld [vmem:[%s269 + $0x1c] sm:$0xf]
      %v278 = vld [vmem:[%s269 + $0x20] sm:$0xf]
      %v279 = vld [vmem:[%s269 + $0x24] sm:$0xf]
      %v280 = vld [vmem:[%s269 + $0x28] sm:$0xf]
      %v281 = vld [vmem:[%s269 + $0x2c] sm:$0xf]
      %v282 = vld [vmem:[%s269 + $0x30] sm:$0xf]
      %v283 = vld [vmem:[%s269 + $0x34] sm:$0xf]
      %v284 = vld [vmem:[%s269 + $0x38] sm:$0xf]
      %v285 = vld [vmem:[%s269 + $0x3c] sm:$0xf]
      %v288 = vunpack.c.l.b16 %v262
      %v289 = vunpack.c.l.b16 %v263
      %v290 = vpack.c.b16 %v289, %v288
      %v308 = vunpack.c.l.b16 %v270
      %v309 = vunpack.c.l.b16 %v271
      %v310 = vunpack.c.l.b16 %v272
      %v311 = vunpack.c.l.b16 %v273
      %v312 = vunpack.c.l.b16 %v274
      %v313 = vunpack.c.l.b16 %v275
      %v314 = vunpack.c.l.b16 %v276
      %v315 = vunpack.c.l.b16 %v277
      %v316 = vunpack.c.l.b16 %v278
      %v317 = vunpack.c.l.b16 %v279
      %v318 = vunpack.c.l.b16 %v280
      %v319 = vunpack.c.l.b16 %v281
      %v320 = vunpack.c.l.b16 %v282
      %v321 = vunpack.c.l.b16 %v283
      %v322 = vunpack.c.l.b16 %v284
      %v323 = vunpack.c.l.b16 %v285
      %v324 = vpack.c.b16 %v309, %v308
      %v325 = vpack.c.b16 %v311, %v310
      %v326 = vpack.c.b16 %v313, %v312
      %v327 = vpack.c.b16 %v315, %v314
      %v328 = vpack.c.b16 %v317, %v316
      %v329 = vpack.c.b16 %v319, %v318
      %v330 = vpack.c.b16 %v321, %v320
      %v331 = vpack.c.b16 %v323, %v322
      %340 = vmatprep.subr.bf16.mxu0 0
      %341 = vmatpush1.bf16.msra.mxu0 %v331
      %342 = vmatprep.subr.bf16.mxu0 0
      %343 = vmatpush1.bf16.msra.mxu0 %v330
      %344 = vmatprep.subr.bf16.mxu0 0
      %345 = vmatpush1.bf16.msra.mxu0 %v329
      %346 = vmatprep.subr.bf16.mxu0 0
      %347 = vmatpush1.bf16.msra.mxu0 %v328
      %348 = vmatprep.subr.bf16.mxu0 0
      %349 = vmatpush1.bf16.msra.mxu0 %v327
      %350 = vmatprep.subr.bf16.mxu0 0
      %351 = vmatpush1.bf16.msra.mxu0 %v326
      %352 = vmatprep.subr.bf16.mxu0 0
      %353 = vmatpush1.bf16.msra.mxu0 %v325
      %354 = vmatprep.subr.bf16.mxu0 0
      %355 = vmatpush1.bf16.msra.mxu0 %v324
      %356 = vmatprep.subr.bf16.mxu0 0
      %357 = vmatpush2.bf16.msra.mxu0 0
      %358 = vmatprep.subr.bf16.mxu0 0
      %359 = vmatpush2.bf16.msra.mxu0 0
      %360 = vmatprep.subr.bf16.mxu0 0
      %361 = vmatpush2.bf16.msra.mxu0 0
      %362 = vmatprep.subr.bf16.mxu0 0
      %363 = vmatpush2.bf16.msra.mxu0 0
      %364 = vmatprep.subr.bf16.mxu0 0
      %365 = vmatpush2.bf16.msra.mxu0 0
      %366 = vmatprep.subr.bf16.mxu0 0
      %367 = vmatpush2.bf16.msra.mxu0 0
      %368 = vmatprep.subr.bf16.mxu0 0
      %369 = vmatpush2.bf16.msra.mxu0 0
      %370 = vmatprep.subr.bf16.mxu0 0
      %371 = vmatpush2.bf16.msra.mxu0 0
      %372 = vmatprep.mubr.bf16.mxu0 0
      %373 = vmatmul.mubr.bf16.gmra.mxu0 %v290
      %v374 = vpop.f32.mrf.mxu0
      %v375 = vadd.f32 0.0, %v374
      %v376 = vpop.f32.mrf.mxu0
      %v377 = vpop.f32.mrf.mxu0
      %v378 = vadd.f32 0.0, %v377
      %v379 = vpop.f32.mrf.mxu0
      %380 = vdwg.mxu0
      %v381 = vadd.f32 %v264, %v375
      %v382 = vadd.f32 %v265, %v378
      %s383 = sadd.s32 %s266, 1
      %s384 = smul.u32 %s383, 16
      %s385 = smul.addr %s384, 4
      %s386 = scalar_lea.vmem %s1, %s385
      %v387 = vld [vmem:[%s386] sm:$0xf]
      %v388 = vld [vmem:[%s386 + $0x4] sm:$0xf]
      %v389 = vld [vmem:[%s386 + $0x8] sm:$0xf]
      %v390 = vld [vmem:[%s386 + $0xc] sm:$0xf]
      %v391 = vld [vmem:[%s386 + $0x10] sm:$0xf]
      %v392 = vld [vmem:[%s386 + $0x14] sm:$0xf]
      %v393 = vld [vmem:[%s386 + $0x18] sm:$0xf]
      %v394 = vld [vmem:[%s386 + $0x1c] sm:$0xf]
      %v395 = vld [vmem:[%s386 + $0x20] sm:$0xf]
      %v396 = vld [vmem:[%s386 + $0x24] sm:$0xf]
      %v397 = vld [vmem:[%s386 + $0x28] sm:$0xf]
      %v398 = vld [vmem:[%s386 + $0x2c] sm:$0xf]
      %v399 = vld [vmem:[%s386 + $0x30] sm:$0xf]
      %v400 = vld [vmem:[%s386 + $0x34] sm:$0xf]
      %v401 = vld [vmem:[%s386 + $0x38] sm:$0xf]
      %v402 = vld [vmem:[%s386 + $0x3c] sm:$0xf]
      %v404 = vshrl.u32 %v290, 16
      %v406 = vshll.u32 %v290, 16
      %v408 = vrot.slane %v406, 1
      %v409 = vor.u32 %v404, %v408
      %v427 = vunpack.c.l.b16 %v387
      %v428 = vunpack.c.l.b16 %v388
      %v429 = vunpack.c.l.b16 %v389
      %v430 = vunpack.c.l.b16 %v390
      %v431 = vunpack.c.l.b16 %v391
      %v432 = vunpack.c.l.b16 %v392
      %v433 = vunpack.c.l.b16 %v393
      %v434 = vunpack.c.l.b16 %v394
      %v435 = vunpack.c.l.b16 %v395
      %v436 = vunpack.c.l.b16 %v396
      %v437 = vunpack.c.l.b16 %v397
      %v438 = vunpack.c.l.b16 %v398
      %v439 = vunpack.c.l.b16 %v399
      %v440 = vunpack.c.l.b16 %v400
      %v441 = vunpack.c.l.b16 %v401
      %v442 = vunpack.c.l.b16 %v402
      %v443 = vpack.c.b16 %v428, %v427
      %v444 = vpack.c.b16 %v430, %v429
      %v445 = vpack.c.b16 %v432, %v431
      %v446 = vpack.c.b16 %v434, %v433
      %v447 = vpack.c.b16 %v436, %v435
      %v448 = vpack.c.b16 %v438, %v437
      %v449 = vpack.c.b16 %v440, %v439
      %v450 = vpack.c.b16 %v442, %v441
      %459 = vmatprep.subr.bf16.mxu0 0
      %460 = vmatpush1.bf16.msra.mxu0 %v450
      %461 = vmatprep.subr.bf16.mxu0 0
      %462 = vmatpush1.bf16.msra.mxu0 %v449
      %463 = vmatprep.subr.bf16.mxu0 0
      %464 = vmatpush1.bf16.msra.mxu0 %v448
      %465 = vmatprep.subr.bf16.mxu0 0
      %466 = vmatpush1.bf16.msra.mxu0 %v447
      %467 = vmatprep.subr.bf16.mxu0 0
      %468 = vmatpush1.bf16.msra.mxu0 %v446
      %469 = vmatprep.subr.bf16.mxu0 0
      %470 = vmatpush1.bf16.msra.mxu0 %v445
      %471 = vmatprep.subr.bf16.mxu0 0
      %472 = vmatpush1.bf16.msra.mxu0 %v444
      %473 = vmatprep.subr.bf16.mxu0 0
      %474 = vmatpush1.bf16.msra.mxu0 %v443
      %475 = vmatprep.subr.bf16.mxu0 0
      %476 = vmatpush2.bf16.msra.mxu0 0
      %477 = vmatprep.subr.bf16.mxu0 0
      %478 = vmatpush2.bf16.msra.mxu0 0
      %479 = vmatprep.subr.bf16.mxu0 0
      %480 = vmatpush2.bf16.msra.mxu0 0
      %481 = vmatprep.subr.bf16.mxu0 0
      %482 = vmatpush2.bf16.msra.mxu0 0
      %483 = vmatprep.subr.bf16.mxu0 0
      %484 = vmatpush2.bf16.msra.mxu0 0
      %485 = vmatprep.subr.bf16.mxu0 0
      %486 = vmatpush2.bf16.msra.mxu0 0
      %487 = vmatprep.subr.bf16.mxu0 0
      %488 = vmatpush2.bf16.msra.mxu0 0
      %489 = vmatprep.subr.bf16.mxu0 0
      %490 = vmatpush2.bf16.msra.mxu0 0
      %491 = vmatprep.mubr.bf16.mxu0 0
      %492 = vmatmul.mubr.bf16.gmra.mxu0 %v409
      %v493 = vpop.f32.mrf.mxu0
      %v494 = vadd.f32 0.0, %v493
      %v495 = vpop.f32.mrf.mxu0
      %v496 = vpop.f32.mrf.mxu0
      %v497 = vadd.f32 0.0, %v496
      %v498 = vpop.f32.mrf.mxu0
      %499 = vdwg.mxu0
      %v500 = vadd.f32 %v381, %v494
      %v501 = vadd.f32 %v382, %v497
      %502 = vst [vmem:[#allocation2] sm:$0xff] %v500
      %503 = vst [vmem:[#allocation2 + $0x8] sm:$0x3] %v501
      %p504 = scmp.eq.s32.totalorder %s22, 1
      // Predicated region
      $region41: #{resnet_forward.40} parent=35 // pred_check
        %p505 = pneg %p504
      $region42: #{resnet_forward.40} parent=35 // pred_check_branch
        %507 = sbr.rel (%p505) target = $region44
      $region43: #{resnet_forward.40} parent=35 // pred_region
        %v508 = vld [vmem:[#allocation2] sm:$0xff]
        %v509 = vld [vmem:[#allocation2 + $0x8] sm:$0x3]
        %v510 = vld [vmem:[%s2] sm:$0x1]
        %v512 = vlaneseq
        %v513 = vshrl.u32 %v512, 7
        %v514 = vsub.s32 0, %v513
        %v515 = vrot.slane %v510, %v514
        %v517 = vmul.f32 %v508, %v515
        %v518 = vmul.f32 %v509, %v515
        %v519 = vld [vmem:[%s3] sm:$0x1]
        %v521 = vlaneseq
        %v522 = vshrl.u32 %v521, 7
        %v523 = vsub.s32 0, %v522
        %v524 = vrot.slane %v519, %v523
        %v526 = vadd.f32 %v517, %v524
        %v527 = vadd.f32 %v518, %v524
        %v528 = vmax.f32 %v526, 0.0
        %v529 = vmax.f32 %v527, 0.0
        %v530 = vpack.c.bf16 %v529, %v528
        %v532 = vunpack.c.l.b16 %v530
        %v533 = vunpack.c.h.b16 %v530
        %v534 = vpack.c.b16 %v532, %v532
        %v535 = vpack.c.b16 %v533, %v533
        %538 = vst [vmem:[%s254] sm:$0xf] %v534
        %539 = vst [vmem:[%s254 + $0x4] sm:$0x1] %v535
      $region44: #{resnet_forward.40} parent=35 // pred_fallthru
        _
      %p540 = scmp.lt.s32.totalorder %s20, 1
      %s541 = scalar_select %p540, %s20, 1
      %p542 = scmp.lt.s32.totalorder %s21, 1
      %s543 = scalar_select %p542, %s21, 1
      %s544 = smul.addr %s543, 2
      %s545 = smul.addr %s541, 4
      %s546 = sadd.s32 %s544, %s545
      %s547 = smul.addr %s546, 4
      %s548 = scalar_lea.vmem %s4, %s547
      // Predicated region
      $region45: #{resnet_forward.40} parent=35 // pred_check
        %p549 = pneg %p149
      $region46: #{resnet_forward.40} parent=35 // pred_check_branch
        %551 = sbr.rel (%p549) target = $region48
      $region47: #{resnet_forward.40} parent=35 // pred_region
        _
      $region48: #{resnet_forward.40} parent=35 // pred_fallthru
        _
    $region36: #{resnet_forward.40} parent=5 // pred_fallthru
      _
    %p552 = scmp.le.s32.totalorder 2, %s10
    // Predicated region
    $region49: #{resnet_forward.40} parent=5 // pred_check
      %p553 = pneg %p552
    $region50: #{resnet_forward.40} parent=5 // pred_check_branch
      %555 = sbr.rel (%p553) target = $region52
    $region51: #{resnet_forward.40} parent=5 // pred_region
      %s556 = ssub.s32 %s10, 2
      // Predicated region
      $region53: #{resnet_forward.40} parent=51 // pred_check
        %p557 = pneg %p155
      $region54: #{resnet_forward.40} parent=51 // pred_check_branch
        %559 = sbr.rel (%p557) target = $region56
      $region55: #{resnet_forward.40} parent=51 // pred_region
        %p560 = scmp.lt.s32.totalorder %s23, 1
        %s561 = scalar_select %p560, %s23, 1
        %p562 = scmp.lt.s32.totalorder %s24, 1
        %s563 = scalar_select %p562, %s24, 1
        %s564 = smul.addr %s563, 2
        %s565 = smul.addr %s561, 4
        %s566 = sadd.s32 %s564, %s565
        %s567 = smul.addr %s566, 4
        %s568 = scalar_lea.vmem %s4, %s567
      $region56: #{resnet_forward.40} parent=51 // pred_fallthru
        _
    $region52: #{resnet_forward.40} parent=5 // pred_fallthru
      _
  $region6: #{resnet_forward.40} parent=0 // loop_footer
    %s14 = sadd.s32 1, %s10
  $region7: #{resnet_forward.40} parent=0 // loop_footer_branch
    %9 = sbr.rel target = $region3
  $region8: #{resnet_forward.40} parent=0 // loop_exit
    _

// kernel: resnet_forward.41
$region0: #{resnet_forward.41}
  #allocation0 [shape = 'u32[]', space=smem, size = 0x4, offset = 0x4, fixed_abs, tag = 'smem constant byte address 0x4 - core index']
  #allocation1 [shape = 'u32[144,128]{1,0:T(1,128)}', space=vmem, size = 0x12000, scoped, tag = 'internal scratch']
  #allocation2 [shape = 'f32[9,128]{1,0:T(8,128)}', space=vmem, size = 0x2000, scoped, tag = 'scratch operand']
  %s0 = inlined_call_operand.vmem [shape: bf16[2,2,10,128], index: 0, kind: input, shape index: {}]
  %s1 = inlined_call_operand.vmem [shape: bf16[4,128,128], index: 1, kind: input, shape index: {}]
  %s2 = inlined_call_operand.vmem [shape: f32[1,128], index: 2, kind: input, shape index: {}]
  %s3 = inlined_call_operand.vmem [shape: f32[1,128], index: 3, kind: input, shape index: {}]
  %s4 = inlined_call_operand.vmem [shape: bf16[2,1,9,128], index: 4, kind: output, shape index: {}]
  %s5 = sld [smem:[#allocation0]]
  $region57: #{resnet_forward.41} parent=0
    _
  %s7 = ssub.s32 1, %s5
  %s8 = scalar_select 0, %s7, %s5
  loop: start=0, step=1, limit=6
  $region2: #{resnet_forward.41} parent=0 // loop_pre_header
    _
  $region3: #{resnet_forward.41} parent=0 // loop_header
    %s10 = sphi 0, %s14
    %p11 = scmp.ge.s32.totalorder %s10, 6
    %s17 = sphi 0, %s36
    %s18 = sphi 0, %s32
    %s19 = sphi 0, %s28
    %s20 = sphi 0, %s17
    %s21 = sphi 0, %s18
    %s22 = sphi 0, %s19
    %s23 = sphi 0, %s20
    %s24 = sphi 0, %s21
    %s25 = sphi 0, %s22
    %s43 = sphi 0, %s45
    %s46 = sphi 0, %s43
    %s47 = sphi 0, %s46
    %s63 = sphi 0, %s47
    %s67 = sphi 0, %s67
    %s69 = sphi 0, %s67
    %s70 = sphi 0, %s69
    %s84 = sphi 0, %s70
    %s88 = sphi 0, %s88
    %s90 = sphi 0, %s88
    %s91 = sphi 0, %s90
    %s105 = sphi 0, %s91
    %s109 = sphi 0, %s109
    %s111 = sphi 0, %s109
    %s112 = sphi 0, %s111
    %s126 = sphi 0, %s112
    %s134 = sphi 0, %s136
    %s137 = sphi 0, %s134
    %s138 = sphi 0, %s137
    %s154 = sphi 0, %s138
  $region4: #{resnet_forward.41} parent=0 // loop_header_branch
    %13 = sbr.rel (%p11) target = $region8
  $region5: #{resnet_forward.41} parent=0 // loop_body
    %s15 = ssub.s32 %s10, 1
    %s16 = ssub.s32 %s10, 2
    %s26 = sadd.s32 1, %s19
    %p27 = scmp.ge.s32.totalorder %s26, 2
    %s28 = scalar_select %p27, 0, %s26
    %s29 = sadd.s32 1, %s18
    %s30 = scalar_select %p27, %s29, %s18
    %p31 = scmp.ge.s32.totalorder %s30, 1
    %s32 = scalar_select %p31, 0, %s30
    %s33 = sadd.s32 1, %s17
    %s34 = scalar_select %p31, %s33, %s17
    %p35 = scmp.ge.s32.totalorder %s34, 2
    %s36 = scalar_select %p35, 0, %s34
    %s37 = sadd.s32 %s18, %s19
    %s38 = sadd.s32 %s32, %s28
    %s39 = ssub.s32 %s17, %s36
    %s40 = ssub.s32 %s37, %s38
    %s41 = sor.u32 %s39, %s40
    %p42 = scmp.eq.s32.totalorder %s41, 0
    %s44 = sadd.s32 %s43, 1
    %s45 = scalar_select %p42, %s43, %s44
    %p48 = pneg %p42
    %p49 = scmp.eq.s32.totalorder %s10, 3
    %p50 = por %p48, %p49
    %p51 = scmp.ne.s32.totalorder %s43, %s46
    %p52 = scmp.eq.s32.totalorder %s10, 0
    %p53 = por %p51, %p52
    %p54 = scmp.ne.s32.totalorder %s43, %s46
    %p55 = scmp.eq.s32.totalorder %s15, 3
    %p56 = por %p54, %p55
    %p57 = scmp.ne.s32.totalorder %s46, %s47
    %p58 = scmp.eq.s32.totalorder %s15, 0
    %p59 = por %p57, %p58
    %p60 = scmp.ne.s32.totalorder %s46, %s47
    %p61 = scmp.eq.s32.totalorder %s16, 3
    %p62 = por %p60, %p61
    %p64 = scmp.ne.s32.totalorder %s47, %s63
    %p65 = scmp.eq.s32.totalorder %s16, 0
    %p66 = por %p64, %p65
    %s68 = sadd.s32 %s67, 1
    %p71 = scmp.eq.s32.totalorder %s10, 3
    %p72 = scmp.ne.s32.totalorder %s67, %s69
    %p73 = scmp.eq.s32.totalorder %s10, 0
    %p74 = por %p72, %p73
    %p75 = scmp.ne.s32.totalorder %s67, %s69
    %p76 = scmp.eq.s32.totalorder %s15, 3
    %p77 = por %p75, %p76
    %p78 = scmp.ne.s32.totalorder %s69, %s70
    %p79 = scmp.eq.s32.totalorder %s15, 0
    %p80 = por %p78, %p79
    %p81 = scmp.ne.s32.totalorder %s69, %s70
    %p82 = scmp.eq.s32.totalorder %s16, 3
    %p83 = por %p81, %p82
    %p85 = scmp.ne.s32.totalorder %s70, %s84
    %p86 = scmp.eq.s32.totalorder %s16, 0
    %p87 = por %p85, %p86
    %s89 = sadd.s32 %s88, 1
    %p92 = scmp.eq.s32.totalorder %s10, 3
    %p93 = scmp.ne.s32.totalorder %s88, %s90
    %p94 = scmp.eq.s32.totalorder %s10, 0
    %p95 = por %p93, %p94
    %p96 = scmp.ne.s32.totalorder %s88, %s90
    %p97 = scmp.eq.s32.totalorder %s15, 3
    %p98 = por %p96, %p97
    %p99 = scmp.ne.s32.totalorder %s90, %s91
    %p100 = scmp.eq.s32.totalorder %s15, 0
    %p101 = por %p99, %p100
    %p102 = scmp.ne.s32.totalorder %s90, %s91
    %p103 = scmp.eq.s32.totalorder %s16, 3
    %p104 = por %p102, %p103
    %p106 = scmp.ne.s32.totalorder %s91, %s105
    %p107 = scmp.eq.s32.totalorder %s16, 0
    %p108 = por %p106, %p107
    %s110 = sadd.s32 %s109, 1
    %p113 = scmp.eq.s32.totalorder %s10, 3
    %p114 = scmp.ne.s32.totalorder %s109, %s111
    %p115 = scmp.eq.s32.totalorder %s10, 0
    %p116 = por %p114, %p115
    %p117 = scmp.ne.s32.totalorder %s109, %s111
    %p118 = scmp.eq.s32.totalorder %s15, 3
    %p119 = por %p117, %p118
    %p120 = scmp.ne.s32.totalorder %s111, %s112
    %p121 = scmp.eq.s32.totalorder %s15, 0
    %p122 = por %p120, %p121
    %p123 = scmp.ne.s32.totalorder %s111, %s112
    %p124 = scmp.eq.s32.totalorder %s16, 3
    %p125 = por %p123, %p124
    %p127 = scmp.ne.s32.totalorder %s112, %s126
    %p128 = scmp.eq.s32.totalorder %s16, 0
    %p129 = por %p127, %p128
    %s130 = ssub.s32 %s17, %s36
    %s131 = ssub.s32 %s18, %s32
    %s132 = sor.u32 %s130, %s131
    %p133 = scmp.eq.s32.totalorder %s132, 0
    %s135 = sadd.s32 %s134, 1
    %s136 = scalar_select %p133, %s134, %s135
    %p139 = pneg %p133
    %p140 = scmp.eq.s32.totalorder %s10, 3
    %p141 = por %p139, %p140
    %p142 = scmp.ne.s32.totalorder %s134, %s137
    %p143 = scmp.eq.s32.totalorder %s10, 0
    %p144 = por %p142, %p143
    %p145 = scmp.ne.s32.totalorder %s134, %s137
    %p146 = scmp.eq.s32.totalorder %s15, 3
    %p147 = por %p145, %p146
    %p148 = scmp.ne.s32.totalorder %s137, %s138
    %p149 = scmp.eq.s32.totalorder %s15, 0
    %p150 = por %p148, %p149
    %p151 = scmp.ne.s32.totalorder %s137, %s138
    %p152 = scmp.eq.s32.totalorder %s16, 3
    %p153 = por %p151, %p152
    %p155 = scmp.ne.s32.totalorder %s138, %s154
    %p156 = scmp.eq.s32.totalorder %s16, 0
    %p157 = por %p155, %p156
    %p158 = scmp.le.s32.totalorder 1, %s10
    %p159 = scmp.lt.s32.totalorder %s10, 5
    %p160 = pnand %p158, %p159
    %p161 = pneg %p160
    // Predicated region
    $region9: #{resnet_forward.41} parent=5 // pred_check
      _
    $region10: #{resnet_forward.41} parent=5 // pred_check_branch
      %163 = sbr.rel (%p160) target = $region12
    $region11: #{resnet_forward.41} parent=5 // pred_region
      %s164 = ssub.s32 %s10, 1
      // Predicated region
      $region13: #{resnet_forward.41} parent=11 // pred_check
        %p165 = pneg %p80
      $region14: #{resnet_forward.41} parent=11 // pred_check_branch
        %167 = sbr.rel (%p165) target = $region16
      $region15: #{resnet_forward.41} parent=11 // pred_region
        _
      $region16: #{resnet_forward.41} parent=11 // pred_fallthru
        _
      // Predicated region
      $region17: #{resnet_forward.41} parent=11 // pred_check
        %p168 = pneg %p101
      $region18: #{resnet_forward.41} parent=11 // pred_check_branch
        %170 = sbr.rel (%p168) target = $region20
      $region19: #{resnet_forward.41} parent=11 // pred_region
        _
      $region20: #{resnet_forward.41} parent=11 // pred_fallthru
        _
      // Predicated region
      $region21: #{resnet_forward.41} parent=11 // pred_check
        %p171 = pneg %p122
      $region22: #{resnet_forward.41} parent=11 // pred_check_branch
        %173 = sbr.rel (%p171) target = $region24
      $region23: #{resnet_forward.41} parent=11 // pred_region
        _
      $region24: #{resnet_forward.41} parent=11 // pred_fallthru
        _
    $region12: #{resnet_forward.41} parent=5 // pred_fallthru
      _
    %p174 = scmp.lt.s32.totalorder %s10, 4
    // Predicated region
    $region25: #{resnet_forward.41} parent=5 // pred_check
      %p175 = pneg %p174
    $region26: #{resnet_forward.41} parent=5 // pred_check_branch
      %177 = sbr.rel (%p175) target = $region28
    $region27: #{resnet_forward.41} parent=5 // pred_region
      // Predicated region
      $region29: #{resnet_forward.41} parent=27 // pred_check
        %p178 = pneg %p53
      $region30: #{resnet_forward.41} parent=27 // pred_check_branch
        %180 = sbr.rel (%p178) target = $region32
      $region31: #{resnet_forward.41} parent=27 // pred_region
        %s181 = sadd.s32 %s18, %s19
        %p182 = scmp.lt.s32.totalorder %s17, 1
        %s183 = scalar_select %p182, %s17, 1
        %p184 = scmp.lt.s32.totalorder %s181, 1
        %s185 = scalar_select %p184, %s181, 1
        %s186 = smul.addr %s185, 2
        %s187 = smul.addr %s183, 4
        %s188 = sadd.s32 %s186, %s187
        %s189 = smul.addr %s188, 4
        %s190 = scalar_lea.vmem %s0, %s189
        %s191 = sadd.s32 %s18, %s19
      $region32: #{resnet_forward.41} parent=27 // pred_fallthru
        _
    $region28: #{resnet_forward.41} parent=5 // pred_fallthru
      _
    %p192 = scmp.le.s32.totalorder 1, %s10
    %p193 = scmp.lt.s32.totalorder %s10, 5
    %p194 = pnand %p192, %p193
    %p195 = pneg %p194
    // Predicated region
    $region33: #{resnet_forward.41} parent=5 // pred_check
      _
    $region34: #{resnet_forward.41} parent=5 // pred_check_branch
      %197 = sbr.rel (%p194) target = $region36
    $region35: #{resnet_forward.41} parent=5 // pred_region
      %s198 = ssub.s32 %s10, 1
      %s199 = sadd.s32 %s21, %s22
      %p200 = scmp.lt.s32.totalorder %s20, 1
      %s201 = scalar_select %p200, %s20, 1
      %p202 = scmp.lt.s32.totalorder %s199, 1
      %s203 = scalar_select %p202, %s199, 1
      %s204 = smul.addr %s203, 2
      %s205 = smul.addr %s201, 4
      %s206 = sadd.s32 %s204, %s205
      %s207 = smul.addr %s206, 4
      %s208 = scalar_lea.vmem %s0, %s207
      %p209 = pneg %p59
      %p210 = pneg %p56
      %p211 = pneg %p80
      %p212 = pneg %p77
      %p213 = pneg %p101
      %p214 = pneg %p98
      %p215 = pneg %p122
      %p216 = pneg %p119
      %p217 = pneg %p150
      %p218 = pneg %p147
      %p219 = scmp.lt.s32.totalorder %s20, 1
      %s220 = scalar_select %p219, %s20, 1
      %p221 = scmp.lt.s32.totalorder %s21, 0
      %s222 = scalar_select %p221, %s21, 0
      %s223 = smul.addr %s222, 2
      %s224 = smul.addr %s220, 2
      %s225 = sadd.s32 %s223, %s224
      %s226 = smul.addr %s225, 4
      %s227 = scalar_lea.vmem %s4, %s226
      %s228 = sadd.s32 %s21, %s22
      %p229 = scmp.lt.s32.totalorder %s20, 1
      %s230 = scalar_select %p229, %s20, 1
      %p231 = scmp.lt.s32.totalorder %s228, 1
      %s232 = scalar_select %p231, %s228, 1
      %s233 = smul.addr %s232, 2
      %s234 = smul.addr %s230, 4
      %s235 = sadd.s32 %s233, %s234
      %s236 = smul.addr %s235, 4
      %s237 = scalar_lea.vmem %s0, %s236
      %s238 = sadd.s32 %s21, %s22
      %p239 = scmp.lt.s32.totalorder %s20, 1
      %s240 = scalar_select %p239, %s20, 1
      %p241 = scmp.lt.s32.totalorder %s21, 0
      %s242 = scalar_select %p241, %s21, 0
      %s243 = smul.addr %s242, 2
      %s244 = smul.addr %s240, 2
      %s245 = sadd.s32 %s243, %s244
      %s246 = smul.addr %s245, 4
      %s247 = scalar_lea.vmem %s4, %s246
      %p249 = scmp.eq.s32.totalorder %s22, 0
      // Predicated region
      $region37: #{resnet_forward.41} parent=35 // pred_check
        %p250 = pneg %p249
      $region38: #{resnet_forward.41} parent=35 // pred_check_branch
        %252 = sbr.rel (%p250) target = $region40
      $region39: #{resnet_forward.41} parent=35 // pred_region
        %253 = vst [vmem:[#allocation2] sm:$0xff] 0.0
        %254 = vst [vmem:[#allocation2 + $0x8] sm:$0x1] 0.0
      $region40: #{resnet_forward.41} parent=35 // pred_fallthru
        _
      %v255 = vld [vmem:[%s237] sm:$0xf]
      %v256 = vld [vmem:[%s237 + $0x4] sm:$0x1]
      %v257 = vld [vmem:[#allocation2] sm:$0xff]
      %v258 = vld [vmem:[#allocation2 + $0x8] sm:$0x1]
      %s259 = smul.u32 %s22, 2
      %s260 = smul.u32 %s259, 16
      %s261 = smul.addr %s260, 4
      %s262 = scalar_lea.vmem %s1, %s261
      %v263 = vld [vmem:[%s262] sm:$0xf]
      %v264 = vld [vmem:[%s262 + $0x4] sm:$0xf]
      %v265 = vld [vmem:[%s262 + $0x8] sm:$0xf]
      %v266 = vld [vmem:[%s262 + $0xc] sm:$0xf]
      %v267 = vld [vmem:[%s262 + $0x10] sm:$0xf]
      %v268 = vld [vmem:[%s262 + $0x14] sm:$0xf]
      %v269 = vld [vmem:[%s262 + $0x18] sm:$0xf]
      %v270 = vld [vmem:[%s262 + $0x1c] sm:$0xf]
      %v271 = vld [vmem:[%s262 + $0x20] sm:$0xf]
      %v272 = vld [vmem:[%s262 + $0x24] sm:$0xf]
      %v273 = vld [vmem:[%s262 + $0x28] sm:$0xf]
      %v274 = vld [vmem:[%s262 + $0x2c] sm:$0xf]
      %v275 = vld [vmem:[%s262 + $0x30] sm:$0xf]
      %v276 = vld [vmem:[%s262 + $0x34] sm:$0xf]
      %v277 = vld [vmem:[%s262 + $0x38] sm:$0xf]
      %v278 = vld [vmem:[%s262 + $0x3c] sm:$0xf]
      %v281 = vunpack.c.l.b16 %v255
      %v282 = vunpack.c.l.b16 %v256
      %v283 = vpack.c.b16 %v282, %v281
      %v301 = vunpack.c.l.b16 %v263
      %v302 = vunpack.c.l.b16 %v264
      %v303 = vunpack.c.l.b16 %v265
      %v304 = vunpack.c.l.b16 %v266
      %v305 = vunpack.c.l.b16 %v267
      %v306 = vunpack.c.l.b16 %v268
      %v307 = vunpack.c.l.b16 %v269
      %v308 = vunpack.c.l.b16 %v270
      %v309 = vunpack.c.l.b16 %v271
      %v310 = vunpack.c.l.b16 %v272
      %v311 = vunpack.c.l.b16 %v273
      %v312 = vunpack.c.l.b16 %v274
      %v313 = vunpack.c.l.b16 %v275
      %v314 = vunpack.c.l.b16 %v276
      %v315 = vunpack.c.l.b16 %v277
      %v316 = vunpack.c.l.b16 %v278
      %v317 = vpack.c.b16 %v302, %v301
      %v318 = vpack.c.b16 %v304, %v303
      %v319 = vpack.c.b16 %v306, %v305
      %v320 = vpack.c.b16 %v308, %v307
      %v321 = vpack.c.b16 %v310, %v309
      %v322 = vpack.c.b16 %v312, %v311
      %v323 = vpack.c.b16 %v314, %v313
      %v324 = vpack.c.b16 %v316, %v315
      %333 = vmatprep.subr.bf16.mxu0 0
      %334 = vmatpush1.bf16.msra.mxu0 %v324
      %335 = vmatprep.subr.bf16.mxu0 0
      %336 = vmatpush1.bf16.msra.mxu0 %v323
      %337 = vmatprep.subr.bf16.mxu0 0
      %338 = vmatpush1.bf16.msra.mxu0 %v322
      %339 = vmatprep.subr.bf16.mxu0 0
      %340 = vmatpush1.bf16.msra.mxu0 %v321
      %341 = vmatprep.subr.bf16.mxu0 0
      %342 = vmatpush1.bf16.msra.mxu0 %v320
      %343 = vmatprep.subr.bf16.mxu0 0
      %344 = vmatpush1.bf16.msra.mxu0 %v319
      %345 = vmatprep.subr.bf16.mxu0 0
      %346 = vmatpush1.bf16.msra.mxu0 %v318
      %347 = vmatprep.subr.bf16.mxu0 0
      %348 = vmatpush1.bf16.msra.mxu0 %v317
      %349 = vmatprep.subr.bf16.mxu0 0
      %350 = vmatpush2.bf16.msra.mxu0 0
      %351 = vmatprep.subr.bf16.mxu0 0
      %352 = vmatpush2.bf16.msra.mxu0 0
      %353 = vmatprep.subr.bf16.mxu0 0
      %354 = vmatpush2.bf16.msra.mxu0 0
      %355 = vmatprep.subr.bf16.mxu0 0
      %356 = vmatpush2.bf16.msra.mxu0 0
      %357 = vmatprep.subr.bf16.mxu0 0
      %358 = vmatpush2.bf16.msra.mxu0 0
      %359 = vmatprep.subr.bf16.mxu0 0
      %360 = vmatpush2.bf16.msra.mxu0 0
      %361 = vmatprep.subr.bf16.mxu0 0
      %362 = vmatpush2.bf16.msra.mxu0 0
      %363 = vmatprep.subr.bf16.mxu0 0
      %364 = vmatpush2.bf16.msra.mxu0 0
      %365 = vmatprep.mubr.bf16.mxu0 0
      %366 = vmatmul.mubr.bf16.gmra.mxu0 %v283
      %v367 = vpop.f32.mrf.mxu0
      %v368 = vadd.f32 0.0, %v367
      %v369 = vpop.f32.mrf.mxu0
      %v370 = vpop.f32.mrf.mxu0
      %v371 = vadd.f32 0.0, %v370
      %v372 = vpop.f32.mrf.mxu0
      %373 = vdwg.mxu0
      %v374 = vadd.f32 %v257, %v368
      %v375 = vadd.f32 %v258, %v371
      %s376 = sadd.s32 %s259, 1
      %s377 = smul.u32 %s376, 16
      %s378 = smul.addr %s377, 4
      %s379 = scalar_lea.vmem %s1, %s378
      %v380 = vld [vmem:[%s379] sm:$0xf]
      %v381 = vld [vmem:[%s379 + $0x4] sm:$0xf]
      %v382 = vld [vmem:[%s379 + $0x8] sm:$0xf]
      %v383 = vld [vmem:[%s379 + $0xc] sm:$0xf]
      %v384 = vld [vmem:[%s379 + $0x10] sm:$0xf]
      %v385 = vld [vmem:[%s379 + $0x14] sm:$0xf]
      %v386 = vld [vmem:[%s379 + $0x18] sm:$0xf]
      %v387 = vld [vmem:[%s379 + $0x1c] sm:$0xf]
      %v388 = vld [vmem:[%s379 + $0x20] sm:$0xf]
      %v389 = vld [vmem:[%s379 + $0x24] sm:$0xf]
      %v390 = vld [vmem:[%s379 + $0x28] sm:$0xf]
      %v391 = vld [vmem:[%s379 + $0x2c] sm:$0xf]
      %v392 = vld [vmem:[%s379 + $0x30] sm:$0xf]
      %v393 = vld [vmem:[%s379 + $0x34] sm:$0xf]
      %v394 = vld [vmem:[%s379 + $0x38] sm:$0xf]
      %v395 = vld [vmem:[%s379 + $0x3c] sm:$0xf]
      %v397 = vshrl.u32 %v283, 16
      %v399 = vshll.u32 %v283, 16
      %v401 = vrot.slane %v399, 1
      %v402 = vor.u32 %v397, %v401
      %v420 = vunpack.c.l.b16 %v380
      %v421 = vunpack.c.l.b16 %v381
      %v422 = vunpack.c.l.b16 %v382
      %v423 = vunpack.c.l.b16 %v383
      %v424 = vunpack.c.l.b16 %v384
      %v425 = vunpack.c.l.b16 %v385
      %v426 = vunpack.c.l.b16 %v386
      %v427 = vunpack.c.l.b16 %v387
      %v428 = vunpack.c.l.b16 %v388
      %v429 = vunpack.c.l.b16 %v389
      %v430 = vunpack.c.l.b16 %v390
      %v431 = vunpack.c.l.b16 %v391
      %v432 = vunpack.c.l.b16 %v392
      %v433 = vunpack.c.l.b16 %v393
      %v434 = vunpack.c.l.b16 %v394
      %v435 = vunpack.c.l.b16 %v395
      %v436 = vpack.c.b16 %v421, %v420
      %v437 = vpack.c.b16 %v423, %v422
      %v438 = vpack.c.b16 %v425, %v424
      %v439 = vpack.c.b16 %v427, %v426
      %v440 = vpack.c.b16 %v429, %v428
      %v441 = vpack.c.b16 %v431, %v430
      %v442 = vpack.c.b16 %v433, %v432
      %v443 = vpack.c.b16 %v435, %v434
      %452 = vmatprep.subr.bf16.mxu0 0
      %453 = vmatpush1.bf16.msra.mxu0 %v443
      %454 = vmatprep.subr.bf16.mxu0 0
      %455 = vmatpush1.bf16.msra.mxu0 %v442
      %456 = vmatprep.subr.bf16.mxu0 0
      %457 = vmatpush1.bf16.msra.mxu0 %v441
      %458 = vmatprep.subr.bf16.mxu0 0
      %459 = vmatpush1.bf16.msra.mxu0 %v440
      %460 = vmatprep.subr.bf16.mxu0 0
      %461 = vmatpush1.bf16.msra.mxu0 %v439
      %462 = vmatprep.subr.bf16.mxu0 0
      %463 = vmatpush1.bf16.msra.mxu0 %v438
      %464 = vmatprep.subr.bf16.mxu0 0
      %465 = vmatpush1.bf16.msra.mxu0 %v437
      %466 = vmatprep.subr.bf16.mxu0 0
      %467 = vmatpush1.bf16.msra.mxu0 %v436
      %468 = vmatprep.subr.bf16.mxu0 0
      %469 = vmatpush2.bf16.msra.mxu0 0
      %470 = vmatprep.subr.bf16.mxu0 0
      %471 = vmatpush2.bf16.msra.mxu0 0
      %472 = vmatprep.subr.bf16.mxu0 0
      %473 = vmatpush2.bf16.msra.mxu0 0
      %474 = vmatprep.subr.bf16.mxu0 0
      %475 = vmatpush2.bf16.msra.mxu0 0
      %476 = vmatprep.subr.bf16.mxu0 0
      %477 = vmatpush2.bf16.msra.mxu0 0
      %478 = vmatprep.subr.bf16.mxu0 0
      %479 = vmatpush2.bf16.msra.mxu0 0
      %480 = vmatprep.subr.bf16.mxu0 0
      %481 = vmatpush2.bf16.msra.mxu0 0
      %482 = vmatprep.subr.bf16.mxu0 0
      %483 = vmatpush2.bf16.msra.mxu0 0
      %484 = vmatprep.mubr.bf16.mxu0 0
      %485 = vmatmul.mubr.bf16.gmra.mxu0 %v402
      %v486 = vpop.f32.mrf.mxu0
      %v487 = vadd.f32 0.0, %v486
      %v488 = vpop.f32.mrf.mxu0
      %v489 = vpop.f32.mrf.mxu0
      %v490 = vadd.f32 0.0, %v489
      %v491 = vpop.f32.mrf.mxu0
      %492 = vdwg.mxu0
      %v493 = vadd.f32 %v374, %v487
      %v494 = vadd.f32 %v375, %v490
      %495 = vst [vmem:[#allocation2] sm:$0xff] %v493
      %496 = vst [vmem:[#allocation2 + $0x8] sm:$0x1] %v494
      %p497 = scmp.eq.s32.totalorder %s22, 1
      // Predicated region
      $region41: #{resnet_forward.41} parent=35 // pred_check
        %p498 = pneg %p497
      $region42: #{resnet_forward.41} parent=35 // pred_check_branch
        %500 = sbr.rel (%p498) target = $region44
      $region43: #{resnet_forward.41} parent=35 // pred_region
        %v501 = vld [vmem:[#allocation2] sm:$0xff]
        %v502 = vld [vmem:[#allocation2 + $0x8] sm:$0x1]
        %v503 = vld [vmem:[%s2] sm:$0x1]
        %v505 = vlaneseq
        %v506 = vshrl.u32 %v505, 7
        %v507 = vsub.s32 0, %v506
        %v508 = vrot.slane %v503, %v507
        %v510 = vmul.f32 %v501, %v508
        %v511 = vmul.f32 %v502, %v508
        %v512 = vld [vmem:[%s3] sm:$0x1]
        %v514 = vlaneseq
        %v515 = vshrl.u32 %v514, 7
        %v516 = vsub.s32 0, %v515
        %v517 = vrot.slane %v512, %v516
        %v519 = vadd.f32 %v510, %v517
        %v520 = vadd.f32 %v511, %v517
        %v521 = vmax.f32 %v519, 0.0
        %v522 = vmax.f32 %v520, 0.0
        %v523 = vpack.c.bf16 %v522, %v521
        %v525 = vunpack.c.l.b16 %v523
        %v526 = vunpack.c.h.b16 %v523
        %v527 = vpack.c.b16 %v525, %v525
        %v528 = vpack.c.b16 %v526, %v526
        %531 = vst [vmem:[%s247] sm:$0xf] %v527
        %vm532 = vcmask 1040384
        %vm533 = vsmask.f32 256
        %vm534 = vmand %vm532, %vm533
        %v535 = vld [vmem:[%s247 + $0x4] sm:$0x1]
        %v536 = vsel %vm534, %v528, %v535
        %537 = vst [vmem:[%s247 + $0x4] sm:$0x1] %v536
      $region44: #{resnet_forward.41} parent=35 // pred_fallthru
        _
      %p538 = scmp.lt.s32.totalorder %s20, 1
      %s539 = scalar_select %p538, %s20, 1
      %p540 = scmp.lt.s32.totalorder %s21, 0
      %s541 = scalar_select %p540, %s21, 0
      %s542 = smul.addr %s541, 2
      %s543 = smul.addr %s539, 2
      %s544 = sadd.s32 %s542, %s543
      %s545 = smul.addr %s544, 4
      %s546 = scalar_lea.vmem %s4, %s545
      // Predicated region
      $region45: #{resnet_forward.41} parent=35 // pred_check
        %p547 = pneg %p147
      $region46: #{resnet_forward.41} parent=35 // pred_check_branch
        %549 = sbr.rel (%p547) target = $region48
      $region47: #{resnet_forward.41} parent=35 // pred_region
        _
      $region48: #{resnet_forward.41} parent=35 // pred_fallthru
        _
    $region36: #{resnet_forward.41} parent=5 // pred_fallthru
      _
    %p550 = scmp.le.s32.totalorder 2, %s10
    // Predicated region
    $region49: #{resnet_forward.41} parent=5 // pred_check
      %p551 = pneg %p550
    $region50: #{resnet_forward.41} parent=5 // pred_check_branch
      %553 = sbr.rel (%p551) target = $region52
    $region51: #{resnet_forward.41} parent=5 // pred_region
      %s554 = ssub.s32 %s10, 2
      // Predicated region
      $region53: #{resnet_forward.41} parent=51 // pred_check
        %p555 = pneg %p153
      $region54: #{resnet_forward.41} parent=51 // pred_check_branch
        %557 = sbr.rel (%p555) target = $region56
      $region55: #{resnet_forward.41} parent=51 // pred_region
        %p558 = scmp.lt.s32.totalorder %s23, 1
        %s559 = scalar_select %p558, %s23, 1
        %p560 = scmp.lt.s32.totalorder %s24, 0
        %s561 = scalar_select %p560, %s24, 0
        %s562 = smul.addr %s561, 2
        %s563 = smul.addr %s559, 2
        %s564 = sadd.s32 %s562, %s563
        %s565 = smul.addr %s564, 4
        %s566 = scalar_lea.vmem %s4, %s565
      $region56: #{resnet_forward.41} parent=51 // pred_fallthru
        _
    $region52: #{resnet_forward.41} parent=5 // pred_fallthru
      _
  $region6: #{resnet_forward.41} parent=0 // loop_footer
    %s14 = sadd.s32 1, %s10
  $region7: #{resnet_forward.41} parent=0 // loop_footer_branch
    %9 = sbr.rel target = $region3
  $region8: #{resnet_forward.41} parent=0 // loop_exit
    _

</llo_original>
